<compile_context>
chip_gen: v6e
topology: v6e:2x2x1
jax: 0.10.0
libtpu: 0.0.40
codegen_flags: <defaults>
</compile_context>

<pallas_src>
import functools

import numpy as np
import jax
import jax.numpy as jnp
from jax.experimental import pallas as pl
from jax.experimental.pallas import tpu as pltpu


# --------------------------------------------------------------------------- #
# MXU matmul kernel (used by every conv via im2col)                            #
# --------------------------------------------------------------------------- #
def _matmul_bias_kernel(a_ref, b_ref, bias_ref, o_ref, *, relu):
    acc = jnp.dot(a_ref[...], b_ref[...], preferred_element_type=jnp.float32)
    acc = acc + bias_ref[...]
    if relu:
        acc = jnp.maximum(acc, 0.0)
    o_ref[...] = acc


def matmul_bias(a, b, bias, relu=False, block_m=256):
    """(M, K) @ (K, N) + bias -> (M, N) f32; bf16 MXU operands, f32 accumulation."""
    M, K = a.shape
    _, N = b.shape
    tm = block_m
    while tm > 8 and M % tm:
        tm //= 2
    if M % tm:                       # tiny / irregular M: one full-row block
        tm = M
    a16 = a.astype(jnp.bfloat16)
    b16 = b.astype(jnp.bfloat16)
    bias2 = bias.reshape(1, N).astype(jnp.float32)
    return pl.pallas_call(
        functools.partial(_matmul_bias_kernel, relu=relu),
        out_shape=jax.ShapeDtypeStruct((M, N), jnp.float32),
        grid=(M // tm,),
        in_specs=[
            pl.BlockSpec((tm, K), lambda i: (i, 0)),
            pl.BlockSpec((K, N), lambda i: (0, 0)),
            pl.BlockSpec((1, N), lambda i: (0, 0)),
        ],
        out_specs=pl.BlockSpec((tm, N), lambda i: (i, 0)),
        compiler_params=pltpu.CompilerParams(dimension_semantics=("parallel",)),
    )(a16, b16, bias2)


# --------------------------------------------------------------------------- #
# Conv3d = channels-last im2col (XLA glue) + Pallas MXU matmul                 #
# --------------------------------------------------------------------------- #
# TODO(synk): at real video resolutions, move the 27-tap loop into the matmul kernel as
# an "arbitrary" reduction grid axis to avoid materializing the 27x im2col blowup.
def im2col_3d(x_cl, ksize, stride, padding):
    """x_cl: (B, D, H, W, C) -> (B*Do*Ho*Wo, kd*kh*kw*C); row order (b, do, ho, wo)."""
    B, D, H, W, C = x_cl.shape
    kd, kh, kw = ksize
    sd, sh, sw = stride
    pd, ph, pw = padding
    xp = jnp.pad(x_cl, ((0, 0), (pd, pd), (ph, ph), (pw, pw), (0, 0)))
    Do = (D + 2 * pd - kd) // sd + 1
    Ho = (H + 2 * ph - kh) // sh + 1
    Wo = (W + 2 * pw - kw) // sw + 1
    cols = []
    for dz in range(kd):
        for dy in range(kh):
            for dx in range(kw):
                cols.append(xp[:, dz:dz + sd * Do:sd,
                               dy:dy + sh * Ho:sh,
                               dx:dx + sw * Wo:sw, :])
    col = jnp.concatenate(cols, axis=-1)              # (B, Do, Ho, Wo, k3*C)
    return col.reshape(B * Do * Ho * Wo, kd * kh * kw * C), (Do, Ho, Wo)


def conv3d_cl(x_cl, w, b, stride, padding, relu=False):
    """Channels-last Conv3d. x_cl: (B, D, H, W, Cin); w: (Cout, Cin, kd, kh, kw)."""
    B = x_cl.shape[0]
    Cout = w.shape[0]
    ksize = w.shape[2:]
    col, (Do, Ho, Wo) = im2col_3d(x_cl, ksize, stride, padding)
    wmat = jnp.transpose(w, (2, 3, 4, 1, 0)).reshape(-1, Cout)   # (k3*Cin, Cout)
    out = matmul_bias(col, wmat, b, relu=relu)                   # (M, Cout)
    return out.reshape(B, Do, Ho, Wo, Cout)


# --------------------------------------------------------------------------- #
# In-kernel helpers                                                            #
# --------------------------------------------------------------------------- #
def _dot_bias(x, w, b):
    """In-kernel (M, K) @ (K, N) + b; pads M up to a sublane multiple for the MXU."""
    m = x.shape[0]
    pad = (-m) % 8
    if pad:
        x = jnp.concatenate([x, jnp.zeros((pad, x.shape[1]), x.dtype)], axis=0)
    y = jnp.dot(x, w, preferred_element_type=jnp.float32) + b
    return y[:m] if pad else y


def _softmax_last(x):
    m = jnp.max(x, axis=-1, keepdims=True)
    e = jnp.exp(x - m)
    return e / jnp.sum(e, axis=-1, keepdims=True)


# --------------------------------------------------------------------------- #
# Fused STA-block tail: pools + 1x1x1 fc + softmax + attention fusion          #
# --------------------------------------------------------------------------- #
def _sta_tail_kernel(y_ref, wt_ref, bt_ref, ws_ref, bs_ref, o_ref, *, C, use_sigmoid):
    y = y_ref[0]                                  # (D, HW, 2C) = [x_t | x_s]
    xt = y[:, :, :C]
    xs = y[:, :, C:]

    # temporal attention: AdaptiveAvgPool3d((None,1,1)) == mean over H,W -> fc
    att_t = _dot_bias(jnp.mean(xt, axis=1), wt_ref[...], bt_ref[...])   # (D, C)
    # spatial attention: AdaptiveAvgPool3d((1,None,None)) == mean over D -> fc
    att_s = _dot_bias(jnp.mean(xs, axis=0), ws_ref[...], bs_ref[...])   # (HW, C)

    if use_sigmoid:   # SoftMax module falls back to sigmoid when the channel dim == 1
        att_t = 1.0 / (1.0 + jnp.exp(-att_t))
        att_s = 1.0 / (1.0 + jnp.exp(-att_s))
    else:             # softmax over the channel axis (dim=2 of the PyTorch 6-D view)
        att_t = _softmax_last(att_t)
        att_s = _softmax_last(att_s)

    o_ref[0] = (att_t[:, None, :] * att_s[None, :, :]) * (xs + xt)


def sta_block(x_cl, p):
    """x_cl: (B, D, H, W, Cin) -> (B, D, H, W, Cinner), channels-last."""
    B, D, H, W, _ = x_cl.shape
    C = p["wt"].shape[0]
    HW = H * W

    # Fused temporal+spatial conv: shared im2col, lane-dense N=2*C, fused bias+ReLU.
    w_cat = jnp.concatenate([p["wt"], p["ws"]], axis=0)
    b_cat = jnp.concatenate([p["bt"], p["bs"]], axis=0)
    y = conv3d_cl(x_cl, w_cat, b_cat, stride=(1, 1, 1), padding=(1, 1, 1), relu=True)
    y = y.reshape(B, D, HW, 2 * C)                # [x_t | x_s] along channels

    wfc_t = jnp.transpose(p["wfc_t"].reshape(C, C))     # (Cin, Cout) so att @ W
    wfc_s = jnp.transpose(p["wfc_s"].reshape(C, C))

    # TODO(synk): tile the HW axis here for large spatial resolutions; whole-slab
    # blocks easily fit VMEM at this model's shapes.
    out = pl.pallas_call(
        functools.partial(_sta_tail_kernel, C=C, use_sigmoid=(C <= 1)),
        out_shape=jax.ShapeDtypeStruct((B, D, HW, C), jnp.float32),
        grid=(B,),
        in_specs=[
            pl.BlockSpec((1, D, HW, 2 * C), lambda b: (b, 0, 0, 0)),
            pl.BlockSpec((C, C), lambda b: (0, 0)),
            pl.BlockSpec((1, C), lambda b: (0, 0)),
            pl.BlockSpec((C, C), lambda b: (0, 0)),
            pl.BlockSpec((1, C), lambda b: (0, 0)),
        ],
        out_specs=pl.BlockSpec((1, D, HW, C), lambda b: (b, 0, 0, 0)),
        compiler_params=pltpu.CompilerParams(dimension_semantics=("parallel",)),
    )(y, wfc_t, p["bfc_t"].reshape(1, C), wfc_s, p["bfc_s"].reshape(1, C))
    return out.reshape(B, D, H, W, C)


# --------------------------------------------------------------------------- #
# Fused head: AdaptiveAvgPool3d((None,1,1)) + 1x1x1 feature conv               #
# --------------------------------------------------------------------------- #
def _head_kernel(x_ref, w_ref, b_ref, o_ref):
    pooled = jnp.mean(x_ref[0], axis=1)                         # (D, C)
    o_ref[0] = _dot_bias(pooled, w_ref[...], b_ref[...])        # (D, Nout)


def head(x_cl, w_feat, b_feat):
    B, D, H, W, C = x_cl.shape
    HW = H * W
    Nout = w_feat.shape[0]
    wmat = jnp.transpose(w_feat.reshape(Nout, C))               # (C, Nout)
    return pl.pallas_call(
        _head_kernel,
        out_shape=jax.ShapeDtypeStruct((B, D, Nout), jnp.float32),
        grid=(B,),
        in_specs=[
            pl.BlockSpec((1, D, HW, C), lambda b: (b, 0, 0, 0)),
            pl.BlockSpec((C, Nout), lambda b: (0, 0)),
            pl.BlockSpec((1, Nout), lambda b: (0, 0)),
        ],
        out_specs=pl.BlockSpec((1, D, Nout), lambda b: (b, 0, 0)),
        compiler_params=pltpu.CompilerParams(dimension_semantics=("parallel",)),
    )(x_cl.reshape(B, D, HW, C), wmat, b_feat.reshape(1, Nout))


# --------------------------------------------------------------------------- #
# Full network                                                                 #
# --------------------------------------------------------------------------- #
def emotion_net(x, params):
    """x: (B, T, 3, H, W) -> (B, T, 512, 1, 1), matching the PyTorch module."""
    # channels-last (B, D=T, H, W, C=3); PyTorch's x.transpose(1, 2) folds in here.
    x_cl = jnp.transpose(x, (0, 1, 3, 4, 2))
    x_cl = conv3d_cl(x_cl, params["conv_w"], params["conv_b"],
                     stride=(1, 2, 2), padding=(1, 1, 1))
    x_cl = sta_block(x_cl, params["sta1"])
    x_cl = sta_block(x_cl, params["sta2"])
    feat = head(x_cl, params["feat_w"], params["feat_b"])       # (B, T, 512)
    B, D, Nout = feat.shape
    return feat.reshape(B, D, Nout, 1, 1)       # == transpose(1,2) of (B, 512, T, 1, 1)


# --------------------------------------------------------------------------- #
# Deterministic parameter initialization (PyTorch-style uniform bounds)        #
# --------------------------------------------------------------------------- #
def init_params(key):
    keys = iter(jax.random.split(key, 10))

    def conv_init(cout, cin, ksz):
        fan_in = cin * ksz[0] * ksz[1] * ksz[2]
        bound = 1.0 / float(np.sqrt(fan_in))
        k1, k2 = jax.random.split(next(keys))
        w = jax.random.uniform(k1, (cout, cin) + ksz, jnp.float32, -bound, bound)
        b = jax.random.uniform(k2, (cout,), jnp.float32, -bound, bound)
        return w, b

    def sta_params(cin, cinner):
        wt, bt = conv_init(cinner, cin, (3, 3, 3))
        ws, bs = conv_init(cinner, cin, (3, 3, 3))
        wfc_t, bfc_t = conv_init(cinner, cinner, (1, 1, 1))
        wfc_s, bfc_s = conv_init(cinner, cinner, (1, 1, 1))
        return dict(wt=wt, bt=bt, ws=ws, bs=bs,
                    wfc_t=wfc_t, bfc_t=bfc_t, wfc_s=wfc_s, bfc_s=bfc_s)

    params = {}
    params["conv_w"], params["conv_b"] = conv_init(32, 3, (3, 3, 3))
    params["sta1"] = sta_params(32, 64)
    params["sta2"] = sta_params(64, 128)
    params["feat_w"], params["feat_b"] = conv_init(512, 128, (1, 1, 1))
    return params


if __name__ == "__main__":
    key = jax.random.PRNGKey(0)
    pkey, xkey = jax.random.split(key)
    params = init_params(pkey)
    # (B=2, T=4, C=3, H=16, W=16), matching EmotionNet's expected video input.
    x = jax.random.normal(xkey, (2, 4, 3, 16, 16), jnp.float32)
    out = jax.jit(emotion_net)(x, params)
    out = jax.block_until_ready(out)
    assert out.shape == (2, 4, 512, 1, 1), out.shape
    assert bool(jnp.all(jnp.isfinite(out)))
    print("KERNEL_OK")
</pallas_src>

<mosaic_0001>
module attributes {stable_mosaic.version = 11 : i64} {
  func.func @_matmul_bias_kernel(%arg0: i32, %arg1: memref<256x81xbf16, #tpu.memory_space<vmem>>, %arg2: memref<81x32xbf16, #tpu.memory_space<vmem>>, %arg3: memref<1x32xf32, #tpu.memory_space<vmem>>, %arg4: memref<256x32xf32, #tpu.memory_space<vmem>>) attributes {dimension_semantics = [#tpu.dimension_semantics<parallel>], iteration_bounds = array<i64: 2>, scalar_prefetch = 0 : i64, scratch_operands = 0 : i64, tpu.core_type = #tpu.core_type<tc>, window_params = [{transform_indices = @transform_0, window_bounds = array<i64: 256, 81>}, {pipeline_mode = #tpu.pipeline_mode<synchronous>, transform_indices = @transform_1, window_bounds = array<i64: 81, 32>}, {pipeline_mode = #tpu.pipeline_mode<synchronous>, transform_indices = @transform_2, window_bounds = array<i64: 1, 32>}, {transform_indices = @transform_3, window_bounds = array<i64: 256, 32>}]} {
    %c0 = arith.constant 0 : index
    %c0_0 = arith.constant 0 : index
    %0 = vector.load %arg1[%c0, %c0_0] : memref<256x81xbf16, #tpu.memory_space<vmem>>, vector<256x81xbf16>
    %c0_1 = arith.constant 0 : index
    %c0_2 = arith.constant 0 : index
    %1 = vector.load %arg2[%c0_1, %c0_2] : memref<81x32xbf16, #tpu.memory_space<vmem>>, vector<81x32xbf16>
    %cst = arith.constant dense<0.000000e+00> : vector<256x32xf32>
    %2 = tpu.matmul %0, %1, %cst {dimension_numbers = #tpu.dot_dimension_numbers<[1], [0], [0], [1], [0, 0, 1, 1], [], []>} : vector<256x81xbf16>, vector<81x32xbf16>, vector<256x32xf32> -> vector<256x32xf32>
    %c0_3 = arith.constant 0 : index
    %c0_4 = arith.constant 0 : index
    %3 = vector.load %arg3[%c0_3, %c0_4] : memref<1x32xf32, #tpu.memory_space<vmem>>, vector<1x32xf32>
    %4 = vector.broadcast %3 : vector<1x32xf32> to vector<256x32xf32>
    %5 = arith.addf %2, %4 : vector<256x32xf32>
    %c0_5 = arith.constant 0 : index
    %c0_6 = arith.constant 0 : index
    %6 = vector.load %arg4[%c0_5, %c0_6] : memref<256x32xf32, #tpu.memory_space<vmem>>, vector<256x32xf32>
    tpu.vector_store %arg4[%c0_5, %c0_6], %5 {strides = array<i32>} : memref<256x32xf32, #tpu.memory_space<vmem>>, vector<256x32xf32>,
    return
  }
  func.func @transform_0(%arg0: i32) -> (i32, i32) {
    %c0_i32 = arith.constant 0 : i32
    %c0_i32_0 = arith.constant 0 : i32
    return %arg0, %c0_i32 : i32, i32
  }
  func.func @transform_1(%arg0: i32) -> (i32, i32) {
    %c0_i32 = arith.constant 0 : i32
    %c0_i32_0 = arith.constant 0 : i32
    %c0_i32_1 = arith.constant 0 : i32
    return %c0_i32, %c0_i32_0 : i32, i32
  }
  func.func @transform_2(%arg0: i32) -> (i32, i32) {
    %c0_i32 = arith.constant 0 : i32
    %c0_i32_0 = arith.constant 0 : i32
    %c0_i32_1 = arith.constant 0 : i32
    return %c0_i32, %c0_i32_0 : i32, i32
  }
  func.func @transform_3(%arg0: i32) -> (i32, i32) {
    %c0_i32 = arith.constant 0 : i32
    %c0_i32_0 = arith.constant 0 : i32
    return %arg0, %c0_i32 : i32, i32
  }
}

module attributes {stable_mosaic.version = 11 : i64} {
  func.func @_matmul_bias_kernel(%arg0: i32, %arg1: memref<256x864xbf16, #tpu.memory_space<vmem>>, %arg2: memref<864x128xbf16, #tpu.memory_space<vmem>>, %arg3: memref<1x128xf32, #tpu.memory_space<vmem>>, %arg4: memref<256x128xf32, #tpu.memory_space<vmem>>) attributes {dimension_semantics = [#tpu.dimension_semantics<parallel>], iteration_bounds = array<i64: 2>, scalar_prefetch = 0 : i64, scratch_operands = 0 : i64, tpu.core_type = #tpu.core_type<tc>, window_params = [{transform_indices = @transform_0, window_bounds = array<i64: 256, 864>}, {pipeline_mode = #tpu.pipeline_mode<synchronous>, transform_indices = @transform_1, window_bounds = array<i64: 864, 128>}, {pipeline_mode = #tpu.pipeline_mode<synchronous>, transform_indices = @transform_2, window_bounds = array<i64: 1, 128>}, {transform_indices = @transform_3, window_bounds = array<i64: 256, 128>}]} {
    %c0 = arith.constant 0 : index
    %c0_0 = arith.constant 0 : index
    %0 = vector.load %arg1[%c0, %c0_0] : memref<256x864xbf16, #tpu.memory_space<vmem>>, vector<256x864xbf16>
    %c0_1 = arith.constant 0 : index
    %c0_2 = arith.constant 0 : index
    %1 = vector.load %arg2[%c0_1, %c0_2] : memref<864x128xbf16, #tpu.memory_space<vmem>>, vector<864x128xbf16>
    %cst = arith.constant dense<0.000000e+00> : vector<256x128xf32>
    %2 = tpu.matmul %0, %1, %cst {dimension_numbers = #tpu.dot_dimension_numbers<[1], [0], [0], [1], [0, 0, 1, 1], [], []>} : vector<256x864xbf16>, vector<864x128xbf16>, vector<256x128xf32> -> vector<256x128xf32>
    %c0_3 = arith.constant 0 : index
    %c0_4 = arith.constant 0 : index
    %3 = vector.load %arg3[%c0_3, %c0_4] : memref<1x128xf32, #tpu.memory_space<vmem>>, vector<1x128xf32>
    %4 = vector.broadcast %3 : vector<1x128xf32> to vector<256x128xf32>
    %5 = arith.addf %2, %4 : vector<256x128xf32>
    %cst_5 = arith.constant 0.000000e+00 : f32
    %6 = vector.broadcast %cst_5 : f32 to vector<256x128xf32>
    %7 = arith.maximumf %5, %6 : vector<256x128xf32>
    %c0_6 = arith.constant 0 : index
    %c0_7 = arith.constant 0 : index
    %8 = vector.load %arg4[%c0_6, %c0_7] : memref<256x128xf32, #tpu.memory_space<vmem>>, vector<256x128xf32>
    tpu.vector_store %arg4[%c0_6, %c0_7], %7 {strides = array<i32>} : memref<256x128xf32, #tpu.memory_space<vmem>>, vector<256x128xf32>,
    return
  }
  func.func @transform_0(%arg0: i32) -> (i32, i32) {
    %c0_i32 = arith.constant 0 : i32
    %c0_i32_0 = arith.constant 0 : i32
    return %arg0, %c0_i32 : i32, i32
  }
  func.func @transform_1(%arg0: i32) -> (i32, i32) {
    %c0_i32 = arith.constant 0 : i32
    %c0_i32_0 = arith.constant 0 : i32
    %c0_i32_1 = arith.constant 0 : i32
    return %c0_i32, %c0_i32_0 : i32, i32
  }
  func.func @transform_2(%arg0: i32) -> (i32, i32) {
    %c0_i32 = arith.constant 0 : i32
    %c0_i32_0 = arith.constant 0 : i32
    %c0_i32_1 = arith.constant 0 : i32
    return %c0_i32, %c0_i32_0 : i32, i32
  }
  func.func @transform_3(%arg0: i32) -> (i32, i32) {
    %c0_i32 = arith.constant 0 : i32
    %c0_i32_0 = arith.constant 0 : i32
    return %arg0, %c0_i32 : i32, i32
  }
}

module attributes {stable_mosaic.version = 11 : i64} {
  func.func @_sta_tail_kernel(%arg0: i32, %arg1: memref<1x4x64x128xf32, #tpu.memory_space<vmem>>, %arg2: memref<64x64xf32, #tpu.memory_space<vmem>>, %arg3: memref<1x64xf32, #tpu.memory_space<vmem>>, %arg4: memref<64x64xf32, #tpu.memory_space<vmem>>, %arg5: memref<1x64xf32, #tpu.memory_space<vmem>>, %arg6: memref<1x4x64x64xf32, #tpu.memory_space<vmem>>) attributes {dimension_semantics = [#tpu.dimension_semantics<parallel>], iteration_bounds = array<i64: 2>, scalar_prefetch = 0 : i64, scratch_operands = 0 : i64, tpu.core_type = #tpu.core_type<tc>, window_params = [{transform_indices = @transform_0, window_bounds = array<i64: 1, 4, 64, 128>}, {pipeline_mode = #tpu.pipeline_mode<synchronous>, transform_indices = @transform_1, window_bounds = array<i64: 64, 64>}, {pipeline_mode = #tpu.pipeline_mode<synchronous>, transform_indices = @transform_2, window_bounds = array<i64: 1, 64>}, {pipeline_mode = #tpu.pipeline_mode<synchronous>, transform_indices = @transform_3, window_bounds = array<i64: 64, 64>}, {pipeline_mode = #tpu.pipeline_mode<synchronous>, transform_indices = @transform_4, window_bounds = array<i64: 1, 64>}, {transform_indices = @transform_5, window_bounds = array<i64: 1, 4, 64, 64>}]} {
    %c0 = arith.constant 0 : index
    %c0_0 = arith.constant 0 : index
    %c0_1 = arith.constant 0 : index
    %c0_2 = arith.constant 0 : index
    %0 = vector.load %arg1[%c0, %c0_0, %c0_1, %c0_2] : memref<1x4x64x128xf32, #tpu.memory_space<vmem>>, vector<1x4x64x128xf32>
    %1 = vector.shape_cast %0 : vector<1x4x64x128xf32> to vector<4x64x128xf32>
    %2 = vector.extract_strided_slice %1 {offsets = [0, 0, 0], sizes = [4, 64, 64], strides = [1, 1, 1]} : vector<4x64x128xf32> to vector<4x64x64xf32>
    %3 = vector.extract_strided_slice %1 {offsets = [0, 0, 64], sizes = [4, 64, 64], strides = [1, 1, 1]} : vector<4x64x128xf32> to vector<4x64x64xf32>
    %cst = arith.constant dense<0.000000e+00> : vector<4x64xf32>
    %4 = vector.multi_reduction <add>, %2, %cst [1] : vector<4x64x64xf32> to vector<4x64xf32>
    %cst_3 = arith.constant 6.400000e+01 : f32
    %5 = vector.broadcast %cst_3 : f32 to vector<4x64xf32>
    %6 = arith.divf %4, %5 : vector<4x64xf32>
    %c0_4 = arith.constant 0 : index
    %c0_5 = arith.constant 0 : index
    %7 = vector.load %arg2[%c0_4, %c0_5] : memref<64x64xf32, #tpu.memory_space<vmem>>, vector<64x64xf32>
    %c0_6 = arith.constant 0 : index
    %c0_7 = arith.constant 0 : index
    %8 = vector.load %arg3[%c0_6, %c0_7] : memref<1x64xf32, #tpu.memory_space<vmem>>, vector<1x64xf32>
    %cst_8 = arith.constant 0.000000e+00 : f32
    %9 = vector.broadcast %cst_8 : f32 to vector<4x64xf32>
    %10 = tpu.concatenate %6, %9 in 0 : vector<4x64xf32>, vector<4x64xf32> -> vector<8x64xf32>
    %cst_9 = arith.constant dense<0.000000e+00> : vector<8x64xf32>
    %11 = tpu.matmul %10, %7, %cst_9 {dimension_numbers = #tpu.dot_dimension_numbers<[1], [0], [0], [1], [0, 0, 1, 1], [], []>} : vector<8x64xf32>, vector<64x64xf32>, vector<8x64xf32> -> vector<8x64xf32>
    %12 = vector.broadcast %8 : vector<1x64xf32> to vector<8x64xf32>
    %13 = arith.addf %11, %12 : vector<8x64xf32>
    %14 = vector.extract_strided_slice %13 {offsets = [0, 0], sizes = [4, 64], strides = [1, 1]} : vector<8x64xf32> to vector<4x64xf32>
    %cst_10 = arith.constant dense<0.000000e+00> : vector<64x64xf32>
    %15 = vector.multi_reduction <add>, %3, %cst_10 [0] : vector<4x64x64xf32> to vector<64x64xf32>
    %cst_11 = arith.constant 4.000000e+00 : f32
    %16 = vector.broadcast %cst_11 : f32 to vector<64x64xf32>
    %17 = arith.divf %15, %16 : vector<64x64xf32>
    %c0_12 = arith.constant 0 : index
    %c0_13 = arith.constant 0 : index
    %18 = vector.load %arg4[%c0_12, %c0_13] : memref<64x64xf32, #tpu.memory_space<vmem>>, vector<64x64xf32>
    %c0_14 = arith.constant 0 : index
    %c0_15 = arith.constant 0 : index
    %19 = vector.load %arg5[%c0_14, %c0_15] : memref<1x64xf32, #tpu.memory_space<vmem>>, vector<1x64xf32>
    %cst_16 = arith.constant dense<0.000000e+00> : vector<64x64xf32>
    %20 = tpu.matmul %17, %18, %cst_16 {dimension_numbers = #tpu.dot_dimension_numbers<[1], [0], [0], [1], [0, 0, 1, 1], [], []>} : vector<64x64xf32>, vector<64x64xf32>, vector<64x64xf32> -> vector<64x64xf32>
    %21 = vector.broadcast %19 : vector<1x64xf32> to vector<64x64xf32>
    %22 = arith.addf %20, %21 : vector<64x64xf32>
    %cst_17 = arith.constant dense<0xFF800000> : vector<4xf32>
    %23 = vector.multi_reduction <maximumf>, %14, %cst_17 [1] : vector<4x64xf32> to vector<4xf32>
    %24 = vector.shape_cast %23 : vector<4xf32> to vector<4x1xf32>
    %25 = vector.broadcast %24 : vector<4x1xf32> to vector<4x64xf32>
    %26 = arith.subf %14, %25 : vector<4x64xf32>
    %27 = math.exp %26 : vector<4x64xf32>
    %cst_18 = arith.constant dense<0.000000e+00> : vector<4xf32>
    %28 = vector.multi_reduction <add>, %27, %cst_18 [1] : vector<4x64xf32> to vector<4xf32>
    %29 = vector.shape_cast %28 : vector<4xf32> to vector<4x1xf32>
    %30 = vector.broadcast %29 : vector<4x1xf32> to vector<4x64xf32>
    %31 = arith.divf %27, %30 : vector<4x64xf32>
    %cst_19 = arith.constant dense<0xFF800000> : vector<64xf32>
    %32 = vector.multi_reduction <maximumf>, %22, %cst_19 [1] : vector<64x64xf32> to vector<64xf32>
    %33 = vector.shape_cast %32 : vector<64xf32> to vector<64x1xf32>
    %34 = vector.broadcast %33 : vector<64x1xf32> to vector<64x64xf32>
    %35 = arith.subf %22, %34 : vector<64x64xf32>
    %36 = math.exp %35 : vector<64x64xf32>
    %cst_20 = arith.constant dense<0.000000e+00> : vector<64xf32>
    %37 = vector.multi_reduction <add>, %36, %cst_20 [1] : vector<64x64xf32> to vector<64xf32>
    %38 = vector.shape_cast %37 : vector<64xf32> to vector<64x1xf32>
    %39 = vector.broadcast %38 : vector<64x1xf32> to vector<64x64xf32>
    %40 = arith.divf %36, %39 : vector<64x64xf32>
    %41 = vector.shape_cast %31 : vector<4x64xf32> to vector<4x1x64xf32>
    %42 = vector.shape_cast %40 : vector<64x64xf32> to vector<1x64x64xf32>
    %43 = vector.broadcast %41 : vector<4x1x64xf32> to vector<4x64x64xf32>
    %44 = vector.broadcast %42 : vector<1x64x64xf32> to vector<4x64x64xf32>
    %45 = arith.mulf %43, %44 : vector<4x64x64xf32>
    %46 = arith.addf %3, %2 : vector<4x64x64xf32>
    %47 = arith.mulf %45, %46 : vector<4x64x64xf32>
    %c0_21 = arith.constant 0 : index
    %c0_22 = arith.constant 0 : index
    %c0_23 = arith.constant 0 : index
    %c0_24 = arith.constant 0 : index
    %48 = vector.load %arg6[%c0_21, %c0_22, %c0_23, %c0_24] : memref<1x4x64x64xf32, #tpu.memory_space<vmem>>, vector<1x4x64x64xf32>
    %49 = vector.shape_cast %48 : vector<1x4x64x64xf32> to vector<4x64x64xf32>
    %50 = vector.shape_cast %47 : vector<4x64x64xf32> to vector<1x4x64x64xf32>
    tpu.vector_store %arg6[%c0_21, %c0_22, %c0_23, %c0_24], %50 {strides = array<i32>} : memref<1x4x64x64xf32, #tpu.memory_space<vmem>>, vector<1x4x64x64xf32>,
    return
  }
  func.func @transform_0(%arg0: i32) -> (i32, i32, i32, i32) {
    %c0_i32 = arith.constant 0 : i32
    %c0_i32_0 = arith.constant 0 : i32
    %c0_i32_1 = arith.constant 0 : i32
    %c0_i32_2 = arith.constant 0 : i32
    return %arg0, %c0_i32, %c0_i32_0, %c0_i32_1 : i32, i32, i32, i32
  }
  func.func @transform_1(%arg0: i32) -> (i32, i32) {
    %c0_i32 = arith.constant 0 : i32
    %c0_i32_0 = arith.constant 0 : i32
    %c0_i32_1 = arith.constant 0 : i32
    return %c0_i32, %c0_i32_0 : i32, i32
  }
  func.func @transform_2(%arg0: i32) -> (i32, i32) {
    %c0_i32 = arith.constant 0 : i32
    %c0_i32_0 = arith.constant 0 : i32
    %c0_i32_1 = arith.constant 0 : i32
    return %c0_i32, %c0_i32_0 : i32, i32
  }
  func.func @transform_3(%arg0: i32) -> (i32, i32) {
    %c0_i32 = arith.constant 0 : i32
    %c0_i32_0 = arith.constant 0 : i32
    %c0_i32_1 = arith.constant 0 : i32
    return %c0_i32, %c0_i32_0 : i32, i32
  }
  func.func @transform_4(%arg0: i32) -> (i32, i32) {
    %c0_i32 = arith.constant 0 : i32
    %c0_i32_0 = arith.constant 0 : i32
    %c0_i32_1 = arith.constant 0 : i32
    return %c0_i32, %c0_i32_0 : i32, i32
  }
  func.func @transform_5(%arg0: i32) -> (i32, i32, i32, i32) {
    %c0_i32 = arith.constant 0 : i32
    %c0_i32_0 = arith.constant 0 : i32
    %c0_i32_1 = arith.constant 0 : i32
    %c0_i32_2 = arith.constant 0 : i32
    return %arg0, %c0_i32, %c0_i32_0, %c0_i32_1 : i32, i32, i32, i32
  }
}

module attributes {stable_mosaic.version = 11 : i64} {
  func.func @_matmul_bias_kernel(%arg0: i32, %arg1: memref<256x1728xbf16, #tpu.memory_space<vmem>>, %arg2: memref<1728x256xbf16, #tpu.memory_space<vmem>>, %arg3: memref<1x256xf32, #tpu.memory_space<vmem>>, %arg4: memref<256x256xf32, #tpu.memory_space<vmem>>) attributes {dimension_semantics = [#tpu.dimension_semantics<parallel>], iteration_bounds = array<i64: 2>, scalar_prefetch = 0 : i64, scratch_operands = 0 : i64, tpu.core_type = #tpu.core_type<tc>, window_params = [{transform_indices = @transform_0, window_bounds = array<i64: 256, 1728>}, {pipeline_mode = #tpu.pipeline_mode<synchronous>, transform_indices = @transform_1, window_bounds = array<i64: 1728, 256>}, {pipeline_mode = #tpu.pipeline_mode<synchronous>, transform_indices = @transform_2, window_bounds = array<i64: 1, 256>}, {transform_indices = @transform_3, window_bounds = array<i64: 256, 256>}]} {
    %c0 = arith.constant 0 : index
    %c0_0 = arith.constant 0 : index
    %0 = vector.load %arg1[%c0, %c0_0] : memref<256x1728xbf16, #tpu.memory_space<vmem>>, vector<256x1728xbf16>
    %c0_1 = arith.constant 0 : index
    %c0_2 = arith.constant 0 : index
    %1 = vector.load %arg2[%c0_1, %c0_2] : memref<1728x256xbf16, #tpu.memory_space<vmem>>, vector<1728x256xbf16>
    %cst = arith.constant dense<0.000000e+00> : vector<256x256xf32>
    %2 = tpu.matmul %0, %1, %cst {dimension_numbers = #tpu.dot_dimension_numbers<[1], [0], [0], [1], [0, 0, 1, 1], [], []>} : vector<256x1728xbf16>, vector<1728x256xbf16>, vector<256x256xf32> -> vector<256x256xf32>
    %c0_3 = arith.constant 0 : index
    %c0_4 = arith.constant 0 : index
    %3 = vector.load %arg3[%c0_3, %c0_4] : memref<1x256xf32, #tpu.memory_space<vmem>>, vector<1x256xf32>
    %4 = vector.broadcast %3 : vector<1x256xf32> to vector<256x256xf32>
    %5 = arith.addf %2, %4 : vector<256x256xf32>
    %cst_5 = arith.constant 0.000000e+00 : f32
    %6 = vector.broadcast %cst_5 : f32 to vector<256x256xf32>
    %7 = arith.maximumf %5, %6 : vector<256x256xf32>
    %c0_6 = arith.constant 0 : index
    %c0_7 = arith.constant 0 : index
    %8 = vector.load %arg4[%c0_6, %c0_7] : memref<256x256xf32, #tpu.memory_space<vmem>>, vector<256x256xf32>
    tpu.vector_store %arg4[%c0_6, %c0_7], %7 {strides = array<i32>} : memref<256x256xf32, #tpu.memory_space<vmem>>, vector<256x256xf32>,
    return
  }
  func.func @transform_0(%arg0: i32) -> (i32, i32) {
    %c0_i32 = arith.constant 0 : i32
    %c0_i32_0 = arith.constant 0 : i32
    return %arg0, %c0_i32 : i32, i32
  }
  func.func @transform_1(%arg0: i32) -> (i32, i32) {
    %c0_i32 = arith.constant 0 : i32
    %c0_i32_0 = arith.constant 0 : i32
    %c0_i32_1 = arith.constant 0 : i32
    return %c0_i32, %c0_i32_0 : i32, i32
  }
  func.func @transform_2(%arg0: i32) -> (i32, i32) {
    %c0_i32 = arith.constant 0 : i32
    %c0_i32_0 = arith.constant 0 : i32
    %c0_i32_1 = arith.constant 0 : i32
    return %c0_i32, %c0_i32_0 : i32, i32
  }
  func.func @transform_3(%arg0: i32) -> (i32, i32) {
    %c0_i32 = arith.constant 0 : i32
    %c0_i32_0 = arith.constant 0 : i32
    return %arg0, %c0_i32 : i32, i32
  }
}

module attributes {stable_mosaic.version = 11 : i64} {
  func.func @_sta_tail_kernel(%arg0: i32, %arg1: memref<1x4x64x256xf32, #tpu.memory_space<vmem>>, %arg2: memref<128x128xf32, #tpu.memory_space<vmem>>, %arg3: memref<1x128xf32, #tpu.memory_space<vmem>>, %arg4: memref<128x128xf32, #tpu.memory_space<vmem>>, %arg5: memref<1x128xf32, #tpu.memory_space<vmem>>, %arg6: memref<1x4x64x128xf32, #tpu.memory_space<vmem>>) attributes {dimension_semantics = [#tpu.dimension_semantics<parallel>], iteration_bounds = array<i64: 2>, scalar_prefetch = 0 : i64, scratch_operands = 0 : i64, tpu.core_type = #tpu.core_type<tc>, window_params = [{transform_indices = @transform_0, window_bounds = array<i64: 1, 4, 64, 256>}, {pipeline_mode = #tpu.pipeline_mode<synchronous>, transform_indices = @transform_1, window_bounds = array<i64: 128, 128>}, {pipeline_mode = #tpu.pipeline_mode<synchronous>, transform_indices = @transform_2, window_bounds = array<i64: 1, 128>}, {pipeline_mode = #tpu.pipeline_mode<synchronous>, transform_indices = @transform_3, window_bounds = array<i64: 128, 128>}, {pipeline_mode = #tpu.pipeline_mode<synchronous>, transform_indices = @transform_4, window_bounds = array<i64: 1, 128>}, {transform_indices = @transform_5, window_bounds = array<i64: 1, 4, 64, 128>}]} {
    %c0 = arith.constant 0 : index
    %c0_0 = arith.constant 0 : index
    %c0_1 = arith.constant 0 : index
    %c0_2 = arith.constant 0 : index
    %0 = vector.load %arg1[%c0, %c0_0, %c0_1, %c0_2] : memref<1x4x64x256xf32, #tpu.memory_space<vmem>>, vector<1x4x64x256xf32>
    %1 = vector.shape_cast %0 : vector<1x4x64x256xf32> to vector<4x64x256xf32>
    %2 = vector.extract_strided_slice %1 {offsets = [0, 0, 0], sizes = [4, 64, 128], strides = [1, 1, 1]} : vector<4x64x256xf32> to vector<4x64x128xf32>
    %3 = vector.extract_strided_slice %1 {offsets = [0, 0, 128], sizes = [4, 64, 128], strides = [1, 1, 1]} : vector<4x64x256xf32> to vector<4x64x128xf32>
    %cst = arith.constant dense<0.000000e+00> : vector<4x128xf32>
    %4 = vector.multi_reduction <add>, %2, %cst [1] : vector<4x64x128xf32> to vector<4x128xf32>
    %cst_3 = arith.constant 6.400000e+01 : f32
    %5 = vector.broadcast %cst_3 : f32 to vector<4x128xf32>
    %6 = arith.divf %4, %5 : vector<4x128xf32>
    %c0_4 = arith.constant 0 : index
    %c0_5 = arith.constant 0 : index
    %7 = vector.load %arg2[%c0_4, %c0_5] : memref<128x128xf32, #tpu.memory_space<vmem>>, vector<128x128xf32>
    %c0_6 = arith.constant 0 : index
    %c0_7 = arith.constant 0 : index
    %8 = vector.load %arg3[%c0_6, %c0_7] : memref<1x128xf32, #tpu.memory_space<vmem>>, vector<1x128xf32>
    %cst_8 = arith.constant 0.000000e+00 : f32
    %9 = vector.broadcast %cst_8 : f32 to vector<4x128xf32>
    %10 = tpu.concatenate %6, %9 in 0 : vector<4x128xf32>, vector<4x128xf32> -> vector<8x128xf32>
    %cst_9 = arith.constant dense<0.000000e+00> : vector<8x128xf32>
    %11 = tpu.matmul %10, %7, %cst_9 {dimension_numbers = #tpu.dot_dimension_numbers<[1], [0], [0], [1], [0, 0, 1, 1], [], []>} : vector<8x128xf32>, vector<128x128xf32>, vector<8x128xf32> -> vector<8x128xf32>
    %12 = vector.broadcast %8 : vector<1x128xf32> to vector<8x128xf32>
    %13 = arith.addf %11, %12 : vector<8x128xf32>
    %14 = vector.extract_strided_slice %13 {offsets = [0, 0], sizes = [4, 128], strides = [1, 1]} : vector<8x128xf32> to vector<4x128xf32>
    %cst_10 = arith.constant dense<0.000000e+00> : vector<64x128xf32>
    %15 = vector.multi_reduction <add>, %3, %cst_10 [0] : vector<4x64x128xf32> to vector<64x128xf32>
    %cst_11 = arith.constant 4.000000e+00 : f32
    %16 = vector.broadcast %cst_11 : f32 to vector<64x128xf32>
    %17 = arith.divf %15, %16 : vector<64x128xf32>
    %c0_12 = arith.constant 0 : index
    %c0_13 = arith.constant 0 : index
    %18 = vector.load %arg4[%c0_12, %c0_13] : memref<128x128xf32, #tpu.memory_space<vmem>>, vector<128x128xf32>
    %c0_14 = arith.constant 0 : index
    %c0_15 = arith.constant 0 : index
    %19 = vector.load %arg5[%c0_14, %c0_15] : memref<1x128xf32, #tpu.memory_space<vmem>>, vector<1x128xf32>
    %cst_16 = arith.constant dense<0.000000e+00> : vector<64x128xf32>
    %20 = tpu.matmul %17, %18, %cst_16 {dimension_numbers = #tpu.dot_dimension_numbers<[1], [0], [0], [1], [0, 0, 1, 1], [], []>} : vector<64x128xf32>, vector<128x128xf32>, vector<64x128xf32> -> vector<64x128xf32>
    %21 = vector.broadcast %19 : vector<1x128xf32> to vector<64x128xf32>
    %22 = arith.addf %20, %21 : vector<64x128xf32>
    %cst_17 = arith.constant dense<0xFF800000> : vector<4xf32>
    %23 = vector.multi_reduction <maximumf>, %14, %cst_17 [1] : vector<4x128xf32> to vector<4xf32>
    %24 = vector.shape_cast %23 : vector<4xf32> to vector<4x1xf32>
    %25 = vector.broadcast %24 : vector<4x1xf32> to vector<4x128xf32>
    %26 = arith.subf %14, %25 : vector<4x128xf32>
    %27 = math.exp %26 : vector<4x128xf32>
    %cst_18 = arith.constant dense<0.000000e+00> : vector<4xf32>
    %28 = vector.multi_reduction <add>, %27, %cst_18 [1] : vector<4x128xf32> to vector<4xf32>
    %29 = vector.shape_cast %28 : vector<4xf32> to vector<4x1xf32>
    %30 = vector.broadcast %29 : vector<4x1xf32> to vector<4x128xf32>
    %31 = arith.divf %27, %30 : vector<4x128xf32>
    %cst_19 = arith.constant dense<0xFF800000> : vector<64xf32>
    %32 = vector.multi_reduction <maximumf>, %22, %cst_19 [1] : vector<64x128xf32> to vector<64xf32>
    %33 = vector.shape_cast %32 : vector<64xf32> to vector<64x1xf32>
    %34 = vector.broadcast %33 : vector<64x1xf32> to vector<64x128xf32>
    %35 = arith.subf %22, %34 : vector<64x128xf32>
    %36 = math.exp %35 : vector<64x128xf32>
    %cst_20 = arith.constant dense<0.000000e+00> : vector<64xf32>
    %37 = vector.multi_reduction <add>, %36, %cst_20 [1] : vector<64x128xf32> to vector<64xf32>
    %38 = vector.shape_cast %37 : vector<64xf32> to vector<64x1xf32>
    %39 = vector.broadcast %38 : vector<64x1xf32> to vector<64x128xf32>
    %40 = arith.divf %36, %39 : vector<64x128xf32>
    %41 = vector.shape_cast %31 : vector<4x128xf32> to vector<4x1x128xf32>
    %42 = vector.shape_cast %40 : vector<64x128xf32> to vector<1x64x128xf32>
    %43 = vector.broadcast %41 : vector<4x1x128xf32> to vector<4x64x128xf32>
    %44 = vector.broadcast %42 : vector<1x64x128xf32> to vector<4x64x128xf32>
    %45 = arith.mulf %43, %44 : vector<4x64x128xf32>
    %46 = arith.addf %3, %2 : vector<4x64x128xf32>
    %47 = arith.mulf %45, %46 : vector<4x64x128xf32>
    %c0_21 = arith.constant 0 : index
    %c0_22 = arith.constant 0 : index
    %c0_23 = arith.constant 0 : index
    %c0_24 = arith.constant 0 : index
    %48 = vector.load %arg6[%c0_21, %c0_22, %c0_23, %c0_24] : memref<1x4x64x128xf32, #tpu.memory_space<vmem>>, vector<1x4x64x128xf32>
    %49 = vector.shape_cast %48 : vector<1x4x64x128xf32> to vector<4x64x128xf32>
    %50 = vector.shape_cast %47 : vector<4x64x128xf32> to vector<1x4x64x128xf32>
    tpu.vector_store %arg6[%c0_21, %c0_22, %c0_23, %c0_24], %50 {strides = array<i32>} : memref<1x4x64x128xf32, #tpu.memory_space<vmem>>, vector<1x4x64x128xf32>,
    return
  }
  func.func @transform_0(%arg0: i32) -> (i32, i32, i32, i32) {
    %c0_i32 = arith.constant 0 : i32
    %c0_i32_0 = arith.constant 0 : i32
    %c0_i32_1 = arith.constant 0 : i32
    %c0_i32_2 = arith.constant 0 : i32
    return %arg0, %c0_i32, %c0_i32_0, %c0_i32_1 : i32, i32, i32, i32
  }
  func.func @transform_1(%arg0: i32) -> (i32, i32) {
    %c0_i32 = arith.constant 0 : i32
    %c0_i32_0 = arith.constant 0 : i32
    %c0_i32_1 = arith.constant 0 : i32
    return %c0_i32, %c0_i32_0 : i32, i32
  }
  func.func @transform_2(%arg0: i32) -> (i32, i32) {
    %c0_i32 = arith.constant 0 : i32
    %c0_i32_0 = arith.constant 0 : i32
    %c0_i32_1 = arith.constant 0 : i32
    return %c0_i32, %c0_i32_0 : i32, i32
  }
  func.func @transform_3(%arg0: i32) -> (i32, i32) {
    %c0_i32 = arith.constant 0 : i32
    %c0_i32_0 = arith.constant 0 : i32
    %c0_i32_1 = arith.constant 0 : i32
    return %c0_i32, %c0_i32_0 : i32, i32
  }
  func.func @transform_4(%arg0: i32) -> (i32, i32) {
    %c0_i32 = arith.constant 0 : i32
    %c0_i32_0 = arith.constant 0 : i32
    %c0_i32_1 = arith.constant 0 : i32
    return %c0_i32, %c0_i32_0 : i32, i32
  }
  func.func @transform_5(%arg0: i32) -> (i32, i32, i32, i32) {
    %c0_i32 = arith.constant 0 : i32
    %c0_i32_0 = arith.constant 0 : i32
    %c0_i32_1 = arith.constant 0 : i32
    %c0_i32_2 = arith.constant 0 : i32
    return %arg0, %c0_i32, %c0_i32_0, %c0_i32_1 : i32, i32, i32, i32
  }
}

module attributes {stable_mosaic.version = 11 : i64} {
  func.func @_head_kernel(%arg0: i32, %arg1: memref<1x4x64x128xf32, #tpu.memory_space<vmem>>, %arg2: memref<128x512xf32, #tpu.memory_space<vmem>>, %arg3: memref<1x512xf32, #tpu.memory_space<vmem>>, %arg4: memref<1x4x512xf32, #tpu.memory_space<vmem>>) attributes {dimension_semantics = [#tpu.dimension_semantics<parallel>], iteration_bounds = array<i64: 2>, scalar_prefetch = 0 : i64, scratch_operands = 0 : i64, tpu.core_type = #tpu.core_type<tc>, window_params = [{transform_indices = @transform_0, window_bounds = array<i64: 1, 4, 64, 128>}, {pipeline_mode = #tpu.pipeline_mode<synchronous>, transform_indices = @transform_1, window_bounds = array<i64: 128, 512>}, {pipeline_mode = #tpu.pipeline_mode<synchronous>, transform_indices = @transform_2, window_bounds = array<i64: 1, 512>}, {transform_indices = @transform_3, window_bounds = array<i64: 1, 4, 512>}]} {
    %c0 = arith.constant 0 : index
    %c0_0 = arith.constant 0 : index
    %c0_1 = arith.constant 0 : index
    %c0_2 = arith.constant 0 : index
    %0 = vector.load %arg1[%c0, %c0_0, %c0_1, %c0_2] : memref<1x4x64x128xf32, #tpu.memory_space<vmem>>, vector<1x4x64x128xf32>
    %1 = vector.shape_cast %0 : vector<1x4x64x128xf32> to vector<4x64x128xf32>
    %cst = arith.constant dense<0.000000e+00> : vector<4x128xf32>
    %2 = vector.multi_reduction <add>, %1, %cst [1] : vector<4x64x128xf32> to vector<4x128xf32>
    %cst_3 = arith.constant 6.400000e+01 : f32
    %3 = vector.broadcast %cst_3 : f32 to vector<4x128xf32>
    %4 = arith.divf %2, %3 : vector<4x128xf32>
    %c0_4 = arith.constant 0 : index
    %c0_5 = arith.constant 0 : index
    %5 = vector.load %arg2[%c0_4, %c0_5] : memref<128x512xf32, #tpu.memory_space<vmem>>, vector<128x512xf32>
    %c0_6 = arith.constant 0 : index
    %c0_7 = arith.constant 0 : index
    %6 = vector.load %arg3[%c0_6, %c0_7] : memref<1x512xf32, #tpu.memory_space<vmem>>, vector<1x512xf32>
    %cst_8 = arith.constant 0.000000e+00 : f32
    %7 = vector.broadcast %cst_8 : f32 to vector<4x128xf32>
    %8 = tpu.concatenate %4, %7 in 0 : vector<4x128xf32>, vector<4x128xf32> -> vector<8x128xf32>
    %cst_9 = arith.constant dense<0.000000e+00> : vector<8x512xf32>
    %9 = tpu.matmul %8, %5, %cst_9 {dimension_numbers = #tpu.dot_dimension_numbers<[1], [0], [0], [1], [0, 0, 1, 1], [], []>} : vector<8x128xf32>, vector<128x512xf32>, vector<8x512xf32> -> vector<8x512xf32>
    %10 = vector.broadcast %6 : vector<1x512xf32> to vector<8x512xf32>
    %11 = arith.addf %9, %10 : vector<8x512xf32>
    %12 = vector.extract_strided_slice %11 {offsets = [0, 0], sizes = [4, 512], strides = [1, 1]} : vector<8x512xf32> to vector<4x512xf32>
    %c0_10 = arith.constant 0 : index
    %c0_11 = arith.constant 0 : index
    %c0_12 = arith.constant 0 : index
    %13 = vector.load %arg4[%c0_10, %c0_11, %c0_12] : memref<1x4x512xf32, #tpu.memory_space<vmem>>, vector<1x4x512xf32>
    %14 = vector.shape_cast %13 : vector<1x4x512xf32> to vector<4x512xf32>
    %15 = vector.shape_cast %12 : vector<4x512xf32> to vector<1x4x512xf32>
    tpu.vector_store %arg4[%c0_10, %c0_11, %c0_12], %15 {strides = array<i32>} : memref<1x4x512xf32, #tpu.memory_space<vmem>>, vector<1x4x512xf32>,
    return
  }
  func.func @transform_0(%arg0: i32) -> (i32, i32, i32, i32) {
    %c0_i32 = arith.constant 0 : i32
    %c0_i32_0 = arith.constant 0 : i32
    %c0_i32_1 = arith.constant 0 : i32
    %c0_i32_2 = arith.constant 0 : i32
    return %arg0, %c0_i32, %c0_i32_0, %c0_i32_1 : i32, i32, i32, i32
  }
  func.func @transform_1(%arg0: i32) -> (i32, i32) {
    %c0_i32 = arith.constant 0 : i32
    %c0_i32_0 = arith.constant 0 : i32
    %c0_i32_1 = arith.constant 0 : i32
    return %c0_i32, %c0_i32_0 : i32, i32
  }
  func.func @transform_2(%arg0: i32) -> (i32, i32) {
    %c0_i32 = arith.constant 0 : i32
    %c0_i32_0 = arith.constant 0 : i32
    %c0_i32_1 = arith.constant 0 : i32
    return %c0_i32, %c0_i32_0 : i32, i32
  }
  func.func @transform_3(%arg0: i32) -> (i32, i32, i32) {
    %c0_i32 = arith.constant 0 : i32
    %c0_i32_0 = arith.constant 0 : i32
    %c0_i32_1 = arith.constant 0 : i32
    return %arg0, %c0_i32, %c0_i32_0 : i32, i32, i32
  }
}

</mosaic_0001>

<llo_original>
// kernel: emotion_net.6
$region0: #{emotion_net.6}
  #allocation0 [shape = 'u32[]', space=smem, size = 0x4, offset = 0x4, fixed_abs, tag = 'smem constant byte address 0x4 - core index']
  #allocation1 [shape = 'u32[144,128]{1,0:T(1,128)}', space=vmem, size = 0x12000, scoped, tag = 'internal scratch']
  %s0 = inlined_call_operand.vmem [shape: bf16[512,81], index: 0, kind: input, shape index: {}]
  %s1 = inlined_call_operand.vmem [shape: bf16[81,32], index: 1, kind: input, shape index: {}]
  %s2 = inlined_call_operand.vmem [shape: f32[1,32], index: 2, kind: input, shape index: {}]
  %s3 = inlined_call_operand.vmem [shape: f32[512,32], index: 3, kind: output, shape index: {}]
  %s4 = sld [smem:[#allocation0]]
  $region45: #{emotion_net.6} parent=0
    _
  %s6 = ssub.s32 1, %s4
  %s7 = scalar_select 0, %s6, %s4
  loop: start=0, step=1, limit=4
  $region2: #{emotion_net.6} parent=0 // loop_pre_header
    _
  $region3: #{emotion_net.6} parent=0 // loop_header
    %s9 = sphi 0, %s13
    %p10 = scmp.ge.s32.totalorder %s9, 4
    %s19 = sphi 0, %s21
    %s22 = sphi 0, %s19
    %s23 = sphi 0, %s22
    %s39 = sphi 0, %s23
    %s43 = sphi 0, %s43
    %s45 = sphi 0, %s43
    %s46 = sphi 0, %s45
    %s60 = sphi 0, %s46
    %s64 = sphi 0, %s64
    %s66 = sphi 0, %s64
    %s67 = sphi 0, %s66
    %s81 = sphi 0, %s67
    %s87 = sphi 0, %s89
    %s90 = sphi 0, %s87
    %s91 = sphi 0, %s90
    %s107 = sphi 0, %s91
  $region4: #{emotion_net.6} parent=0 // loop_header_branch
    %12 = sbr.rel (%p10) target = $region8
  $region5: #{emotion_net.6} parent=0 // loop_body
    %s14 = ssub.s32 %s9, 1
    %s15 = ssub.s32 %s9, 2
    %s16 = sadd.s32 %s9, 1
    %s17 = ssub.s32 %s9, %s16
    %p18 = scmp.eq.s32.totalorder %s17, 0
    %s20 = sadd.s32 %s19, 1
    %s21 = scalar_select %p18, %s19, %s20
    %p24 = pneg %p18
    %p25 = scmp.eq.s32.totalorder %s9, 1
    %p26 = por %p24, %p25
    %p27 = scmp.ne.s32.totalorder %s19, %s22
    %p28 = scmp.eq.s32.totalorder %s9, 0
    %p29 = por %p27, %p28
    %p30 = scmp.ne.s32.totalorder %s19, %s22
    %p31 = scmp.eq.s32.totalorder %s14, 1
    %p32 = por %p30, %p31
    %p33 = scmp.ne.s32.totalorder %s22, %s23
    %p34 = scmp.eq.s32.totalorder %s14, 0
    %p35 = por %p33, %p34
    %p36 = scmp.ne.s32.totalorder %s22, %s23
    %p37 = scmp.eq.s32.totalorder %s15, 1
    %p38 = por %p36, %p37
    %p40 = scmp.ne.s32.totalorder %s23, %s39
    %p41 = scmp.eq.s32.totalorder %s15, 0
    %p42 = por %p40, %p41
    %s44 = sadd.s32 %s43, 1
    %p47 = scmp.eq.s32.totalorder %s9, 1
    %p48 = scmp.ne.s32.totalorder %s43, %s45
    %p49 = scmp.eq.s32.totalorder %s9, 0
    %p50 = por %p48, %p49
    %p51 = scmp.ne.s32.totalorder %s43, %s45
    %p52 = scmp.eq.s32.totalorder %s14, 1
    %p53 = por %p51, %p52
    %p54 = scmp.ne.s32.totalorder %s45, %s46
    %p55 = scmp.eq.s32.totalorder %s14, 0
    %p56 = por %p54, %p55
    %p57 = scmp.ne.s32.totalorder %s45, %s46
    %p58 = scmp.eq.s32.totalorder %s15, 1
    %p59 = por %p57, %p58
    %p61 = scmp.ne.s32.totalorder %s46, %s60
    %p62 = scmp.eq.s32.totalorder %s15, 0
    %p63 = por %p61, %p62
    %s65 = sadd.s32 %s64, 1
    %p68 = scmp.eq.s32.totalorder %s9, 1
    %p69 = scmp.ne.s32.totalorder %s64, %s66
    %p70 = scmp.eq.s32.totalorder %s9, 0
    %p71 = por %p69, %p70
    %p72 = scmp.ne.s32.totalorder %s64, %s66
    %p73 = scmp.eq.s32.totalorder %s14, 1
    %p74 = por %p72, %p73
    %p75 = scmp.ne.s32.totalorder %s66, %s67
    %p76 = scmp.eq.s32.totalorder %s14, 0
    %p77 = por %p75, %p76
    %p78 = scmp.ne.s32.totalorder %s66, %s67
    %p79 = scmp.eq.s32.totalorder %s15, 1
    %p80 = por %p78, %p79
    %p82 = scmp.ne.s32.totalorder %s67, %s81
    %p83 = scmp.eq.s32.totalorder %s15, 0
    %p84 = por %p82, %p83
    %s85 = ssub.s32 %s9, %s16
    %p86 = scmp.eq.s32.totalorder %s85, 0
    %s88 = sadd.s32 %s87, 1
    %s89 = scalar_select %p86, %s87, %s88
    %p92 = pneg %p86
    %p93 = scmp.eq.s32.totalorder %s9, 1
    %p94 = por %p92, %p93
    %p95 = scmp.ne.s32.totalorder %s87, %s90
    %p96 = scmp.eq.s32.totalorder %s9, 0
    %p97 = por %p95, %p96
    %p98 = scmp.ne.s32.totalorder %s87, %s90
    %p99 = scmp.eq.s32.totalorder %s14, 1
    %p100 = por %p98, %p99
    %p101 = scmp.ne.s32.totalorder %s90, %s91
    %p102 = scmp.eq.s32.totalorder %s14, 0
    %p103 = por %p101, %p102
    %p104 = scmp.ne.s32.totalorder %s90, %s91
    %p105 = scmp.eq.s32.totalorder %s15, 1
    %p106 = por %p104, %p105
    %p108 = scmp.ne.s32.totalorder %s91, %s107
    %p109 = scmp.eq.s32.totalorder %s15, 0
    %p110 = por %p108, %p109
    %p111 = scmp.le.s32.totalorder 1, %s9
    %p112 = scmp.lt.s32.totalorder %s9, 3
    %p113 = pnand %p111, %p112
    %p114 = pneg %p113
    // Predicated region
    $region9: #{emotion_net.6} parent=5 // pred_check
      _
    $region10: #{emotion_net.6} parent=5 // pred_check_branch
      %116 = sbr.rel (%p113) target = $region12
    $region11: #{emotion_net.6} parent=5 // pred_region
      %s117 = ssub.s32 %s9, 1
      // Predicated region
      $region13: #{emotion_net.6} parent=11 // pred_check
        %p118 = pneg %p56
      $region14: #{emotion_net.6} parent=11 // pred_check_branch
        %120 = sbr.rel (%p118) target = $region16
      $region15: #{emotion_net.6} parent=11 // pred_region
        _
      $region16: #{emotion_net.6} parent=11 // pred_fallthru
        _
      // Predicated region
      $region17: #{emotion_net.6} parent=11 // pred_check
        %p121 = pneg %p77
      $region18: #{emotion_net.6} parent=11 // pred_check_branch
        %123 = sbr.rel (%p121) target = $region20
      $region19: #{emotion_net.6} parent=11 // pred_region
        _
      $region20: #{emotion_net.6} parent=11 // pred_fallthru
        _
    $region12: #{emotion_net.6} parent=5 // pred_fallthru
      _
    %p124 = scmp.lt.s32.totalorder %s9, 2
    // Predicated region
    $region21: #{emotion_net.6} parent=5 // pred_check
      %p125 = pneg %p124
    $region22: #{emotion_net.6} parent=5 // pred_check_branch
      %127 = sbr.rel (%p125) target = $region24
    $region23: #{emotion_net.6} parent=5 // pred_region
      // Predicated region
      $region25: #{emotion_net.6} parent=23 // pred_check
        %p128 = pneg %p29
      $region26: #{emotion_net.6} parent=23 // pred_check_branch
        %130 = sbr.rel (%p128) target = $region28
      $region27: #{emotion_net.6} parent=23 // pred_region
        %s131 = smul.u32 32, %s9
        %p132 = scmp.lt.s32.totalorder %s131, 63
        %s133 = scalar_select %p132, %s131, 63
        %s134 = smul.addr %s133, 4
        %s135 = scalar_lea.vmem %s0, %s134
        %s136 = smul.u32 32, %s9
      $region28: #{emotion_net.6} parent=23 // pred_fallthru
        _
    $region24: #{emotion_net.6} parent=5 // pred_fallthru
      _
    %p137 = scmp.le.s32.totalorder 1, %s9
    %p138 = scmp.lt.s32.totalorder %s9, 3
    %p139 = pnand %p137, %p138
    %p140 = pneg %p139
    // Predicated region
    $region29: #{emotion_net.6} parent=5 // pred_check
      _
    $region30: #{emotion_net.6} parent=5 // pred_check_branch
      %142 = sbr.rel (%p139) target = $region32
    $region31: #{emotion_net.6} parent=5 // pred_region
      %s143 = ssub.s32 %s9, 1
      %s144 = smul.u32 32, %s14
      %p145 = scmp.lt.s32.totalorder %s144, 63
      %s146 = scalar_select %p145, %s144, 63
      %s147 = smul.addr %s146, 4
      %s148 = scalar_lea.vmem %s0, %s147
      %p149 = pneg %p35
      %p150 = pneg %p32
      %p151 = pneg %p56
      %p152 = pneg %p53
      %p153 = pneg %p77
      %p154 = pneg %p74
      %p155 = pneg %p103
      %p156 = pneg %p100
      %s157 = smul.u32 32, %s14
      %p158 = scmp.lt.s32.totalorder %s157, 63
      %s159 = scalar_select %p158, %s157, 63
      %s160 = smul.addr %s159, 8
      %s161 = scalar_lea.vmem %s3, %s160
      %s162 = smul.u32 32, %s14
      %p163 = scmp.lt.s32.totalorder %s162, 63
      %s164 = scalar_select %p163, %s162, 63
      %s165 = smul.addr %s164, 4
      %s166 = scalar_lea.vmem %s0, %s165
      %s167 = smul.u32 32, %s14
      %s168 = smul.u32 32, %s14
      %p169 = scmp.lt.s32.totalorder %s168, 63
      %s170 = scalar_select %p169, %s168, 63
      %s171 = smul.addr %s170, 8
      %s172 = scalar_lea.vmem %s3, %s171
      %s173 = smul.u32 32, %s14
      %v175 = vld [vmem:[%s166] sm:$0xf]
      %v176 = vld [vmem:[%s166 + $0x4] sm:$0xf]
      %v177 = vld [vmem:[%s166 + $0x8] sm:$0xf]
      %v178 = vld [vmem:[%s166 + $0xc] sm:$0xf]
      %v179 = vld [vmem:[%s166 + $0x10] sm:$0xf]
      %v180 = vld [vmem:[%s166 + $0x14] sm:$0xf]
      %v181 = vld [vmem:[%s166 + $0x18] sm:$0xf]
      %v182 = vld [vmem:[%s166 + $0x1c] sm:$0xf]
      %v183 = vld [vmem:[%s166 + $0x20] sm:$0xf]
      %v184 = vld [vmem:[%s166 + $0x24] sm:$0xf]
      %v185 = vld [vmem:[%s166 + $0x28] sm:$0xf]
      %v186 = vld [vmem:[%s166 + $0x2c] sm:$0xf]
      %v187 = vld [vmem:[%s166 + $0x30] sm:$0xf]
      %v188 = vld [vmem:[%s166 + $0x34] sm:$0xf]
      %v189 = vld [vmem:[%s166 + $0x38] sm:$0xf]
      %v190 = vld [vmem:[%s166 + $0x3c] sm:$0xf]
      %v191 = vld [vmem:[%s166 + $0x40] sm:$0xf]
      %v192 = vld [vmem:[%s166 + $0x44] sm:$0xf]
      %v193 = vld [vmem:[%s166 + $0x48] sm:$0xf]
      %v194 = vld [vmem:[%s166 + $0x4c] sm:$0xf]
      %v195 = vld [vmem:[%s166 + $0x50] sm:$0xf]
      %v196 = vld [vmem:[%s166 + $0x54] sm:$0xf]
      %v197 = vld [vmem:[%s166 + $0x58] sm:$0xf]
      %v198 = vld [vmem:[%s166 + $0x5c] sm:$0xf]
      %v199 = vld [vmem:[%s166 + $0x60] sm:$0xf]
      %v200 = vld [vmem:[%s166 + $0x64] sm:$0xf]
      %v201 = vld [vmem:[%s166 + $0x68] sm:$0xf]
      %v202 = vld [vmem:[%s166 + $0x6c] sm:$0xf]
      %v203 = vld [vmem:[%s166 + $0x70] sm:$0xf]
      %v204 = vld [vmem:[%s166 + $0x74] sm:$0xf]
      %v205 = vld [vmem:[%s166 + $0x78] sm:$0xf]
      %v206 = vld [vmem:[%s166 + $0x7c] sm:$0xf]
      %v207 = vld [vmem:[%s1] sm:$0xf]
      %v208 = vld [vmem:[%s1 + $0x4] sm:$0xf]
      %v209 = vld [vmem:[%s1 + $0x8] sm:$0xf]
      %v210 = vld [vmem:[%s1 + $0xc] sm:$0xf]
      %v211 = vld [vmem:[%s1 + $0x10] sm:$0xf]
      %v212 = vld [vmem:[%s1 + $0x14] sm:$0xf]
      %v213 = vld [vmem:[%s1 + $0x18] sm:$0xf]
      %v214 = vld [vmem:[%s1 + $0x1c] sm:$0xf]
      %v215 = vld [vmem:[%s1 + $0x20] sm:$0xf]
      %v216 = vld [vmem:[%s1 + $0x24] sm:$0xf]
      %v217 = vld [vmem:[%s1 + $0x28] sm:$0x1]
      %v218 = vld [vmem:[%s2] sm:$0x1]
      %v220 = vlaneseq
      %v221 = vshrl.u32 %v220, 7
      %v222 = vsub.s32 0, %v221
      %v223 = vrot.slane %v218, %v222
      %v257 = vunpack.c.l.b16 %v175
      %v258 = vunpack.c.l.b16 %v176
      %v259 = vunpack.c.l.b16 %v177
      %v260 = vunpack.c.l.b16 %v178
      %v261 = vunpack.c.l.b16 %v179
      %v262 = vunpack.c.l.b16 %v180
      %v263 = vunpack.c.l.b16 %v181
      %v264 = vunpack.c.l.b16 %v182
      %v265 = vunpack.c.l.b16 %v183
      %v266 = vunpack.c.l.b16 %v184
      %v267 = vunpack.c.l.b16 %v185
      %v268 = vunpack.c.l.b16 %v186
      %v269 = vunpack.c.l.b16 %v187
      %v270 = vunpack.c.l.b16 %v188
      %v271 = vunpack.c.l.b16 %v189
      %v272 = vunpack.c.l.b16 %v190
      %v273 = vunpack.c.l.b16 %v191
      %v274 = vunpack.c.l.b16 %v192
      %v275 = vunpack.c.l.b16 %v193
      %v276 = vunpack.c.l.b16 %v194
      %v277 = vunpack.c.l.b16 %v195
      %v278 = vunpack.c.l.b16 %v196
      %v279 = vunpack.c.l.b16 %v197
      %v280 = vunpack.c.l.b16 %v198
      %v281 = vunpack.c.l.b16 %v199
      %v282 = vunpack.c.l.b16 %v200
      %v283 = vunpack.c.l.b16 %v201
      %v284 = vunpack.c.l.b16 %v202
      %v285 = vunpack.c.l.b16 %v203
      %v286 = vunpack.c.l.b16 %v204
      %v287 = vunpack.c.l.b16 %v205
      %v288 = vunpack.c.l.b16 %v206
      %v289 = vpack.c.b16 %v258, %v257
      %v290 = vpack.c.b16 %v260, %v259
      %v291 = vpack.c.b16 %v262, %v261
      %v292 = vpack.c.b16 %v264, %v263
      %v293 = vpack.c.b16 %v266, %v265
      %v294 = vpack.c.b16 %v268, %v267
      %v295 = vpack.c.b16 %v270, %v269
      %v296 = vpack.c.b16 %v272, %v271
      %v297 = vpack.c.b16 %v274, %v273
      %v298 = vpack.c.b16 %v276, %v275
      %v299 = vpack.c.b16 %v278, %v277
      %v300 = vpack.c.b16 %v280, %v279
      %v301 = vpack.c.b16 %v282, %v281
      %v302 = vpack.c.b16 %v284, %v283
      %v303 = vpack.c.b16 %v286, %v285
      %v304 = vpack.c.b16 %v288, %v287
      %v316 = vunpack.c.l.b16 %v207
      %v317 = vunpack.c.l.b16 %v208
      %v318 = vunpack.c.l.b16 %v209
      %v319 = vunpack.c.l.b16 %v210
      %v320 = vunpack.c.l.b16 %v211
      %v321 = vunpack.c.l.b16 %v212
      %v322 = vunpack.c.l.b16 %v213
      %v323 = vunpack.c.l.b16 %v214
      %v324 = vunpack.c.l.b16 %v215
      %v325 = vunpack.c.l.b16 %v216
      %v326 = vunpack.c.l.b16 %v217
      %v327 = vpack.c.b16 %v317, %v316
      %v328 = vpack.c.b16 %v319, %v318
      %v329 = vpack.c.b16 %v321, %v320
      %v330 = vpack.c.b16 %v323, %v322
      %v331 = vpack.c.b16 %v325, %v324
      %v332 = vpack.c.b16 %v326, %v326
      %vm338 = vcmask 662528
      %v340 = vsel %vm338, %v289, 0
      %v343 = vsel %vm338, %v290, 0
      %v346 = vsel %vm338, %v291, 0
      %v349 = vsel %vm338, %v292, 0
      %v352 = vsel %vm338, %v293, 0
      %v355 = vsel %vm338, %v294, 0
      %v358 = vsel %vm338, %v295, 0
      %v361 = vsel %vm338, %v296, 0
      %v364 = vsel %vm338, %v297, 0
      %v367 = vsel %vm338, %v298, 0
      %v370 = vsel %vm338, %v299, 0
      %v373 = vsel %vm338, %v300, 0
      %v376 = vsel %vm338, %v301, 0
      %v379 = vsel %vm338, %v302, 0
      %v382 = vsel %vm338, %v303, 0
      %v385 = vsel %vm338, %v304, 0
      %vm387 = vcmask 1040384
      %v388 = vsel 0, 4294967295, 65535
      %v389 = vsel %vm387, %v388, 0
      %v391 = vand.u32 %v332, %v389
      %393 = vmatprep.subr.bf16.mxu0 0
      %394 = vmatpush1.bf16.msra.mxu0 0
      %395 = vmatprep.subr.bf16.mxu0 0
      %396 = vmatpush1.bf16.msra.mxu0 0
      %397 = vmatprep.subr.bf16.mxu0 0
      %398 = vmatpush1.bf16.msra.mxu0 %v391
      %399 = vmatprep.subr.bf16.mxu0 0
      %400 = vmatpush1.bf16.msra.mxu0 %v331
      %401 = vmatprep.subr.bf16.mxu0 0
      %402 = vmatpush1.bf16.msra.mxu0 %v330
      %403 = vmatprep.subr.bf16.mxu0 0
      %404 = vmatpush1.bf16.msra.mxu0 %v329
      %405 = vmatprep.subr.bf16.mxu0 0
      %406 = vmatpush1.bf16.msra.mxu0 %v328
      %407 = vmatprep.subr.bf16.mxu0 0
      %408 = vmatpush1.bf16.msra.mxu0 %v327
      %409 = vmatprep.subr.bf16.mxu0 0
      %410 = vmatpush2.bf16.msra.mxu0 0
      %411 = vmatprep.subr.bf16.mxu0 0
      %412 = vmatpush2.bf16.msra.mxu0 0
      %413 = vmatprep.subr.bf16.mxu0 0
      %414 = vmatpush2.bf16.msra.mxu0 0
      %415 = vmatprep.subr.bf16.mxu0 0
      %416 = vmatpush2.bf16.msra.mxu0 0
      %417 = vmatprep.subr.bf16.mxu0 0
      %418 = vmatpush2.bf16.msra.mxu0 0
      %419 = vmatprep.subr.bf16.mxu0 0
      %420 = vmatpush2.bf16.msra.mxu0 0
      %421 = vmatprep.subr.bf16.mxu0 0
      %422 = vmatpush2.bf16.msra.mxu0 0
      %423 = vmatprep.subr.bf16.mxu0 0
      %424 = vmatpush2.bf16.msra.mxu0 0
      %425 = vmatprep.mubr.bf16.mxu0 0
      %426 = vmatmul.mubr.bf16.gmra.mxu0 %v340
      %v427 = vpop.f32.mrf.mxu0
      %v428 = vadd.f32 %v223, %v427
      %v429 = vpop.f32.mrf.mxu0
      %v430 = vpop.f32.mrf.mxu0
      %v431 = vadd.f32 %v223, %v430
      %v432 = vpop.f32.mrf.mxu0
      %433 = vmatprep.mubr.bf16.mxu0 0
      %434 = vmatmul.mubr.bf16.gmra.mxu0 %v343
      %v435 = vpop.f32.mrf.mxu0
      %v436 = vadd.f32 %v223, %v435
      %v437 = vpop.f32.mrf.mxu0
      %v438 = vpop.f32.mrf.mxu0
      %v439 = vadd.f32 %v223, %v438
      %v440 = vpop.f32.mrf.mxu0
      %441 = vmatprep.mubr.bf16.mxu0 0
      %442 = vmatmul.mubr.bf16.gmra.mxu0 %v346
      %v443 = vpop.f32.mrf.mxu0
      %v444 = vadd.f32 %v223, %v443
      %v445 = vpop.f32.mrf.mxu0
      %v446 = vpop.f32.mrf.mxu0
      %v447 = vadd.f32 %v223, %v446
      %v448 = vpop.f32.mrf.mxu0
      %449 = vmatprep.mubr.bf16.mxu0 0
      %450 = vmatmul.mubr.bf16.gmra.mxu0 %v349
      %v451 = vpop.f32.mrf.mxu0
      %v452 = vadd.f32 %v223, %v451
      %v453 = vpop.f32.mrf.mxu0
      %v454 = vpop.f32.mrf.mxu0
      %v455 = vadd.f32 %v223, %v454
      %v456 = vpop.f32.mrf.mxu0
      %457 = vmatprep.mubr.bf16.mxu0 0
      %458 = vmatmul.mubr.bf16.gmra.mxu0 %v352
      %v459 = vpop.f32.mrf.mxu0
      %v460 = vadd.f32 %v223, %v459
      %v461 = vpop.f32.mrf.mxu0
      %v462 = vpop.f32.mrf.mxu0
      %v463 = vadd.f32 %v223, %v462
      %v464 = vpop.f32.mrf.mxu0
      %465 = vmatprep.mubr.bf16.mxu0 0
      %466 = vmatmul.mubr.bf16.gmra.mxu0 %v355
      %v467 = vpop.f32.mrf.mxu0
      %v468 = vadd.f32 %v223, %v467
      %v469 = vpop.f32.mrf.mxu0
      %v470 = vpop.f32.mrf.mxu0
      %v471 = vadd.f32 %v223, %v470
      %v472 = vpop.f32.mrf.mxu0
      %473 = vmatprep.mubr.bf16.mxu0 0
      %474 = vmatmul.mubr.bf16.gmra.mxu0 %v358
      %v475 = vpop.f32.mrf.mxu0
      %v476 = vadd.f32 %v223, %v475
      %v477 = vpop.f32.mrf.mxu0
      %v478 = vpop.f32.mrf.mxu0
      %v479 = vadd.f32 %v223, %v478
      %v480 = vpop.f32.mrf.mxu0
      %481 = vmatprep.mubr.bf16.mxu0 0
      %482 = vmatmul.mubr.bf16.gmra.mxu0 %v361
      %v483 = vpop.f32.mrf.mxu0
      %v484 = vadd.f32 %v223, %v483
      %v485 = vpop.f32.mrf.mxu0
      %v486 = vpop.f32.mrf.mxu0
      %v487 = vadd.f32 %v223, %v486
      %v488 = vpop.f32.mrf.mxu0
      %489 = vmatprep.mubr.bf16.mxu0 0
      %490 = vmatmul.mubr.bf16.gmra.mxu0 %v364
      %v491 = vpop.f32.mrf.mxu0
      %v492 = vadd.f32 %v223, %v491
      %v493 = vpop.f32.mrf.mxu0
      %v494 = vpop.f32.mrf.mxu0
      %v495 = vadd.f32 %v223, %v494
      %v496 = vpop.f32.mrf.mxu0
      %497 = vmatprep.mubr.bf16.mxu0 0
      %498 = vmatmul.mubr.bf16.gmra.mxu0 %v367
      %v499 = vpop.f32.mrf.mxu0
      %v500 = vadd.f32 %v223, %v499
      %v501 = vpop.f32.mrf.mxu0
      %v502 = vpop.f32.mrf.mxu0
      %v503 = vadd.f32 %v223, %v502
      %v504 = vpop.f32.mrf.mxu0
      %505 = vmatprep.mubr.bf16.mxu0 0
      %506 = vmatmul.mubr.bf16.gmra.mxu0 %v370
      %v507 = vpop.f32.mrf.mxu0
      %v508 = vadd.f32 %v223, %v507
      %v509 = vpop.f32.mrf.mxu0
      %v510 = vpop.f32.mrf.mxu0
      %v511 = vadd.f32 %v223, %v510
      %v512 = vpop.f32.mrf.mxu0
      %513 = vmatprep.mubr.bf16.mxu0 0
      %514 = vmatmul.mubr.bf16.gmra.mxu0 %v373
      %v515 = vpop.f32.mrf.mxu0
      %v516 = vadd.f32 %v223, %v515
      %v517 = vpop.f32.mrf.mxu0
      %v518 = vpop.f32.mrf.mxu0
      %v519 = vadd.f32 %v223, %v518
      %v520 = vpop.f32.mrf.mxu0
      %521 = vmatprep.mubr.bf16.mxu0 0
      %522 = vmatmul.mubr.bf16.gmra.mxu0 %v376
      %v523 = vpop.f32.mrf.mxu0
      %v524 = vadd.f32 %v223, %v523
      %v525 = vpop.f32.mrf.mxu0
      %v526 = vpop.f32.mrf.mxu0
      %v527 = vadd.f32 %v223, %v526
      %v528 = vpop.f32.mrf.mxu0
      %529 = vmatprep.mubr.bf16.mxu0 0
      %530 = vmatmul.mubr.bf16.gmra.mxu0 %v379
      %v531 = vpop.f32.mrf.mxu0
      %v532 = vadd.f32 %v223, %v531
      %v533 = vpop.f32.mrf.mxu0
      %v534 = vpop.f32.mrf.mxu0
      %v535 = vadd.f32 %v223, %v534
      %v536 = vpop.f32.mrf.mxu0
      %537 = vmatprep.mubr.bf16.mxu0 0
      %538 = vmatmul.mubr.bf16.gmra.mxu0 %v382
      %v539 = vpop.f32.mrf.mxu0
      %v540 = vadd.f32 %v223, %v539
      %v541 = vpop.f32.mrf.mxu0
      %v542 = vpop.f32.mrf.mxu0
      %v543 = vadd.f32 %v223, %v542
      %v544 = vpop.f32.mrf.mxu0
      %545 = vmatprep.mubr.bf16.mxu0 0
      %546 = vmatmul.mubr.bf16.gmra.mxu0 %v385
      %v547 = vpop.f32.mrf.mxu0
      %v548 = vadd.f32 %v223, %v547
      %v549 = vpop.f32.mrf.mxu0
      %v550 = vpop.f32.mrf.mxu0
      %v551 = vadd.f32 %v223, %v550
      %v552 = vpop.f32.mrf.mxu0
      %553 = vdwg.mxu0
      %vm554 = vcmask 261120
      %555 = vst.msk [vmem:[%s172] sm:$0xff] %vm554, %v428
      %556 = vst.msk [vmem:[%s172 + $0x8] sm:$0xff] %vm554, %v431
      %557 = vst.msk [vmem:[%s172 + $0x10] sm:$0xff] %vm554, %v436
      %558 = vst.msk [vmem:[%s172 + $0x18] sm:$0xff] %vm554, %v439
      %559 = vst.msk [vmem:[%s172 + $0x20] sm:$0xff] %vm554, %v444
      %560 = vst.msk [vmem:[%s172 + $0x28] sm:$0xff] %vm554, %v447
      %561 = vst.msk [vmem:[%s172 + $0x30] sm:$0xff] %vm554, %v452
      %562 = vst.msk [vmem:[%s172 + $0x38] sm:$0xff] %vm554, %v455
      %563 = vst.msk [vmem:[%s172 + $0x40] sm:$0xff] %vm554, %v460
      %564 = vst.msk [vmem:[%s172 + $0x48] sm:$0xff] %vm554, %v463
      %565 = vst.msk [vmem:[%s172 + $0x50] sm:$0xff] %vm554, %v468
      %566 = vst.msk [vmem:[%s172 + $0x58] sm:$0xff] %vm554, %v471
      %567 = vst.msk [vmem:[%s172 + $0x60] sm:$0xff] %vm554, %v476
      %568 = vst.msk [vmem:[%s172 + $0x68] sm:$0xff] %vm554, %v479
      %569 = vst.msk [vmem:[%s172 + $0x70] sm:$0xff] %vm554, %v484
      %570 = vst.msk [vmem:[%s172 + $0x78] sm:$0xff] %vm554, %v487
      %571 = vst.msk [vmem:[%s172 + $0x80] sm:$0xff] %vm554, %v492
      %572 = vst.msk [vmem:[%s172 + $0x88] sm:$0xff] %vm554, %v495
      %573 = vst.msk [vmem:[%s172 + $0x90] sm:$0xff] %vm554, %v500
      %574 = vst.msk [vmem:[%s172 + $0x98] sm:$0xff] %vm554, %v503
      %575 = vst.msk [vmem:[%s172 + $0xa0] sm:$0xff] %vm554, %v508
      %576 = vst.msk [vmem:[%s172 + $0xa8] sm:$0xff] %vm554, %v511
      %577 = vst.msk [vmem:[%s172 + $0xb0] sm:$0xff] %vm554, %v516
      %578 = vst.msk [vmem:[%s172 + $0xb8] sm:$0xff] %vm554, %v519
      %579 = vst.msk [vmem:[%s172 + $0xc0] sm:$0xff] %vm554, %v524
      %580 = vst.msk [vmem:[%s172 + $0xc8] sm:$0xff] %vm554, %v527
      %581 = vst.msk [vmem:[%s172 + $0xd0] sm:$0xff] %vm554, %v532
      %582 = vst.msk [vmem:[%s172 + $0xd8] sm:$0xff] %vm554, %v535
      %583 = vst.msk [vmem:[%s172 + $0xe0] sm:$0xff] %vm554, %v540
      %584 = vst.msk [vmem:[%s172 + $0xe8] sm:$0xff] %vm554, %v543
      %585 = vst.msk [vmem:[%s172 + $0xf0] sm:$0xff] %vm554, %v548
      %586 = vst.msk [vmem:[%s172 + $0xf8] sm:$0xff] %vm554, %v551
      %s587 = smul.u32 32, %s14
      %p588 = scmp.lt.s32.totalorder %s587, 63
      %s589 = scalar_select %p588, %s587, 63
      %s590 = smul.addr %s589, 8
      %s591 = scalar_lea.vmem %s3, %s590
      // Predicated region
      $region33: #{emotion_net.6} parent=31 // pred_check
        %p592 = pneg %p100
      $region34: #{emotion_net.6} parent=31 // pred_check_branch
        %594 = sbr.rel (%p592) target = $region36
      $region35: #{emotion_net.6} parent=31 // pred_region
        %s595 = smul.u32 32, %s14
      $region36: #{emotion_net.6} parent=31 // pred_fallthru
        _
    $region32: #{emotion_net.6} parent=5 // pred_fallthru
      _
    %p596 = scmp.le.s32.totalorder 2, %s9
    // Predicated region
    $region37: #{emotion_net.6} parent=5 // pred_check
      %p597 = pneg %p596
    $region38: #{emotion_net.6} parent=5 // pred_check_branch
      %599 = sbr.rel (%p597) target = $region40
    $region39: #{emotion_net.6} parent=5 // pred_region
      %s600 = ssub.s32 %s9, 2
      // Predicated region
      $region41: #{emotion_net.6} parent=39 // pred_check
        %p601 = pneg %p106
      $region42: #{emotion_net.6} parent=39 // pred_check_branch
        %603 = sbr.rel (%p601) target = $region44
      $region43: #{emotion_net.6} parent=39 // pred_region
        %s604 = smul.u32 32, %s15
        %p605 = scmp.lt.s32.totalorder %s604, 63
        %s606 = scalar_select %p605, %s604, 63
        %s607 = smul.addr %s606, 8
        %s608 = scalar_lea.vmem %s3, %s607
      $region44: #{emotion_net.6} parent=39 // pred_fallthru
        _
    $region40: #{emotion_net.6} parent=5 // pred_fallthru
      _
  $region6: #{emotion_net.6} parent=0 // loop_footer
    %s13 = sadd.s32 1, %s9
  $region7: #{emotion_net.6} parent=0 // loop_footer_branch
    %8 = sbr.rel target = $region3
  $region8: #{emotion_net.6} parent=0 // loop_exit
    _

// kernel: emotion_net.7
$region0: #{emotion_net.7}
  #allocation0 [shape = 'u32[]', space=smem, size = 0x4, offset = 0x4, fixed_abs, tag = 'smem constant byte address 0x4 - core index']
  #allocation1 [shape = 'u32[144,128]{1,0:T(1,128)}', space=vmem, size = 0x12000, scoped, tag = 'internal scratch']
  %s0 = inlined_call_operand.vmem [shape: bf16[512,864], index: 0, kind: input, shape index: {}]
  %s1 = inlined_call_operand.vmem [shape: bf16[864,128], index: 1, kind: input, shape index: {}]
  %s2 = inlined_call_operand.vmem [shape: f32[1,128], index: 2, kind: input, shape index: {}]
  %s3 = inlined_call_operand.vmem [shape: f32[512,128], index: 3, kind: output, shape index: {}]
  %s4 = sld [smem:[#allocation0]]
  $region45: #{emotion_net.7} parent=0
    _
  %s6 = ssub.s32 1, %s4
  %s7 = scalar_select 0, %s6, %s4
  loop: start=0, step=1, limit=4
  $region2: #{emotion_net.7} parent=0 // loop_pre_header
    _
  $region3: #{emotion_net.7} parent=0 // loop_header
    %s9 = sphi 0, %s13
    %p10 = scmp.ge.s32.totalorder %s9, 4
    %s19 = sphi 0, %s21
    %s22 = sphi 0, %s19
    %s23 = sphi 0, %s22
    %s39 = sphi 0, %s23
    %s43 = sphi 0, %s43
    %s45 = sphi 0, %s43
    %s46 = sphi 0, %s45
    %s60 = sphi 0, %s46
    %s64 = sphi 0, %s64
    %s66 = sphi 0, %s64
    %s67 = sphi 0, %s66
    %s81 = sphi 0, %s67
    %s87 = sphi 0, %s89
    %s90 = sphi 0, %s87
    %s91 = sphi 0, %s90
    %s107 = sphi 0, %s91
  $region4: #{emotion_net.7} parent=0 // loop_header_branch
    %12 = sbr.rel (%p10) target = $region8
  $region5: #{emotion_net.7} parent=0 // loop_body
    %s14 = ssub.s32 %s9, 1
    %s15 = ssub.s32 %s9, 2
    %s16 = sadd.s32 %s9, 1
    %s17 = ssub.s32 %s9, %s16
    %p18 = scmp.eq.s32.totalorder %s17, 0
    %s20 = sadd.s32 %s19, 1
    %s21 = scalar_select %p18, %s19, %s20
    %p24 = pneg %p18
    %p25 = scmp.eq.s32.totalorder %s9, 1
    %p26 = por %p24, %p25
    %p27 = scmp.ne.s32.totalorder %s19, %s22
    %p28 = scmp.eq.s32.totalorder %s9, 0
    %p29 = por %p27, %p28
    %p30 = scmp.ne.s32.totalorder %s19, %s22
    %p31 = scmp.eq.s32.totalorder %s14, 1
    %p32 = por %p30, %p31
    %p33 = scmp.ne.s32.totalorder %s22, %s23
    %p34 = scmp.eq.s32.totalorder %s14, 0
    %p35 = por %p33, %p34
    %p36 = scmp.ne.s32.totalorder %s22, %s23
    %p37 = scmp.eq.s32.totalorder %s15, 1
    %p38 = por %p36, %p37
    %p40 = scmp.ne.s32.totalorder %s23, %s39
    %p41 = scmp.eq.s32.totalorder %s15, 0
    %p42 = por %p40, %p41
    %s44 = sadd.s32 %s43, 1
    %p47 = scmp.eq.s32.totalorder %s9, 1
    %p48 = scmp.ne.s32.totalorder %s43, %s45
    %p49 = scmp.eq.s32.totalorder %s9, 0
    %p50 = por %p48, %p49
    %p51 = scmp.ne.s32.totalorder %s43, %s45
    %p52 = scmp.eq.s32.totalorder %s14, 1
    %p53 = por %p51, %p52
    %p54 = scmp.ne.s32.totalorder %s45, %s46
    %p55 = scmp.eq.s32.totalorder %s14, 0
    %p56 = por %p54, %p55
    %p57 = scmp.ne.s32.totalorder %s45, %s46
    %p58 = scmp.eq.s32.totalorder %s15, 1
    %p59 = por %p57, %p58
    %p61 = scmp.ne.s32.totalorder %s46, %s60
    %p62 = scmp.eq.s32.totalorder %s15, 0
    %p63 = por %p61, %p62
    %s65 = sadd.s32 %s64, 1
    %p68 = scmp.eq.s32.totalorder %s9, 1
    %p69 = scmp.ne.s32.totalorder %s64, %s66
    %p70 = scmp.eq.s32.totalorder %s9, 0
    %p71 = por %p69, %p70
    %p72 = scmp.ne.s32.totalorder %s64, %s66
    %p73 = scmp.eq.s32.totalorder %s14, 1
    %p74 = por %p72, %p73
    %p75 = scmp.ne.s32.totalorder %s66, %s67
    %p76 = scmp.eq.s32.totalorder %s14, 0
    %p77 = por %p75, %p76
    %p78 = scmp.ne.s32.totalorder %s66, %s67
    %p79 = scmp.eq.s32.totalorder %s15, 1
    %p80 = por %p78, %p79
    %p82 = scmp.ne.s32.totalorder %s67, %s81
    %p83 = scmp.eq.s32.totalorder %s15, 0
    %p84 = por %p82, %p83
    %s85 = ssub.s32 %s9, %s16
    %p86 = scmp.eq.s32.totalorder %s85, 0
    %s88 = sadd.s32 %s87, 1
    %s89 = scalar_select %p86, %s87, %s88
    %p92 = pneg %p86
    %p93 = scmp.eq.s32.totalorder %s9, 1
    %p94 = por %p92, %p93
    %p95 = scmp.ne.s32.totalorder %s87, %s90
    %p96 = scmp.eq.s32.totalorder %s9, 0
    %p97 = por %p95, %p96
    %p98 = scmp.ne.s32.totalorder %s87, %s90
    %p99 = scmp.eq.s32.totalorder %s14, 1
    %p100 = por %p98, %p99
    %p101 = scmp.ne.s32.totalorder %s90, %s91
    %p102 = scmp.eq.s32.totalorder %s14, 0
    %p103 = por %p101, %p102
    %p104 = scmp.ne.s32.totalorder %s90, %s91
    %p105 = scmp.eq.s32.totalorder %s15, 1
    %p106 = por %p104, %p105
    %p108 = scmp.ne.s32.totalorder %s91, %s107
    %p109 = scmp.eq.s32.totalorder %s15, 0
    %p110 = por %p108, %p109
    %p111 = scmp.le.s32.totalorder 1, %s9
    %p112 = scmp.lt.s32.totalorder %s9, 3
    %p113 = pnand %p111, %p112
    %p114 = pneg %p113
    // Predicated region
    $region9: #{emotion_net.7} parent=5 // pred_check
      _
    $region10: #{emotion_net.7} parent=5 // pred_check_branch
      %116 = sbr.rel (%p113) target = $region12
    $region11: #{emotion_net.7} parent=5 // pred_region
      %s117 = ssub.s32 %s9, 1
      // Predicated region
      $region13: #{emotion_net.7} parent=11 // pred_check
        %p118 = pneg %p56
      $region14: #{emotion_net.7} parent=11 // pred_check_branch
        %120 = sbr.rel (%p118) target = $region16
      $region15: #{emotion_net.7} parent=11 // pred_region
        _
      $region16: #{emotion_net.7} parent=11 // pred_fallthru
        _
      // Predicated region
      $region17: #{emotion_net.7} parent=11 // pred_check
        %p121 = pneg %p77
      $region18: #{emotion_net.7} parent=11 // pred_check_branch
        %123 = sbr.rel (%p121) target = $region20
      $region19: #{emotion_net.7} parent=11 // pred_region
        _
      $region20: #{emotion_net.7} parent=11 // pred_fallthru
        _
    $region12: #{emotion_net.7} parent=5 // pred_fallthru
      _
    %p124 = scmp.lt.s32.totalorder %s9, 2
    // Predicated region
    $region21: #{emotion_net.7} parent=5 // pred_check
      %p125 = pneg %p124
    $region22: #{emotion_net.7} parent=5 // pred_check_branch
      %127 = sbr.rel (%p125) target = $region24
    $region23: #{emotion_net.7} parent=5 // pred_region
      // Predicated region
      $region25: #{emotion_net.7} parent=23 // pred_check
        %p128 = pneg %p29
      $region26: #{emotion_net.7} parent=23 // pred_check_branch
        %130 = sbr.rel (%p128) target = $region28
      $region27: #{emotion_net.7} parent=23 // pred_region
        %s131 = smul.u32 32, %s9
        %p132 = scmp.lt.s32.totalorder %s131, 63
        %s133 = scalar_select %p132, %s131, 63
        %s134 = smul.addr %s133, 7
        %s135 = smul.addr %s134, 4
        %s136 = scalar_lea.vmem %s0, %s135
        %s137 = smul.u32 32, %s9
      $region28: #{emotion_net.7} parent=23 // pred_fallthru
        _
    $region24: #{emotion_net.7} parent=5 // pred_fallthru
      _
    %p138 = scmp.le.s32.totalorder 1, %s9
    %p139 = scmp.lt.s32.totalorder %s9, 3
    %p140 = pnand %p138, %p139
    %p141 = pneg %p140
    // Predicated region
    $region29: #{emotion_net.7} parent=5 // pred_check
      _
    $region30: #{emotion_net.7} parent=5 // pred_check_branch
      %143 = sbr.rel (%p140) target = $region32
    $region31: #{emotion_net.7} parent=5 // pred_region
      %s144 = ssub.s32 %s9, 1
      %s145 = smul.u32 32, %s14
      %p146 = scmp.lt.s32.totalorder %s145, 63
      %s147 = scalar_select %p146, %s145, 63
      %s148 = smul.addr %s147, 7
      %s149 = smul.addr %s148, 4
      %s150 = scalar_lea.vmem %s0, %s149
      %p151 = pneg %p35
      %p152 = pneg %p32
      %p153 = pneg %p56
      %p154 = pneg %p53
      %p155 = pneg %p77
      %p156 = pneg %p74
      %p157 = pneg %p103
      %p158 = pneg %p100
      %s159 = smul.u32 32, %s14
      %p160 = scmp.lt.s32.totalorder %s159, 63
      %s161 = scalar_select %p160, %s159, 63
      %s162 = smul.addr %s161, 8
      %s163 = scalar_lea.vmem %s3, %s162
      %s164 = smul.u32 32, %s14
      %p165 = scmp.lt.s32.totalorder %s164, 63
      %s166 = scalar_select %p165, %s164, 63
      %s167 = smul.addr %s166, 7
      %s168 = smul.addr %s167, 4
      %s169 = scalar_lea.vmem %s0, %s168
      %s170 = smul.u32 32, %s14
      %s171 = smul.u32 32, %s14
      %p172 = scmp.lt.s32.totalorder %s171, 63
      %s173 = scalar_select %p172, %s171, 63
      %s174 = smul.addr %s173, 8
      %s175 = scalar_lea.vmem %s3, %s174
      %s176 = smul.u32 32, %s14
      %v178 = vld [vmem:[%s169] sm:$0xff]
      %v179 = vld [vmem:[%s169 + $0x8] sm:$0xff]
      %v180 = vld [vmem:[%s169 + $0x10] sm:$0xff]
      %v181 = vld [vmem:[%s169 + $0x18] sm:$0xf]
      %v182 = vld [vmem:[%s169 + $0x1c] sm:$0xff]
      %v183 = vld [vmem:[%s169 + $0x24] sm:$0xff]
      %v184 = vld [vmem:[%s169 + $0x2c] sm:$0xff]
      %v185 = vld [vmem:[%s169 + $0x34] sm:$0xf]
      %v186 = vld [vmem:[%s169 + $0x38] sm:$0xff]
      %v187 = vld [vmem:[%s169 + $0x40] sm:$0xff]
      %v188 = vld [vmem:[%s169 + $0x48] sm:$0xff]
      %v189 = vld [vmem:[%s169 + $0x50] sm:$0xf]
      %v190 = vld [vmem:[%s169 + $0x54] sm:$0xff]
      %v191 = vld [vmem:[%s169 + $0x5c] sm:$0xff]
      %v192 = vld [vmem:[%s169 + $0x64] sm:$0xff]
      %v193 = vld [vmem:[%s169 + $0x6c] sm:$0xf]
      %v194 = vld [vmem:[%s169 + $0x70] sm:$0xff]
      %v195 = vld [vmem:[%s169 + $0x78] sm:$0xff]
      %v196 = vld [vmem:[%s169 + $0x80] sm:$0xff]
      %v197 = vld [vmem:[%s169 + $0x88] sm:$0xf]
      %v198 = vld [vmem:[%s169 + $0x8c] sm:$0xff]
      %v199 = vld [vmem:[%s169 + $0x94] sm:$0xff]
      %v200 = vld [vmem:[%s169 + $0x9c] sm:$0xff]
      %v201 = vld [vmem:[%s169 + $0xa4] sm:$0xf]
      %v202 = vld [vmem:[%s169 + $0xa8] sm:$0xff]
      %v203 = vld [vmem:[%s169 + $0xb0] sm:$0xff]
      %v204 = vld [vmem:[%s169 + $0xb8] sm:$0xff]
      %v205 = vld [vmem:[%s169 + $0xc0] sm:$0xf]
      %v206 = vld [vmem:[%s169 + $0xc4] sm:$0xff]
      %v207 = vld [vmem:[%s169 + $0xcc] sm:$0xff]
      %v208 = vld [vmem:[%s169 + $0xd4] sm:$0xff]
      %v209 = vld [vmem:[%s169 + $0xdc] sm:$0xf]
      %v210 = vld [vmem:[%s169 + $0xe0] sm:$0xff]
      %v211 = vld [vmem:[%s169 + $0xe8] sm:$0xff]
      %v212 = vld [vmem:[%s169 + $0xf0] sm:$0xff]
      %v213 = vld [vmem:[%s169 + $0xf8] sm:$0xf]
      %v214 = vld [vmem:[%s169 + $0xfc] sm:$0xff]
      %v215 = vld [vmem:[%s169 + $0x104] sm:$0xff]
      %v216 = vld [vmem:[%s169 + $0x10c] sm:$0xff]
      %v217 = vld [vmem:[%s169 + $0x114] sm:$0xf]
      %v218 = vld [vmem:[%s169 + $0x118] sm:$0xff]
      %v219 = vld [vmem:[%s169 + $0x120] sm:$0xff]
      %v220 = vld [vmem:[%s169 + $0x128] sm:$0xff]
      %v221 = vld [vmem:[%s169 + $0x130] sm:$0xf]
      %v222 = vld [vmem:[%s169 + $0x134] sm:$0xff]
      %v223 = vld [vmem:[%s169 + $0x13c] sm:$0xff]
      %v224 = vld [vmem:[%s169 + $0x144] sm:$0xff]
      %v225 = vld [vmem:[%s169 + $0x14c] sm:$0xf]
      %v226 = vld [vmem:[%s169 + $0x150] sm:$0xff]
      %v227 = vld [vmem:[%s169 + $0x158] sm:$0xff]
      %v228 = vld [vmem:[%s169 + $0x160] sm:$0xff]
      %v229 = vld [vmem:[%s169 + $0x168] sm:$0xf]
      %v230 = vld [vmem:[%s169 + $0x16c] sm:$0xff]
      %v231 = vld [vmem:[%s169 + $0x174] sm:$0xff]
      %v232 = vld [vmem:[%s169 + $0x17c] sm:$0xff]
      %v233 = vld [vmem:[%s169 + $0x184] sm:$0xf]
      %v234 = vld [vmem:[%s169 + $0x188] sm:$0xff]
      %v235 = vld [vmem:[%s169 + $0x190] sm:$0xff]
      %v236 = vld [vmem:[%s169 + $0x198] sm:$0xff]
      %v237 = vld [vmem:[%s169 + $0x1a0] sm:$0xf]
      %v238 = vld [vmem:[%s169 + $0x1a4] sm:$0xff]
      %v239 = vld [vmem:[%s169 + $0x1ac] sm:$0xff]
      %v240 = vld [vmem:[%s169 + $0x1b4] sm:$0xff]
      %v241 = vld [vmem:[%s169 + $0x1bc] sm:$0xf]
      %v242 = vld [vmem:[%s169 + $0x1c0] sm:$0xff]
      %v243 = vld [vmem:[%s169 + $0x1c8] sm:$0xff]
      %v244 = vld [vmem:[%s169 + $0x1d0] sm:$0xff]
      %v245 = vld [vmem:[%s169 + $0x1d8] sm:$0xf]
      %v246 = vld [vmem:[%s169 + $0x1dc] sm:$0xff]
      %v247 = vld [vmem:[%s169 + $0x1e4] sm:$0xff]
      %v248 = vld [vmem:[%s169 + $0x1ec] sm:$0xff]
      %v249 = vld [vmem:[%s169 + $0x1f4] sm:$0xf]
      %v250 = vld [vmem:[%s169 + $0x1f8] sm:$0xff]
      %v251 = vld [vmem:[%s169 + $0x200] sm:$0xff]
      %v252 = vld [vmem:[%s169 + $0x208] sm:$0xff]
      %v253 = vld [vmem:[%s169 + $0x210] sm:$0xf]
      %v254 = vld [vmem:[%s169 + $0x214] sm:$0xff]
      %v255 = vld [vmem:[%s169 + $0x21c] sm:$0xff]
      %v256 = vld [vmem:[%s169 + $0x224] sm:$0xff]
      %v257 = vld [vmem:[%s169 + $0x22c] sm:$0xf]
      %v258 = vld [vmem:[%s169 + $0x230] sm:$0xff]
      %v259 = vld [vmem:[%s169 + $0x238] sm:$0xff]
      %v260 = vld [vmem:[%s169 + $0x240] sm:$0xff]
      %v261 = vld [vmem:[%s169 + $0x248] sm:$0xf]
      %v262 = vld [vmem:[%s169 + $0x24c] sm:$0xff]
      %v263 = vld [vmem:[%s169 + $0x254] sm:$0xff]
      %v264 = vld [vmem:[%s169 + $0x25c] sm:$0xff]
      %v265 = vld [vmem:[%s169 + $0x264] sm:$0xf]
      %v266 = vld [vmem:[%s169 + $0x268] sm:$0xff]
      %v267 = vld [vmem:[%s169 + $0x270] sm:$0xff]
      %v268 = vld [vmem:[%s169 + $0x278] sm:$0xff]
      %v269 = vld [vmem:[%s169 + $0x280] sm:$0xf]
      %v270 = vld [vmem:[%s169 + $0x284] sm:$0xff]
      %v271 = vld [vmem:[%s169 + $0x28c] sm:$0xff]
      %v272 = vld [vmem:[%s169 + $0x294] sm:$0xff]
      %v273 = vld [vmem:[%s169 + $0x29c] sm:$0xf]
      %v274 = vld [vmem:[%s169 + $0x2a0] sm:$0xff]
      %v275 = vld [vmem:[%s169 + $0x2a8] sm:$0xff]
      %v276 = vld [vmem:[%s169 + $0x2b0] sm:$0xff]
      %v277 = vld [vmem:[%s169 + $0x2b8] sm:$0xf]
      %v278 = vld [vmem:[%s169 + $0x2bc] sm:$0xff]
      %v279 = vld [vmem:[%s169 + $0x2c4] sm:$0xff]
      %v280 = vld [vmem:[%s169 + $0x2cc] sm:$0xff]
      %v281 = vld [vmem:[%s169 + $0x2d4] sm:$0xf]
      %v282 = vld [vmem:[%s169 + $0x2d8] sm:$0xff]
      %v283 = vld [vmem:[%s169 + $0x2e0] sm:$0xff]
      %v284 = vld [vmem:[%s169 + $0x2e8] sm:$0xff]
      %v285 = vld [vmem:[%s169 + $0x2f0] sm:$0xf]
      %v286 = vld [vmem:[%s169 + $0x2f4] sm:$0xff]
      %v287 = vld [vmem:[%s169 + $0x2fc] sm:$0xff]
      %v288 = vld [vmem:[%s169 + $0x304] sm:$0xff]
      %v289 = vld [vmem:[%s169 + $0x30c] sm:$0xf]
      %v290 = vld [vmem:[%s169 + $0x310] sm:$0xff]
      %v291 = vld [vmem:[%s169 + $0x318] sm:$0xff]
      %v292 = vld [vmem:[%s169 + $0x320] sm:$0xff]
      %v293 = vld [vmem:[%s169 + $0x328] sm:$0xf]
      %v294 = vld [vmem:[%s169 + $0x32c] sm:$0xff]
      %v295 = vld [vmem:[%s169 + $0x334] sm:$0xff]
      %v296 = vld [vmem:[%s169 + $0x33c] sm:$0xff]
      %v297 = vld [vmem:[%s169 + $0x344] sm:$0xf]
      %v298 = vld [vmem:[%s169 + $0x348] sm:$0xff]
      %v299 = vld [vmem:[%s169 + $0x350] sm:$0xff]
      %v300 = vld [vmem:[%s169 + $0x358] sm:$0xff]
      %v301 = vld [vmem:[%s169 + $0x360] sm:$0xf]
      %v302 = vld [vmem:[%s169 + $0x364] sm:$0xff]
      %v303 = vld [vmem:[%s169 + $0x36c] sm:$0xff]
      %v304 = vld [vmem:[%s169 + $0x374] sm:$0xff]
      %v305 = vld [vmem:[%s169 + $0x37c] sm:$0xf]
      %v306 = vld [vmem:[%s1] sm:$0xf]
      %v307 = vld [vmem:[%s1 + $0x4] sm:$0xf]
      %v308 = vld [vmem:[%s1 + $0x8] sm:$0xf]
      %v309 = vld [vmem:[%s1 + $0xc] sm:$0xf]
      %v310 = vld [vmem:[%s1 + $0x10] sm:$0xf]
      %v311 = vld [vmem:[%s1 + $0x14] sm:$0xf]
      %v312 = vld [vmem:[%s1 + $0x18] sm:$0xf]
      %v313 = vld [vmem:[%s1 + $0x1c] sm:$0xf]
      %v314 = vld [vmem:[%s1 + $0x20] sm:$0xf]
      %v315 = vld [vmem:[%s1 + $0x24] sm:$0xf]
      %v316 = vld [vmem:[%s1 + $0x28] sm:$0xf]
      %v317 = vld [vmem:[%s1 + $0x2c] sm:$0xf]
      %v318 = vld [vmem:[%s1 + $0x30] sm:$0xf]
      %v319 = vld [vmem:[%s1 + $0x34] sm:$0xf]
      %v320 = vld [vmem:[%s1 + $0x38] sm:$0xf]
      %v321 = vld [vmem:[%s1 + $0x3c] sm:$0xf]
      %v322 = vld [vmem:[%s1 + $0x40] sm:$0xf]
      %v323 = vld [vmem:[%s1 + $0x44] sm:$0xf]
      %v324 = vld [vmem:[%s1 + $0x48] sm:$0xf]
      %v325 = vld [vmem:[%s1 + $0x4c] sm:$0xf]
      %v326 = vld [vmem:[%s1 + $0x50] sm:$0xf]
      %v327 = vld [vmem:[%s1 + $0x54] sm:$0xf]
      %v328 = vld [vmem:[%s1 + $0x58] sm:$0xf]
      %v329 = vld [vmem:[%s1 + $0x5c] sm:$0xf]
      %v330 = vld [vmem:[%s1 + $0x60] sm:$0xf]
      %v331 = vld [vmem:[%s1 + $0x64] sm:$0xf]
      %v332 = vld [vmem:[%s1 + $0x68] sm:$0xf]
      %v333 = vld [vmem:[%s1 + $0x6c] sm:$0xf]
      %v334 = vld [vmem:[%s1 + $0x70] sm:$0xf]
      %v335 = vld [vmem:[%s1 + $0x74] sm:$0xf]
      %v336 = vld [vmem:[%s1 + $0x78] sm:$0xf]
      %v337 = vld [vmem:[%s1 + $0x7c] sm:$0xf]
      %v338 = vld [vmem:[%s1 + $0x80] sm:$0xf]
      %v339 = vld [vmem:[%s1 + $0x84] sm:$0xf]
      %v340 = vld [vmem:[%s1 + $0x88] sm:$0xf]
      %v341 = vld [vmem:[%s1 + $0x8c] sm:$0xf]
      %v342 = vld [vmem:[%s1 + $0x90] sm:$0xf]
      %v343 = vld [vmem:[%s1 + $0x94] sm:$0xf]
      %v344 = vld [vmem:[%s1 + $0x98] sm:$0xf]
      %v345 = vld [vmem:[%s1 + $0x9c] sm:$0xf]
      %v346 = vld [vmem:[%s1 + $0xa0] sm:$0xf]
      %v347 = vld [vmem:[%s1 + $0xa4] sm:$0xf]
      %v348 = vld [vmem:[%s1 + $0xa8] sm:$0xf]
      %v349 = vld [vmem:[%s1 + $0xac] sm:$0xf]
      %v350 = vld [vmem:[%s1 + $0xb0] sm:$0xf]
      %v351 = vld [vmem:[%s1 + $0xb4] sm:$0xf]
      %v352 = vld [vmem:[%s1 + $0xb8] sm:$0xf]
      %v353 = vld [vmem:[%s1 + $0xbc] sm:$0xf]
      %v354 = vld [vmem:[%s1 + $0xc0] sm:$0xf]
      %v355 = vld [vmem:[%s1 + $0xc4] sm:$0xf]
      %v356 = vld [vmem:[%s1 + $0xc8] sm:$0xf]
      %v357 = vld [vmem:[%s1 + $0xcc] sm:$0xf]
      %v358 = vld [vmem:[%s1 + $0xd0] sm:$0xf]
      %v359 = vld [vmem:[%s1 + $0xd4] sm:$0xf]
      %v360 = vld [vmem:[%s1 + $0xd8] sm:$0xf]
      %v361 = vld [vmem:[%s1 + $0xdc] sm:$0xf]
      %v362 = vld [vmem:[%s1 + $0xe0] sm:$0xf]
      %v363 = vld [vmem:[%s1 + $0xe4] sm:$0xf]
      %v364 = vld [vmem:[%s1 + $0xe8] sm:$0xf]
      %v365 = vld [vmem:[%s1 + $0xec] sm:$0xf]
      %v366 = vld [vmem:[%s1 + $0xf0] sm:$0xf]
      %v367 = vld [vmem:[%s1 + $0xf4] sm:$0xf]
      %v368 = vld [vmem:[%s1 + $0xf8] sm:$0xf]
      %v369 = vld [vmem:[%s1 + $0xfc] sm:$0xf]
      %v370 = vld [vmem:[%s1 + $0x100] sm:$0xf]
      %v371 = vld [vmem:[%s1 + $0x104] sm:$0xf]
      %v372 = vld [vmem:[%s1 + $0x108] sm:$0xf]
      %v373 = vld [vmem:[%s1 + $0x10c] sm:$0xf]
      %v374 = vld [vmem:[%s1 + $0x110] sm:$0xf]
      %v375 = vld [vmem:[%s1 + $0x114] sm:$0xf]
      %v376 = vld [vmem:[%s1 + $0x118] sm:$0xf]
      %v377 = vld [vmem:[%s1 + $0x11c] sm:$0xf]
      %v378 = vld [vmem:[%s1 + $0x120] sm:$0xf]
      %v379 = vld [vmem:[%s1 + $0x124] sm:$0xf]
      %v380 = vld [vmem:[%s1 + $0x128] sm:$0xf]
      %v381 = vld [vmem:[%s1 + $0x12c] sm:$0xf]
      %v382 = vld [vmem:[%s1 + $0x130] sm:$0xf]
      %v383 = vld [vmem:[%s1 + $0x134] sm:$0xf]
      %v384 = vld [vmem:[%s1 + $0x138] sm:$0xf]
      %v385 = vld [vmem:[%s1 + $0x13c] sm:$0xf]
      %v386 = vld [vmem:[%s1 + $0x140] sm:$0xf]
      %v387 = vld [vmem:[%s1 + $0x144] sm:$0xf]
      %v388 = vld [vmem:[%s1 + $0x148] sm:$0xf]
      %v389 = vld [vmem:[%s1 + $0x14c] sm:$0xf]
      %v390 = vld [vmem:[%s1 + $0x150] sm:$0xf]
      %v391 = vld [vmem:[%s1 + $0x154] sm:$0xf]
      %v392 = vld [vmem:[%s1 + $0x158] sm:$0xf]
      %v393 = vld [vmem:[%s1 + $0x15c] sm:$0xf]
      %v394 = vld [vmem:[%s1 + $0x160] sm:$0xf]
      %v395 = vld [vmem:[%s1 + $0x164] sm:$0xf]
      %v396 = vld [vmem:[%s1 + $0x168] sm:$0xf]
      %v397 = vld [vmem:[%s1 + $0x16c] sm:$0xf]
      %v398 = vld [vmem:[%s1 + $0x170] sm:$0xf]
      %v399 = vld [vmem:[%s1 + $0x174] sm:$0xf]
      %v400 = vld [vmem:[%s1 + $0x178] sm:$0xf]
      %v401 = vld [vmem:[%s1 + $0x17c] sm:$0xf]
      %v402 = vld [vmem:[%s1 + $0x180] sm:$0xf]
      %v403 = vld [vmem:[%s1 + $0x184] sm:$0xf]
      %v404 = vld [vmem:[%s1 + $0x188] sm:$0xf]
      %v405 = vld [vmem:[%s1 + $0x18c] sm:$0xf]
      %v406 = vld [vmem:[%s1 + $0x190] sm:$0xf]
      %v407 = vld [vmem:[%s1 + $0x194] sm:$0xf]
      %v408 = vld [vmem:[%s1 + $0x198] sm:$0xf]
      %v409 = vld [vmem:[%s1 + $0x19c] sm:$0xf]
      %v410 = vld [vmem:[%s1 + $0x1a0] sm:$0xf]
      %v411 = vld [vmem:[%s1 + $0x1a4] sm:$0xf]
      %v412 = vld [vmem:[%s1 + $0x1a8] sm:$0xf]
      %v413 = vld [vmem:[%s1 + $0x1ac] sm:$0xf]
      %v414 = vld [vmem:[%s2] sm:$0x1]
      %v416 = vlaneseq
      %v417 = vshrl.u32 %v416, 7
      %v418 = vsub.s32 0, %v417
      %v419 = vrot.slane %v414, %v418
      %v549 = vunpack.c.l.b16 %v178
      %v550 = vunpack.c.h.b16 %v178
      %v551 = vunpack.c.l.b16 %v179
      %v552 = vunpack.c.h.b16 %v179
      %v553 = vunpack.c.l.b16 %v180
      %v554 = vunpack.c.h.b16 %v180
      %v555 = vunpack.c.l.b16 %v181
      %v556 = vunpack.c.l.b16 %v182
      %v557 = vunpack.c.h.b16 %v182
      %v558 = vunpack.c.l.b16 %v183
      %v559 = vunpack.c.h.b16 %v183
      %v560 = vunpack.c.l.b16 %v184
      %v561 = vunpack.c.h.b16 %v184
      %v562 = vunpack.c.l.b16 %v185
      %v563 = vunpack.c.l.b16 %v186
      %v564 = vunpack.c.h.b16 %v186
      %v565 = vunpack.c.l.b16 %v187
      %v566 = vunpack.c.h.b16 %v187
      %v567 = vunpack.c.l.b16 %v188
      %v568 = vunpack.c.h.b16 %v188
      %v569 = vunpack.c.l.b16 %v189
      %v570 = vunpack.c.l.b16 %v190
      %v571 = vunpack.c.h.b16 %v190
      %v572 = vunpack.c.l.b16 %v191
      %v573 = vunpack.c.h.b16 %v191
      %v574 = vunpack.c.l.b16 %v192
      %v575 = vunpack.c.h.b16 %v192
      %v576 = vunpack.c.l.b16 %v193
      %v577 = vunpack.c.l.b16 %v194
      %v578 = vunpack.c.h.b16 %v194
      %v579 = vunpack.c.l.b16 %v195
      %v580 = vunpack.c.h.b16 %v195
      %v581 = vunpack.c.l.b16 %v196
      %v582 = vunpack.c.h.b16 %v196
      %v583 = vunpack.c.l.b16 %v197
      %v584 = vunpack.c.l.b16 %v198
      %v585 = vunpack.c.h.b16 %v198
      %v586 = vunpack.c.l.b16 %v199
      %v587 = vunpack.c.h.b16 %v199
      %v588 = vunpack.c.l.b16 %v200
      %v589 = vunpack.c.h.b16 %v200
      %v590 = vunpack.c.l.b16 %v201
      %v591 = vunpack.c.l.b16 %v202
      %v592 = vunpack.c.h.b16 %v202
      %v593 = vunpack.c.l.b16 %v203
      %v594 = vunpack.c.h.b16 %v203
      %v595 = vunpack.c.l.b16 %v204
      %v596 = vunpack.c.h.b16 %v204
      %v597 = vunpack.c.l.b16 %v205
      %v598 = vunpack.c.l.b16 %v206
      %v599 = vunpack.c.h.b16 %v206
      %v600 = vunpack.c.l.b16 %v207
      %v601 = vunpack.c.h.b16 %v207
      %v602 = vunpack.c.l.b16 %v208
      %v603 = vunpack.c.h.b16 %v208
      %v604 = vunpack.c.l.b16 %v209
      %v605 = vunpack.c.l.b16 %v210
      %v606 = vunpack.c.h.b16 %v210
      %v607 = vunpack.c.l.b16 %v211
      %v608 = vunpack.c.h.b16 %v211
      %v609 = vunpack.c.l.b16 %v212
      %v610 = vunpack.c.h.b16 %v212
      %v611 = vunpack.c.l.b16 %v213
      %v612 = vunpack.c.l.b16 %v214
      %v613 = vunpack.c.h.b16 %v214
      %v614 = vunpack.c.l.b16 %v215
      %v615 = vunpack.c.h.b16 %v215
      %v616 = vunpack.c.l.b16 %v216
      %v617 = vunpack.c.h.b16 %v216
      %v618 = vunpack.c.l.b16 %v217
      %v619 = vunpack.c.l.b16 %v218
      %v620 = vunpack.c.h.b16 %v218
      %v621 = vunpack.c.l.b16 %v219
      %v622 = vunpack.c.h.b16 %v219
      %v623 = vunpack.c.l.b16 %v220
      %v624 = vunpack.c.h.b16 %v220
      %v625 = vunpack.c.l.b16 %v221
      %v626 = vunpack.c.l.b16 %v222
      %v627 = vunpack.c.h.b16 %v222
      %v628 = vunpack.c.l.b16 %v223
      %v629 = vunpack.c.h.b16 %v223
      %v630 = vunpack.c.l.b16 %v224
      %v631 = vunpack.c.h.b16 %v224
      %v632 = vunpack.c.l.b16 %v225
      %v633 = vunpack.c.l.b16 %v226
      %v634 = vunpack.c.h.b16 %v226
      %v635 = vunpack.c.l.b16 %v227
      %v636 = vunpack.c.h.b16 %v227
      %v637 = vunpack.c.l.b16 %v228
      %v638 = vunpack.c.h.b16 %v228
      %v639 = vunpack.c.l.b16 %v229
      %v640 = vunpack.c.l.b16 %v230
      %v641 = vunpack.c.h.b16 %v230
      %v642 = vunpack.c.l.b16 %v231
      %v643 = vunpack.c.h.b16 %v231
      %v644 = vunpack.c.l.b16 %v232
      %v645 = vunpack.c.h.b16 %v232
      %v646 = vunpack.c.l.b16 %v233
      %v647 = vunpack.c.l.b16 %v234
      %v648 = vunpack.c.h.b16 %v234
      %v649 = vunpack.c.l.b16 %v235
      %v650 = vunpack.c.h.b16 %v235
      %v651 = vunpack.c.l.b16 %v236
      %v652 = vunpack.c.h.b16 %v236
      %v653 = vunpack.c.l.b16 %v237
      %v654 = vunpack.c.l.b16 %v238
      %v655 = vunpack.c.h.b16 %v238
      %v656 = vunpack.c.l.b16 %v239
      %v657 = vunpack.c.h.b16 %v239
      %v658 = vunpack.c.l.b16 %v240
      %v659 = vunpack.c.h.b16 %v240
      %v660 = vunpack.c.l.b16 %v241
      %v661 = vunpack.c.l.b16 %v242
      %v662 = vunpack.c.h.b16 %v242
      %v663 = vunpack.c.l.b16 %v243
      %v664 = vunpack.c.h.b16 %v243
      %v665 = vunpack.c.l.b16 %v244
      %v666 = vunpack.c.h.b16 %v244
      %v667 = vunpack.c.l.b16 %v245
      %v668 = vunpack.c.l.b16 %v246
      %v669 = vunpack.c.h.b16 %v246
      %v670 = vunpack.c.l.b16 %v247
      %v671 = vunpack.c.h.b16 %v247
      %v672 = vunpack.c.l.b16 %v248
      %v673 = vunpack.c.h.b16 %v248
      %v674 = vunpack.c.l.b16 %v249
      %v675 = vunpack.c.l.b16 %v250
      %v676 = vunpack.c.h.b16 %v250
      %v677 = vunpack.c.l.b16 %v251
      %v678 = vunpack.c.h.b16 %v251
      %v679 = vunpack.c.l.b16 %v252
      %v680 = vunpack.c.h.b16 %v252
      %v681 = vunpack.c.l.b16 %v253
      %v682 = vunpack.c.l.b16 %v254
      %v683 = vunpack.c.h.b16 %v254
      %v684 = vunpack.c.l.b16 %v255
      %v685 = vunpack.c.h.b16 %v255
      %v686 = vunpack.c.l.b16 %v256
      %v687 = vunpack.c.h.b16 %v256
      %v688 = vunpack.c.l.b16 %v257
      %v689 = vunpack.c.l.b16 %v258
      %v690 = vunpack.c.h.b16 %v258
      %v691 = vunpack.c.l.b16 %v259
      %v692 = vunpack.c.h.b16 %v259
      %v693 = vunpack.c.l.b16 %v260
      %v694 = vunpack.c.h.b16 %v260
      %v695 = vunpack.c.l.b16 %v261
      %v696 = vunpack.c.l.b16 %v262
      %v697 = vunpack.c.h.b16 %v262
      %v698 = vunpack.c.l.b16 %v263
      %v699 = vunpack.c.h.b16 %v263
      %v700 = vunpack.c.l.b16 %v264
      %v701 = vunpack.c.h.b16 %v264
      %v702 = vunpack.c.l.b16 %v265
      %v703 = vunpack.c.l.b16 %v266
      %v704 = vunpack.c.h.b16 %v266
      %v705 = vunpack.c.l.b16 %v267
      %v706 = vunpack.c.h.b16 %v267
      %v707 = vunpack.c.l.b16 %v268
      %v708 = vunpack.c.h.b16 %v268
      %v709 = vunpack.c.l.b16 %v269
      %v710 = vunpack.c.l.b16 %v270
      %v711 = vunpack.c.h.b16 %v270
      %v712 = vunpack.c.l.b16 %v271
      %v713 = vunpack.c.h.b16 %v271
      %v714 = vunpack.c.l.b16 %v272
      %v715 = vunpack.c.h.b16 %v272
      %v716 = vunpack.c.l.b16 %v273
      %v717 = vunpack.c.l.b16 %v274
      %v718 = vunpack.c.h.b16 %v274
      %v719 = vunpack.c.l.b16 %v275
      %v720 = vunpack.c.h.b16 %v275
      %v721 = vunpack.c.l.b16 %v276
      %v722 = vunpack.c.h.b16 %v276
      %v723 = vunpack.c.l.b16 %v277
      %v724 = vunpack.c.l.b16 %v278
      %v725 = vunpack.c.h.b16 %v278
      %v726 = vunpack.c.l.b16 %v279
      %v727 = vunpack.c.h.b16 %v279
      %v728 = vunpack.c.l.b16 %v280
      %v729 = vunpack.c.h.b16 %v280
      %v730 = vunpack.c.l.b16 %v281
      %v731 = vunpack.c.l.b16 %v282
      %v732 = vunpack.c.h.b16 %v282
      %v733 = vunpack.c.l.b16 %v283
      %v734 = vunpack.c.h.b16 %v283
      %v735 = vunpack.c.l.b16 %v284
      %v736 = vunpack.c.h.b16 %v284
      %v737 = vunpack.c.l.b16 %v285
      %v738 = vunpack.c.l.b16 %v286
      %v739 = vunpack.c.h.b16 %v286
      %v740 = vunpack.c.l.b16 %v287
      %v741 = vunpack.c.h.b16 %v287
      %v742 = vunpack.c.l.b16 %v288
      %v743 = vunpack.c.h.b16 %v288
      %v744 = vunpack.c.l.b16 %v289
      %v745 = vunpack.c.l.b16 %v290
      %v746 = vunpack.c.h.b16 %v290
      %v747 = vunpack.c.l.b16 %v291
      %v748 = vunpack.c.h.b16 %v291
      %v749 = vunpack.c.l.b16 %v292
      %v750 = vunpack.c.h.b16 %v292
      %v751 = vunpack.c.l.b16 %v293
      %v752 = vunpack.c.l.b16 %v294
      %v753 = vunpack.c.h.b16 %v294
      %v754 = vunpack.c.l.b16 %v295
      %v755 = vunpack.c.h.b16 %v295
      %v756 = vunpack.c.l.b16 %v296
      %v757 = vunpack.c.h.b16 %v296
      %v758 = vunpack.c.l.b16 %v297
      %v759 = vunpack.c.l.b16 %v298
      %v760 = vunpack.c.h.b16 %v298
      %v761 = vunpack.c.l.b16 %v299
      %v762 = vunpack.c.h.b16 %v299
      %v763 = vunpack.c.l.b16 %v300
      %v764 = vunpack.c.h.b16 %v300
      %v765 = vunpack.c.l.b16 %v301
      %v766 = vunpack.c.l.b16 %v302
      %v767 = vunpack.c.h.b16 %v302
      %v768 = vunpack.c.l.b16 %v303
      %v769 = vunpack.c.h.b16 %v303
      %v770 = vunpack.c.l.b16 %v304
      %v771 = vunpack.c.h.b16 %v304
      %v772 = vunpack.c.l.b16 %v305
      %v773 = vpack.c.b16 %v556, %v549
      %v774 = vpack.c.b16 %v557, %v550
      %v775 = vpack.c.b16 %v558, %v551
      %v776 = vpack.c.b16 %v559, %v552
      %v777 = vpack.c.b16 %v560, %v553
      %v778 = vpack.c.b16 %v561, %v554
      %v779 = vpack.c.b16 %v562, %v555
      %v780 = vpack.c.b16 %v570, %v563
      %v781 = vpack.c.b16 %v571, %v564
      %v782 = vpack.c.b16 %v572, %v565
      %v783 = vpack.c.b16 %v573, %v566
      %v784 = vpack.c.b16 %v574, %v567
      %v785 = vpack.c.b16 %v575, %v568
      %v786 = vpack.c.b16 %v576, %v569
      %v787 = vpack.c.b16 %v584, %v577
      %v788 = vpack.c.b16 %v585, %v578
      %v789 = vpack.c.b16 %v586, %v579
      %v790 = vpack.c.b16 %v587, %v580
      %v791 = vpack.c.b16 %v588, %v581
      %v792 = vpack.c.b16 %v589, %v582
      %v793 = vpack.c.b16 %v590, %v583
      %v794 = vpack.c.b16 %v598, %v591
      %v795 = vpack.c.b16 %v599, %v592
      %v796 = vpack.c.b16 %v600, %v593
      %v797 = vpack.c.b16 %v601, %v594
      %v798 = vpack.c.b16 %v602, %v595
      %v799 = vpack.c.b16 %v603, %v596
      %v800 = vpack.c.b16 %v604, %v597
      %v801 = vpack.c.b16 %v612, %v605
      %v802 = vpack.c.b16 %v613, %v606
      %v803 = vpack.c.b16 %v614, %v607
      %v804 = vpack.c.b16 %v615, %v608
      %v805 = vpack.c.b16 %v616, %v609
      %v806 = vpack.c.b16 %v617, %v610
      %v807 = vpack.c.b16 %v618, %v611
      %v808 = vpack.c.b16 %v626, %v619
      %v809 = vpack.c.b16 %v627, %v620
      %v810 = vpack.c.b16 %v628, %v621
      %v811 = vpack.c.b16 %v629, %v622
      %v812 = vpack.c.b16 %v630, %v623
      %v813 = vpack.c.b16 %v631, %v624
      %v814 = vpack.c.b16 %v632, %v625
      %v815 = vpack.c.b16 %v640, %v633
      %v816 = vpack.c.b16 %v641, %v634
      %v817 = vpack.c.b16 %v642, %v635
      %v818 = vpack.c.b16 %v643, %v636
      %v819 = vpack.c.b16 %v644, %v637
      %v820 = vpack.c.b16 %v645, %v638
      %v821 = vpack.c.b16 %v646, %v639
      %v822 = vpack.c.b16 %v654, %v647
      %v823 = vpack.c.b16 %v655, %v648
      %v824 = vpack.c.b16 %v656, %v649
      %v825 = vpack.c.b16 %v657, %v650
      %v826 = vpack.c.b16 %v658, %v651
      %v827 = vpack.c.b16 %v659, %v652
      %v828 = vpack.c.b16 %v660, %v653
      %v829 = vpack.c.b16 %v668, %v661
      %v830 = vpack.c.b16 %v669, %v662
      %v831 = vpack.c.b16 %v670, %v663
      %v832 = vpack.c.b16 %v671, %v664
      %v833 = vpack.c.b16 %v672, %v665
      %v834 = vpack.c.b16 %v673, %v666
      %v835 = vpack.c.b16 %v674, %v667
      %v836 = vpack.c.b16 %v682, %v675
      %v837 = vpack.c.b16 %v683, %v676
      %v838 = vpack.c.b16 %v684, %v677
      %v839 = vpack.c.b16 %v685, %v678
      %v840 = vpack.c.b16 %v686, %v679
      %v841 = vpack.c.b16 %v687, %v680
      %v842 = vpack.c.b16 %v688, %v681
      %v843 = vpack.c.b16 %v696, %v689
      %v844 = vpack.c.b16 %v697, %v690
      %v845 = vpack.c.b16 %v698, %v691
      %v846 = vpack.c.b16 %v699, %v692
      %v847 = vpack.c.b16 %v700, %v693
      %v848 = vpack.c.b16 %v701, %v694
      %v849 = vpack.c.b16 %v702, %v695
      %v850 = vpack.c.b16 %v710, %v703
      %v851 = vpack.c.b16 %v711, %v704
      %v852 = vpack.c.b16 %v712, %v705
      %v853 = vpack.c.b16 %v713, %v706
      %v854 = vpack.c.b16 %v714, %v707
      %v855 = vpack.c.b16 %v715, %v708
      %v856 = vpack.c.b16 %v716, %v709
      %v857 = vpack.c.b16 %v724, %v717
      %v858 = vpack.c.b16 %v725, %v718
      %v859 = vpack.c.b16 %v726, %v719
      %v860 = vpack.c.b16 %v727, %v720
      %v861 = vpack.c.b16 %v728, %v721
      %v862 = vpack.c.b16 %v729, %v722
      %v863 = vpack.c.b16 %v730, %v723
      %v864 = vpack.c.b16 %v738, %v731
      %v865 = vpack.c.b16 %v739, %v732
      %v866 = vpack.c.b16 %v740, %v733
      %v867 = vpack.c.b16 %v741, %v734
      %v868 = vpack.c.b16 %v742, %v735
      %v869 = vpack.c.b16 %v743, %v736
      %v870 = vpack.c.b16 %v744, %v737
      %v871 = vpack.c.b16 %v752, %v745
      %v872 = vpack.c.b16 %v753, %v746
      %v873 = vpack.c.b16 %v754, %v747
      %v874 = vpack.c.b16 %v755, %v748
      %v875 = vpack.c.b16 %v756, %v749
      %v876 = vpack.c.b16 %v757, %v750
      %v877 = vpack.c.b16 %v758, %v751
      %v878 = vpack.c.b16 %v766, %v759
      %v879 = vpack.c.b16 %v767, %v760
      %v880 = vpack.c.b16 %v768, %v761
      %v881 = vpack.c.b16 %v769, %v762
      %v882 = vpack.c.b16 %v770, %v763
      %v883 = vpack.c.b16 %v771, %v764
      %v884 = vpack.c.b16 %v772, %v765
      %v1089 = vunpack.c.l.b16 %v306
      %v1090 = vunpack.c.l.b16 %v307
      %v1091 = vunpack.c.l.b16 %v308
      %v1092 = vunpack.c.l.b16 %v309
      %v1093 = vunpack.c.l.b16 %v310
      %v1094 = vunpack.c.l.b16 %v311
      %v1095 = vunpack.c.l.b16 %v312
      %v1096 = vunpack.c.l.b16 %v313
      %v1097 = vunpack.c.l.b16 %v314
      %v1098 = vunpack.c.l.b16 %v315
      %v1099 = vunpack.c.l.b16 %v316
      %v1100 = vunpack.c.l.b16 %v317
      %v1101 = vunpack.c.l.b16 %v318
      %v1102 = vunpack.c.l.b16 %v319
      %v1103 = vunpack.c.l.b16 %v320
      %v1104 = vunpack.c.l.b16 %v321
      %v1105 = vunpack.c.l.b16 %v322
      %v1106 = vunpack.c.l.b16 %v323
      %v1107 = vunpack.c.l.b16 %v324
      %v1108 = vunpack.c.l.b16 %v325
      %v1109 = vunpack.c.l.b16 %v326
      %v1110 = vunpack.c.l.b16 %v327
      %v1111 = vunpack.c.l.b16 %v328
      %v1112 = vunpack.c.l.b16 %v329
      %v1113 = vunpack.c.l.b16 %v330
      %v1114 = vunpack.c.l.b16 %v331
      %v1115 = vunpack.c.l.b16 %v332
      %v1116 = vunpack.c.l.b16 %v333
      %v1117 = vunpack.c.l.b16 %v334
      %v1118 = vunpack.c.l.b16 %v335
      %v1119 = vunpack.c.l.b16 %v336
      %v1120 = vunpack.c.l.b16 %v337
      %v1121 = vunpack.c.l.b16 %v338
      %v1122 = vunpack.c.l.b16 %v339
      %v1123 = vunpack.c.l.b16 %v340
      %v1124 = vunpack.c.l.b16 %v341
      %v1125 = vunpack.c.l.b16 %v342
      %v1126 = vunpack.c.l.b16 %v343
      %v1127 = vunpack.c.l.b16 %v344
      %v1128 = vunpack.c.l.b16 %v345
      %v1129 = vunpack.c.l.b16 %v346
      %v1130 = vunpack.c.l.b16 %v347
      %v1131 = vunpack.c.l.b16 %v348
      %v1132 = vunpack.c.l.b16 %v349
      %v1133 = vunpack.c.l.b16 %v350
      %v1134 = vunpack.c.l.b16 %v351
      %v1135 = vunpack.c.l.b16 %v352
      %v1136 = vunpack.c.l.b16 %v353
      %v1137 = vunpack.c.l.b16 %v354
      %v1138 = vunpack.c.l.b16 %v355
      %v1139 = vunpack.c.l.b16 %v356
      %v1140 = vunpack.c.l.b16 %v357
      %v1141 = vunpack.c.l.b16 %v358
      %v1142 = vunpack.c.l.b16 %v359
      %v1143 = vunpack.c.l.b16 %v360
      %v1144 = vunpack.c.l.b16 %v361
      %v1145 = vunpack.c.l.b16 %v362
      %v1146 = vunpack.c.l.b16 %v363
      %v1147 = vunpack.c.l.b16 %v364
      %v1148 = vunpack.c.l.b16 %v365
      %v1149 = vunpack.c.l.b16 %v366
      %v1150 = vunpack.c.l.b16 %v367
      %v1151 = vunpack.c.l.b16 %v368
      %v1152 = vunpack.c.l.b16 %v369
      %v1153 = vunpack.c.l.b16 %v370
      %v1154 = vunpack.c.l.b16 %v371
      %v1155 = vunpack.c.l.b16 %v372
      %v1156 = vunpack.c.l.b16 %v373
      %v1157 = vunpack.c.l.b16 %v374
      %v1158 = vunpack.c.l.b16 %v375
      %v1159 = vunpack.c.l.b16 %v376
      %v1160 = vunpack.c.l.b16 %v377
      %v1161 = vunpack.c.l.b16 %v378
      %v1162 = vunpack.c.l.b16 %v379
      %v1163 = vunpack.c.l.b16 %v380
      %v1164 = vunpack.c.l.b16 %v381
      %v1165 = vunpack.c.l.b16 %v382
      %v1166 = vunpack.c.l.b16 %v383
      %v1167 = vunpack.c.l.b16 %v384
      %v1168 = vunpack.c.l.b16 %v385
      %v1169 = vunpack.c.l.b16 %v386
      %v1170 = vunpack.c.l.b16 %v387
      %v1171 = vunpack.c.l.b16 %v388
      %v1172 = vunpack.c.l.b16 %v389
      %v1173 = vunpack.c.l.b16 %v390
      %v1174 = vunpack.c.l.b16 %v391
      %v1175 = vunpack.c.l.b16 %v392
      %v1176 = vunpack.c.l.b16 %v393
      %v1177 = vunpack.c.l.b16 %v394
      %v1178 = vunpack.c.l.b16 %v395
      %v1179 = vunpack.c.l.b16 %v396
      %v1180 = vunpack.c.l.b16 %v397
      %v1181 = vunpack.c.l.b16 %v398
      %v1182 = vunpack.c.l.b16 %v399
      %v1183 = vunpack.c.l.b16 %v400
      %v1184 = vunpack.c.l.b16 %v401
      %v1185 = vunpack.c.l.b16 %v402
      %v1186 = vunpack.c.l.b16 %v403
      %v1187 = vunpack.c.l.b16 %v404
      %v1188 = vunpack.c.l.b16 %v405
      %v1189 = vunpack.c.l.b16 %v406
      %v1190 = vunpack.c.l.b16 %v407
      %v1191 = vunpack.c.l.b16 %v408
      %v1192 = vunpack.c.l.b16 %v409
      %v1193 = vunpack.c.l.b16 %v410
      %v1194 = vunpack.c.l.b16 %v411
      %v1195 = vunpack.c.l.b16 %v412
      %v1196 = vunpack.c.l.b16 %v413
      %v1197 = vpack.c.b16 %v1090, %v1089
      %v1198 = vpack.c.b16 %v1092, %v1091
      %v1199 = vpack.c.b16 %v1094, %v1093
      %v1200 = vpack.c.b16 %v1096, %v1095
      %v1201 = vpack.c.b16 %v1098, %v1097
      %v1202 = vpack.c.b16 %v1100, %v1099
      %v1203 = vpack.c.b16 %v1102, %v1101
      %v1204 = vpack.c.b16 %v1104, %v1103
      %v1205 = vpack.c.b16 %v1106, %v1105
      %v1206 = vpack.c.b16 %v1108, %v1107
      %v1207 = vpack.c.b16 %v1110, %v1109
      %v1208 = vpack.c.b16 %v1112, %v1111
      %v1209 = vpack.c.b16 %v1114, %v1113
      %v1210 = vpack.c.b16 %v1116, %v1115
      %v1211 = vpack.c.b16 %v1118, %v1117
      %v1212 = vpack.c.b16 %v1120, %v1119
      %v1213 = vpack.c.b16 %v1122, %v1121
      %v1214 = vpack.c.b16 %v1124, %v1123
      %v1215 = vpack.c.b16 %v1126, %v1125
      %v1216 = vpack.c.b16 %v1128, %v1127
      %v1217 = vpack.c.b16 %v1130, %v1129
      %v1218 = vpack.c.b16 %v1132, %v1131
      %v1219 = vpack.c.b16 %v1134, %v1133
      %v1220 = vpack.c.b16 %v1136, %v1135
      %v1221 = vpack.c.b16 %v1138, %v1137
      %v1222 = vpack.c.b16 %v1140, %v1139
      %v1223 = vpack.c.b16 %v1142, %v1141
      %v1224 = vpack.c.b16 %v1144, %v1143
      %v1225 = vpack.c.b16 %v1146, %v1145
      %v1226 = vpack.c.b16 %v1148, %v1147
      %v1227 = vpack.c.b16 %v1150, %v1149
      %v1228 = vpack.c.b16 %v1152, %v1151
      %v1229 = vpack.c.b16 %v1154, %v1153
      %v1230 = vpack.c.b16 %v1156, %v1155
      %v1231 = vpack.c.b16 %v1158, %v1157
      %v1232 = vpack.c.b16 %v1160, %v1159
      %v1233 = vpack.c.b16 %v1162, %v1161
      %v1234 = vpack.c.b16 %v1164, %v1163
      %v1235 = vpack.c.b16 %v1166, %v1165
      %v1236 = vpack.c.b16 %v1168, %v1167
      %v1237 = vpack.c.b16 %v1170, %v1169
      %v1238 = vpack.c.b16 %v1172, %v1171
      %v1239 = vpack.c.b16 %v1174, %v1173
      %v1240 = vpack.c.b16 %v1176, %v1175
      %v1241 = vpack.c.b16 %v1178, %v1177
      %v1242 = vpack.c.b16 %v1180, %v1179
      %v1243 = vpack.c.b16 %v1182, %v1181
      %v1244 = vpack.c.b16 %v1184, %v1183
      %v1245 = vpack.c.b16 %v1186, %v1185
      %v1246 = vpack.c.b16 %v1188, %v1187
      %v1247 = vpack.c.b16 %v1190, %v1189
      %v1248 = vpack.c.b16 %v1192, %v1191
      %v1249 = vpack.c.b16 %v1194, %v1193
      %v1250 = vpack.c.b16 %v1196, %v1195
      %vm1305 = vcmask 785408
      %v1307 = vsel %vm1305, %v779, 0
      %v1310 = vsel %vm1305, %v786, 0
      %v1313 = vsel %vm1305, %v793, 0
      %v1316 = vsel %vm1305, %v800, 0
      %v1319 = vsel %vm1305, %v807, 0
      %v1322 = vsel %vm1305, %v814, 0
      %v1325 = vsel %vm1305, %v821, 0
      %v1328 = vsel %vm1305, %v828, 0
      %v1331 = vsel %vm1305, %v835, 0
      %v1334 = vsel %vm1305, %v842, 0
      %v1337 = vsel %vm1305, %v849, 0
      %v1340 = vsel %vm1305, %v856, 0
      %v1343 = vsel %vm1305, %v863, 0
      %v1346 = vsel %vm1305, %v870, 0
      %v1349 = vsel %vm1305, %v877, 0
      %v1352 = vsel %vm1305, %v884, 0
      %1354 = vmatprep.subr.bf16.mxu0 0
      %1355 = vmatpush1.bf16.msra.mxu0 %v1204
      %1356 = vmatprep.subr.bf16.mxu0 0
      %1357 = vmatpush1.bf16.msra.mxu0 %v1203
      %1358 = vmatprep.subr.bf16.mxu0 0
      %1359 = vmatpush1.bf16.msra.mxu0 %v1202
      %1360 = vmatprep.subr.bf16.mxu0 0
      %1361 = vmatpush1.bf16.msra.mxu0 %v1201
      %1362 = vmatprep.subr.bf16.mxu0 0
      %1363 = vmatpush1.bf16.msra.mxu0 %v1200
      %1364 = vmatprep.subr.bf16.mxu0 0
      %1365 = vmatpush1.bf16.msra.mxu0 %v1199
      %1366 = vmatprep.subr.bf16.mxu0 0
      %1367 = vmatpush1.bf16.msra.mxu0 %v1198
      %1368 = vmatprep.subr.bf16.mxu0 0
      %1369 = vmatpush1.bf16.msra.mxu0 %v1197
      %1370 = vmatprep.subr.bf16.mxu0 0
      %1371 = vmatpush2.bf16.msra.mxu0 %v1212
      %1372 = vmatprep.subr.bf16.mxu0 0
      %1373 = vmatpush2.bf16.msra.mxu0 %v1211
      %1374 = vmatprep.subr.bf16.mxu0 0
      %1375 = vmatpush2.bf16.msra.mxu0 %v1210
      %1376 = vmatprep.subr.bf16.mxu0 0
      %1377 = vmatpush2.bf16.msra.mxu0 %v1209
      %1378 = vmatprep.subr.bf16.mxu0 0
      %1379 = vmatpush2.bf16.msra.mxu0 %v1208
      %1380 = vmatprep.subr.bf16.mxu0 0
      %1381 = vmatpush2.bf16.msra.mxu0 %v1207
      %1382 = vmatprep.subr.bf16.mxu0 0
      %1383 = vmatpush2.bf16.msra.mxu0 %v1206
      %1384 = vmatprep.subr.bf16.mxu0 0
      %1385 = vmatpush2.bf16.msra.mxu0 %v1205
      %1386 = vmatprep.mubr.bf16.mxu0 %v774
      %1387 = vmatmul.mubr.bf16.gmra.mxu0 %v773
      %v1388 = vpop.f32.mrf.mxu0
      %v1389 = vadd.f32 %v419, %v1388
      %v1390 = vpop.f32.mrf.mxu0
      %v1391 = vpop.f32.mrf.mxu0
      %v1392 = vadd.f32 %v419, %v1391
      %v1393 = vpop.f32.mrf.mxu0
      %1394 = vmatprep.mubr.bf16.mxu0 %v781
      %1395 = vmatmul.mubr.bf16.gmra.mxu0 %v780
      %v1396 = vpop.f32.mrf.mxu0
      %v1397 = vadd.f32 %v419, %v1396
      %v1398 = vpop.f32.mrf.mxu0
      %v1399 = vpop.f32.mrf.mxu0
      %v1400 = vadd.f32 %v419, %v1399
      %v1401 = vpop.f32.mrf.mxu0
      %1402 = vmatprep.mubr.bf16.mxu0 %v788
      %1403 = vmatmul.mubr.bf16.gmra.mxu0 %v787
      %v1404 = vpop.f32.mrf.mxu0
      %v1405 = vadd.f32 %v419, %v1404
      %v1406 = vpop.f32.mrf.mxu0
      %v1407 = vpop.f32.mrf.mxu0
      %v1408 = vadd.f32 %v419, %v1407
      %v1409 = vpop.f32.mrf.mxu0
      %1410 = vmatprep.mubr.bf16.mxu0 %v795
      %1411 = vmatmul.mubr.bf16.gmra.mxu0 %v794
      %v1412 = vpop.f32.mrf.mxu0
      %v1413 = vadd.f32 %v419, %v1412
      %v1414 = vpop.f32.mrf.mxu0
      %v1415 = vpop.f32.mrf.mxu0
      %v1416 = vadd.f32 %v419, %v1415
      %v1417 = vpop.f32.mrf.mxu0
      %1418 = vmatprep.mubr.bf16.mxu0 %v802
      %1419 = vmatmul.mubr.bf16.gmra.mxu0 %v801
      %v1420 = vpop.f32.mrf.mxu0
      %v1421 = vadd.f32 %v419, %v1420
      %v1422 = vpop.f32.mrf.mxu0
      %v1423 = vpop.f32.mrf.mxu0
      %v1424 = vadd.f32 %v419, %v1423
      %v1425 = vpop.f32.mrf.mxu0
      %1426 = vmatprep.mubr.bf16.mxu0 %v809
      %1427 = vmatmul.mubr.bf16.gmra.mxu0 %v808
      %v1428 = vpop.f32.mrf.mxu0
      %v1429 = vadd.f32 %v419, %v1428
      %v1430 = vpop.f32.mrf.mxu0
      %v1431 = vpop.f32.mrf.mxu0
      %v1432 = vadd.f32 %v419, %v1431
      %v1433 = vpop.f32.mrf.mxu0
      %1434 = vmatprep.mubr.bf16.mxu0 %v816
      %1435 = vmatmul.mubr.bf16.gmra.mxu0 %v815
      %v1436 = vpop.f32.mrf.mxu0
      %v1437 = vadd.f32 %v419, %v1436
      %v1438 = vpop.f32.mrf.mxu0
      %v1439 = vpop.f32.mrf.mxu0
      %v1440 = vadd.f32 %v419, %v1439
      %v1441 = vpop.f32.mrf.mxu0
      %1442 = vmatprep.mubr.bf16.mxu0 %v823
      %1443 = vmatmul.mubr.bf16.gmra.mxu0 %v822
      %v1444 = vpop.f32.mrf.mxu0
      %v1445 = vadd.f32 %v419, %v1444
      %v1446 = vpop.f32.mrf.mxu0
      %v1447 = vpop.f32.mrf.mxu0
      %v1448 = vadd.f32 %v419, %v1447
      %v1449 = vpop.f32.mrf.mxu0
      %1450 = vmatprep.mubr.bf16.mxu0 %v830
      %1451 = vmatmul.mubr.bf16.gmra.mxu0 %v829
      %v1452 = vpop.f32.mrf.mxu0
      %v1453 = vadd.f32 %v419, %v1452
      %v1454 = vpop.f32.mrf.mxu0
      %v1455 = vpop.f32.mrf.mxu0
      %v1456 = vadd.f32 %v419, %v1455
      %v1457 = vpop.f32.mrf.mxu0
      %1458 = vmatprep.mubr.bf16.mxu0 %v837
      %1459 = vmatmul.mubr.bf16.gmra.mxu0 %v836
      %v1460 = vpop.f32.mrf.mxu0
      %v1461 = vadd.f32 %v419, %v1460
      %v1462 = vpop.f32.mrf.mxu0
      %v1463 = vpop.f32.mrf.mxu0
      %v1464 = vadd.f32 %v419, %v1463
      %v1465 = vpop.f32.mrf.mxu0
      %1466 = vmatprep.mubr.bf16.mxu0 %v844
      %1467 = vmatmul.mubr.bf16.gmra.mxu0 %v843
      %v1468 = vpop.f32.mrf.mxu0
      %v1469 = vadd.f32 %v419, %v1468
      %v1470 = vpop.f32.mrf.mxu0
      %v1471 = vpop.f32.mrf.mxu0
      %v1472 = vadd.f32 %v419, %v1471
      %v1473 = vpop.f32.mrf.mxu0
      %1474 = vmatprep.mubr.bf16.mxu0 %v851
      %1475 = vmatmul.mubr.bf16.gmra.mxu0 %v850
      %v1476 = vpop.f32.mrf.mxu0
      %v1477 = vadd.f32 %v419, %v1476
      %v1478 = vpop.f32.mrf.mxu0
      %v1479 = vpop.f32.mrf.mxu0
      %v1480 = vadd.f32 %v419, %v1479
      %v1481 = vpop.f32.mrf.mxu0
      %1482 = vmatprep.mubr.bf16.mxu0 %v858
      %1483 = vmatmul.mubr.bf16.gmra.mxu0 %v857
      %v1484 = vpop.f32.mrf.mxu0
      %v1485 = vadd.f32 %v419, %v1484
      %v1486 = vpop.f32.mrf.mxu0
      %v1487 = vpop.f32.mrf.mxu0
      %v1488 = vadd.f32 %v419, %v1487
      %v1489 = vpop.f32.mrf.mxu0
      %1490 = vmatprep.mubr.bf16.mxu0 %v865
      %1491 = vmatmul.mubr.bf16.gmra.mxu0 %v864
      %v1492 = vpop.f32.mrf.mxu0
      %v1493 = vadd.f32 %v419, %v1492
      %v1494 = vpop.f32.mrf.mxu0
      %v1495 = vpop.f32.mrf.mxu0
      %v1496 = vadd.f32 %v419, %v1495
      %v1497 = vpop.f32.mrf.mxu0
      %1498 = vmatprep.mubr.bf16.mxu0 %v872
      %1499 = vmatmul.mubr.bf16.gmra.mxu0 %v871
      %v1500 = vpop.f32.mrf.mxu0
      %v1501 = vadd.f32 %v419, %v1500
      %v1502 = vpop.f32.mrf.mxu0
      %v1503 = vpop.f32.mrf.mxu0
      %v1504 = vadd.f32 %v419, %v1503
      %v1505 = vpop.f32.mrf.mxu0
      %1506 = vmatprep.mubr.bf16.mxu0 %v879
      %1507 = vmatmul.mubr.bf16.gmra.mxu0 %v878
      %v1508 = vpop.f32.mrf.mxu0
      %v1509 = vadd.f32 %v419, %v1508
      %v1510 = vpop.f32.mrf.mxu0
      %v1511 = vpop.f32.mrf.mxu0
      %v1512 = vadd.f32 %v419, %v1511
      %v1513 = vpop.f32.mrf.mxu0
      %1514 = vdwg.mxu0
      %1515 = vmatprep.subr.bf16.mxu0 0
      %1516 = vmatpush1.bf16.msra.mxu0 %v1220
      %1517 = vmatprep.subr.bf16.mxu0 0
      %1518 = vmatpush1.bf16.msra.mxu0 %v1219
      %1519 = vmatprep.subr.bf16.mxu0 0
      %1520 = vmatpush1.bf16.msra.mxu0 %v1218
      %1521 = vmatprep.subr.bf16.mxu0 0
      %1522 = vmatpush1.bf16.msra.mxu0 %v1217
      %1523 = vmatprep.subr.bf16.mxu0 0
      %1524 = vmatpush1.bf16.msra.mxu0 %v1216
      %1525 = vmatprep.subr.bf16.mxu0 0
      %1526 = vmatpush1.bf16.msra.mxu0 %v1215
      %1527 = vmatprep.subr.bf16.mxu0 0
      %1528 = vmatpush1.bf16.msra.mxu0 %v1214
      %1529 = vmatprep.subr.bf16.mxu0 0
      %1530 = vmatpush1.bf16.msra.mxu0 %v1213
      %1531 = vmatprep.subr.bf16.mxu0 0
      %1532 = vmatpush2.bf16.msra.mxu0 %v1228
      %1533 = vmatprep.subr.bf16.mxu0 0
      %1534 = vmatpush2.bf16.msra.mxu0 %v1227
      %1535 = vmatprep.subr.bf16.mxu0 0
      %1536 = vmatpush2.bf16.msra.mxu0 %v1226
      %1537 = vmatprep.subr.bf16.mxu0 0
      %1538 = vmatpush2.bf16.msra.mxu0 %v1225
      %1539 = vmatprep.subr.bf16.mxu0 0
      %1540 = vmatpush2.bf16.msra.mxu0 %v1224
      %1541 = vmatprep.subr.bf16.mxu0 0
      %1542 = vmatpush2.bf16.msra.mxu0 %v1223
      %1543 = vmatprep.subr.bf16.mxu0 0
      %1544 = vmatpush2.bf16.msra.mxu0 %v1222
      %1545 = vmatprep.subr.bf16.mxu0 0
      %1546 = vmatpush2.bf16.msra.mxu0 %v1221
      %1547 = vmatprep.mubr.bf16.mxu0 %v776
      %1548 = vmatmul.mubr.bf16.gmra.mxu0 %v775
      %v1549 = vpop.f32.mrf.mxu0
      %v1550 = vadd.f32 %v1389, %v1549
      %v1551 = vpop.f32.mrf.mxu0
      %v1552 = vpop.f32.mrf.mxu0
      %v1553 = vadd.f32 %v1392, %v1552
      %v1554 = vpop.f32.mrf.mxu0
      %1555 = vmatprep.mubr.bf16.mxu0 %v783
      %1556 = vmatmul.mubr.bf16.gmra.mxu0 %v782
      %v1557 = vpop.f32.mrf.mxu0
      %v1558 = vadd.f32 %v1397, %v1557
      %v1559 = vpop.f32.mrf.mxu0
      %v1560 = vpop.f32.mrf.mxu0
      %v1561 = vadd.f32 %v1400, %v1560
      %v1562 = vpop.f32.mrf.mxu0
      %1563 = vmatprep.mubr.bf16.mxu0 %v790
      %1564 = vmatmul.mubr.bf16.gmra.mxu0 %v789
      %v1565 = vpop.f32.mrf.mxu0
      %v1566 = vadd.f32 %v1405, %v1565
      %v1567 = vpop.f32.mrf.mxu0
      %v1568 = vpop.f32.mrf.mxu0
      %v1569 = vadd.f32 %v1408, %v1568
      %v1570 = vpop.f32.mrf.mxu0
      %1571 = vmatprep.mubr.bf16.mxu0 %v797
      %1572 = vmatmul.mubr.bf16.gmra.mxu0 %v796
      %v1573 = vpop.f32.mrf.mxu0
      %v1574 = vadd.f32 %v1413, %v1573
      %v1575 = vpop.f32.mrf.mxu0
      %v1576 = vpop.f32.mrf.mxu0
      %v1577 = vadd.f32 %v1416, %v1576
      %v1578 = vpop.f32.mrf.mxu0
      %1579 = vmatprep.mubr.bf16.mxu0 %v804
      %1580 = vmatmul.mubr.bf16.gmra.mxu0 %v803
      %v1581 = vpop.f32.mrf.mxu0
      %v1582 = vadd.f32 %v1421, %v1581
      %v1583 = vpop.f32.mrf.mxu0
      %v1584 = vpop.f32.mrf.mxu0
      %v1585 = vadd.f32 %v1424, %v1584
      %v1586 = vpop.f32.mrf.mxu0
      %1587 = vmatprep.mubr.bf16.mxu0 %v811
      %1588 = vmatmul.mubr.bf16.gmra.mxu0 %v810
      %v1589 = vpop.f32.mrf.mxu0
      %v1590 = vadd.f32 %v1429, %v1589
      %v1591 = vpop.f32.mrf.mxu0
      %v1592 = vpop.f32.mrf.mxu0
      %v1593 = vadd.f32 %v1432, %v1592
      %v1594 = vpop.f32.mrf.mxu0
      %1595 = vmatprep.mubr.bf16.mxu0 %v818
      %1596 = vmatmul.mubr.bf16.gmra.mxu0 %v817
      %v1597 = vpop.f32.mrf.mxu0
      %v1598 = vadd.f32 %v1437, %v1597
      %v1599 = vpop.f32.mrf.mxu0
      %v1600 = vpop.f32.mrf.mxu0
      %v1601 = vadd.f32 %v1440, %v1600
      %v1602 = vpop.f32.mrf.mxu0
      %1603 = vmatprep.mubr.bf16.mxu0 %v825
      %1604 = vmatmul.mubr.bf16.gmra.mxu0 %v824
      %v1605 = vpop.f32.mrf.mxu0
      %v1606 = vadd.f32 %v1445, %v1605
      %v1607 = vpop.f32.mrf.mxu0
      %v1608 = vpop.f32.mrf.mxu0
      %v1609 = vadd.f32 %v1448, %v1608
      %v1610 = vpop.f32.mrf.mxu0
      %1611 = vmatprep.mubr.bf16.mxu0 %v832
      %1612 = vmatmul.mubr.bf16.gmra.mxu0 %v831
      %v1613 = vpop.f32.mrf.mxu0
      %v1614 = vadd.f32 %v1453, %v1613
      %v1615 = vpop.f32.mrf.mxu0
      %v1616 = vpop.f32.mrf.mxu0
      %v1617 = vadd.f32 %v1456, %v1616
      %v1618 = vpop.f32.mrf.mxu0
      %1619 = vmatprep.mubr.bf16.mxu0 %v839
      %1620 = vmatmul.mubr.bf16.gmra.mxu0 %v838
      %v1621 = vpop.f32.mrf.mxu0
      %v1622 = vadd.f32 %v1461, %v1621
      %v1623 = vpop.f32.mrf.mxu0
      %v1624 = vpop.f32.mrf.mxu0
      %v1625 = vadd.f32 %v1464, %v1624
      %v1626 = vpop.f32.mrf.mxu0
      %1627 = vmatprep.mubr.bf16.mxu0 %v846
      %1628 = vmatmul.mubr.bf16.gmra.mxu0 %v845
      %v1629 = vpop.f32.mrf.mxu0
      %v1630 = vadd.f32 %v1469, %v1629
      %v1631 = vpop.f32.mrf.mxu0
      %v1632 = vpop.f32.mrf.mxu0
      %v1633 = vadd.f32 %v1472, %v1632
      %v1634 = vpop.f32.mrf.mxu0
      %1635 = vmatprep.mubr.bf16.mxu0 %v853
      %1636 = vmatmul.mubr.bf16.gmra.mxu0 %v852
      %v1637 = vpop.f32.mrf.mxu0
      %v1638 = vadd.f32 %v1477, %v1637
      %v1639 = vpop.f32.mrf.mxu0
      %v1640 = vpop.f32.mrf.mxu0
      %v1641 = vadd.f32 %v1480, %v1640
      %v1642 = vpop.f32.mrf.mxu0
      %1643 = vmatprep.mubr.bf16.mxu0 %v860
      %1644 = vmatmul.mubr.bf16.gmra.mxu0 %v859
      %v1645 = vpop.f32.mrf.mxu0
      %v1646 = vadd.f32 %v1485, %v1645
      %v1647 = vpop.f32.mrf.mxu0
      %v1648 = vpop.f32.mrf.mxu0
      %v1649 = vadd.f32 %v1488, %v1648
      %v1650 = vpop.f32.mrf.mxu0
      %1651 = vmatprep.mubr.bf16.mxu0 %v867
      %1652 = vmatmul.mubr.bf16.gmra.mxu0 %v866
      %v1653 = vpop.f32.mrf.mxu0
      %v1654 = vadd.f32 %v1493, %v1653
      %v1655 = vpop.f32.mrf.mxu0
      %v1656 = vpop.f32.mrf.mxu0
      %v1657 = vadd.f32 %v1496, %v1656
      %v1658 = vpop.f32.mrf.mxu0
      %1659 = vmatprep.mubr.bf16.mxu0 %v874
      %1660 = vmatmul.mubr.bf16.gmra.mxu0 %v873
      %v1661 = vpop.f32.mrf.mxu0
      %v1662 = vadd.f32 %v1501, %v1661
      %v1663 = vpop.f32.mrf.mxu0
      %v1664 = vpop.f32.mrf.mxu0
      %v1665 = vadd.f32 %v1504, %v1664
      %v1666 = vpop.f32.mrf.mxu0
      %1667 = vmatprep.mubr.bf16.mxu0 %v881
      %1668 = vmatmul.mubr.bf16.gmra.mxu0 %v880
      %v1669 = vpop.f32.mrf.mxu0
      %v1670 = vadd.f32 %v1509, %v1669
      %v1671 = vpop.f32.mrf.mxu0
      %v1672 = vpop.f32.mrf.mxu0
      %v1673 = vadd.f32 %v1512, %v1672
      %v1674 = vpop.f32.mrf.mxu0
      %1675 = vdwg.mxu0
      %1676 = vmatprep.subr.bf16.mxu0 0
      %1677 = vmatpush1.bf16.msra.mxu0 %v1236
      %1678 = vmatprep.subr.bf16.mxu0 0
      %1679 = vmatpush1.bf16.msra.mxu0 %v1235
      %1680 = vmatprep.subr.bf16.mxu0 0
      %1681 = vmatpush1.bf16.msra.mxu0 %v1234
      %1682 = vmatprep.subr.bf16.mxu0 0
      %1683 = vmatpush1.bf16.msra.mxu0 %v1233
      %1684 = vmatprep.subr.bf16.mxu0 0
      %1685 = vmatpush1.bf16.msra.mxu0 %v1232
      %1686 = vmatprep.subr.bf16.mxu0 0
      %1687 = vmatpush1.bf16.msra.mxu0 %v1231
      %1688 = vmatprep.subr.bf16.mxu0 0
      %1689 = vmatpush1.bf16.msra.mxu0 %v1230
      %1690 = vmatprep.subr.bf16.mxu0 0
      %1691 = vmatpush1.bf16.msra.mxu0 %v1229
      %1692 = vmatprep.subr.bf16.mxu0 0
      %1693 = vmatpush2.bf16.msra.mxu0 %v1244
      %1694 = vmatprep.subr.bf16.mxu0 0
      %1695 = vmatpush2.bf16.msra.mxu0 %v1243
      %1696 = vmatprep.subr.bf16.mxu0 0
      %1697 = vmatpush2.bf16.msra.mxu0 %v1242
      %1698 = vmatprep.subr.bf16.mxu0 0
      %1699 = vmatpush2.bf16.msra.mxu0 %v1241
      %1700 = vmatprep.subr.bf16.mxu0 0
      %1701 = vmatpush2.bf16.msra.mxu0 %v1240
      %1702 = vmatprep.subr.bf16.mxu0 0
      %1703 = vmatpush2.bf16.msra.mxu0 %v1239
      %1704 = vmatprep.subr.bf16.mxu0 0
      %1705 = vmatpush2.bf16.msra.mxu0 %v1238
      %1706 = vmatprep.subr.bf16.mxu0 0
      %1707 = vmatpush2.bf16.msra.mxu0 %v1237
      %1708 = vmatprep.mubr.bf16.mxu0 %v778
      %1709 = vmatmul.mubr.bf16.gmra.mxu0 %v777
      %v1710 = vpop.f32.mrf.mxu0
      %v1711 = vadd.f32 %v1550, %v1710
      %v1712 = vpop.f32.mrf.mxu0
      %v1713 = vpop.f32.mrf.mxu0
      %v1714 = vadd.f32 %v1553, %v1713
      %v1715 = vpop.f32.mrf.mxu0
      %1716 = vmatprep.mubr.bf16.mxu0 %v785
      %1717 = vmatmul.mubr.bf16.gmra.mxu0 %v784
      %v1718 = vpop.f32.mrf.mxu0
      %v1719 = vadd.f32 %v1558, %v1718
      %v1720 = vpop.f32.mrf.mxu0
      %v1721 = vpop.f32.mrf.mxu0
      %v1722 = vadd.f32 %v1561, %v1721
      %v1723 = vpop.f32.mrf.mxu0
      %1724 = vmatprep.mubr.bf16.mxu0 %v792
      %1725 = vmatmul.mubr.bf16.gmra.mxu0 %v791
      %v1726 = vpop.f32.mrf.mxu0
      %v1727 = vadd.f32 %v1566, %v1726
      %v1728 = vpop.f32.mrf.mxu0
      %v1729 = vpop.f32.mrf.mxu0
      %v1730 = vadd.f32 %v1569, %v1729
      %v1731 = vpop.f32.mrf.mxu0
      %1732 = vmatprep.mubr.bf16.mxu0 %v799
      %1733 = vmatmul.mubr.bf16.gmra.mxu0 %v798
      %v1734 = vpop.f32.mrf.mxu0
      %v1735 = vadd.f32 %v1574, %v1734
      %v1736 = vpop.f32.mrf.mxu0
      %v1737 = vpop.f32.mrf.mxu0
      %v1738 = vadd.f32 %v1577, %v1737
      %v1739 = vpop.f32.mrf.mxu0
      %1740 = vmatprep.mubr.bf16.mxu0 %v806
      %1741 = vmatmul.mubr.bf16.gmra.mxu0 %v805
      %v1742 = vpop.f32.mrf.mxu0
      %v1743 = vadd.f32 %v1582, %v1742
      %v1744 = vpop.f32.mrf.mxu0
      %v1745 = vpop.f32.mrf.mxu0
      %v1746 = vadd.f32 %v1585, %v1745
      %v1747 = vpop.f32.mrf.mxu0
      %1748 = vmatprep.mubr.bf16.mxu0 %v813
      %1749 = vmatmul.mubr.bf16.gmra.mxu0 %v812
      %v1750 = vpop.f32.mrf.mxu0
      %v1751 = vadd.f32 %v1590, %v1750
      %v1752 = vpop.f32.mrf.mxu0
      %v1753 = vpop.f32.mrf.mxu0
      %v1754 = vadd.f32 %v1593, %v1753
      %v1755 = vpop.f32.mrf.mxu0
      %1756 = vmatprep.mubr.bf16.mxu0 %v820
      %1757 = vmatmul.mubr.bf16.gmra.mxu0 %v819
      %v1758 = vpop.f32.mrf.mxu0
      %v1759 = vadd.f32 %v1598, %v1758
      %v1760 = vpop.f32.mrf.mxu0
      %v1761 = vpop.f32.mrf.mxu0
      %v1762 = vadd.f32 %v1601, %v1761
      %v1763 = vpop.f32.mrf.mxu0
      %1764 = vmatprep.mubr.bf16.mxu0 %v827
      %1765 = vmatmul.mubr.bf16.gmra.mxu0 %v826
      %v1766 = vpop.f32.mrf.mxu0
      %v1767 = vadd.f32 %v1606, %v1766
      %v1768 = vpop.f32.mrf.mxu0
      %v1769 = vpop.f32.mrf.mxu0
      %v1770 = vadd.f32 %v1609, %v1769
      %v1771 = vpop.f32.mrf.mxu0
      %1772 = vmatprep.mubr.bf16.mxu0 %v834
      %1773 = vmatmul.mubr.bf16.gmra.mxu0 %v833
      %v1774 = vpop.f32.mrf.mxu0
      %v1775 = vadd.f32 %v1614, %v1774
      %v1776 = vpop.f32.mrf.mxu0
      %v1777 = vpop.f32.mrf.mxu0
      %v1778 = vadd.f32 %v1617, %v1777
      %v1779 = vpop.f32.mrf.mxu0
      %1780 = vmatprep.mubr.bf16.mxu0 %v841
      %1781 = vmatmul.mubr.bf16.gmra.mxu0 %v840
      %v1782 = vpop.f32.mrf.mxu0
      %v1783 = vadd.f32 %v1622, %v1782
      %v1784 = vpop.f32.mrf.mxu0
      %v1785 = vpop.f32.mrf.mxu0
      %v1786 = vadd.f32 %v1625, %v1785
      %v1787 = vpop.f32.mrf.mxu0
      %1788 = vmatprep.mubr.bf16.mxu0 %v848
      %1789 = vmatmul.mubr.bf16.gmra.mxu0 %v847
      %v1790 = vpop.f32.mrf.mxu0
      %v1791 = vadd.f32 %v1630, %v1790
      %v1792 = vpop.f32.mrf.mxu0
      %v1793 = vpop.f32.mrf.mxu0
      %v1794 = vadd.f32 %v1633, %v1793
      %v1795 = vpop.f32.mrf.mxu0
      %1796 = vmatprep.mubr.bf16.mxu0 %v855
      %1797 = vmatmul.mubr.bf16.gmra.mxu0 %v854
      %v1798 = vpop.f32.mrf.mxu0
      %v1799 = vadd.f32 %v1638, %v1798
      %v1800 = vpop.f32.mrf.mxu0
      %v1801 = vpop.f32.mrf.mxu0
      %v1802 = vadd.f32 %v1641, %v1801
      %v1803 = vpop.f32.mrf.mxu0
      %1804 = vmatprep.mubr.bf16.mxu0 %v862
      %1805 = vmatmul.mubr.bf16.gmra.mxu0 %v861
      %v1806 = vpop.f32.mrf.mxu0
      %v1807 = vadd.f32 %v1646, %v1806
      %v1808 = vpop.f32.mrf.mxu0
      %v1809 = vpop.f32.mrf.mxu0
      %v1810 = vadd.f32 %v1649, %v1809
      %v1811 = vpop.f32.mrf.mxu0
      %1812 = vmatprep.mubr.bf16.mxu0 %v869
      %1813 = vmatmul.mubr.bf16.gmra.mxu0 %v868
      %v1814 = vpop.f32.mrf.mxu0
      %v1815 = vadd.f32 %v1654, %v1814
      %v1816 = vpop.f32.mrf.mxu0
      %v1817 = vpop.f32.mrf.mxu0
      %v1818 = vadd.f32 %v1657, %v1817
      %v1819 = vpop.f32.mrf.mxu0
      %1820 = vmatprep.mubr.bf16.mxu0 %v876
      %1821 = vmatmul.mubr.bf16.gmra.mxu0 %v875
      %v1822 = vpop.f32.mrf.mxu0
      %v1823 = vadd.f32 %v1662, %v1822
      %v1824 = vpop.f32.mrf.mxu0
      %v1825 = vpop.f32.mrf.mxu0
      %v1826 = vadd.f32 %v1665, %v1825
      %v1827 = vpop.f32.mrf.mxu0
      %1828 = vmatprep.mubr.bf16.mxu0 %v883
      %1829 = vmatmul.mubr.bf16.gmra.mxu0 %v882
      %v1830 = vpop.f32.mrf.mxu0
      %v1831 = vadd.f32 %v1670, %v1830
      %v1832 = vpop.f32.mrf.mxu0
      %v1833 = vpop.f32.mrf.mxu0
      %v1834 = vadd.f32 %v1673, %v1833
      %v1835 = vpop.f32.mrf.mxu0
      %1836 = vdwg.mxu0
      %1837 = vmatprep.subr.bf16.mxu0 0
      %1838 = vmatpush1.bf16.msra.mxu0 0
      %1839 = vmatprep.subr.bf16.mxu0 0
      %1840 = vmatpush1.bf16.msra.mxu0 0
      %1841 = vmatprep.subr.bf16.mxu0 0
      %1842 = vmatpush1.bf16.msra.mxu0 %v1250
      %1843 = vmatprep.subr.bf16.mxu0 0
      %1844 = vmatpush1.bf16.msra.mxu0 %v1249
      %1845 = vmatprep.subr.bf16.mxu0 0
      %1846 = vmatpush1.bf16.msra.mxu0 %v1248
      %1847 = vmatprep.subr.bf16.mxu0 0
      %1848 = vmatpush1.bf16.msra.mxu0 %v1247
      %1849 = vmatprep.subr.bf16.mxu0 0
      %1850 = vmatpush1.bf16.msra.mxu0 %v1246
      %1851 = vmatprep.subr.bf16.mxu0 0
      %1852 = vmatpush1.bf16.msra.mxu0 %v1245
      %1853 = vmatprep.subr.bf16.mxu0 0
      %1854 = vmatpush2.bf16.msra.mxu0 0
      %1855 = vmatprep.subr.bf16.mxu0 0
      %1856 = vmatpush2.bf16.msra.mxu0 0
      %1857 = vmatprep.subr.bf16.mxu0 0
      %1858 = vmatpush2.bf16.msra.mxu0 0
      %1859 = vmatprep.subr.bf16.mxu0 0
      %1860 = vmatpush2.bf16.msra.mxu0 0
      %1861 = vmatprep.subr.bf16.mxu0 0
      %1862 = vmatpush2.bf16.msra.mxu0 0
      %1863 = vmatprep.subr.bf16.mxu0 0
      %1864 = vmatpush2.bf16.msra.mxu0 0
      %1865 = vmatprep.subr.bf16.mxu0 0
      %1866 = vmatpush2.bf16.msra.mxu0 0
      %1867 = vmatprep.subr.bf16.mxu0 0
      %1868 = vmatpush2.bf16.msra.mxu0 0
      %1869 = vmatprep.mubr.bf16.mxu0 0
      %1870 = vmatmul.mubr.bf16.gmra.mxu0 %v1307
      %v1871 = vpop.f32.mrf.mxu0
      %v1872 = vadd.f32 %v1711, %v1871
      %v1873 = vpop.f32.mrf.mxu0
      %v1874 = vpop.f32.mrf.mxu0
      %v1875 = vadd.f32 %v1714, %v1874
      %v1876 = vpop.f32.mrf.mxu0
      %1877 = vmatprep.mubr.bf16.mxu0 0
      %1878 = vmatmul.mubr.bf16.gmra.mxu0 %v1310
      %v1879 = vpop.f32.mrf.mxu0
      %v1880 = vadd.f32 %v1719, %v1879
      %v1881 = vpop.f32.mrf.mxu0
      %v1882 = vpop.f32.mrf.mxu0
      %v1883 = vadd.f32 %v1722, %v1882
      %v1884 = vpop.f32.mrf.mxu0
      %1885 = vmatprep.mubr.bf16.mxu0 0
      %1886 = vmatmul.mubr.bf16.gmra.mxu0 %v1313
      %v1887 = vpop.f32.mrf.mxu0
      %v1888 = vadd.f32 %v1727, %v1887
      %v1889 = vpop.f32.mrf.mxu0
      %v1890 = vpop.f32.mrf.mxu0
      %v1891 = vadd.f32 %v1730, %v1890
      %v1892 = vpop.f32.mrf.mxu0
      %1893 = vmatprep.mubr.bf16.mxu0 0
      %1894 = vmatmul.mubr.bf16.gmra.mxu0 %v1316
      %v1895 = vpop.f32.mrf.mxu0
      %v1896 = vadd.f32 %v1735, %v1895
      %v1897 = vpop.f32.mrf.mxu0
      %v1898 = vpop.f32.mrf.mxu0
      %v1899 = vadd.f32 %v1738, %v1898
      %v1900 = vpop.f32.mrf.mxu0
      %1901 = vmatprep.mubr.bf16.mxu0 0
      %1902 = vmatmul.mubr.bf16.gmra.mxu0 %v1319
      %v1903 = vpop.f32.mrf.mxu0
      %v1904 = vadd.f32 %v1743, %v1903
      %v1905 = vpop.f32.mrf.mxu0
      %v1906 = vpop.f32.mrf.mxu0
      %v1907 = vadd.f32 %v1746, %v1906
      %v1908 = vpop.f32.mrf.mxu0
      %1909 = vmatprep.mubr.bf16.mxu0 0
      %1910 = vmatmul.mubr.bf16.gmra.mxu0 %v1322
      %v1911 = vpop.f32.mrf.mxu0
      %v1912 = vadd.f32 %v1751, %v1911
      %v1913 = vpop.f32.mrf.mxu0
      %v1914 = vpop.f32.mrf.mxu0
      %v1915 = vadd.f32 %v1754, %v1914
      %v1916 = vpop.f32.mrf.mxu0
      %1917 = vmatprep.mubr.bf16.mxu0 0
      %1918 = vmatmul.mubr.bf16.gmra.mxu0 %v1325
      %v1919 = vpop.f32.mrf.mxu0
      %v1920 = vadd.f32 %v1759, %v1919
      %v1921 = vpop.f32.mrf.mxu0
      %v1922 = vpop.f32.mrf.mxu0
      %v1923 = vadd.f32 %v1762, %v1922
      %v1924 = vpop.f32.mrf.mxu0
      %1925 = vmatprep.mubr.bf16.mxu0 0
      %1926 = vmatmul.mubr.bf16.gmra.mxu0 %v1328
      %v1927 = vpop.f32.mrf.mxu0
      %v1928 = vadd.f32 %v1767, %v1927
      %v1929 = vpop.f32.mrf.mxu0
      %v1930 = vpop.f32.mrf.mxu0
      %v1931 = vadd.f32 %v1770, %v1930
      %v1932 = vpop.f32.mrf.mxu0
      %1933 = vmatprep.mubr.bf16.mxu0 0
      %1934 = vmatmul.mubr.bf16.gmra.mxu0 %v1331
      %v1935 = vpop.f32.mrf.mxu0
      %v1936 = vadd.f32 %v1775, %v1935
      %v1937 = vpop.f32.mrf.mxu0
      %v1938 = vpop.f32.mrf.mxu0
      %v1939 = vadd.f32 %v1778, %v1938
      %v1940 = vpop.f32.mrf.mxu0
      %1941 = vmatprep.mubr.bf16.mxu0 0
      %1942 = vmatmul.mubr.bf16.gmra.mxu0 %v1334
      %v1943 = vpop.f32.mrf.mxu0
      %v1944 = vadd.f32 %v1783, %v1943
      %v1945 = vpop.f32.mrf.mxu0
      %v1946 = vpop.f32.mrf.mxu0
      %v1947 = vadd.f32 %v1786, %v1946
      %v1948 = vpop.f32.mrf.mxu0
      %1949 = vmatprep.mubr.bf16.mxu0 0
      %1950 = vmatmul.mubr.bf16.gmra.mxu0 %v1337
      %v1951 = vpop.f32.mrf.mxu0
      %v1952 = vadd.f32 %v1791, %v1951
      %v1953 = vpop.f32.mrf.mxu0
      %v1954 = vpop.f32.mrf.mxu0
      %v1955 = vadd.f32 %v1794, %v1954
      %v1956 = vpop.f32.mrf.mxu0
      %1957 = vmatprep.mubr.bf16.mxu0 0
      %1958 = vmatmul.mubr.bf16.gmra.mxu0 %v1340
      %v1959 = vpop.f32.mrf.mxu0
      %v1960 = vadd.f32 %v1799, %v1959
      %v1961 = vpop.f32.mrf.mxu0
      %v1962 = vpop.f32.mrf.mxu0
      %v1963 = vadd.f32 %v1802, %v1962
      %v1964 = vpop.f32.mrf.mxu0
      %1965 = vmatprep.mubr.bf16.mxu0 0
      %1966 = vmatmul.mubr.bf16.gmra.mxu0 %v1343
      %v1967 = vpop.f32.mrf.mxu0
      %v1968 = vadd.f32 %v1807, %v1967
      %v1969 = vpop.f32.mrf.mxu0
      %v1970 = vpop.f32.mrf.mxu0
      %v1971 = vadd.f32 %v1810, %v1970
      %v1972 = vpop.f32.mrf.mxu0
      %1973 = vmatprep.mubr.bf16.mxu0 0
      %1974 = vmatmul.mubr.bf16.gmra.mxu0 %v1346
      %v1975 = vpop.f32.mrf.mxu0
      %v1976 = vadd.f32 %v1815, %v1975
      %v1977 = vpop.f32.mrf.mxu0
      %v1978 = vpop.f32.mrf.mxu0
      %v1979 = vadd.f32 %v1818, %v1978
      %v1980 = vpop.f32.mrf.mxu0
      %1981 = vmatprep.mubr.bf16.mxu0 0
      %1982 = vmatmul.mubr.bf16.gmra.mxu0 %v1349
      %v1983 = vpop.f32.mrf.mxu0
      %v1984 = vadd.f32 %v1823, %v1983
      %v1985 = vpop.f32.mrf.mxu0
      %v1986 = vpop.f32.mrf.mxu0
      %v1987 = vadd.f32 %v1826, %v1986
      %v1988 = vpop.f32.mrf.mxu0
      %1989 = vmatprep.mubr.bf16.mxu0 0
      %1990 = vmatmul.mubr.bf16.gmra.mxu0 %v1352
      %v1991 = vpop.f32.mrf.mxu0
      %v1992 = vadd.f32 %v1831, %v1991
      %v1993 = vpop.f32.mrf.mxu0
      %v1994 = vpop.f32.mrf.mxu0
      %v1995 = vadd.f32 %v1834, %v1994
      %v1996 = vpop.f32.mrf.mxu0
      %1997 = vdwg.mxu0
      %v1998 = vmax.f32 %v1872, 0.0
      %v1999 = vmax.f32 %v1875, 0.0
      %v2000 = vmax.f32 %v1880, 0.0
      %v2001 = vmax.f32 %v1883, 0.0
      %v2002 = vmax.f32 %v1888, 0.0
      %v2003 = vmax.f32 %v1891, 0.0
      %v2004 = vmax.f32 %v1896, 0.0
      %v2005 = vmax.f32 %v1899, 0.0
      %v2006 = vmax.f32 %v1904, 0.0
      %v2007 = vmax.f32 %v1907, 0.0
      %v2008 = vmax.f32 %v1912, 0.0
      %v2009 = vmax.f32 %v1915, 0.0
      %v2010 = vmax.f32 %v1920, 0.0
      %v2011 = vmax.f32 %v1923, 0.0
      %v2012 = vmax.f32 %v1928, 0.0
      %v2013 = vmax.f32 %v1931, 0.0
      %v2014 = vmax.f32 %v1936, 0.0
      %v2015 = vmax.f32 %v1939, 0.0
      %v2016 = vmax.f32 %v1944, 0.0
      %v2017 = vmax.f32 %v1947, 0.0
      %v2018 = vmax.f32 %v1952, 0.0
      %v2019 = vmax.f32 %v1955, 0.0
      %v2020 = vmax.f32 %v1960, 0.0
      %v2021 = vmax.f32 %v1963, 0.0
      %v2022 = vmax.f32 %v1968, 0.0
      %v2023 = vmax.f32 %v1971, 0.0
      %v2024 = vmax.f32 %v1976, 0.0
      %v2025 = vmax.f32 %v1979, 0.0
      %v2026 = vmax.f32 %v1984, 0.0
      %v2027 = vmax.f32 %v1987, 0.0
      %v2028 = vmax.f32 %v1992, 0.0
      %v2029 = vmax.f32 %v1995, 0.0
      %2030 = vst [vmem:[%s175] sm:$0xff] %v1998
      %2031 = vst [vmem:[%s175 + $0x8] sm:$0xff] %v1999
      %2032 = vst [vmem:[%s175 + $0x10] sm:$0xff] %v2000
      %2033 = vst [vmem:[%s175 + $0x18] sm:$0xff] %v2001
      %2034 = vst [vmem:[%s175 + $0x20] sm:$0xff] %v2002
      %2035 = vst [vmem:[%s175 + $0x28] sm:$0xff] %v2003
      %2036 = vst [vmem:[%s175 + $0x30] sm:$0xff] %v2004
      %2037 = vst [vmem:[%s175 + $0x38] sm:$0xff] %v2005
      %2038 = vst [vmem:[%s175 + $0x40] sm:$0xff] %v2006
      %2039 = vst [vmem:[%s175 + $0x48] sm:$0xff] %v2007
      %2040 = vst [vmem:[%s175 + $0x50] sm:$0xff] %v2008
      %2041 = vst [vmem:[%s175 + $0x58] sm:$0xff] %v2009
      %2042 = vst [vmem:[%s175 + $0x60] sm:$0xff] %v2010
      %2043 = vst [vmem:[%s175 + $0x68] sm:$0xff] %v2011
      %2044 = vst [vmem:[%s175 + $0x70] sm:$0xff] %v2012
      %2045 = vst [vmem:[%s175 + $0x78] sm:$0xff] %v2013
      %2046 = vst [vmem:[%s175 + $0x80] sm:$0xff] %v2014
      %2047 = vst [vmem:[%s175 + $0x88] sm:$0xff] %v2015
      %2048 = vst [vmem:[%s175 + $0x90] sm:$0xff] %v2016
      %2049 = vst [vmem:[%s175 + $0x98] sm:$0xff] %v2017
      %2050 = vst [vmem:[%s175 + $0xa0] sm:$0xff] %v2018
      %2051 = vst [vmem:[%s175 + $0xa8] sm:$0xff] %v2019
      %2052 = vst [vmem:[%s175 + $0xb0] sm:$0xff] %v2020
      %2053 = vst [vmem:[%s175 + $0xb8] sm:$0xff] %v2021
      %2054 = vst [vmem:[%s175 + $0xc0] sm:$0xff] %v2022
      %2055 = vst [vmem:[%s175 + $0xc8] sm:$0xff] %v2023
      %2056 = vst [vmem:[%s175 + $0xd0] sm:$0xff] %v2024
      %2057 = vst [vmem:[%s175 + $0xd8] sm:$0xff] %v2025
      %2058 = vst [vmem:[%s175 + $0xe0] sm:$0xff] %v2026
      %2059 = vst [vmem:[%s175 + $0xe8] sm:$0xff] %v2027
      %2060 = vst [vmem:[%s175 + $0xf0] sm:$0xff] %v2028
      %2061 = vst [vmem:[%s175 + $0xf8] sm:$0xff] %v2029
      %s2062 = smul.u32 32, %s14
      %p2063 = scmp.lt.s32.totalorder %s2062, 63
      %s2064 = scalar_select %p2063, %s2062, 63
      %s2065 = smul.addr %s2064, 8
      %s2066 = scalar_lea.vmem %s3, %s2065
      // Predicated region
      $region33: #{emotion_net.7} parent=31 // pred_check
        %p2067 = pneg %p100
      $region34: #{emotion_net.7} parent=31 // pred_check_branch
        %2069 = sbr.rel (%p2067) target = $region36
      $region35: #{emotion_net.7} parent=31 // pred_region
        %s2070 = smul.u32 32, %s14
      $region36: #{emotion_net.7} parent=31 // pred_fallthru
        _
    $region32: #{emotion_net.7} parent=5 // pred_fallthru
      _
    %p2071 = scmp.le.s32.totalorder 2, %s9
    // Predicated region
    $region37: #{emotion_net.7} parent=5 // pred_check
      %p2072 = pneg %p2071
    $region38: #{emotion_net.7} parent=5 // pred_check_branch
      %2074 = sbr.rel (%p2072) target = $region40
    $region39: #{emotion_net.7} parent=5 // pred_region
      %s2075 = ssub.s32 %s9, 2
      // Predicated region
      $region41: #{emotion_net.7} parent=39 // pred_check
        %p2076 = pneg %p106
      $region42: #{emotion_net.7} parent=39 // pred_check_branch
        %2078 = sbr.rel (%p2076) target = $region44
      $region43: #{emotion_net.7} parent=39 // pred_region
        %s2079 = smul.u32 32, %s15
        %p2080 = scmp.lt.s32.totalorder %s2079, 63
        %s2081 = scalar_select %p2080, %s2079, 63
        %s2082 = smul.addr %s2081, 8
        %s2083 = scalar_lea.vmem %s3, %s2082
      $region44: #{emotion_net.7} parent=39 // pred_fallthru
        _
    $region40: #{emotion_net.7} parent=5 // pred_fallthru
      _
  $region6: #{emotion_net.7} parent=0 // loop_footer
    %s13 = sadd.s32 1, %s9
  $region7: #{emotion_net.7} parent=0 // loop_footer_branch
    %8 = sbr.rel target = $region3
  $region8: #{emotion_net.7} parent=0 // loop_exit
    _

// kernel: emotion_net.8
$region0: #{emotion_net.8}
  #allocation0 [shape = 'u32[]', space=smem, size = 0x4, offset = 0x4, fixed_abs, tag = 'smem constant byte address 0x4 - core index']
  #allocation1 [shape = 'u32[144,128]{1,0:T(1,128)}', space=vmem, size = 0x12000, scoped, tag = 'internal scratch']
  %s0 = inlined_call_operand.vmem [shape: f32[2,4,64,128], index: 0, kind: input, shape index: {}]
  %s1 = inlined_call_operand.vmem [shape: f32[64,64], index: 1, kind: input, shape index: {}]
  %s2 = inlined_call_operand.vmem [shape: f32[1,64], index: 2, kind: input, shape index: {}]
  %s3 = inlined_call_operand.vmem [shape: f32[64,64], index: 3, kind: input, shape index: {}]
  %s4 = inlined_call_operand.vmem [shape: f32[1,64], index: 4, kind: input, shape index: {}]
  %s5 = inlined_call_operand.vmem [shape: f32[2,4,64,64], index: 5, kind: output, shape index: {}]
  %s6 = sld [smem:[#allocation0]]
  $region53: #{emotion_net.8} parent=0
    _
  %s8 = ssub.s32 1, %s6
  %s9 = scalar_select 0, %s8, %s6
  loop: start=0, step=1, limit=4
  $region2: #{emotion_net.8} parent=0 // loop_pre_header
    _
  $region3: #{emotion_net.8} parent=0 // loop_header
    %s11 = sphi 0, %s15
    %p12 = scmp.ge.s32.totalorder %s11, 4
    %s21 = sphi 0, %s23
    %s24 = sphi 0, %s21
    %s25 = sphi 0, %s24
    %s41 = sphi 0, %s25
    %s45 = sphi 0, %s45
    %s47 = sphi 0, %s45
    %s48 = sphi 0, %s47
    %s62 = sphi 0, %s48
    %s66 = sphi 0, %s66
    %s68 = sphi 0, %s66
    %s69 = sphi 0, %s68
    %s83 = sphi 0, %s69
    %s87 = sphi 0, %s87
    %s89 = sphi 0, %s87
    %s90 = sphi 0, %s89
    %s104 = sphi 0, %s90
    %s108 = sphi 0, %s108
    %s110 = sphi 0, %s108
    %s111 = sphi 0, %s110
    %s125 = sphi 0, %s111
    %s131 = sphi 0, %s133
    %s134 = sphi 0, %s131
    %s135 = sphi 0, %s134
    %s151 = sphi 0, %s135
  $region4: #{emotion_net.8} parent=0 // loop_header_branch
    %14 = sbr.rel (%p12) target = $region8
  $region5: #{emotion_net.8} parent=0 // loop_body
    %s16 = ssub.s32 %s11, 1
    %s17 = ssub.s32 %s11, 2
    %s18 = sadd.s32 %s11, 1
    %s19 = ssub.s32 %s11, %s18
    %p20 = scmp.eq.s32.totalorder %s19, 0
    %s22 = sadd.s32 %s21, 1
    %s23 = scalar_select %p20, %s21, %s22
    %p26 = pneg %p20
    %p27 = scmp.eq.s32.totalorder %s11, 1
    %p28 = por %p26, %p27
    %p29 = scmp.ne.s32.totalorder %s21, %s24
    %p30 = scmp.eq.s32.totalorder %s11, 0
    %p31 = por %p29, %p30
    %p32 = scmp.ne.s32.totalorder %s21, %s24
    %p33 = scmp.eq.s32.totalorder %s16, 1
    %p34 = por %p32, %p33
    %p35 = scmp.ne.s32.totalorder %s24, %s25
    %p36 = scmp.eq.s32.totalorder %s16, 0
    %p37 = por %p35, %p36
    %p38 = scmp.ne.s32.totalorder %s24, %s25
    %p39 = scmp.eq.s32.totalorder %s17, 1
    %p40 = por %p38, %p39
    %p42 = scmp.ne.s32.totalorder %s25, %s41
    %p43 = scmp.eq.s32.totalorder %s17, 0
    %p44 = por %p42, %p43
    %s46 = sadd.s32 %s45, 1
    %p49 = scmp.eq.s32.totalorder %s11, 1
    %p50 = scmp.ne.s32.totalorder %s45, %s47
    %p51 = scmp.eq.s32.totalorder %s11, 0
    %p52 = por %p50, %p51
    %p53 = scmp.ne.s32.totalorder %s45, %s47
    %p54 = scmp.eq.s32.totalorder %s16, 1
    %p55 = por %p53, %p54
    %p56 = scmp.ne.s32.totalorder %s47, %s48
    %p57 = scmp.eq.s32.totalorder %s16, 0
    %p58 = por %p56, %p57
    %p59 = scmp.ne.s32.totalorder %s47, %s48
    %p60 = scmp.eq.s32.totalorder %s17, 1
    %p61 = por %p59, %p60
    %p63 = scmp.ne.s32.totalorder %s48, %s62
    %p64 = scmp.eq.s32.totalorder %s17, 0
    %p65 = por %p63, %p64
    %s67 = sadd.s32 %s66, 1
    %p70 = scmp.eq.s32.totalorder %s11, 1
    %p71 = scmp.ne.s32.totalorder %s66, %s68
    %p72 = scmp.eq.s32.totalorder %s11, 0
    %p73 = por %p71, %p72
    %p74 = scmp.ne.s32.totalorder %s66, %s68
    %p75 = scmp.eq.s32.totalorder %s16, 1
    %p76 = por %p74, %p75
    %p77 = scmp.ne.s32.totalorder %s68, %s69
    %p78 = scmp.eq.s32.totalorder %s16, 0
    %p79 = por %p77, %p78
    %p80 = scmp.ne.s32.totalorder %s68, %s69
    %p81 = scmp.eq.s32.totalorder %s17, 1
    %p82 = por %p80, %p81
    %p84 = scmp.ne.s32.totalorder %s69, %s83
    %p85 = scmp.eq.s32.totalorder %s17, 0
    %p86 = por %p84, %p85
    %s88 = sadd.s32 %s87, 1
    %p91 = scmp.eq.s32.totalorder %s11, 1
    %p92 = scmp.ne.s32.totalorder %s87, %s89
    %p93 = scmp.eq.s32.totalorder %s11, 0
    %p94 = por %p92, %p93
    %p95 = scmp.ne.s32.totalorder %s87, %s89
    %p96 = scmp.eq.s32.totalorder %s16, 1
    %p97 = por %p95, %p96
    %p98 = scmp.ne.s32.totalorder %s89, %s90
    %p99 = scmp.eq.s32.totalorder %s16, 0
    %p100 = por %p98, %p99
    %p101 = scmp.ne.s32.totalorder %s89, %s90
    %p102 = scmp.eq.s32.totalorder %s17, 1
    %p103 = por %p101, %p102
    %p105 = scmp.ne.s32.totalorder %s90, %s104
    %p106 = scmp.eq.s32.totalorder %s17, 0
    %p107 = por %p105, %p106
    %s109 = sadd.s32 %s108, 1
    %p112 = scmp.eq.s32.totalorder %s11, 1
    %p113 = scmp.ne.s32.totalorder %s108, %s110
    %p114 = scmp.eq.s32.totalorder %s11, 0
    %p115 = por %p113, %p114
    %p116 = scmp.ne.s32.totalorder %s108, %s110
    %p117 = scmp.eq.s32.totalorder %s16, 1
    %p118 = por %p116, %p117
    %p119 = scmp.ne.s32.totalorder %s110, %s111
    %p120 = scmp.eq.s32.totalorder %s16, 0
    %p121 = por %p119, %p120
    %p122 = scmp.ne.s32.totalorder %s110, %s111
    %p123 = scmp.eq.s32.totalorder %s17, 1
    %p124 = por %p122, %p123
    %p126 = scmp.ne.s32.totalorder %s111, %s125
    %p127 = scmp.eq.s32.totalorder %s17, 0
    %p128 = por %p126, %p127
    %s129 = ssub.s32 %s11, %s18
    %p130 = scmp.eq.s32.totalorder %s129, 0
    %s132 = sadd.s32 %s131, 1
    %s133 = scalar_select %p130, %s131, %s132
    %p136 = pneg %p130
    %p137 = scmp.eq.s32.totalorder %s11, 1
    %p138 = por %p136, %p137
    %p139 = scmp.ne.s32.totalorder %s131, %s134
    %p140 = scmp.eq.s32.totalorder %s11, 0
    %p141 = por %p139, %p140
    %p142 = scmp.ne.s32.totalorder %s131, %s134
    %p143 = scmp.eq.s32.totalorder %s16, 1
    %p144 = por %p142, %p143
    %p145 = scmp.ne.s32.totalorder %s134, %s135
    %p146 = scmp.eq.s32.totalorder %s16, 0
    %p147 = por %p145, %p146
    %p148 = scmp.ne.s32.totalorder %s134, %s135
    %p149 = scmp.eq.s32.totalorder %s17, 1
    %p150 = por %p148, %p149
    %p152 = scmp.ne.s32.totalorder %s135, %s151
    %p153 = scmp.eq.s32.totalorder %s17, 0
    %p154 = por %p152, %p153
    %p155 = scmp.le.s32.totalorder 1, %s11
    %p156 = scmp.lt.s32.totalorder %s11, 3
    %p157 = pnand %p155, %p156
    %p158 = pneg %p157
    // Predicated region
    $region9: #{emotion_net.8} parent=5 // pred_check
      _
    $region10: #{emotion_net.8} parent=5 // pred_check_branch
      %160 = sbr.rel (%p157) target = $region12
    $region11: #{emotion_net.8} parent=5 // pred_region
      %s161 = ssub.s32 %s11, 1
      // Predicated region
      $region13: #{emotion_net.8} parent=11 // pred_check
        %p162 = pneg %p58
      $region14: #{emotion_net.8} parent=11 // pred_check_branch
        %164 = sbr.rel (%p162) target = $region16
      $region15: #{emotion_net.8} parent=11 // pred_region
        _
      $region16: #{emotion_net.8} parent=11 // pred_fallthru
        _
      // Predicated region
      $region17: #{emotion_net.8} parent=11 // pred_check
        %p165 = pneg %p79
      $region18: #{emotion_net.8} parent=11 // pred_check_branch
        %167 = sbr.rel (%p165) target = $region20
      $region19: #{emotion_net.8} parent=11 // pred_region
        _
      $region20: #{emotion_net.8} parent=11 // pred_fallthru
        _
      // Predicated region
      $region21: #{emotion_net.8} parent=11 // pred_check
        %p168 = pneg %p100
      $region22: #{emotion_net.8} parent=11 // pred_check_branch
        %170 = sbr.rel (%p168) target = $region24
      $region23: #{emotion_net.8} parent=11 // pred_region
        _
      $region24: #{emotion_net.8} parent=11 // pred_fallthru
        _
      // Predicated region
      $region25: #{emotion_net.8} parent=11 // pred_check
        %p171 = pneg %p121
      $region26: #{emotion_net.8} parent=11 // pred_check_branch
        %173 = sbr.rel (%p171) target = $region28
      $region27: #{emotion_net.8} parent=11 // pred_region
        _
      $region28: #{emotion_net.8} parent=11 // pred_fallthru
        _
    $region12: #{emotion_net.8} parent=5 // pred_fallthru
      _
    %p174 = scmp.lt.s32.totalorder %s11, 2
    // Predicated region
    $region29: #{emotion_net.8} parent=5 // pred_check
      %p175 = pneg %p174
    $region30: #{emotion_net.8} parent=5 // pred_check_branch
      %177 = sbr.rel (%p175) target = $region32
    $region31: #{emotion_net.8} parent=5 // pred_region
      // Predicated region
      $region33: #{emotion_net.8} parent=31 // pred_check
        %p178 = pneg %p31
      $region34: #{emotion_net.8} parent=31 // pred_check_branch
        %180 = sbr.rel (%p178) target = $region36
      $region35: #{emotion_net.8} parent=31 // pred_region
        %p181 = scmp.lt.s32.totalorder %s11, 1
        %s182 = scalar_select %p181, %s11, 1
        %s183 = smul.addr %s182, 32
        %s184 = smul.addr %s183, 8
        %s185 = scalar_lea.vmem %s0, %s184
      $region36: #{emotion_net.8} parent=31 // pred_fallthru
        _
    $region32: #{emotion_net.8} parent=5 // pred_fallthru
      _
    %p186 = scmp.le.s32.totalorder 1, %s11
    %p187 = scmp.lt.s32.totalorder %s11, 3
    %p188 = pnand %p186, %p187
    %p189 = pneg %p188
    // Predicated region
    $region37: #{emotion_net.8} parent=5 // pred_check
      _
    $region38: #{emotion_net.8} parent=5 // pred_check_branch
      %191 = sbr.rel (%p188) target = $region40
    $region39: #{emotion_net.8} parent=5 // pred_region
      %s192 = ssub.s32 %s11, 1
      %p193 = scmp.lt.s32.totalorder %s16, 1
      %s194 = scalar_select %p193, %s16, 1
      %s195 = smul.addr %s194, 32
      %s196 = smul.addr %s195, 8
      %s197 = scalar_lea.vmem %s0, %s196
      %p198 = pneg %p37
      %p199 = pneg %p34
      %p200 = pneg %p58
      %p201 = pneg %p55
      %p202 = pneg %p79
      %p203 = pneg %p76
      %p204 = pneg %p100
      %p205 = pneg %p97
      %p206 = pneg %p121
      %p207 = pneg %p118
      %p208 = pneg %p147
      %p209 = pneg %p144
      %p210 = scmp.lt.s32.totalorder %s16, 1
      %s211 = scalar_select %p210, %s16, 1
      %s212 = smul.addr %s211, 32
      %s213 = smul.addr %s212, 8
      %s214 = scalar_lea.vmem %s5, %s213
      %p215 = scmp.lt.s32.totalorder %s16, 1
      %s216 = scalar_select %p215, %s16, 1
      %s217 = smul.addr %s216, 32
      %s218 = smul.addr %s217, 8
      %s219 = scalar_lea.vmem %s0, %s218
      %p220 = scmp.lt.s32.totalorder %s16, 1
      %s221 = scalar_select %p220, %s16, 1
      %s222 = smul.addr %s221, 32
      %s223 = smul.addr %s222, 8
      %s224 = scalar_lea.vmem %s5, %s223
      %v225 = vld [vmem:[%s219] sm:$0xff]
      %v226 = vld [vmem:[%s219 + $0x8] sm:$0xff]
      %v227 = vld [vmem:[%s219 + $0x10] sm:$0xff]
      %v228 = vld [vmem:[%s219 + $0x18] sm:$0xff]
      %v229 = vld [vmem:[%s219 + $0x20] sm:$0xff]
      %v230 = vld [vmem:[%s219 + $0x28] sm:$0xff]
      %v231 = vld [vmem:[%s219 + $0x30] sm:$0xff]
      %v232 = vld [vmem:[%s219 + $0x38] sm:$0xff]
      %v233 = vld [vmem:[%s219 + $0x40] sm:$0xff]
      %v234 = vld [vmem:[%s219 + $0x48] sm:$0xff]
      %v235 = vld [vmem:[%s219 + $0x50] sm:$0xff]
      %v236 = vld [vmem:[%s219 + $0x58] sm:$0xff]
      %v237 = vld [vmem:[%s219 + $0x60] sm:$0xff]
      %v238 = vld [vmem:[%s219 + $0x68] sm:$0xff]
      %v239 = vld [vmem:[%s219 + $0x70] sm:$0xff]
      %v240 = vld [vmem:[%s219 + $0x78] sm:$0xff]
      %v241 = vld [vmem:[%s219 + $0x80] sm:$0xff]
      %v242 = vld [vmem:[%s219 + $0x88] sm:$0xff]
      %v243 = vld [vmem:[%s219 + $0x90] sm:$0xff]
      %v244 = vld [vmem:[%s219 + $0x98] sm:$0xff]
      %v245 = vld [vmem:[%s219 + $0xa0] sm:$0xff]
      %v246 = vld [vmem:[%s219 + $0xa8] sm:$0xff]
      %v247 = vld [vmem:[%s219 + $0xb0] sm:$0xff]
      %v248 = vld [vmem:[%s219 + $0xb8] sm:$0xff]
      %v249 = vld [vmem:[%s219 + $0xc0] sm:$0xff]
      %v250 = vld [vmem:[%s219 + $0xc8] sm:$0xff]
      %v251 = vld [vmem:[%s219 + $0xd0] sm:$0xff]
      %v252 = vld [vmem:[%s219 + $0xd8] sm:$0xff]
      %v253 = vld [vmem:[%s219 + $0xe0] sm:$0xff]
      %v254 = vld [vmem:[%s219 + $0xe8] sm:$0xff]
      %v255 = vld [vmem:[%s219 + $0xf0] sm:$0xff]
      %v256 = vld [vmem:[%s219 + $0xf8] sm:$0xff]
      %vm257 = vcmask 523264
      %v258 = vsel %vm257, %v225, 0.0
      %v259 = vsel %vm257, %v226, 0.0
      %v260 = vadd.f32 %v258, %v259
      %v261 = vsel %vm257, %v227, 0.0
      %v262 = vadd.f32 %v260, %v261
      %v263 = vsel %vm257, %v228, 0.0
      %v264 = vadd.f32 %v262, %v263
      %v265 = vsel %vm257, %v229, 0.0
      %v266 = vadd.f32 %v264, %v265
      %v267 = vsel %vm257, %v230, 0.0
      %v268 = vadd.f32 %v266, %v267
      %v269 = vsel %vm257, %v231, 0.0
      %v270 = vadd.f32 %v268, %v269
      %v271 = vsel %vm257, %v232, 0.0
      %v272 = vadd.f32 %v270, %v271
      %v273 = vrot.slane %v272, 4
      %v274 = vadd.f32 %v272, %v273
      %v275 = vrot.slane %v274, 2
      %v276 = vadd.f32 %v274, %v275
      %v277 = vrot.slane %v276, 1
      %v278 = vadd.f32 %v276, %v277
      %v279 = vsel %vm257, %v233, 0.0
      %v280 = vsel %vm257, %v234, 0.0
      %v281 = vadd.f32 %v279, %v280
      %v282 = vsel %vm257, %v235, 0.0
      %v283 = vadd.f32 %v281, %v282
      %v284 = vsel %vm257, %v236, 0.0
      %v285 = vadd.f32 %v283, %v284
      %v286 = vsel %vm257, %v237, 0.0
      %v287 = vadd.f32 %v285, %v286
      %v288 = vsel %vm257, %v238, 0.0
      %v289 = vadd.f32 %v287, %v288
      %v290 = vsel %vm257, %v239, 0.0
      %v291 = vadd.f32 %v289, %v290
      %v292 = vsel %vm257, %v240, 0.0
      %v293 = vadd.f32 %v291, %v292
      %v294 = vrot.slane %v293, 4
      %v295 = vadd.f32 %v293, %v294
      %v296 = vrot.slane %v295, 2
      %v297 = vadd.f32 %v295, %v296
      %v298 = vrot.slane %v297, 1
      %v299 = vadd.f32 %v297, %v298
      %v300 = vsel %vm257, %v241, 0.0
      %v301 = vsel %vm257, %v242, 0.0
      %v302 = vadd.f32 %v300, %v301
      %v303 = vsel %vm257, %v243, 0.0
      %v304 = vadd.f32 %v302, %v303
      %v305 = vsel %vm257, %v244, 0.0
      %v306 = vadd.f32 %v304, %v305
      %v307 = vsel %vm257, %v245, 0.0
      %v308 = vadd.f32 %v306, %v307
      %v309 = vsel %vm257, %v246, 0.0
      %v310 = vadd.f32 %v308, %v309
      %v311 = vsel %vm257, %v247, 0.0
      %v312 = vadd.f32 %v310, %v311
      %v313 = vsel %vm257, %v248, 0.0
      %v314 = vadd.f32 %v312, %v313
      %v315 = vrot.slane %v314, 4
      %v316 = vadd.f32 %v314, %v315
      %v317 = vrot.slane %v316, 2
      %v318 = vadd.f32 %v316, %v317
      %v319 = vrot.slane %v318, 1
      %v320 = vadd.f32 %v318, %v319
      %v321 = vsel %vm257, %v249, 0.0
      %v322 = vsel %vm257, %v250, 0.0
      %v323 = vadd.f32 %v321, %v322
      %v324 = vsel %vm257, %v251, 0.0
      %v325 = vadd.f32 %v323, %v324
      %v326 = vsel %vm257, %v252, 0.0
      %v327 = vadd.f32 %v325, %v326
      %v328 = vsel %vm257, %v253, 0.0
      %v329 = vadd.f32 %v327, %v328
      %v330 = vsel %vm257, %v254, 0.0
      %v331 = vadd.f32 %v329, %v330
      %v332 = vsel %vm257, %v255, 0.0
      %v333 = vadd.f32 %v331, %v332
      %v334 = vsel %vm257, %v256, 0.0
      %v335 = vadd.f32 %v333, %v334
      %v336 = vrot.slane %v335, 4
      %v337 = vadd.f32 %v335, %v336
      %v338 = vrot.slane %v337, 2
      %v339 = vadd.f32 %v337, %v338
      %v340 = vrot.slane %v339, 1
      %v341 = vadd.f32 %v339, %v340
      %v342 = vrcp.pop 64.0
      %v343 = vmul.f32 %v278, %v342
      %v344 = vmul.f32 %v299, %v342
      %v345 = vmul.f32 %v320, %v342
      %v346 = vmul.f32 %v341, %v342
      %v347 = vld [vmem:[%s1] sm:$0xff]
      %v348 = vld [vmem:[%s1 + $0x8] sm:$0xff]
      %v349 = vld [vmem:[%s1 + $0x10] sm:$0xff]
      %v350 = vld [vmem:[%s1 + $0x18] sm:$0xff]
      %v351 = vld [vmem:[%s1 + $0x20] sm:$0xff]
      %v352 = vld [vmem:[%s1 + $0x28] sm:$0xff]
      %v353 = vld [vmem:[%s1 + $0x30] sm:$0xff]
      %v354 = vld [vmem:[%s1 + $0x38] sm:$0xff]
      %v355 = vld [vmem:[%s2] sm:$0x1]
      %vm360 = vcmask 1041409
      %v361 = vsel %vm360, %v344, %v343
      %vm362 = vcmask 1042434
      %v363 = vsel %vm362, %v345, %v361
      %vm364 = vcmask 1043459
      %v365 = vsel %vm364, %v346, %v363
      %vm367 = vcmask 1043456
      %v368 = vsel %vm367, %v365, 0.0
      %v370 = vlaneseq
      %v371 = vshrl.u32 %v370, 7
      %v372 = vsub.s32 0, %v371
      %v373 = vrot.slane %v355, %v372
      %v376 = vsel %vm257, %v368, 0
      %378 = vmatprep.subr.mxu0 0.0
      %379 = vmatpush1.msra.mxu0 0.0
      %380 = vmatprep.subr.mxu0 0.0
      %381 = vmatpush1.msra.mxu0 0.0
      %382 = vmatprep.subr.mxu0 0.0
      %383 = vmatpush1.msra.mxu0 0.0
      %384 = vmatprep.subr.mxu0 0.0
      %385 = vmatpush1.msra.mxu0 0.0
      %386 = vmatprep.subr.mxu0 0.0
      %387 = vmatpush1.msra.mxu0 0.0
      %388 = vmatprep.subr.mxu0 0.0
      %389 = vmatpush1.msra.mxu0 0.0
      %390 = vmatprep.subr.mxu0 0.0
      %391 = vmatpush1.msra.mxu0 0.0
      %392 = vmatprep.subr.mxu0 0.0
      %393 = vmatpush1.msra.mxu0 0.0
      %394 = vmatprep.subr.mxu0 0.0
      %395 = vmatpush1.msra.mxu0 %v354
      %396 = vmatprep.subr.mxu0 0.0
      %397 = vmatpush1.msra.mxu0 %v353
      %398 = vmatprep.subr.mxu0 0.0
      %399 = vmatpush1.msra.mxu0 %v352
      %400 = vmatprep.subr.mxu0 0.0
      %401 = vmatpush1.msra.mxu0 %v351
      %402 = vmatprep.subr.mxu0 0.0
      %403 = vmatpush1.msra.mxu0 %v350
      %404 = vmatprep.subr.mxu0 0.0
      %405 = vmatpush1.msra.mxu0 %v349
      %406 = vmatprep.subr.mxu0 0.0
      %407 = vmatpush1.msra.mxu0 %v348
      %408 = vmatprep.subr.mxu0 0.0
      %409 = vmatpush1.msra.mxu0 %v347
      %410 = vmatprep.subr.mxu0 0.0
      %411 = vmatpush2.msra.mxu0 0.0
      %412 = vmatprep.subr.mxu0 0.0
      %413 = vmatpush2.msra.mxu0 0.0
      %414 = vmatprep.subr.mxu0 0.0
      %415 = vmatpush2.msra.mxu0 0.0
      %416 = vmatprep.subr.mxu0 0.0
      %417 = vmatpush2.msra.mxu0 0.0
      %418 = vmatprep.subr.mxu0 0.0
      %419 = vmatpush2.msra.mxu0 0.0
      %420 = vmatprep.subr.mxu0 0.0
      %421 = vmatpush2.msra.mxu0 0.0
      %422 = vmatprep.subr.mxu0 0.0
      %423 = vmatpush2.msra.mxu0 0.0
      %424 = vmatprep.subr.mxu0 0.0
      %425 = vmatpush2.msra.mxu0 0.0
      %426 = vmatprep.subr.mxu0 0.0
      %427 = vmatpush2.msra.mxu0 0.0
      %428 = vmatprep.subr.mxu0 0.0
      %429 = vmatpush2.msra.mxu0 0.0
      %430 = vmatprep.subr.mxu0 0.0
      %431 = vmatpush2.msra.mxu0 0.0
      %432 = vmatprep.subr.mxu0 0.0
      %433 = vmatpush2.msra.mxu0 0.0
      %434 = vmatprep.subr.mxu0 0.0
      %435 = vmatpush2.msra.mxu0 0.0
      %436 = vmatprep.subr.mxu0 0.0
      %437 = vmatpush2.msra.mxu0 0.0
      %438 = vmatprep.subr.mxu0 0.0
      %439 = vmatpush2.msra.mxu0 0.0
      %440 = vmatprep.subr.mxu0 0.0
      %441 = vmatpush2.msra.mxu0 0.0
      %442 = vmatprep.mubr.f32.mxu0 0.0
      %443 = vmatmul.mubr.f32.gmra.mxu0 %v376
      %v444 = vpop.f32.mrf.mxu0
      %v445 = vadd.f32 %v373, %v444
      %v446 = vpop.f32.mrf.mxu0
      %447 = vdwg.mxu0
      %vm448 = vcmask 1048064
      %v449 = vsel %vm448, %v225, 0.0
      %v450 = vsel %vm448, %v233, 0.0
      %v451 = vadd.f32 %v449, %v450
      %v452 = vsel %vm448, %v241, 0.0
      %v453 = vadd.f32 %v451, %v452
      %v454 = vsel %vm448, %v249, 0.0
      %v455 = vadd.f32 %v453, %v454
      %v456 = vsel %vm448, %v226, 0.0
      %v457 = vsel %vm448, %v234, 0.0
      %v458 = vadd.f32 %v456, %v457
      %v459 = vsel %vm448, %v242, 0.0
      %v460 = vadd.f32 %v458, %v459
      %v461 = vsel %vm448, %v250, 0.0
      %v462 = vadd.f32 %v460, %v461
      %v463 = vsel %vm448, %v227, 0.0
      %v464 = vsel %vm448, %v235, 0.0
      %v465 = vadd.f32 %v463, %v464
      %v466 = vsel %vm448, %v243, 0.0
      %v467 = vadd.f32 %v465, %v466
      %v468 = vsel %vm448, %v251, 0.0
      %v469 = vadd.f32 %v467, %v468
      %v470 = vsel %vm448, %v228, 0.0
      %v471 = vsel %vm448, %v236, 0.0
      %v472 = vadd.f32 %v470, %v471
      %v473 = vsel %vm448, %v244, 0.0
      %v474 = vadd.f32 %v472, %v473
      %v475 = vsel %vm448, %v252, 0.0
      %v476 = vadd.f32 %v474, %v475
      %v477 = vsel %vm448, %v229, 0.0
      %v478 = vsel %vm448, %v237, 0.0
      %v479 = vadd.f32 %v477, %v478
      %v480 = vsel %vm448, %v245, 0.0
      %v481 = vadd.f32 %v479, %v480
      %v482 = vsel %vm448, %v253, 0.0
      %v483 = vadd.f32 %v481, %v482
      %v484 = vsel %vm448, %v230, 0.0
      %v485 = vsel %vm448, %v238, 0.0
      %v486 = vadd.f32 %v484, %v485
      %v487 = vsel %vm448, %v246, 0.0
      %v488 = vadd.f32 %v486, %v487
      %v489 = vsel %vm448, %v254, 0.0
      %v490 = vadd.f32 %v488, %v489
      %v491 = vsel %vm448, %v231, 0.0
      %v492 = vsel %vm448, %v239, 0.0
      %v493 = vadd.f32 %v491, %v492
      %v494 = vsel %vm448, %v247, 0.0
      %v495 = vadd.f32 %v493, %v494
      %v496 = vsel %vm448, %v255, 0.0
      %v497 = vadd.f32 %v495, %v496
      %v498 = vsel %vm448, %v232, 0.0
      %v499 = vsel %vm448, %v240, 0.0
      %v500 = vadd.f32 %v498, %v499
      %v501 = vsel %vm448, %v248, 0.0
      %v502 = vadd.f32 %v500, %v501
      %v503 = vsel %vm448, %v256, 0.0
      %v504 = vadd.f32 %v502, %v503
      %v505 = vrcp.pop 4.0
      %v506 = vmul.f32 %v455, %v505
      %v507 = vmul.f32 %v462, %v505
      %v508 = vmul.f32 %v469, %v505
      %v509 = vmul.f32 %v476, %v505
      %v510 = vmul.f32 %v483, %v505
      %v511 = vmul.f32 %v490, %v505
      %v512 = vmul.f32 %v497, %v505
      %v513 = vmul.f32 %v504, %v505
      %v514 = vld [vmem:[%s3] sm:$0xff]
      %v515 = vld [vmem:[%s3 + $0x8] sm:$0xff]
      %v516 = vld [vmem:[%s3 + $0x10] sm:$0xff]
      %v517 = vld [vmem:[%s3 + $0x18] sm:$0xff]
      %v518 = vld [vmem:[%s3 + $0x20] sm:$0xff]
      %v519 = vld [vmem:[%s3 + $0x28] sm:$0xff]
      %v520 = vld [vmem:[%s3 + $0x30] sm:$0xff]
      %v521 = vld [vmem:[%s3 + $0x38] sm:$0xff]
      %v522 = vld [vmem:[%s4] sm:$0x1]
      %v524 = vlaneseq
      %v525 = vshrl.u32 %v524, 7
      %v526 = vsub.s32 0, %v525
      %v527 = vrot.slane %v522, %v526
      %537 = vrot.lane.b32.xlu0 %v506, 64
      %v538 = vpop.permute.xlu0 %537
      %539 = vrot.lane.b32.xlu0 %v507, 64
      %v540 = vpop.permute.xlu0 %539
      %541 = vrot.lane.b32.xlu0 %v508, 64
      %v542 = vpop.permute.xlu0 %541
      %543 = vrot.lane.b32.xlu0 %v509, 64
      %v544 = vpop.permute.xlu0 %543
      %545 = vrot.lane.b32.xlu0 %v510, 64
      %v546 = vpop.permute.xlu0 %545
      %547 = vrot.lane.b32.xlu0 %v511, 64
      %v548 = vpop.permute.xlu0 %547
      %549 = vrot.lane.b32.xlu0 %v512, 64
      %v550 = vpop.permute.xlu0 %549
      %551 = vrot.lane.b32.xlu0 %v513, 64
      %v552 = vpop.permute.xlu0 %551
      %v553 = vsel %vm257, %v538, 0
      %v555 = vsel %vm257, %v540, 0
      %v557 = vsel %vm257, %v542, 0
      %v559 = vsel %vm257, %v544, 0
      %v561 = vsel %vm257, %v546, 0
      %v563 = vsel %vm257, %v548, 0
      %v565 = vsel %vm257, %v550, 0
      %v567 = vsel %vm257, %v552, 0
      %569 = vmatprep.subr.mxu0 0.0
      %570 = vmatpush1.msra.mxu0 0.0
      %571 = vmatprep.subr.mxu0 0.0
      %572 = vmatpush1.msra.mxu0 0.0
      %573 = vmatprep.subr.mxu0 0.0
      %574 = vmatpush1.msra.mxu0 0.0
      %575 = vmatprep.subr.mxu0 0.0
      %576 = vmatpush1.msra.mxu0 0.0
      %577 = vmatprep.subr.mxu0 0.0
      %578 = vmatpush1.msra.mxu0 0.0
      %579 = vmatprep.subr.mxu0 0.0
      %580 = vmatpush1.msra.mxu0 0.0
      %581 = vmatprep.subr.mxu0 0.0
      %582 = vmatpush1.msra.mxu0 0.0
      %583 = vmatprep.subr.mxu0 0.0
      %584 = vmatpush1.msra.mxu0 0.0
      %585 = vmatprep.subr.mxu0 0.0
      %586 = vmatpush1.msra.mxu0 %v521
      %587 = vmatprep.subr.mxu0 0.0
      %588 = vmatpush1.msra.mxu0 %v520
      %589 = vmatprep.subr.mxu0 0.0
      %590 = vmatpush1.msra.mxu0 %v519
      %591 = vmatprep.subr.mxu0 0.0
      %592 = vmatpush1.msra.mxu0 %v518
      %593 = vmatprep.subr.mxu0 0.0
      %594 = vmatpush1.msra.mxu0 %v517
      %595 = vmatprep.subr.mxu0 0.0
      %596 = vmatpush1.msra.mxu0 %v516
      %597 = vmatprep.subr.mxu0 0.0
      %598 = vmatpush1.msra.mxu0 %v515
      %599 = vmatprep.subr.mxu0 0.0
      %600 = vmatpush1.msra.mxu0 %v514
      %601 = vmatprep.subr.mxu0 0.0
      %602 = vmatpush2.msra.mxu0 0.0
      %603 = vmatprep.subr.mxu0 0.0
      %604 = vmatpush2.msra.mxu0 0.0
      %605 = vmatprep.subr.mxu0 0.0
      %606 = vmatpush2.msra.mxu0 0.0
      %607 = vmatprep.subr.mxu0 0.0
      %608 = vmatpush2.msra.mxu0 0.0
      %609 = vmatprep.subr.mxu0 0.0
      %610 = vmatpush2.msra.mxu0 0.0
      %611 = vmatprep.subr.mxu0 0.0
      %612 = vmatpush2.msra.mxu0 0.0
      %613 = vmatprep.subr.mxu0 0.0
      %614 = vmatpush2.msra.mxu0 0.0
      %615 = vmatprep.subr.mxu0 0.0
      %616 = vmatpush2.msra.mxu0 0.0
      %617 = vmatprep.subr.mxu0 0.0
      %618 = vmatpush2.msra.mxu0 0.0
      %619 = vmatprep.subr.mxu0 0.0
      %620 = vmatpush2.msra.mxu0 0.0
      %621 = vmatprep.subr.mxu0 0.0
      %622 = vmatpush2.msra.mxu0 0.0
      %623 = vmatprep.subr.mxu0 0.0
      %624 = vmatpush2.msra.mxu0 0.0
      %625 = vmatprep.subr.mxu0 0.0
      %626 = vmatpush2.msra.mxu0 0.0
      %627 = vmatprep.subr.mxu0 0.0
      %628 = vmatpush2.msra.mxu0 0.0
      %629 = vmatprep.subr.mxu0 0.0
      %630 = vmatpush2.msra.mxu0 0.0
      %631 = vmatprep.subr.mxu0 0.0
      %632 = vmatpush2.msra.mxu0 0.0
      %633 = vmatprep.mubr.f32.mxu0 0.0
      %634 = vmatmul.mubr.f32.gmra.mxu0 %v553
      %v635 = vpop.f32.mrf.mxu0
      %v636 = vadd.f32 %v527, %v635
      %v637 = vpop.f32.mrf.mxu0
      %638 = vmatprep.mubr.f32.mxu0 0.0
      %639 = vmatmul.mubr.f32.gmra.mxu0 %v555
      %v640 = vpop.f32.mrf.mxu0
      %v641 = vadd.f32 %v527, %v640
      %v642 = vpop.f32.mrf.mxu0
      %643 = vmatprep.mubr.f32.mxu0 0.0
      %644 = vmatmul.mubr.f32.gmra.mxu0 %v557
      %v645 = vpop.f32.mrf.mxu0
      %v646 = vadd.f32 %v527, %v645
      %v647 = vpop.f32.mrf.mxu0
      %648 = vmatprep.mubr.f32.mxu0 0.0
      %649 = vmatmul.mubr.f32.gmra.mxu0 %v559
      %v650 = vpop.f32.mrf.mxu0
      %v651 = vadd.f32 %v527, %v650
      %v652 = vpop.f32.mrf.mxu0
      %653 = vmatprep.mubr.f32.mxu0 0.0
      %654 = vmatmul.mubr.f32.gmra.mxu0 %v561
      %v655 = vpop.f32.mrf.mxu0
      %v656 = vadd.f32 %v527, %v655
      %v657 = vpop.f32.mrf.mxu0
      %658 = vmatprep.mubr.f32.mxu0 0.0
      %659 = vmatmul.mubr.f32.gmra.mxu0 %v563
      %v660 = vpop.f32.mrf.mxu0
      %v661 = vadd.f32 %v527, %v660
      %v662 = vpop.f32.mrf.mxu0
      %663 = vmatprep.mubr.f32.mxu0 0.0
      %664 = vmatmul.mubr.f32.gmra.mxu0 %v565
      %v665 = vpop.f32.mrf.mxu0
      %v666 = vadd.f32 %v527, %v665
      %v667 = vpop.f32.mrf.mxu0
      %668 = vmatprep.mubr.f32.mxu0 0.0
      %669 = vmatmul.mubr.f32.gmra.mxu0 %v567
      %v670 = vpop.f32.mrf.mxu0
      %v671 = vadd.f32 %v527, %v670
      %v672 = vpop.f32.mrf.mxu0
      %673 = vdwg.mxu0
      %vm674 = vcmask 519168
      %v675 = vsel %vm674, %v445, -inf
      %676 = vmax.xlane.f32.xlu0 %v675
      %v677 = vpop.xlane.xlu0 %676
      %v678 = vsub.f32 %v445, %v677
      %v679 = vmul.f32 %v678, 1.442695
      %v680 = vpow.pop %v679
      %v681 = vsel %vm674, %v680, 0.0
      %682 = vadd.xlane.f32.xlu0 %v681
      %v683 = vpop.xlane.xlu0 %682
      %v684 = vrcp.pop %v683
      %v685 = vmul.f32 %v680, %v684
      %v686 = vsel %vm257, %v636, -inf
      %687 = vmax.xlane.f32.xlu0 %v686
      %v688 = vpop.xlane.xlu0 %687
      %v689 = vsel %vm257, %v641, -inf
      %690 = vmax.xlane.f32.xlu0 %v689
      %v691 = vpop.xlane.xlu0 %690
      %v692 = vsel %vm257, %v646, -inf
      %693 = vmax.xlane.f32.xlu0 %v692
      %v694 = vpop.xlane.xlu0 %693
      %v695 = vsel %vm257, %v651, -inf
      %696 = vmax.xlane.f32.xlu0 %v695
      %v697 = vpop.xlane.xlu0 %696
      %v698 = vsel %vm257, %v656, -inf
      %699 = vmax.xlane.f32.xlu0 %v698
      %v700 = vpop.xlane.xlu0 %699
      %v701 = vsel %vm257, %v661, -inf
      %702 = vmax.xlane.f32.xlu0 %v701
      %v703 = vpop.xlane.xlu0 %702
      %v704 = vsel %vm257, %v666, -inf
      %705 = vmax.xlane.f32.xlu0 %v704
      %v706 = vpop.xlane.xlu0 %705
      %v707 = vsel %vm257, %v671, -inf
      %708 = vmax.xlane.f32.xlu0 %v707
      %v709 = vpop.xlane.xlu0 %708
      %v710 = vsub.f32 %v636, %v688
      %v711 = vsub.f32 %v641, %v691
      %v712 = vsub.f32 %v646, %v694
      %v713 = vsub.f32 %v651, %v697
      %v714 = vsub.f32 %v656, %v700
      %v715 = vsub.f32 %v661, %v703
      %v716 = vsub.f32 %v666, %v706
      %v717 = vsub.f32 %v671, %v709
      %v718 = vmul.f32 %v710, 1.442695
      %v719 = vpow.pop %v718
      %v720 = vmul.f32 %v711, 1.442695
      %v721 = vpow.pop %v720
      %v722 = vmul.f32 %v712, 1.442695
      %v723 = vpow.pop %v722
      %v724 = vmul.f32 %v713, 1.442695
      %v725 = vpow.pop %v724
      %v726 = vmul.f32 %v714, 1.442695
      %v727 = vpow.pop %v726
      %v728 = vmul.f32 %v715, 1.442695
      %v729 = vpow.pop %v728
      %v730 = vmul.f32 %v716, 1.442695
      %v731 = vpow.pop %v730
      %v732 = vmul.f32 %v717, 1.442695
      %v733 = vpow.pop %v732
      %v734 = vsel %vm257, %v719, 0.0
      %735 = vadd.xlane.f32.xlu0 %v734
      %v736 = vpop.xlane.xlu0 %735
      %v737 = vsel %vm257, %v721, 0.0
      %738 = vadd.xlane.f32.xlu0 %v737
      %v739 = vpop.xlane.xlu0 %738
      %v740 = vsel %vm257, %v723, 0.0
      %741 = vadd.xlane.f32.xlu0 %v740
      %v742 = vpop.xlane.xlu0 %741
      %v743 = vsel %vm257, %v725, 0.0
      %744 = vadd.xlane.f32.xlu0 %v743
      %v745 = vpop.xlane.xlu0 %744
      %v746 = vsel %vm257, %v727, 0.0
      %747 = vadd.xlane.f32.xlu0 %v746
      %v748 = vpop.xlane.xlu0 %747
      %v749 = vsel %vm257, %v729, 0.0
      %750 = vadd.xlane.f32.xlu0 %v749
      %v751 = vpop.xlane.xlu0 %750
      %v752 = vsel %vm257, %v731, 0.0
      %753 = vadd.xlane.f32.xlu0 %v752
      %v754 = vpop.xlane.xlu0 %753
      %v755 = vsel %vm257, %v733, 0.0
      %756 = vadd.xlane.f32.xlu0 %v755
      %v757 = vpop.xlane.xlu0 %756
      %v758 = vrcp.pop %v736
      %v759 = vmul.f32 %v719, %v758
      %v760 = vrcp.pop %v739
      %v761 = vmul.f32 %v721, %v760
      %v762 = vrcp.pop %v742
      %v763 = vmul.f32 %v723, %v762
      %v764 = vrcp.pop %v745
      %v765 = vmul.f32 %v725, %v764
      %v766 = vrcp.pop %v748
      %v767 = vmul.f32 %v727, %v766
      %v768 = vrcp.pop %v751
      %v769 = vmul.f32 %v729, %v768
      %v770 = vrcp.pop %v754
      %v771 = vmul.f32 %v731, %v770
      %v772 = vrcp.pop %v757
      %v773 = vmul.f32 %v733, %v772
      %v776 = vunpack.c.l.s4 1966171168
      %v777 = vunpack.c.0.s8 %v776
      %v778 = vlaneseq
      %v779 = vshrl.u32 %v778, 7
      %v780 = vsub.s32 %v777, %v779
      %v781 = vrot.slane %v685, %v780
      %v782 = vcombine.high %v781, %v781
      %v784 = vunpack.c.l.s4 1966171168
      %v785 = vunpack.c.0.s8 %v784
      %v786 = vlaneseq
      %v787 = vshrl.u32 %v786, 7
      %v788 = vsub.s32 %v785, %v787
      %v789 = vrot.slane %v781, %v788
      %v791 = vunpack.c.l.s4 1966171168
      %v792 = vunpack.c.0.s8 %v791
      %v793 = vlaneseq
      %v794 = vshrl.u32 %v793, 7
      %v795 = vsub.s32 %v792, %v794
      %v796 = vrot.slane %v782, %v795
      %v797 = vcombine.high %v789, %v789
      %v798 = vcombine.high %v796, %v796
      %v799 = vlaneseq
      %v800 = vshrl.u32 %v799, 7
      %v801 = vsub.s32 0, %v800
      %v802 = vrot.slane %v789, %v801
      %v803 = vlaneseq
      %v804 = vshrl.u32 %v803, 7
      %v805 = vsub.s32 0, %v804
      %v806 = vrot.slane %v796, %v805
      %v807 = vlaneseq
      %v808 = vshrl.u32 %v807, 7
      %v809 = vsub.s32 0, %v808
      %v810 = vrot.slane %v797, %v809
      %v811 = vlaneseq
      %v812 = vshrl.u32 %v811, 7
      %v813 = vsub.s32 0, %v812
      %v814 = vrot.slane %v798, %v813
      %v819 = vmul.f32 %v802, %v759
      %v820 = vmul.f32 %v802, %v761
      %v821 = vmul.f32 %v802, %v763
      %v822 = vmul.f32 %v802, %v765
      %v823 = vmul.f32 %v802, %v767
      %v824 = vmul.f32 %v802, %v769
      %v825 = vmul.f32 %v802, %v771
      %v826 = vmul.f32 %v802, %v773
      %v827 = vmul.f32 %v806, %v759
      %v828 = vmul.f32 %v806, %v761
      %v829 = vmul.f32 %v806, %v763
      %v830 = vmul.f32 %v806, %v765
      %v831 = vmul.f32 %v806, %v767
      %v832 = vmul.f32 %v806, %v769
      %v833 = vmul.f32 %v806, %v771
      %v834 = vmul.f32 %v806, %v773
      %v835 = vmul.f32 %v810, %v759
      %v836 = vmul.f32 %v810, %v761
      %v837 = vmul.f32 %v810, %v763
      %v838 = vmul.f32 %v810, %v765
      %v839 = vmul.f32 %v810, %v767
      %v840 = vmul.f32 %v810, %v769
      %v841 = vmul.f32 %v810, %v771
      %v842 = vmul.f32 %v810, %v773
      %v843 = vmul.f32 %v814, %v759
      %v844 = vmul.f32 %v814, %v761
      %v845 = vmul.f32 %v814, %v763
      %v846 = vmul.f32 %v814, %v765
      %v847 = vmul.f32 %v814, %v767
      %v848 = vmul.f32 %v814, %v769
      %v849 = vmul.f32 %v814, %v771
      %v850 = vmul.f32 %v814, %v773
      %883 = vrot.lane.b32.xlu0 %v225, 64
      %v884 = vpop.permute.xlu0 %883
      %885 = vrot.lane.b32.xlu0 %v226, 64
      %v886 = vpop.permute.xlu0 %885
      %887 = vrot.lane.b32.xlu0 %v227, 64
      %v888 = vpop.permute.xlu0 %887
      %889 = vrot.lane.b32.xlu0 %v228, 64
      %v890 = vpop.permute.xlu0 %889
      %891 = vrot.lane.b32.xlu0 %v229, 64
      %v892 = vpop.permute.xlu0 %891
      %893 = vrot.lane.b32.xlu0 %v230, 64
      %v894 = vpop.permute.xlu0 %893
      %895 = vrot.lane.b32.xlu0 %v231, 64
      %v896 = vpop.permute.xlu0 %895
      %897 = vrot.lane.b32.xlu0 %v232, 64
      %v898 = vpop.permute.xlu0 %897
      %899 = vrot.lane.b32.xlu0 %v233, 64
      %v900 = vpop.permute.xlu0 %899
      %901 = vrot.lane.b32.xlu0 %v234, 64
      %v902 = vpop.permute.xlu0 %901
      %903 = vrot.lane.b32.xlu0 %v235, 64
      %v904 = vpop.permute.xlu0 %903
      %905 = vrot.lane.b32.xlu0 %v236, 64
      %v906 = vpop.permute.xlu0 %905
      %907 = vrot.lane.b32.xlu0 %v237, 64
      %v908 = vpop.permute.xlu0 %907
      %909 = vrot.lane.b32.xlu0 %v238, 64
      %v910 = vpop.permute.xlu0 %909
      %911 = vrot.lane.b32.xlu0 %v239, 64
      %v912 = vpop.permute.xlu0 %911
      %913 = vrot.lane.b32.xlu0 %v240, 64
      %v914 = vpop.permute.xlu0 %913
      %915 = vrot.lane.b32.xlu0 %v241, 64
      %v916 = vpop.permute.xlu0 %915
      %917 = vrot.lane.b32.xlu0 %v242, 64
      %v918 = vpop.permute.xlu0 %917
      %919 = vrot.lane.b32.xlu0 %v243, 64
      %v920 = vpop.permute.xlu0 %919
      %921 = vrot.lane.b32.xlu0 %v244, 64
      %v922 = vpop.permute.xlu0 %921
      %923 = vrot.lane.b32.xlu0 %v245, 64
      %v924 = vpop.permute.xlu0 %923
      %925 = vrot.lane.b32.xlu0 %v246, 64
      %v926 = vpop.permute.xlu0 %925
      %927 = vrot.lane.b32.xlu0 %v247, 64
      %v928 = vpop.permute.xlu0 %927
      %929 = vrot.lane.b32.xlu0 %v248, 64
      %v930 = vpop.permute.xlu0 %929
      %931 = vrot.lane.b32.xlu0 %v249, 64
      %v932 = vpop.permute.xlu0 %931
      %933 = vrot.lane.b32.xlu0 %v250, 64
      %v934 = vpop.permute.xlu0 %933
      %935 = vrot.lane.b32.xlu0 %v251, 64
      %v936 = vpop.permute.xlu0 %935
      %937 = vrot.lane.b32.xlu0 %v252, 64
      %v938 = vpop.permute.xlu0 %937
      %939 = vrot.lane.b32.xlu0 %v253, 64
      %v940 = vpop.permute.xlu0 %939
      %941 = vrot.lane.b32.xlu0 %v254, 64
      %v942 = vpop.permute.xlu0 %941
      %943 = vrot.lane.b32.xlu0 %v255, 64
      %v944 = vpop.permute.xlu0 %943
      %945 = vrot.lane.b32.xlu0 %v256, 64
      %v946 = vpop.permute.xlu0 %945
      %v979 = vadd.f32 %v225, %v884
      %v980 = vadd.f32 %v226, %v886
      %v981 = vadd.f32 %v227, %v888
      %v982 = vadd.f32 %v228, %v890
      %v983 = vadd.f32 %v229, %v892
      %v984 = vadd.f32 %v230, %v894
      %v985 = vadd.f32 %v231, %v896
      %v986 = vadd.f32 %v232, %v898
      %v987 = vadd.f32 %v233, %v900
      %v988 = vadd.f32 %v234, %v902
      %v989 = vadd.f32 %v235, %v904
      %v990 = vadd.f32 %v236, %v906
      %v991 = vadd.f32 %v237, %v908
      %v992 = vadd.f32 %v238, %v910
      %v993 = vadd.f32 %v239, %v912
      %v994 = vadd.f32 %v240, %v914
      %v995 = vadd.f32 %v241, %v916
      %v996 = vadd.f32 %v242, %v918
      %v997 = vadd.f32 %v243, %v920
      %v998 = vadd.f32 %v244, %v922
      %v999 = vadd.f32 %v245, %v924
      %v1000 = vadd.f32 %v246, %v926
      %v1001 = vadd.f32 %v247, %v928
      %v1002 = vadd.f32 %v248, %v930
      %v1003 = vadd.f32 %v249, %v932
      %v1004 = vadd.f32 %v250, %v934
      %v1005 = vadd.f32 %v251, %v936
      %v1006 = vadd.f32 %v252, %v938
      %v1007 = vadd.f32 %v253, %v940
      %v1008 = vadd.f32 %v254, %v942
      %v1009 = vadd.f32 %v255, %v944
      %v1010 = vadd.f32 %v256, %v946
      %1043 = vrot.lane.b32.xlu0 %v979, 64
      %v1044 = vpop.permute.xlu0 %1043
      %1045 = vrot.lane.b32.xlu0 %v980, 64
      %v1046 = vpop.permute.xlu0 %1045
      %1047 = vrot.lane.b32.xlu0 %v981, 64
      %v1048 = vpop.permute.xlu0 %1047
      %1049 = vrot.lane.b32.xlu0 %v982, 64
      %v1050 = vpop.permute.xlu0 %1049
      %1051 = vrot.lane.b32.xlu0 %v983, 64
      %v1052 = vpop.permute.xlu0 %1051
      %1053 = vrot.lane.b32.xlu0 %v984, 64
      %v1054 = vpop.permute.xlu0 %1053
      %1055 = vrot.lane.b32.xlu0 %v985, 64
      %v1056 = vpop.permute.xlu0 %1055
      %1057 = vrot.lane.b32.xlu0 %v986, 64
      %v1058 = vpop.permute.xlu0 %1057
      %1059 = vrot.lane.b32.xlu0 %v987, 64
      %v1060 = vpop.permute.xlu0 %1059
      %1061 = vrot.lane.b32.xlu0 %v988, 64
      %v1062 = vpop.permute.xlu0 %1061
      %1063 = vrot.lane.b32.xlu0 %v989, 64
      %v1064 = vpop.permute.xlu0 %1063
      %1065 = vrot.lane.b32.xlu0 %v990, 64
      %v1066 = vpop.permute.xlu0 %1065
      %1067 = vrot.lane.b32.xlu0 %v991, 64
      %v1068 = vpop.permute.xlu0 %1067
      %1069 = vrot.lane.b32.xlu0 %v992, 64
      %v1070 = vpop.permute.xlu0 %1069
      %1071 = vrot.lane.b32.xlu0 %v993, 64
      %v1072 = vpop.permute.xlu0 %1071
      %1073 = vrot.lane.b32.xlu0 %v994, 64
      %v1074 = vpop.permute.xlu0 %1073
      %1075 = vrot.lane.b32.xlu0 %v995, 64
      %v1076 = vpop.permute.xlu0 %1075
      %1077 = vrot.lane.b32.xlu0 %v996, 64
      %v1078 = vpop.permute.xlu0 %1077
      %1079 = vrot.lane.b32.xlu0 %v997, 64
      %v1080 = vpop.permute.xlu0 %1079
      %1081 = vrot.lane.b32.xlu0 %v998, 64
      %v1082 = vpop.permute.xlu0 %1081
      %1083 = vrot.lane.b32.xlu0 %v999, 64
      %v1084 = vpop.permute.xlu0 %1083
      %1085 = vrot.lane.b32.xlu0 %v1000, 64
      %v1086 = vpop.permute.xlu0 %1085
      %1087 = vrot.lane.b32.xlu0 %v1001, 64
      %v1088 = vpop.permute.xlu0 %1087
      %1089 = vrot.lane.b32.xlu0 %v1002, 64
      %v1090 = vpop.permute.xlu0 %1089
      %1091 = vrot.lane.b32.xlu0 %v1003, 64
      %v1092 = vpop.permute.xlu0 %1091
      %1093 = vrot.lane.b32.xlu0 %v1004, 64
      %v1094 = vpop.permute.xlu0 %1093
      %1095 = vrot.lane.b32.xlu0 %v1005, 64
      %v1096 = vpop.permute.xlu0 %1095
      %1097 = vrot.lane.b32.xlu0 %v1006, 64
      %v1098 = vpop.permute.xlu0 %1097
      %1099 = vrot.lane.b32.xlu0 %v1007, 64
      %v1100 = vpop.permute.xlu0 %1099
      %1101 = vrot.lane.b32.xlu0 %v1008, 64
      %v1102 = vpop.permute.xlu0 %1101
      %1103 = vrot.lane.b32.xlu0 %v1009, 64
      %v1104 = vpop.permute.xlu0 %1103
      %1105 = vrot.lane.b32.xlu0 %v1010, 64
      %v1106 = vpop.permute.xlu0 %1105
      %v1139 = vmul.f32 %v819, %v1044
      %v1140 = vmul.f32 %v820, %v1046
      %v1141 = vmul.f32 %v821, %v1048
      %v1142 = vmul.f32 %v822, %v1050
      %v1143 = vmul.f32 %v823, %v1052
      %v1144 = vmul.f32 %v824, %v1054
      %v1145 = vmul.f32 %v825, %v1056
      %v1146 = vmul.f32 %v826, %v1058
      %v1147 = vmul.f32 %v827, %v1060
      %v1148 = vmul.f32 %v828, %v1062
      %v1149 = vmul.f32 %v829, %v1064
      %v1150 = vmul.f32 %v830, %v1066
      %v1151 = vmul.f32 %v831, %v1068
      %v1152 = vmul.f32 %v832, %v1070
      %v1153 = vmul.f32 %v833, %v1072
      %v1154 = vmul.f32 %v834, %v1074
      %v1155 = vmul.f32 %v835, %v1076
      %v1156 = vmul.f32 %v836, %v1078
      %v1157 = vmul.f32 %v837, %v1080
      %v1158 = vmul.f32 %v838, %v1082
      %v1159 = vmul.f32 %v839, %v1084
      %v1160 = vmul.f32 %v840, %v1086
      %v1161 = vmul.f32 %v841, %v1088
      %v1162 = vmul.f32 %v842, %v1090
      %v1163 = vmul.f32 %v843, %v1092
      %v1164 = vmul.f32 %v844, %v1094
      %v1165 = vmul.f32 %v845, %v1096
      %v1166 = vmul.f32 %v846, %v1098
      %v1167 = vmul.f32 %v847, %v1100
      %v1168 = vmul.f32 %v848, %v1102
      %v1169 = vmul.f32 %v849, %v1104
      %v1170 = vmul.f32 %v850, %v1106
      %1171 = vst.msk [vmem:[%s224] sm:$0xff] %vm257, %v1139
      %1172 = vst.msk [vmem:[%s224 + $0x8] sm:$0xff] %vm257, %v1140
      %1173 = vst.msk [vmem:[%s224 + $0x10] sm:$0xff] %vm257, %v1141
      %1174 = vst.msk [vmem:[%s224 + $0x18] sm:$0xff] %vm257, %v1142
      %1175 = vst.msk [vmem:[%s224 + $0x20] sm:$0xff] %vm257, %v1143
      %1176 = vst.msk [vmem:[%s224 + $0x28] sm:$0xff] %vm257, %v1144
      %1177 = vst.msk [vmem:[%s224 + $0x30] sm:$0xff] %vm257, %v1145
      %1178 = vst.msk [vmem:[%s224 + $0x38] sm:$0xff] %vm257, %v1146
      %1179 = vst.msk [vmem:[%s224 + $0x40] sm:$0xff] %vm257, %v1147
      %1180 = vst.msk [vmem:[%s224 + $0x48] sm:$0xff] %vm257, %v1148
      %1181 = vst.msk [vmem:[%s224 + $0x50] sm:$0xff] %vm257, %v1149
      %1182 = vst.msk [vmem:[%s224 + $0x58] sm:$0xff] %vm257, %v1150
      %1183 = vst.msk [vmem:[%s224 + $0x60] sm:$0xff] %vm257, %v1151
      %1184 = vst.msk [vmem:[%s224 + $0x68] sm:$0xff] %vm257, %v1152
      %1185 = vst.msk [vmem:[%s224 + $0x70] sm:$0xff] %vm257, %v1153
      %1186 = vst.msk [vmem:[%s224 + $0x78] sm:$0xff] %vm257, %v1154
      %1187 = vst.msk [vmem:[%s224 + $0x80] sm:$0xff] %vm257, %v1155
      %1188 = vst.msk [vmem:[%s224 + $0x88] sm:$0xff] %vm257, %v1156
      %1189 = vst.msk [vmem:[%s224 + $0x90] sm:$0xff] %vm257, %v1157
      %1190 = vst.msk [vmem:[%s224 + $0x98] sm:$0xff] %vm257, %v1158
      %1191 = vst.msk [vmem:[%s224 + $0xa0] sm:$0xff] %vm257, %v1159
      %1192 = vst.msk [vmem:[%s224 + $0xa8] sm:$0xff] %vm257, %v1160
      %1193 = vst.msk [vmem:[%s224 + $0xb0] sm:$0xff] %vm257, %v1161
      %1194 = vst.msk [vmem:[%s224 + $0xb8] sm:$0xff] %vm257, %v1162
      %1195 = vst.msk [vmem:[%s224 + $0xc0] sm:$0xff] %vm257, %v1163
      %1196 = vst.msk [vmem:[%s224 + $0xc8] sm:$0xff] %vm257, %v1164
      %1197 = vst.msk [vmem:[%s224 + $0xd0] sm:$0xff] %vm257, %v1165
      %1198 = vst.msk [vmem:[%s224 + $0xd8] sm:$0xff] %vm257, %v1166
      %1199 = vst.msk [vmem:[%s224 + $0xe0] sm:$0xff] %vm257, %v1167
      %1200 = vst.msk [vmem:[%s224 + $0xe8] sm:$0xff] %vm257, %v1168
      %1201 = vst.msk [vmem:[%s224 + $0xf0] sm:$0xff] %vm257, %v1169
      %1202 = vst.msk [vmem:[%s224 + $0xf8] sm:$0xff] %vm257, %v1170
      %p1203 = scmp.lt.s32.totalorder %s16, 1
      %s1204 = scalar_select %p1203, %s16, 1
      %s1205 = smul.addr %s1204, 32
      %s1206 = smul.addr %s1205, 8
      %s1207 = scalar_lea.vmem %s5, %s1206
      // Predicated region
      $region41: #{emotion_net.8} parent=39 // pred_check
        %p1208 = pneg %p144
      $region42: #{emotion_net.8} parent=39 // pred_check_branch
        %1210 = sbr.rel (%p1208) target = $region44
      $region43: #{emotion_net.8} parent=39 // pred_region
        _
      $region44: #{emotion_net.8} parent=39 // pred_fallthru
        _
    $region40: #{emotion_net.8} parent=5 // pred_fallthru
      _
    %p1211 = scmp.le.s32.totalorder 2, %s11
    // Predicated region
    $region45: #{emotion_net.8} parent=5 // pred_check
      %p1212 = pneg %p1211
    $region46: #{emotion_net.8} parent=5 // pred_check_branch
      %1214 = sbr.rel (%p1212) target = $region48
    $region47: #{emotion_net.8} parent=5 // pred_region
      %s1215 = ssub.s32 %s11, 2
      // Predicated region
      $region49: #{emotion_net.8} parent=47 // pred_check
        %p1216 = pneg %p150
      $region50: #{emotion_net.8} parent=47 // pred_check_branch
        %1218 = sbr.rel (%p1216) target = $region52
      $region51: #{emotion_net.8} parent=47 // pred_region
        %p1219 = scmp.lt.s32.totalorder %s17, 1
        %s1220 = scalar_select %p1219, %s17, 1
        %s1221 = smul.addr %s1220, 32
        %s1222 = smul.addr %s1221, 8
        %s1223 = scalar_lea.vmem %s5, %s1222
      $region52: #{emotion_net.8} parent=47 // pred_fallthru
        _
    $region48: #{emotion_net.8} parent=5 // pred_fallthru
      _
  $region6: #{emotion_net.8} parent=0 // loop_footer
    %s15 = sadd.s32 1, %s11
  $region7: #{emotion_net.8} parent=0 // loop_footer_branch
    %10 = sbr.rel target = $region3
  $region8: #{emotion_net.8} parent=0 // loop_exit
    _

// kernel: emotion_net.10
$region0: #{emotion_net.10}
  #allocation0 [shape = 'u32[]', space=smem, size = 0x4, offset = 0x4, fixed_abs, tag = 'smem constant byte address 0x4 - core index']
  #allocation1 [shape = 'u32[144,128]{1,0:T(1,128)}', space=vmem, size = 0x12000, scoped, tag = 'internal scratch']
  %s0 = inlined_call_operand.vmem [shape: f32[2,4,64,256], index: 0, kind: input, shape index: {}]
  %s1 = inlined_call_operand.vmem [shape: f32[128,128], index: 1, kind: input, shape index: {}]
  %s2 = inlined_call_operand.vmem [shape: f32[1,128], index: 2, kind: input, shape index: {}]
  %s3 = inlined_call_operand.vmem [shape: f32[128,128], index: 3, kind: input, shape index: {}]
  %s4 = inlined_call_operand.vmem [shape: f32[1,128], index: 4, kind: input, shape index: {}]
  %s5 = inlined_call_operand.vmem [shape: f32[2,4,64,128], index: 5, kind: output, shape index: {}]
  %s6 = sld [smem:[#allocation0]]
  $region53: #{emotion_net.10} parent=0
    _
  %s8 = ssub.s32 1, %s6
  %s9 = scalar_select 0, %s8, %s6
  loop: start=0, step=1, limit=4
  $region2: #{emotion_net.10} parent=0 // loop_pre_header
    _
  $region3: #{emotion_net.10} parent=0 // loop_header
    %s11 = sphi 0, %s15
    %p12 = scmp.ge.s32.totalorder %s11, 4
    %s21 = sphi 0, %s23
    %s24 = sphi 0, %s21
    %s25 = sphi 0, %s24
    %s41 = sphi 0, %s25
    %s45 = sphi 0, %s45
    %s47 = sphi 0, %s45
    %s48 = sphi 0, %s47
    %s62 = sphi 0, %s48
    %s66 = sphi 0, %s66
    %s68 = sphi 0, %s66
    %s69 = sphi 0, %s68
    %s83 = sphi 0, %s69
    %s87 = sphi 0, %s87
    %s89 = sphi 0, %s87
    %s90 = sphi 0, %s89
    %s104 = sphi 0, %s90
    %s108 = sphi 0, %s108
    %s110 = sphi 0, %s108
    %s111 = sphi 0, %s110
    %s125 = sphi 0, %s111
    %s131 = sphi 0, %s133
    %s134 = sphi 0, %s131
    %s135 = sphi 0, %s134
    %s151 = sphi 0, %s135
  $region4: #{emotion_net.10} parent=0 // loop_header_branch
    %14 = sbr.rel (%p12) target = $region8
  $region5: #{emotion_net.10} parent=0 // loop_body
    %s16 = ssub.s32 %s11, 1
    %s17 = ssub.s32 %s11, 2
    %s18 = sadd.s32 %s11, 1
    %s19 = ssub.s32 %s11, %s18
    %p20 = scmp.eq.s32.totalorder %s19, 0
    %s22 = sadd.s32 %s21, 1
    %s23 = scalar_select %p20, %s21, %s22
    %p26 = pneg %p20
    %p27 = scmp.eq.s32.totalorder %s11, 1
    %p28 = por %p26, %p27
    %p29 = scmp.ne.s32.totalorder %s21, %s24
    %p30 = scmp.eq.s32.totalorder %s11, 0
    %p31 = por %p29, %p30
    %p32 = scmp.ne.s32.totalorder %s21, %s24
    %p33 = scmp.eq.s32.totalorder %s16, 1
    %p34 = por %p32, %p33
    %p35 = scmp.ne.s32.totalorder %s24, %s25
    %p36 = scmp.eq.s32.totalorder %s16, 0
    %p37 = por %p35, %p36
    %p38 = scmp.ne.s32.totalorder %s24, %s25
    %p39 = scmp.eq.s32.totalorder %s17, 1
    %p40 = por %p38, %p39
    %p42 = scmp.ne.s32.totalorder %s25, %s41
    %p43 = scmp.eq.s32.totalorder %s17, 0
    %p44 = por %p42, %p43
    %s46 = sadd.s32 %s45, 1
    %p49 = scmp.eq.s32.totalorder %s11, 1
    %p50 = scmp.ne.s32.totalorder %s45, %s47
    %p51 = scmp.eq.s32.totalorder %s11, 0
    %p52 = por %p50, %p51
    %p53 = scmp.ne.s32.totalorder %s45, %s47
    %p54 = scmp.eq.s32.totalorder %s16, 1
    %p55 = por %p53, %p54
    %p56 = scmp.ne.s32.totalorder %s47, %s48
    %p57 = scmp.eq.s32.totalorder %s16, 0
    %p58 = por %p56, %p57
    %p59 = scmp.ne.s32.totalorder %s47, %s48
    %p60 = scmp.eq.s32.totalorder %s17, 1
    %p61 = por %p59, %p60
    %p63 = scmp.ne.s32.totalorder %s48, %s62
    %p64 = scmp.eq.s32.totalorder %s17, 0
    %p65 = por %p63, %p64
    %s67 = sadd.s32 %s66, 1
    %p70 = scmp.eq.s32.totalorder %s11, 1
    %p71 = scmp.ne.s32.totalorder %s66, %s68
    %p72 = scmp.eq.s32.totalorder %s11, 0
    %p73 = por %p71, %p72
    %p74 = scmp.ne.s32.totalorder %s66, %s68
    %p75 = scmp.eq.s32.totalorder %s16, 1
    %p76 = por %p74, %p75
    %p77 = scmp.ne.s32.totalorder %s68, %s69
    %p78 = scmp.eq.s32.totalorder %s16, 0
    %p79 = por %p77, %p78
    %p80 = scmp.ne.s32.totalorder %s68, %s69
    %p81 = scmp.eq.s32.totalorder %s17, 1
    %p82 = por %p80, %p81
    %p84 = scmp.ne.s32.totalorder %s69, %s83
    %p85 = scmp.eq.s32.totalorder %s17, 0
    %p86 = por %p84, %p85
    %s88 = sadd.s32 %s87, 1
    %p91 = scmp.eq.s32.totalorder %s11, 1
    %p92 = scmp.ne.s32.totalorder %s87, %s89
    %p93 = scmp.eq.s32.totalorder %s11, 0
    %p94 = por %p92, %p93
    %p95 = scmp.ne.s32.totalorder %s87, %s89
    %p96 = scmp.eq.s32.totalorder %s16, 1
    %p97 = por %p95, %p96
    %p98 = scmp.ne.s32.totalorder %s89, %s90
    %p99 = scmp.eq.s32.totalorder %s16, 0
    %p100 = por %p98, %p99
    %p101 = scmp.ne.s32.totalorder %s89, %s90
    %p102 = scmp.eq.s32.totalorder %s17, 1
    %p103 = por %p101, %p102
    %p105 = scmp.ne.s32.totalorder %s90, %s104
    %p106 = scmp.eq.s32.totalorder %s17, 0
    %p107 = por %p105, %p106
    %s109 = sadd.s32 %s108, 1
    %p112 = scmp.eq.s32.totalorder %s11, 1
    %p113 = scmp.ne.s32.totalorder %s108, %s110
    %p114 = scmp.eq.s32.totalorder %s11, 0
    %p115 = por %p113, %p114
    %p116 = scmp.ne.s32.totalorder %s108, %s110
    %p117 = scmp.eq.s32.totalorder %s16, 1
    %p118 = por %p116, %p117
    %p119 = scmp.ne.s32.totalorder %s110, %s111
    %p120 = scmp.eq.s32.totalorder %s16, 0
    %p121 = por %p119, %p120
    %p122 = scmp.ne.s32.totalorder %s110, %s111
    %p123 = scmp.eq.s32.totalorder %s17, 1
    %p124 = por %p122, %p123
    %p126 = scmp.ne.s32.totalorder %s111, %s125
    %p127 = scmp.eq.s32.totalorder %s17, 0
    %p128 = por %p126, %p127
    %s129 = ssub.s32 %s11, %s18
    %p130 = scmp.eq.s32.totalorder %s129, 0
    %s132 = sadd.s32 %s131, 1
    %s133 = scalar_select %p130, %s131, %s132
    %p136 = pneg %p130
    %p137 = scmp.eq.s32.totalorder %s11, 1
    %p138 = por %p136, %p137
    %p139 = scmp.ne.s32.totalorder %s131, %s134
    %p140 = scmp.eq.s32.totalorder %s11, 0
    %p141 = por %p139, %p140
    %p142 = scmp.ne.s32.totalorder %s131, %s134
    %p143 = scmp.eq.s32.totalorder %s16, 1
    %p144 = por %p142, %p143
    %p145 = scmp.ne.s32.totalorder %s134, %s135
    %p146 = scmp.eq.s32.totalorder %s16, 0
    %p147 = por %p145, %p146
    %p148 = scmp.ne.s32.totalorder %s134, %s135
    %p149 = scmp.eq.s32.totalorder %s17, 1
    %p150 = por %p148, %p149
    %p152 = scmp.ne.s32.totalorder %s135, %s151
    %p153 = scmp.eq.s32.totalorder %s17, 0
    %p154 = por %p152, %p153
    %p155 = scmp.le.s32.totalorder 1, %s11
    %p156 = scmp.lt.s32.totalorder %s11, 3
    %p157 = pnand %p155, %p156
    %p158 = pneg %p157
    // Predicated region
    $region9: #{emotion_net.10} parent=5 // pred_check
      _
    $region10: #{emotion_net.10} parent=5 // pred_check_branch
      %160 = sbr.rel (%p157) target = $region12
    $region11: #{emotion_net.10} parent=5 // pred_region
      %s161 = ssub.s32 %s11, 1
      // Predicated region
      $region13: #{emotion_net.10} parent=11 // pred_check
        %p162 = pneg %p58
      $region14: #{emotion_net.10} parent=11 // pred_check_branch
        %164 = sbr.rel (%p162) target = $region16
      $region15: #{emotion_net.10} parent=11 // pred_region
        _
      $region16: #{emotion_net.10} parent=11 // pred_fallthru
        _
      // Predicated region
      $region17: #{emotion_net.10} parent=11 // pred_check
        %p165 = pneg %p79
      $region18: #{emotion_net.10} parent=11 // pred_check_branch
        %167 = sbr.rel (%p165) target = $region20
      $region19: #{emotion_net.10} parent=11 // pred_region
        _
      $region20: #{emotion_net.10} parent=11 // pred_fallthru
        _
      // Predicated region
      $region21: #{emotion_net.10} parent=11 // pred_check
        %p168 = pneg %p100
      $region22: #{emotion_net.10} parent=11 // pred_check_branch
        %170 = sbr.rel (%p168) target = $region24
      $region23: #{emotion_net.10} parent=11 // pred_region
        _
      $region24: #{emotion_net.10} parent=11 // pred_fallthru
        _
      // Predicated region
      $region25: #{emotion_net.10} parent=11 // pred_check
        %p171 = pneg %p121
      $region26: #{emotion_net.10} parent=11 // pred_check_branch
        %173 = sbr.rel (%p171) target = $region28
      $region27: #{emotion_net.10} parent=11 // pred_region
        _
      $region28: #{emotion_net.10} parent=11 // pred_fallthru
        _
    $region12: #{emotion_net.10} parent=5 // pred_fallthru
      _
    %p174 = scmp.lt.s32.totalorder %s11, 2
    // Predicated region
    $region29: #{emotion_net.10} parent=5 // pred_check
      %p175 = pneg %p174
    $region30: #{emotion_net.10} parent=5 // pred_check_branch
      %177 = sbr.rel (%p175) target = $region32
    $region31: #{emotion_net.10} parent=5 // pred_region
      // Predicated region
      $region33: #{emotion_net.10} parent=31 // pred_check
        %p178 = pneg %p31
      $region34: #{emotion_net.10} parent=31 // pred_check_branch
        %180 = sbr.rel (%p178) target = $region36
      $region35: #{emotion_net.10} parent=31 // pred_region
        %p181 = scmp.lt.s32.totalorder %s11, 1
        %s182 = scalar_select %p181, %s11, 1
        %s183 = smul.addr %s182, 64
        %s184 = smul.addr %s183, 8
        %s185 = scalar_lea.vmem %s0, %s184
      $region36: #{emotion_net.10} parent=31 // pred_fallthru
        _
    $region32: #{emotion_net.10} parent=5 // pred_fallthru
      _
    %p186 = scmp.le.s32.totalorder 1, %s11
    %p187 = scmp.lt.s32.totalorder %s11, 3
    %p188 = pnand %p186, %p187
    %p189 = pneg %p188
    // Predicated region
    $region37: #{emotion_net.10} parent=5 // pred_check
      _
    $region38: #{emotion_net.10} parent=5 // pred_check_branch
      %191 = sbr.rel (%p188) target = $region40
    $region39: #{emotion_net.10} parent=5 // pred_region
      %s192 = ssub.s32 %s11, 1
      %p193 = scmp.lt.s32.totalorder %s16, 1
      %s194 = scalar_select %p193, %s16, 1
      %s195 = smul.addr %s194, 64
      %s196 = smul.addr %s195, 8
      %s197 = scalar_lea.vmem %s0, %s196
      %p198 = pneg %p37
      %p199 = pneg %p34
      %p200 = pneg %p58
      %p201 = pneg %p55
      %p202 = pneg %p79
      %p203 = pneg %p76
      %p204 = pneg %p100
      %p205 = pneg %p97
      %p206 = pneg %p121
      %p207 = pneg %p118
      %p208 = pneg %p147
      %p209 = pneg %p144
      %p210 = scmp.lt.s32.totalorder %s16, 1
      %s211 = scalar_select %p210, %s16, 1
      %s212 = smul.addr %s211, 32
      %s213 = smul.addr %s212, 8
      %s214 = scalar_lea.vmem %s5, %s213
      %p215 = scmp.lt.s32.totalorder %s16, 1
      %s216 = scalar_select %p215, %s16, 1
      %s217 = smul.addr %s216, 64
      %s218 = smul.addr %s217, 8
      %s219 = scalar_lea.vmem %s0, %s218
      %p220 = scmp.lt.s32.totalorder %s16, 1
      %s221 = scalar_select %p220, %s16, 1
      %s222 = smul.addr %s221, 32
      %s223 = smul.addr %s222, 8
      %s224 = scalar_lea.vmem %s5, %s223
      %v225 = vld [vmem:[%s219] sm:$0xff]
      %v226 = vld [vmem:[%s219 + $0x8] sm:$0xff]
      %v227 = vld [vmem:[%s219 + $0x10] sm:$0xff]
      %v228 = vld [vmem:[%s219 + $0x18] sm:$0xff]
      %v229 = vld [vmem:[%s219 + $0x20] sm:$0xff]
      %v230 = vld [vmem:[%s219 + $0x28] sm:$0xff]
      %v231 = vld [vmem:[%s219 + $0x30] sm:$0xff]
      %v232 = vld [vmem:[%s219 + $0x38] sm:$0xff]
      %v233 = vld [vmem:[%s219 + $0x40] sm:$0xff]
      %v234 = vld [vmem:[%s219 + $0x48] sm:$0xff]
      %v235 = vld [vmem:[%s219 + $0x50] sm:$0xff]
      %v236 = vld [vmem:[%s219 + $0x58] sm:$0xff]
      %v237 = vld [vmem:[%s219 + $0x60] sm:$0xff]
      %v238 = vld [vmem:[%s219 + $0x68] sm:$0xff]
      %v239 = vld [vmem:[%s219 + $0x70] sm:$0xff]
      %v240 = vld [vmem:[%s219 + $0x78] sm:$0xff]
      %v241 = vld [vmem:[%s219 + $0x80] sm:$0xff]
      %v242 = vld [vmem:[%s219 + $0x88] sm:$0xff]
      %v243 = vld [vmem:[%s219 + $0x90] sm:$0xff]
      %v244 = vld [vmem:[%s219 + $0x98] sm:$0xff]
      %v245 = vld [vmem:[%s219 + $0xa0] sm:$0xff]
      %v246 = vld [vmem:[%s219 + $0xa8] sm:$0xff]
      %v247 = vld [vmem:[%s219 + $0xb0] sm:$0xff]
      %v248 = vld [vmem:[%s219 + $0xb8] sm:$0xff]
      %v249 = vld [vmem:[%s219 + $0xc0] sm:$0xff]
      %v250 = vld [vmem:[%s219 + $0xc8] sm:$0xff]
      %v251 = vld [vmem:[%s219 + $0xd0] sm:$0xff]
      %v252 = vld [vmem:[%s219 + $0xd8] sm:$0xff]
      %v253 = vld [vmem:[%s219 + $0xe0] sm:$0xff]
      %v254 = vld [vmem:[%s219 + $0xe8] sm:$0xff]
      %v255 = vld [vmem:[%s219 + $0xf0] sm:$0xff]
      %v256 = vld [vmem:[%s219 + $0xf8] sm:$0xff]
      %v257 = vld [vmem:[%s219 + $0x100] sm:$0xff]
      %v258 = vld [vmem:[%s219 + $0x108] sm:$0xff]
      %v259 = vld [vmem:[%s219 + $0x110] sm:$0xff]
      %v260 = vld [vmem:[%s219 + $0x118] sm:$0xff]
      %v261 = vld [vmem:[%s219 + $0x120] sm:$0xff]
      %v262 = vld [vmem:[%s219 + $0x128] sm:$0xff]
      %v263 = vld [vmem:[%s219 + $0x130] sm:$0xff]
      %v264 = vld [vmem:[%s219 + $0x138] sm:$0xff]
      %v265 = vld [vmem:[%s219 + $0x140] sm:$0xff]
      %v266 = vld [vmem:[%s219 + $0x148] sm:$0xff]
      %v267 = vld [vmem:[%s219 + $0x150] sm:$0xff]
      %v268 = vld [vmem:[%s219 + $0x158] sm:$0xff]
      %v269 = vld [vmem:[%s219 + $0x160] sm:$0xff]
      %v270 = vld [vmem:[%s219 + $0x168] sm:$0xff]
      %v271 = vld [vmem:[%s219 + $0x170] sm:$0xff]
      %v272 = vld [vmem:[%s219 + $0x178] sm:$0xff]
      %v273 = vld [vmem:[%s219 + $0x180] sm:$0xff]
      %v274 = vld [vmem:[%s219 + $0x188] sm:$0xff]
      %v275 = vld [vmem:[%s219 + $0x190] sm:$0xff]
      %v276 = vld [vmem:[%s219 + $0x198] sm:$0xff]
      %v277 = vld [vmem:[%s219 + $0x1a0] sm:$0xff]
      %v278 = vld [vmem:[%s219 + $0x1a8] sm:$0xff]
      %v279 = vld [vmem:[%s219 + $0x1b0] sm:$0xff]
      %v280 = vld [vmem:[%s219 + $0x1b8] sm:$0xff]
      %v281 = vld [vmem:[%s219 + $0x1c0] sm:$0xff]
      %v282 = vld [vmem:[%s219 + $0x1c8] sm:$0xff]
      %v283 = vld [vmem:[%s219 + $0x1d0] sm:$0xff]
      %v284 = vld [vmem:[%s219 + $0x1d8] sm:$0xff]
      %v285 = vld [vmem:[%s219 + $0x1e0] sm:$0xff]
      %v286 = vld [vmem:[%s219 + $0x1e8] sm:$0xff]
      %v287 = vld [vmem:[%s219 + $0x1f0] sm:$0xff]
      %v288 = vld [vmem:[%s219 + $0x1f8] sm:$0xff]
      %v289 = vadd.f32 %v225, %v227
      %v290 = vadd.f32 %v289, %v229
      %v291 = vadd.f32 %v290, %v231
      %v292 = vadd.f32 %v291, %v233
      %v293 = vadd.f32 %v292, %v235
      %v294 = vadd.f32 %v293, %v237
      %v295 = vadd.f32 %v294, %v239
      %v296 = vrot.slane %v295, 4
      %v297 = vadd.f32 %v295, %v296
      %v298 = vrot.slane %v297, 2
      %v299 = vadd.f32 %v297, %v298
      %v300 = vrot.slane %v299, 1
      %v301 = vadd.f32 %v299, %v300
      %v302 = vadd.f32 %v241, %v243
      %v303 = vadd.f32 %v302, %v245
      %v304 = vadd.f32 %v303, %v247
      %v305 = vadd.f32 %v304, %v249
      %v306 = vadd.f32 %v305, %v251
      %v307 = vadd.f32 %v306, %v253
      %v308 = vadd.f32 %v307, %v255
      %v309 = vrot.slane %v308, 4
      %v310 = vadd.f32 %v308, %v309
      %v311 = vrot.slane %v310, 2
      %v312 = vadd.f32 %v310, %v311
      %v313 = vrot.slane %v312, 1
      %v314 = vadd.f32 %v312, %v313
      %v315 = vadd.f32 %v257, %v259
      %v316 = vadd.f32 %v315, %v261
      %v317 = vadd.f32 %v316, %v263
      %v318 = vadd.f32 %v317, %v265
      %v319 = vadd.f32 %v318, %v267
      %v320 = vadd.f32 %v319, %v269
      %v321 = vadd.f32 %v320, %v271
      %v322 = vrot.slane %v321, 4
      %v323 = vadd.f32 %v321, %v322
      %v324 = vrot.slane %v323, 2
      %v325 = vadd.f32 %v323, %v324
      %v326 = vrot.slane %v325, 1
      %v327 = vadd.f32 %v325, %v326
      %v328 = vadd.f32 %v273, %v275
      %v329 = vadd.f32 %v328, %v277
      %v330 = vadd.f32 %v329, %v279
      %v331 = vadd.f32 %v330, %v281
      %v332 = vadd.f32 %v331, %v283
      %v333 = vadd.f32 %v332, %v285
      %v334 = vadd.f32 %v333, %v287
      %v335 = vrot.slane %v334, 4
      %v336 = vadd.f32 %v334, %v335
      %v337 = vrot.slane %v336, 2
      %v338 = vadd.f32 %v336, %v337
      %v339 = vrot.slane %v338, 1
      %v340 = vadd.f32 %v338, %v339
      %v341 = vrcp.pop 64.0
      %v342 = vmul.f32 %v301, %v341
      %v343 = vmul.f32 %v314, %v341
      %v344 = vmul.f32 %v327, %v341
      %v345 = vmul.f32 %v340, %v341
      %v346 = vld [vmem:[%s1] sm:$0xff]
      %v347 = vld [vmem:[%s1 + $0x8] sm:$0xff]
      %v348 = vld [vmem:[%s1 + $0x10] sm:$0xff]
      %v349 = vld [vmem:[%s1 + $0x18] sm:$0xff]
      %v350 = vld [vmem:[%s1 + $0x20] sm:$0xff]
      %v351 = vld [vmem:[%s1 + $0x28] sm:$0xff]
      %v352 = vld [vmem:[%s1 + $0x30] sm:$0xff]
      %v353 = vld [vmem:[%s1 + $0x38] sm:$0xff]
      %v354 = vld [vmem:[%s1 + $0x40] sm:$0xff]
      %v355 = vld [vmem:[%s1 + $0x48] sm:$0xff]
      %v356 = vld [vmem:[%s1 + $0x50] sm:$0xff]
      %v357 = vld [vmem:[%s1 + $0x58] sm:$0xff]
      %v358 = vld [vmem:[%s1 + $0x60] sm:$0xff]
      %v359 = vld [vmem:[%s1 + $0x68] sm:$0xff]
      %v360 = vld [vmem:[%s1 + $0x70] sm:$0xff]
      %v361 = vld [vmem:[%s1 + $0x78] sm:$0xff]
      %v362 = vld [vmem:[%s2] sm:$0x1]
      %vm367 = vcmask 1041409
      %v368 = vsel %vm367, %v343, %v342
      %vm369 = vcmask 1042434
      %v370 = vsel %vm369, %v344, %v368
      %vm371 = vcmask 1043459
      %v372 = vsel %vm371, %v345, %v370
      %vm374 = vcmask 1043456
      %v375 = vsel %vm374, %v372, 0.0
      %v377 = vlaneseq
      %v378 = vshrl.u32 %v377, 7
      %v379 = vsub.s32 0, %v378
      %v380 = vrot.slane %v362, %v379
      %382 = vmatprep.subr.mxu0 0.0
      %383 = vmatpush1.msra.mxu0 %v361
      %384 = vmatprep.subr.mxu0 0.0
      %385 = vmatpush1.msra.mxu0 %v360
      %386 = vmatprep.subr.mxu0 0.0
      %387 = vmatpush1.msra.mxu0 %v359
      %388 = vmatprep.subr.mxu0 0.0
      %389 = vmatpush1.msra.mxu0 %v358
      %390 = vmatprep.subr.mxu0 0.0
      %391 = vmatpush1.msra.mxu0 %v357
      %392 = vmatprep.subr.mxu0 0.0
      %393 = vmatpush1.msra.mxu0 %v356
      %394 = vmatprep.subr.mxu0 0.0
      %395 = vmatpush1.msra.mxu0 %v355
      %396 = vmatprep.subr.mxu0 0.0
      %397 = vmatpush1.msra.mxu0 %v354
      %398 = vmatprep.subr.mxu0 0.0
      %399 = vmatpush1.msra.mxu0 %v353
      %400 = vmatprep.subr.mxu0 0.0
      %401 = vmatpush1.msra.mxu0 %v352
      %402 = vmatprep.subr.mxu0 0.0
      %403 = vmatpush1.msra.mxu0 %v351
      %404 = vmatprep.subr.mxu0 0.0
      %405 = vmatpush1.msra.mxu0 %v350
      %406 = vmatprep.subr.mxu0 0.0
      %407 = vmatpush1.msra.mxu0 %v349
      %408 = vmatprep.subr.mxu0 0.0
      %409 = vmatpush1.msra.mxu0 %v348
      %410 = vmatprep.subr.mxu0 0.0
      %411 = vmatpush1.msra.mxu0 %v347
      %412 = vmatprep.subr.mxu0 0.0
      %413 = vmatpush1.msra.mxu0 %v346
      %414 = vmatprep.subr.mxu0 0.0
      %415 = vmatpush2.msra.mxu0 0.0
      %416 = vmatprep.subr.mxu0 0.0
      %417 = vmatpush2.msra.mxu0 0.0
      %418 = vmatprep.subr.mxu0 0.0
      %419 = vmatpush2.msra.mxu0 0.0
      %420 = vmatprep.subr.mxu0 0.0
      %421 = vmatpush2.msra.mxu0 0.0
      %422 = vmatprep.subr.mxu0 0.0
      %423 = vmatpush2.msra.mxu0 0.0
      %424 = vmatprep.subr.mxu0 0.0
      %425 = vmatpush2.msra.mxu0 0.0
      %426 = vmatprep.subr.mxu0 0.0
      %427 = vmatpush2.msra.mxu0 0.0
      %428 = vmatprep.subr.mxu0 0.0
      %429 = vmatpush2.msra.mxu0 0.0
      %430 = vmatprep.subr.mxu0 0.0
      %431 = vmatpush2.msra.mxu0 0.0
      %432 = vmatprep.subr.mxu0 0.0
      %433 = vmatpush2.msra.mxu0 0.0
      %434 = vmatprep.subr.mxu0 0.0
      %435 = vmatpush2.msra.mxu0 0.0
      %436 = vmatprep.subr.mxu0 0.0
      %437 = vmatpush2.msra.mxu0 0.0
      %438 = vmatprep.subr.mxu0 0.0
      %439 = vmatpush2.msra.mxu0 0.0
      %440 = vmatprep.subr.mxu0 0.0
      %441 = vmatpush2.msra.mxu0 0.0
      %442 = vmatprep.subr.mxu0 0.0
      %443 = vmatpush2.msra.mxu0 0.0
      %444 = vmatprep.subr.mxu0 0.0
      %445 = vmatpush2.msra.mxu0 0.0
      %446 = vmatprep.mubr.f32.mxu0 0.0
      %447 = vmatmul.mubr.f32.gmra.mxu0 %v375
      %v448 = vpop.f32.mrf.mxu0
      %v449 = vadd.f32 %v380, %v448
      %v450 = vpop.f32.mrf.mxu0
      %451 = vdwg.mxu0
      %v452 = vadd.f32 %v226, %v242
      %v453 = vadd.f32 %v452, %v258
      %v454 = vadd.f32 %v453, %v274
      %v455 = vadd.f32 %v228, %v244
      %v456 = vadd.f32 %v455, %v260
      %v457 = vadd.f32 %v456, %v276
      %v458 = vadd.f32 %v230, %v246
      %v459 = vadd.f32 %v458, %v262
      %v460 = vadd.f32 %v459, %v278
      %v461 = vadd.f32 %v232, %v248
      %v462 = vadd.f32 %v461, %v264
      %v463 = vadd.f32 %v462, %v280
      %v464 = vadd.f32 %v234, %v250
      %v465 = vadd.f32 %v464, %v266
      %v466 = vadd.f32 %v465, %v282
      %v467 = vadd.f32 %v236, %v252
      %v468 = vadd.f32 %v467, %v268
      %v469 = vadd.f32 %v468, %v284
      %v470 = vadd.f32 %v238, %v254
      %v471 = vadd.f32 %v470, %v270
      %v472 = vadd.f32 %v471, %v286
      %v473 = vadd.f32 %v240, %v256
      %v474 = vadd.f32 %v473, %v272
      %v475 = vadd.f32 %v474, %v288
      %v476 = vrcp.pop 4.0
      %v477 = vmul.f32 %v454, %v476
      %v478 = vmul.f32 %v457, %v476
      %v479 = vmul.f32 %v460, %v476
      %v480 = vmul.f32 %v463, %v476
      %v481 = vmul.f32 %v466, %v476
      %v482 = vmul.f32 %v469, %v476
      %v483 = vmul.f32 %v472, %v476
      %v484 = vmul.f32 %v475, %v476
      %v485 = vld [vmem:[%s3] sm:$0xff]
      %v486 = vld [vmem:[%s3 + $0x8] sm:$0xff]
      %v487 = vld [vmem:[%s3 + $0x10] sm:$0xff]
      %v488 = vld [vmem:[%s3 + $0x18] sm:$0xff]
      %v489 = vld [vmem:[%s3 + $0x20] sm:$0xff]
      %v490 = vld [vmem:[%s3 + $0x28] sm:$0xff]
      %v491 = vld [vmem:[%s3 + $0x30] sm:$0xff]
      %v492 = vld [vmem:[%s3 + $0x38] sm:$0xff]
      %v493 = vld [vmem:[%s3 + $0x40] sm:$0xff]
      %v494 = vld [vmem:[%s3 + $0x48] sm:$0xff]
      %v495 = vld [vmem:[%s3 + $0x50] sm:$0xff]
      %v496 = vld [vmem:[%s3 + $0x58] sm:$0xff]
      %v497 = vld [vmem:[%s3 + $0x60] sm:$0xff]
      %v498 = vld [vmem:[%s3 + $0x68] sm:$0xff]
      %v499 = vld [vmem:[%s3 + $0x70] sm:$0xff]
      %v500 = vld [vmem:[%s3 + $0x78] sm:$0xff]
      %v501 = vld [vmem:[%s4] sm:$0x1]
      %v503 = vlaneseq
      %v504 = vshrl.u32 %v503, 7
      %v505 = vsub.s32 0, %v504
      %v506 = vrot.slane %v501, %v505
      %508 = vmatprep.subr.mxu0 0.0
      %509 = vmatpush1.msra.mxu0 %v500
      %510 = vmatprep.subr.mxu0 0.0
      %511 = vmatpush1.msra.mxu0 %v499
      %512 = vmatprep.subr.mxu0 0.0
      %513 = vmatpush1.msra.mxu0 %v498
      %514 = vmatprep.subr.mxu0 0.0
      %515 = vmatpush1.msra.mxu0 %v497
      %516 = vmatprep.subr.mxu0 0.0
      %517 = vmatpush1.msra.mxu0 %v496
      %518 = vmatprep.subr.mxu0 0.0
      %519 = vmatpush1.msra.mxu0 %v495
      %520 = vmatprep.subr.mxu0 0.0
      %521 = vmatpush1.msra.mxu0 %v494
      %522 = vmatprep.subr.mxu0 0.0
      %523 = vmatpush1.msra.mxu0 %v493
      %524 = vmatprep.subr.mxu0 0.0
      %525 = vmatpush1.msra.mxu0 %v492
      %526 = vmatprep.subr.mxu0 0.0
      %527 = vmatpush1.msra.mxu0 %v491
      %528 = vmatprep.subr.mxu0 0.0
      %529 = vmatpush1.msra.mxu0 %v490
      %530 = vmatprep.subr.mxu0 0.0
      %531 = vmatpush1.msra.mxu0 %v489
      %532 = vmatprep.subr.mxu0 0.0
      %533 = vmatpush1.msra.mxu0 %v488
      %534 = vmatprep.subr.mxu0 0.0
      %535 = vmatpush1.msra.mxu0 %v487
      %536 = vmatprep.subr.mxu0 0.0
      %537 = vmatpush1.msra.mxu0 %v486
      %538 = vmatprep.subr.mxu0 0.0
      %539 = vmatpush1.msra.mxu0 %v485
      %540 = vmatprep.subr.mxu0 0.0
      %541 = vmatpush2.msra.mxu0 0.0
      %542 = vmatprep.subr.mxu0 0.0
      %543 = vmatpush2.msra.mxu0 0.0
      %544 = vmatprep.subr.mxu0 0.0
      %545 = vmatpush2.msra.mxu0 0.0
      %546 = vmatprep.subr.mxu0 0.0
      %547 = vmatpush2.msra.mxu0 0.0
      %548 = vmatprep.subr.mxu0 0.0
      %549 = vmatpush2.msra.mxu0 0.0
      %550 = vmatprep.subr.mxu0 0.0
      %551 = vmatpush2.msra.mxu0 0.0
      %552 = vmatprep.subr.mxu0 0.0
      %553 = vmatpush2.msra.mxu0 0.0
      %554 = vmatprep.subr.mxu0 0.0
      %555 = vmatpush2.msra.mxu0 0.0
      %556 = vmatprep.subr.mxu0 0.0
      %557 = vmatpush2.msra.mxu0 0.0
      %558 = vmatprep.subr.mxu0 0.0
      %559 = vmatpush2.msra.mxu0 0.0
      %560 = vmatprep.subr.mxu0 0.0
      %561 = vmatpush2.msra.mxu0 0.0
      %562 = vmatprep.subr.mxu0 0.0
      %563 = vmatpush2.msra.mxu0 0.0
      %564 = vmatprep.subr.mxu0 0.0
      %565 = vmatpush2.msra.mxu0 0.0
      %566 = vmatprep.subr.mxu0 0.0
      %567 = vmatpush2.msra.mxu0 0.0
      %568 = vmatprep.subr.mxu0 0.0
      %569 = vmatpush2.msra.mxu0 0.0
      %570 = vmatprep.subr.mxu0 0.0
      %571 = vmatpush2.msra.mxu0 0.0
      %572 = vmatprep.mubr.f32.mxu0 0.0
      %573 = vmatmul.mubr.f32.gmra.mxu0 %v477
      %v574 = vpop.f32.mrf.mxu0
      %v575 = vadd.f32 %v506, %v574
      %v576 = vpop.f32.mrf.mxu0
      %577 = vmatprep.mubr.f32.mxu0 0.0
      %578 = vmatmul.mubr.f32.gmra.mxu0 %v478
      %v579 = vpop.f32.mrf.mxu0
      %v580 = vadd.f32 %v506, %v579
      %v581 = vpop.f32.mrf.mxu0
      %582 = vmatprep.mubr.f32.mxu0 0.0
      %583 = vmatmul.mubr.f32.gmra.mxu0 %v479
      %v584 = vpop.f32.mrf.mxu0
      %v585 = vadd.f32 %v506, %v584
      %v586 = vpop.f32.mrf.mxu0
      %587 = vmatprep.mubr.f32.mxu0 0.0
      %588 = vmatmul.mubr.f32.gmra.mxu0 %v480
      %v589 = vpop.f32.mrf.mxu0
      %v590 = vadd.f32 %v506, %v589
      %v591 = vpop.f32.mrf.mxu0
      %592 = vmatprep.mubr.f32.mxu0 0.0
      %593 = vmatmul.mubr.f32.gmra.mxu0 %v481
      %v594 = vpop.f32.mrf.mxu0
      %v595 = vadd.f32 %v506, %v594
      %v596 = vpop.f32.mrf.mxu0
      %597 = vmatprep.mubr.f32.mxu0 0.0
      %598 = vmatmul.mubr.f32.gmra.mxu0 %v482
      %v599 = vpop.f32.mrf.mxu0
      %v600 = vadd.f32 %v506, %v599
      %v601 = vpop.f32.mrf.mxu0
      %602 = vmatprep.mubr.f32.mxu0 0.0
      %603 = vmatmul.mubr.f32.gmra.mxu0 %v483
      %v604 = vpop.f32.mrf.mxu0
      %v605 = vadd.f32 %v506, %v604
      %v606 = vpop.f32.mrf.mxu0
      %607 = vmatprep.mubr.f32.mxu0 0.0
      %608 = vmatmul.mubr.f32.gmra.mxu0 %v484
      %v609 = vpop.f32.mrf.mxu0
      %v610 = vadd.f32 %v506, %v609
      %v611 = vpop.f32.mrf.mxu0
      %612 = vdwg.mxu0
      %v613 = vsel %vm374, %v449, -inf
      %614 = vmax.xlane.f32.xlu0 %v613
      %v615 = vpop.xlane.xlu0 %614
      %v616 = vsub.f32 %v449, %v615
      %v617 = vmul.f32 %v616, 1.442695
      %v618 = vpow.pop %v617
      %v619 = vsel %vm374, %v618, 0.0
      %620 = vadd.xlane.f32.xlu0 %v619
      %v621 = vpop.xlane.xlu0 %620
      %v622 = vrcp.pop %v621
      %v623 = vmul.f32 %v618, %v622
      %624 = vmax.xlane.f32.xlu0 %v575
      %v625 = vpop.xlane.xlu0 %624
      %626 = vmax.xlane.f32.xlu0 %v580
      %v627 = vpop.xlane.xlu0 %626
      %628 = vmax.xlane.f32.xlu0 %v585
      %v629 = vpop.xlane.xlu0 %628
      %630 = vmax.xlane.f32.xlu0 %v590
      %v631 = vpop.xlane.xlu0 %630
      %632 = vmax.xlane.f32.xlu0 %v595
      %v633 = vpop.xlane.xlu0 %632
      %634 = vmax.xlane.f32.xlu0 %v600
      %v635 = vpop.xlane.xlu0 %634
      %636 = vmax.xlane.f32.xlu0 %v605
      %v637 = vpop.xlane.xlu0 %636
      %638 = vmax.xlane.f32.xlu0 %v610
      %v639 = vpop.xlane.xlu0 %638
      %v640 = vsub.f32 %v575, %v625
      %v641 = vsub.f32 %v580, %v627
      %v642 = vsub.f32 %v585, %v629
      %v643 = vsub.f32 %v590, %v631
      %v644 = vsub.f32 %v595, %v633
      %v645 = vsub.f32 %v600, %v635
      %v646 = vsub.f32 %v605, %v637
      %v647 = vsub.f32 %v610, %v639
      %v648 = vmul.f32 %v640, 1.442695
      %v649 = vpow.pop %v648
      %v650 = vmul.f32 %v641, 1.442695
      %v651 = vpow.pop %v650
      %v652 = vmul.f32 %v642, 1.442695
      %v653 = vpow.pop %v652
      %v654 = vmul.f32 %v643, 1.442695
      %v655 = vpow.pop %v654
      %v656 = vmul.f32 %v644, 1.442695
      %v657 = vpow.pop %v656
      %v658 = vmul.f32 %v645, 1.442695
      %v659 = vpow.pop %v658
      %v660 = vmul.f32 %v646, 1.442695
      %v661 = vpow.pop %v660
      %v662 = vmul.f32 %v647, 1.442695
      %v663 = vpow.pop %v662
      %664 = vadd.xlane.f32.xlu0 %v649
      %v665 = vpop.xlane.xlu0 %664
      %666 = vadd.xlane.f32.xlu0 %v651
      %v667 = vpop.xlane.xlu0 %666
      %668 = vadd.xlane.f32.xlu0 %v653
      %v669 = vpop.xlane.xlu0 %668
      %670 = vadd.xlane.f32.xlu0 %v655
      %v671 = vpop.xlane.xlu0 %670
      %672 = vadd.xlane.f32.xlu0 %v657
      %v673 = vpop.xlane.xlu0 %672
      %674 = vadd.xlane.f32.xlu0 %v659
      %v675 = vpop.xlane.xlu0 %674
      %676 = vadd.xlane.f32.xlu0 %v661
      %v677 = vpop.xlane.xlu0 %676
      %678 = vadd.xlane.f32.xlu0 %v663
      %v679 = vpop.xlane.xlu0 %678
      %v680 = vrcp.pop %v665
      %v681 = vmul.f32 %v649, %v680
      %v682 = vrcp.pop %v667
      %v683 = vmul.f32 %v651, %v682
      %v684 = vrcp.pop %v669
      %v685 = vmul.f32 %v653, %v684
      %v686 = vrcp.pop %v671
      %v687 = vmul.f32 %v655, %v686
      %v688 = vrcp.pop %v673
      %v689 = vmul.f32 %v657, %v688
      %v690 = vrcp.pop %v675
      %v691 = vmul.f32 %v659, %v690
      %v692 = vrcp.pop %v677
      %v693 = vmul.f32 %v661, %v692
      %v694 = vrcp.pop %v679
      %v695 = vmul.f32 %v663, %v694
      %v698 = vunpack.c.l.s4 1966171168
      %v699 = vunpack.c.0.s8 %v698
      %v700 = vlaneseq
      %v701 = vshrl.u32 %v700, 7
      %v702 = vsub.s32 %v699, %v701
      %v703 = vrot.slane %v623, %v702
      %v704 = vcombine.high %v703, %v703
      %v706 = vunpack.c.l.s4 1966171168
      %v707 = vunpack.c.0.s8 %v706
      %v708 = vlaneseq
      %v709 = vshrl.u32 %v708, 7
      %v710 = vsub.s32 %v707, %v709
      %v711 = vrot.slane %v703, %v710
      %v713 = vunpack.c.l.s4 1966171168
      %v714 = vunpack.c.0.s8 %v713
      %v715 = vlaneseq
      %v716 = vshrl.u32 %v715, 7
      %v717 = vsub.s32 %v714, %v716
      %v718 = vrot.slane %v704, %v717
      %v719 = vcombine.high %v711, %v711
      %v720 = vcombine.high %v718, %v718
      %v721 = vlaneseq
      %v722 = vshrl.u32 %v721, 7
      %v723 = vsub.s32 0, %v722
      %v724 = vrot.slane %v711, %v723
      %v725 = vlaneseq
      %v726 = vshrl.u32 %v725, 7
      %v727 = vsub.s32 0, %v726
      %v728 = vrot.slane %v718, %v727
      %v729 = vlaneseq
      %v730 = vshrl.u32 %v729, 7
      %v731 = vsub.s32 0, %v730
      %v732 = vrot.slane %v719, %v731
      %v733 = vlaneseq
      %v734 = vshrl.u32 %v733, 7
      %v735 = vsub.s32 0, %v734
      %v736 = vrot.slane %v720, %v735
      %v741 = vmul.f32 %v724, %v681
      %v742 = vmul.f32 %v724, %v683
      %v743 = vmul.f32 %v724, %v685
      %v744 = vmul.f32 %v724, %v687
      %v745 = vmul.f32 %v724, %v689
      %v746 = vmul.f32 %v724, %v691
      %v747 = vmul.f32 %v724, %v693
      %v748 = vmul.f32 %v724, %v695
      %v749 = vmul.f32 %v728, %v681
      %v750 = vmul.f32 %v728, %v683
      %v751 = vmul.f32 %v728, %v685
      %v752 = vmul.f32 %v728, %v687
      %v753 = vmul.f32 %v728, %v689
      %v754 = vmul.f32 %v728, %v691
      %v755 = vmul.f32 %v728, %v693
      %v756 = vmul.f32 %v728, %v695
      %v757 = vmul.f32 %v732, %v681
      %v758 = vmul.f32 %v732, %v683
      %v759 = vmul.f32 %v732, %v685
      %v760 = vmul.f32 %v732, %v687
      %v761 = vmul.f32 %v732, %v689
      %v762 = vmul.f32 %v732, %v691
      %v763 = vmul.f32 %v732, %v693
      %v764 = vmul.f32 %v732, %v695
      %v765 = vmul.f32 %v736, %v681
      %v766 = vmul.f32 %v736, %v683
      %v767 = vmul.f32 %v736, %v685
      %v768 = vmul.f32 %v736, %v687
      %v769 = vmul.f32 %v736, %v689
      %v770 = vmul.f32 %v736, %v691
      %v771 = vmul.f32 %v736, %v693
      %v772 = vmul.f32 %v736, %v695
      %v773 = vadd.f32 %v226, %v225
      %v774 = vadd.f32 %v228, %v227
      %v775 = vadd.f32 %v230, %v229
      %v776 = vadd.f32 %v232, %v231
      %v777 = vadd.f32 %v234, %v233
      %v778 = vadd.f32 %v236, %v235
      %v779 = vadd.f32 %v238, %v237
      %v780 = vadd.f32 %v240, %v239
      %v781 = vadd.f32 %v242, %v241
      %v782 = vadd.f32 %v244, %v243
      %v783 = vadd.f32 %v246, %v245
      %v784 = vadd.f32 %v248, %v247
      %v785 = vadd.f32 %v250, %v249
      %v786 = vadd.f32 %v252, %v251
      %v787 = vadd.f32 %v254, %v253
      %v788 = vadd.f32 %v256, %v255
      %v789 = vadd.f32 %v258, %v257
      %v790 = vadd.f32 %v260, %v259
      %v791 = vadd.f32 %v262, %v261
      %v792 = vadd.f32 %v264, %v263
      %v793 = vadd.f32 %v266, %v265
      %v794 = vadd.f32 %v268, %v267
      %v795 = vadd.f32 %v270, %v269
      %v796 = vadd.f32 %v272, %v271
      %v797 = vadd.f32 %v274, %v273
      %v798 = vadd.f32 %v276, %v275
      %v799 = vadd.f32 %v278, %v277
      %v800 = vadd.f32 %v280, %v279
      %v801 = vadd.f32 %v282, %v281
      %v802 = vadd.f32 %v284, %v283
      %v803 = vadd.f32 %v286, %v285
      %v804 = vadd.f32 %v288, %v287
      %v805 = vmul.f32 %v741, %v773
      %v806 = vmul.f32 %v742, %v774
      %v807 = vmul.f32 %v743, %v775
      %v808 = vmul.f32 %v744, %v776
      %v809 = vmul.f32 %v745, %v777
      %v810 = vmul.f32 %v746, %v778
      %v811 = vmul.f32 %v747, %v779
      %v812 = vmul.f32 %v748, %v780
      %v813 = vmul.f32 %v749, %v781
      %v814 = vmul.f32 %v750, %v782
      %v815 = vmul.f32 %v751, %v783
      %v816 = vmul.f32 %v752, %v784
      %v817 = vmul.f32 %v753, %v785
      %v818 = vmul.f32 %v754, %v786
      %v819 = vmul.f32 %v755, %v787
      %v820 = vmul.f32 %v756, %v788
      %v821 = vmul.f32 %v757, %v789
      %v822 = vmul.f32 %v758, %v790
      %v823 = vmul.f32 %v759, %v791
      %v824 = vmul.f32 %v760, %v792
      %v825 = vmul.f32 %v761, %v793
      %v826 = vmul.f32 %v762, %v794
      %v827 = vmul.f32 %v763, %v795
      %v828 = vmul.f32 %v764, %v796
      %v829 = vmul.f32 %v765, %v797
      %v830 = vmul.f32 %v766, %v798
      %v831 = vmul.f32 %v767, %v799
      %v832 = vmul.f32 %v768, %v800
      %v833 = vmul.f32 %v769, %v801
      %v834 = vmul.f32 %v770, %v802
      %v835 = vmul.f32 %v771, %v803
      %v836 = vmul.f32 %v772, %v804
      %837 = vst [vmem:[%s224] sm:$0xff] %v805
      %838 = vst [vmem:[%s224 + $0x8] sm:$0xff] %v806
      %839 = vst [vmem:[%s224 + $0x10] sm:$0xff] %v807
      %840 = vst [vmem:[%s224 + $0x18] sm:$0xff] %v808
      %841 = vst [vmem:[%s224 + $0x20] sm:$0xff] %v809
      %842 = vst [vmem:[%s224 + $0x28] sm:$0xff] %v810
      %843 = vst [vmem:[%s224 + $0x30] sm:$0xff] %v811
      %844 = vst [vmem:[%s224 + $0x38] sm:$0xff] %v812
      %845 = vst [vmem:[%s224 + $0x40] sm:$0xff] %v813
      %846 = vst [vmem:[%s224 + $0x48] sm:$0xff] %v814
      %847 = vst [vmem:[%s224 + $0x50] sm:$0xff] %v815
      %848 = vst [vmem:[%s224 + $0x58] sm:$0xff] %v816
      %849 = vst [vmem:[%s224 + $0x60] sm:$0xff] %v817
      %850 = vst [vmem:[%s224 + $0x68] sm:$0xff] %v818
      %851 = vst [vmem:[%s224 + $0x70] sm:$0xff] %v819
      %852 = vst [vmem:[%s224 + $0x78] sm:$0xff] %v820
      %853 = vst [vmem:[%s224 + $0x80] sm:$0xff] %v821
      %854 = vst [vmem:[%s224 + $0x88] sm:$0xff] %v822
      %855 = vst [vmem:[%s224 + $0x90] sm:$0xff] %v823
      %856 = vst [vmem:[%s224 + $0x98] sm:$0xff] %v824
      %857 = vst [vmem:[%s224 + $0xa0] sm:$0xff] %v825
      %858 = vst [vmem:[%s224 + $0xa8] sm:$0xff] %v826
      %859 = vst [vmem:[%s224 + $0xb0] sm:$0xff] %v827
      %860 = vst [vmem:[%s224 + $0xb8] sm:$0xff] %v828
      %861 = vst [vmem:[%s224 + $0xc0] sm:$0xff] %v829
      %862 = vst [vmem:[%s224 + $0xc8] sm:$0xff] %v830
      %863 = vst [vmem:[%s224 + $0xd0] sm:$0xff] %v831
      %864 = vst [vmem:[%s224 + $0xd8] sm:$0xff] %v832
      %865 = vst [vmem:[%s224 + $0xe0] sm:$0xff] %v833
      %866 = vst [vmem:[%s224 + $0xe8] sm:$0xff] %v834
      %867 = vst [vmem:[%s224 + $0xf0] sm:$0xff] %v835
      %868 = vst [vmem:[%s224 + $0xf8] sm:$0xff] %v836
      %p869 = scmp.lt.s32.totalorder %s16, 1
      %s870 = scalar_select %p869, %s16, 1
      %s871 = smul.addr %s870, 32
      %s872 = smul.addr %s871, 8
      %s873 = scalar_lea.vmem %s5, %s872
      // Predicated region
      $region41: #{emotion_net.10} parent=39 // pred_check
        %p874 = pneg %p144
      $region42: #{emotion_net.10} parent=39 // pred_check_branch
        %876 = sbr.rel (%p874) target = $region44
      $region43: #{emotion_net.10} parent=39 // pred_region
        _
      $region44: #{emotion_net.10} parent=39 // pred_fallthru
        _
    $region40: #{emotion_net.10} parent=5 // pred_fallthru
      _
    %p877 = scmp.le.s32.totalorder 2, %s11
    // Predicated region
    $region45: #{emotion_net.10} parent=5 // pred_check
      %p878 = pneg %p877
    $region46: #{emotion_net.10} parent=5 // pred_check_branch
      %880 = sbr.rel (%p878) target = $region48
    $region47: #{emotion_net.10} parent=5 // pred_region
      %s881 = ssub.s32 %s11, 2
      // Predicated region
      $region49: #{emotion_net.10} parent=47 // pred_check
        %p882 = pneg %p150
      $region50: #{emotion_net.10} parent=47 // pred_check_branch
        %884 = sbr.rel (%p882) target = $region52
      $region51: #{emotion_net.10} parent=47 // pred_region
        %p885 = scmp.lt.s32.totalorder %s17, 1
        %s886 = scalar_select %p885, %s17, 1
        %s887 = smul.addr %s886, 32
        %s888 = smul.addr %s887, 8
        %s889 = scalar_lea.vmem %s5, %s888
      $region52: #{emotion_net.10} parent=47 // pred_fallthru
        _
    $region48: #{emotion_net.10} parent=5 // pred_fallthru
      _
  $region6: #{emotion_net.10} parent=0 // loop_footer
    %s15 = sadd.s32 1, %s11
  $region7: #{emotion_net.10} parent=0 // loop_footer_branch
    %10 = sbr.rel target = $region3
  $region8: #{emotion_net.10} parent=0 // loop_exit
    _

// kernel: emotion_net.9
$region0: #{emotion_net.9}
  #allocation0 [shape = 'u32[]', space=smem, size = 0x4, offset = 0x4, fixed_abs, tag = 'smem constant byte address 0x4 - core index']
  #allocation1 [shape = 'u32[144,128]{1,0:T(1,128)}', space=vmem, size = 0x12000, scoped, tag = 'internal scratch']
  %s0 = inlined_call_operand.vmem [shape: bf16[512,1728], index: 0, kind: input, shape index: {}]
  %s1 = inlined_call_operand.vmem [shape: bf16[1728,256], index: 1, kind: input, shape index: {}]
  %s2 = inlined_call_operand.vmem [shape: f32[1,256], index: 2, kind: input, shape index: {}]
  %s3 = inlined_call_operand.vmem [shape: f32[512,256], index: 3, kind: output, shape index: {}]
  %s4 = sld [smem:[#allocation0]]
  $region45: #{emotion_net.9} parent=0
    _
  %s6 = ssub.s32 1, %s4
  %s7 = scalar_select 0, %s6, %s4
  loop: start=0, step=1, limit=4
  $region2: #{emotion_net.9} parent=0 // loop_pre_header
    _
  $region3: #{emotion_net.9} parent=0 // loop_header
    %s9 = sphi 0, %s13
    %p10 = scmp.ge.s32.totalorder %s9, 4
    %s19 = sphi 0, %s21
    %s22 = sphi 0, %s19
    %s23 = sphi 0, %s22
    %s39 = sphi 0, %s23
    %s43 = sphi 0, %s43
    %s45 = sphi 0, %s43
    %s46 = sphi 0, %s45
    %s60 = sphi 0, %s46
    %s64 = sphi 0, %s64
    %s66 = sphi 0, %s64
    %s67 = sphi 0, %s66
    %s81 = sphi 0, %s67
    %s87 = sphi 0, %s89
    %s90 = sphi 0, %s87
    %s91 = sphi 0, %s90
    %s107 = sphi 0, %s91
  $region4: #{emotion_net.9} parent=0 // loop_header_branch
    %12 = sbr.rel (%p10) target = $region8
  $region5: #{emotion_net.9} parent=0 // loop_body
    %s14 = ssub.s32 %s9, 1
    %s15 = ssub.s32 %s9, 2
    %s16 = sadd.s32 %s9, 1
    %s17 = ssub.s32 %s9, %s16
    %p18 = scmp.eq.s32.totalorder %s17, 0
    %s20 = sadd.s32 %s19, 1
    %s21 = scalar_select %p18, %s19, %s20
    %p24 = pneg %p18
    %p25 = scmp.eq.s32.totalorder %s9, 1
    %p26 = por %p24, %p25
    %p27 = scmp.ne.s32.totalorder %s19, %s22
    %p28 = scmp.eq.s32.totalorder %s9, 0
    %p29 = por %p27, %p28
    %p30 = scmp.ne.s32.totalorder %s19, %s22
    %p31 = scmp.eq.s32.totalorder %s14, 1
    %p32 = por %p30, %p31
    %p33 = scmp.ne.s32.totalorder %s22, %s23
    %p34 = scmp.eq.s32.totalorder %s14, 0
    %p35 = por %p33, %p34
    %p36 = scmp.ne.s32.totalorder %s22, %s23
    %p37 = scmp.eq.s32.totalorder %s15, 1
    %p38 = por %p36, %p37
    %p40 = scmp.ne.s32.totalorder %s23, %s39
    %p41 = scmp.eq.s32.totalorder %s15, 0
    %p42 = por %p40, %p41
    %s44 = sadd.s32 %s43, 1
    %p47 = scmp.eq.s32.totalorder %s9, 1
    %p48 = scmp.ne.s32.totalorder %s43, %s45
    %p49 = scmp.eq.s32.totalorder %s9, 0
    %p50 = por %p48, %p49
    %p51 = scmp.ne.s32.totalorder %s43, %s45
    %p52 = scmp.eq.s32.totalorder %s14, 1
    %p53 = por %p51, %p52
    %p54 = scmp.ne.s32.totalorder %s45, %s46
    %p55 = scmp.eq.s32.totalorder %s14, 0
    %p56 = por %p54, %p55
    %p57 = scmp.ne.s32.totalorder %s45, %s46
    %p58 = scmp.eq.s32.totalorder %s15, 1
    %p59 = por %p57, %p58
    %p61 = scmp.ne.s32.totalorder %s46, %s60
    %p62 = scmp.eq.s32.totalorder %s15, 0
    %p63 = por %p61, %p62
    %s65 = sadd.s32 %s64, 1
    %p68 = scmp.eq.s32.totalorder %s9, 1
    %p69 = scmp.ne.s32.totalorder %s64, %s66
    %p70 = scmp.eq.s32.totalorder %s9, 0
    %p71 = por %p69, %p70
    %p72 = scmp.ne.s32.totalorder %s64, %s66
    %p73 = scmp.eq.s32.totalorder %s14, 1
    %p74 = por %p72, %p73
    %p75 = scmp.ne.s32.totalorder %s66, %s67
    %p76 = scmp.eq.s32.totalorder %s14, 0
    %p77 = por %p75, %p76
    %p78 = scmp.ne.s32.totalorder %s66, %s67
    %p79 = scmp.eq.s32.totalorder %s15, 1
    %p80 = por %p78, %p79
    %p82 = scmp.ne.s32.totalorder %s67, %s81
    %p83 = scmp.eq.s32.totalorder %s15, 0
    %p84 = por %p82, %p83
    %s85 = ssub.s32 %s9, %s16
    %p86 = scmp.eq.s32.totalorder %s85, 0
    %s88 = sadd.s32 %s87, 1
    %s89 = scalar_select %p86, %s87, %s88
    %p92 = pneg %p86
    %p93 = scmp.eq.s32.totalorder %s9, 1
    %p94 = por %p92, %p93
    %p95 = scmp.ne.s32.totalorder %s87, %s90
    %p96 = scmp.eq.s32.totalorder %s9, 0
    %p97 = por %p95, %p96
    %p98 = scmp.ne.s32.totalorder %s87, %s90
    %p99 = scmp.eq.s32.totalorder %s14, 1
    %p100 = por %p98, %p99
    %p101 = scmp.ne.s32.totalorder %s90, %s91
    %p102 = scmp.eq.s32.totalorder %s14, 0
    %p103 = por %p101, %p102
    %p104 = scmp.ne.s32.totalorder %s90, %s91
    %p105 = scmp.eq.s32.totalorder %s15, 1
    %p106 = por %p104, %p105
    %p108 = scmp.ne.s32.totalorder %s91, %s107
    %p109 = scmp.eq.s32.totalorder %s15, 0
    %p110 = por %p108, %p109
    %p111 = scmp.le.s32.totalorder 1, %s9
    %p112 = scmp.lt.s32.totalorder %s9, 3
    %p113 = pnand %p111, %p112
    %p114 = pneg %p113
    // Predicated region
    $region9: #{emotion_net.9} parent=5 // pred_check
      _
    $region10: #{emotion_net.9} parent=5 // pred_check_branch
      %116 = sbr.rel (%p113) target = $region12
    $region11: #{emotion_net.9} parent=5 // pred_region
      %s117 = ssub.s32 %s9, 1
      // Predicated region
      $region13: #{emotion_net.9} parent=11 // pred_check
        %p118 = pneg %p56
      $region14: #{emotion_net.9} parent=11 // pred_check_branch
        %120 = sbr.rel (%p118) target = $region16
      $region15: #{emotion_net.9} parent=11 // pred_region
        _
      $region16: #{emotion_net.9} parent=11 // pred_fallthru
        _
      // Predicated region
      $region17: #{emotion_net.9} parent=11 // pred_check
        %p121 = pneg %p77
      $region18: #{emotion_net.9} parent=11 // pred_check_branch
        %123 = sbr.rel (%p121) target = $region20
      $region19: #{emotion_net.9} parent=11 // pred_region
        _
      $region20: #{emotion_net.9} parent=11 // pred_fallthru
        _
    $region12: #{emotion_net.9} parent=5 // pred_fallthru
      _
    %p124 = scmp.lt.s32.totalorder %s9, 2
    // Predicated region
    $region21: #{emotion_net.9} parent=5 // pred_check
      %p125 = pneg %p124
    $region22: #{emotion_net.9} parent=5 // pred_check_branch
      %127 = sbr.rel (%p125) target = $region24
    $region23: #{emotion_net.9} parent=5 // pred_region
      // Predicated region
      $region25: #{emotion_net.9} parent=23 // pred_check
        %p128 = pneg %p29
      $region26: #{emotion_net.9} parent=23 // pred_check_branch
        %130 = sbr.rel (%p128) target = $region28
      $region27: #{emotion_net.9} parent=23 // pred_region
        %s131 = smul.u32 32, %s9
        %p132 = scmp.lt.s32.totalorder %s131, 63
        %s133 = scalar_select %p132, %s131, 63
        %s134 = smul.addr %s133, 14
        %s135 = smul.addr %s134, 4
        %s136 = scalar_lea.vmem %s0, %s135
        %s137 = smul.u32 32, %s9
      $region28: #{emotion_net.9} parent=23 // pred_fallthru
        _
    $region24: #{emotion_net.9} parent=5 // pred_fallthru
      _
    %p138 = scmp.le.s32.totalorder 1, %s9
    %p139 = scmp.lt.s32.totalorder %s9, 3
    %p140 = pnand %p138, %p139
    %p141 = pneg %p140
    // Predicated region
    $region29: #{emotion_net.9} parent=5 // pred_check
      _
    $region30: #{emotion_net.9} parent=5 // pred_check_branch
      %143 = sbr.rel (%p140) target = $region32
    $region31: #{emotion_net.9} parent=5 // pred_region
      %s144 = ssub.s32 %s9, 1
      %s145 = smul.u32 32, %s14
      %p146 = scmp.lt.s32.totalorder %s145, 63
      %s147 = scalar_select %p146, %s145, 63
      %s148 = smul.addr %s147, 14
      %s149 = smul.addr %s148, 4
      %s150 = scalar_lea.vmem %s0, %s149
      %p151 = pneg %p35
      %p152 = pneg %p32
      %p153 = pneg %p56
      %p154 = pneg %p53
      %p155 = pneg %p77
      %p156 = pneg %p74
      %p157 = pneg %p103
      %p158 = pneg %p100
      %s159 = smul.u32 32, %s14
      %p160 = scmp.lt.s32.totalorder %s159, 63
      %s161 = scalar_select %p160, %s159, 63
      %s162 = smul.addr %s161, 2
      %s163 = smul.addr %s162, 8
      %s164 = scalar_lea.vmem %s3, %s163
      %s165 = smul.u32 32, %s14
      %p166 = scmp.lt.s32.totalorder %s165, 63
      %s167 = scalar_select %p166, %s165, 63
      %s168 = smul.addr %s167, 14
      %s169 = smul.addr %s168, 4
      %s170 = scalar_lea.vmem %s0, %s169
      %s171 = smul.u32 32, %s14
      %s172 = smul.u32 32, %s14
      %p173 = scmp.lt.s32.totalorder %s172, 63
      %s174 = scalar_select %p173, %s172, 63
      %s175 = smul.addr %s174, 2
      %s176 = smul.addr %s175, 8
      %s177 = scalar_lea.vmem %s3, %s176
      %s178 = smul.u32 32, %s14
      %v180 = vld [vmem:[%s170] sm:$0xff]
      %v181 = vld [vmem:[%s170 + $0x8] sm:$0xff]
      %v182 = vld [vmem:[%s170 + $0x10] sm:$0xff]
      %v183 = vld [vmem:[%s170 + $0x18] sm:$0xff]
      %v184 = vld [vmem:[%s170 + $0x20] sm:$0xff]
      %v185 = vld [vmem:[%s170 + $0x28] sm:$0xff]
      %v186 = vld [vmem:[%s170 + $0x30] sm:$0xff]
      %v187 = vld [vmem:[%s170 + $0x38] sm:$0xff]
      %v188 = vld [vmem:[%s170 + $0x40] sm:$0xff]
      %v189 = vld [vmem:[%s170 + $0x48] sm:$0xff]
      %v190 = vld [vmem:[%s170 + $0x50] sm:$0xff]
      %v191 = vld [vmem:[%s170 + $0x58] sm:$0xff]
      %v192 = vld [vmem:[%s170 + $0x60] sm:$0xff]
      %v193 = vld [vmem:[%s170 + $0x68] sm:$0xff]
      %v194 = vld [vmem:[%s170 + $0x70] sm:$0xff]
      %v195 = vld [vmem:[%s170 + $0x78] sm:$0xff]
      %v196 = vld [vmem:[%s170 + $0x80] sm:$0xff]
      %v197 = vld [vmem:[%s170 + $0x88] sm:$0xff]
      %v198 = vld [vmem:[%s170 + $0x90] sm:$0xff]
      %v199 = vld [vmem:[%s170 + $0x98] sm:$0xff]
      %v200 = vld [vmem:[%s170 + $0xa0] sm:$0xff]
      %v201 = vld [vmem:[%s170 + $0xa8] sm:$0xff]
      %v202 = vld [vmem:[%s170 + $0xb0] sm:$0xff]
      %v203 = vld [vmem:[%s170 + $0xb8] sm:$0xff]
      %v204 = vld [vmem:[%s170 + $0xc0] sm:$0xff]
      %v205 = vld [vmem:[%s170 + $0xc8] sm:$0xff]
      %v206 = vld [vmem:[%s170 + $0xd0] sm:$0xff]
      %v207 = vld [vmem:[%s170 + $0xd8] sm:$0xff]
      %v208 = vld [vmem:[%s170 + $0xe0] sm:$0xff]
      %v209 = vld [vmem:[%s170 + $0xe8] sm:$0xff]
      %v210 = vld [vmem:[%s170 + $0xf0] sm:$0xff]
      %v211 = vld [vmem:[%s170 + $0xf8] sm:$0xff]
      %v212 = vld [vmem:[%s170 + $0x100] sm:$0xff]
      %v213 = vld [vmem:[%s170 + $0x108] sm:$0xff]
      %v214 = vld [vmem:[%s170 + $0x110] sm:$0xff]
      %v215 = vld [vmem:[%s170 + $0x118] sm:$0xff]
      %v216 = vld [vmem:[%s170 + $0x120] sm:$0xff]
      %v217 = vld [vmem:[%s170 + $0x128] sm:$0xff]
      %v218 = vld [vmem:[%s170 + $0x130] sm:$0xff]
      %v219 = vld [vmem:[%s170 + $0x138] sm:$0xff]
      %v220 = vld [vmem:[%s170 + $0x140] sm:$0xff]
      %v221 = vld [vmem:[%s170 + $0x148] sm:$0xff]
      %v222 = vld [vmem:[%s170 + $0x150] sm:$0xff]
      %v223 = vld [vmem:[%s170 + $0x158] sm:$0xff]
      %v224 = vld [vmem:[%s170 + $0x160] sm:$0xff]
      %v225 = vld [vmem:[%s170 + $0x168] sm:$0xff]
      %v226 = vld [vmem:[%s170 + $0x170] sm:$0xff]
      %v227 = vld [vmem:[%s170 + $0x178] sm:$0xff]
      %v228 = vld [vmem:[%s170 + $0x180] sm:$0xff]
      %v229 = vld [vmem:[%s170 + $0x188] sm:$0xff]
      %v230 = vld [vmem:[%s170 + $0x190] sm:$0xff]
      %v231 = vld [vmem:[%s170 + $0x198] sm:$0xff]
      %v232 = vld [vmem:[%s170 + $0x1a0] sm:$0xff]
      %v233 = vld [vmem:[%s170 + $0x1a8] sm:$0xff]
      %v234 = vld [vmem:[%s170 + $0x1b0] sm:$0xff]
      %v235 = vld [vmem:[%s170 + $0x1b8] sm:$0xff]
      %v236 = vld [vmem:[%s170 + $0x1c0] sm:$0xff]
      %v237 = vld [vmem:[%s170 + $0x1c8] sm:$0xff]
      %v238 = vld [vmem:[%s170 + $0x1d0] sm:$0xff]
      %v239 = vld [vmem:[%s170 + $0x1d8] sm:$0xff]
      %v240 = vld [vmem:[%s170 + $0x1e0] sm:$0xff]
      %v241 = vld [vmem:[%s170 + $0x1e8] sm:$0xff]
      %v242 = vld [vmem:[%s170 + $0x1f0] sm:$0xff]
      %v243 = vld [vmem:[%s170 + $0x1f8] sm:$0xff]
      %v244 = vld [vmem:[%s170 + $0x200] sm:$0xff]
      %v245 = vld [vmem:[%s170 + $0x208] sm:$0xff]
      %v246 = vld [vmem:[%s170 + $0x210] sm:$0xff]
      %v247 = vld [vmem:[%s170 + $0x218] sm:$0xff]
      %v248 = vld [vmem:[%s170 + $0x220] sm:$0xff]
      %v249 = vld [vmem:[%s170 + $0x228] sm:$0xff]
      %v250 = vld [vmem:[%s170 + $0x230] sm:$0xff]
      %v251 = vld [vmem:[%s170 + $0x238] sm:$0xff]
      %v252 = vld [vmem:[%s170 + $0x240] sm:$0xff]
      %v253 = vld [vmem:[%s170 + $0x248] sm:$0xff]
      %v254 = vld [vmem:[%s170 + $0x250] sm:$0xff]
      %v255 = vld [vmem:[%s170 + $0x258] sm:$0xff]
      %v256 = vld [vmem:[%s170 + $0x260] sm:$0xff]
      %v257 = vld [vmem:[%s170 + $0x268] sm:$0xff]
      %v258 = vld [vmem:[%s170 + $0x270] sm:$0xff]
      %v259 = vld [vmem:[%s170 + $0x278] sm:$0xff]
      %v260 = vld [vmem:[%s170 + $0x280] sm:$0xff]
      %v261 = vld [vmem:[%s170 + $0x288] sm:$0xff]
      %v262 = vld [vmem:[%s170 + $0x290] sm:$0xff]
      %v263 = vld [vmem:[%s170 + $0x298] sm:$0xff]
      %v264 = vld [vmem:[%s170 + $0x2a0] sm:$0xff]
      %v265 = vld [vmem:[%s170 + $0x2a8] sm:$0xff]
      %v266 = vld [vmem:[%s170 + $0x2b0] sm:$0xff]
      %v267 = vld [vmem:[%s170 + $0x2b8] sm:$0xff]
      %v268 = vld [vmem:[%s170 + $0x2c0] sm:$0xff]
      %v269 = vld [vmem:[%s170 + $0x2c8] sm:$0xff]
      %v270 = vld [vmem:[%s170 + $0x2d0] sm:$0xff]
      %v271 = vld [vmem:[%s170 + $0x2d8] sm:$0xff]
      %v272 = vld [vmem:[%s170 + $0x2e0] sm:$0xff]
      %v273 = vld [vmem:[%s170 + $0x2e8] sm:$0xff]
      %v274 = vld [vmem:[%s170 + $0x2f0] sm:$0xff]
      %v275 = vld [vmem:[%s170 + $0x2f8] sm:$0xff]
      %v276 = vld [vmem:[%s170 + $0x300] sm:$0xff]
      %v277 = vld [vmem:[%s170 + $0x308] sm:$0xff]
      %v278 = vld [vmem:[%s170 + $0x310] sm:$0xff]
      %v279 = vld [vmem:[%s170 + $0x318] sm:$0xff]
      %v280 = vld [vmem:[%s170 + $0x320] sm:$0xff]
      %v281 = vld [vmem:[%s170 + $0x328] sm:$0xff]
      %v282 = vld [vmem:[%s170 + $0x330] sm:$0xff]
      %v283 = vld [vmem:[%s170 + $0x338] sm:$0xff]
      %v284 = vld [vmem:[%s170 + $0x340] sm:$0xff]
      %v285 = vld [vmem:[%s170 + $0x348] sm:$0xff]
      %v286 = vld [vmem:[%s170 + $0x350] sm:$0xff]
      %v287 = vld [vmem:[%s170 + $0x358] sm:$0xff]
      %v288 = vld [vmem:[%s170 + $0x360] sm:$0xff]
      %v289 = vld [vmem:[%s170 + $0x368] sm:$0xff]
      %v290 = vld [vmem:[%s170 + $0x370] sm:$0xff]
      %v291 = vld [vmem:[%s170 + $0x378] sm:$0xff]
      %v292 = vld [vmem:[%s170 + $0x380] sm:$0xff]
      %v293 = vld [vmem:[%s170 + $0x388] sm:$0xff]
      %v294 = vld [vmem:[%s170 + $0x390] sm:$0xff]
      %v295 = vld [vmem:[%s170 + $0x398] sm:$0xff]
      %v296 = vld [vmem:[%s170 + $0x3a0] sm:$0xff]
      %v297 = vld [vmem:[%s170 + $0x3a8] sm:$0xff]
      %v298 = vld [vmem:[%s170 + $0x3b0] sm:$0xff]
      %v299 = vld [vmem:[%s170 + $0x3b8] sm:$0xff]
      %v300 = vld [vmem:[%s170 + $0x3c0] sm:$0xff]
      %v301 = vld [vmem:[%s170 + $0x3c8] sm:$0xff]
      %v302 = vld [vmem:[%s170 + $0x3d0] sm:$0xff]
      %v303 = vld [vmem:[%s170 + $0x3d8] sm:$0xff]
      %v304 = vld [vmem:[%s170 + $0x3e0] sm:$0xff]
      %v305 = vld [vmem:[%s170 + $0x3e8] sm:$0xff]
      %v306 = vld [vmem:[%s170 + $0x3f0] sm:$0xff]
      %v307 = vld [vmem:[%s170 + $0x3f8] sm:$0xff]
      %v308 = vld [vmem:[%s170 + $0x400] sm:$0xff]
      %v309 = vld [vmem:[%s170 + $0x408] sm:$0xff]
      %v310 = vld [vmem:[%s170 + $0x410] sm:$0xff]
      %v311 = vld [vmem:[%s170 + $0x418] sm:$0xff]
      %v312 = vld [vmem:[%s170 + $0x420] sm:$0xff]
      %v313 = vld [vmem:[%s170 + $0x428] sm:$0xff]
      %v314 = vld [vmem:[%s170 + $0x430] sm:$0xff]
      %v315 = vld [vmem:[%s170 + $0x438] sm:$0xff]
      %v316 = vld [vmem:[%s170 + $0x440] sm:$0xff]
      %v317 = vld [vmem:[%s170 + $0x448] sm:$0xff]
      %v318 = vld [vmem:[%s170 + $0x450] sm:$0xff]
      %v319 = vld [vmem:[%s170 + $0x458] sm:$0xff]
      %v320 = vld [vmem:[%s170 + $0x460] sm:$0xff]
      %v321 = vld [vmem:[%s170 + $0x468] sm:$0xff]
      %v322 = vld [vmem:[%s170 + $0x470] sm:$0xff]
      %v323 = vld [vmem:[%s170 + $0x478] sm:$0xff]
      %v324 = vld [vmem:[%s170 + $0x480] sm:$0xff]
      %v325 = vld [vmem:[%s170 + $0x488] sm:$0xff]
      %v326 = vld [vmem:[%s170 + $0x490] sm:$0xff]
      %v327 = vld [vmem:[%s170 + $0x498] sm:$0xff]
      %v328 = vld [vmem:[%s170 + $0x4a0] sm:$0xff]
      %v329 = vld [vmem:[%s170 + $0x4a8] sm:$0xff]
      %v330 = vld [vmem:[%s170 + $0x4b0] sm:$0xff]
      %v331 = vld [vmem:[%s170 + $0x4b8] sm:$0xff]
      %v332 = vld [vmem:[%s170 + $0x4c0] sm:$0xff]
      %v333 = vld [vmem:[%s170 + $0x4c8] sm:$0xff]
      %v334 = vld [vmem:[%s170 + $0x4d0] sm:$0xff]
      %v335 = vld [vmem:[%s170 + $0x4d8] sm:$0xff]
      %v336 = vld [vmem:[%s170 + $0x4e0] sm:$0xff]
      %v337 = vld [vmem:[%s170 + $0x4e8] sm:$0xff]
      %v338 = vld [vmem:[%s170 + $0x4f0] sm:$0xff]
      %v339 = vld [vmem:[%s170 + $0x4f8] sm:$0xff]
      %v340 = vld [vmem:[%s170 + $0x500] sm:$0xff]
      %v341 = vld [vmem:[%s170 + $0x508] sm:$0xff]
      %v342 = vld [vmem:[%s170 + $0x510] sm:$0xff]
      %v343 = vld [vmem:[%s170 + $0x518] sm:$0xff]
      %v344 = vld [vmem:[%s170 + $0x520] sm:$0xff]
      %v345 = vld [vmem:[%s170 + $0x528] sm:$0xff]
      %v346 = vld [vmem:[%s170 + $0x530] sm:$0xff]
      %v347 = vld [vmem:[%s170 + $0x538] sm:$0xff]
      %v348 = vld [vmem:[%s170 + $0x540] sm:$0xff]
      %v349 = vld [vmem:[%s170 + $0x548] sm:$0xff]
      %v350 = vld [vmem:[%s170 + $0x550] sm:$0xff]
      %v351 = vld [vmem:[%s170 + $0x558] sm:$0xff]
      %v352 = vld [vmem:[%s170 + $0x560] sm:$0xff]
      %v353 = vld [vmem:[%s170 + $0x568] sm:$0xff]
      %v354 = vld [vmem:[%s170 + $0x570] sm:$0xff]
      %v355 = vld [vmem:[%s170 + $0x578] sm:$0xff]
      %v356 = vld [vmem:[%s170 + $0x580] sm:$0xff]
      %v357 = vld [vmem:[%s170 + $0x588] sm:$0xff]
      %v358 = vld [vmem:[%s170 + $0x590] sm:$0xff]
      %v359 = vld [vmem:[%s170 + $0x598] sm:$0xff]
      %v360 = vld [vmem:[%s170 + $0x5a0] sm:$0xff]
      %v361 = vld [vmem:[%s170 + $0x5a8] sm:$0xff]
      %v362 = vld [vmem:[%s170 + $0x5b0] sm:$0xff]
      %v363 = vld [vmem:[%s170 + $0x5b8] sm:$0xff]
      %v364 = vld [vmem:[%s170 + $0x5c0] sm:$0xff]
      %v365 = vld [vmem:[%s170 + $0x5c8] sm:$0xff]
      %v366 = vld [vmem:[%s170 + $0x5d0] sm:$0xff]
      %v367 = vld [vmem:[%s170 + $0x5d8] sm:$0xff]
      %v368 = vld [vmem:[%s170 + $0x5e0] sm:$0xff]
      %v369 = vld [vmem:[%s170 + $0x5e8] sm:$0xff]
      %v370 = vld [vmem:[%s170 + $0x5f0] sm:$0xff]
      %v371 = vld [vmem:[%s170 + $0x5f8] sm:$0xff]
      %v372 = vld [vmem:[%s170 + $0x600] sm:$0xff]
      %v373 = vld [vmem:[%s170 + $0x608] sm:$0xff]
      %v374 = vld [vmem:[%s170 + $0x610] sm:$0xff]
      %v375 = vld [vmem:[%s170 + $0x618] sm:$0xff]
      %v376 = vld [vmem:[%s170 + $0x620] sm:$0xff]
      %v377 = vld [vmem:[%s170 + $0x628] sm:$0xff]
      %v378 = vld [vmem:[%s170 + $0x630] sm:$0xff]
      %v379 = vld [vmem:[%s170 + $0x638] sm:$0xff]
      %v380 = vld [vmem:[%s170 + $0x640] sm:$0xff]
      %v381 = vld [vmem:[%s170 + $0x648] sm:$0xff]
      %v382 = vld [vmem:[%s170 + $0x650] sm:$0xff]
      %v383 = vld [vmem:[%s170 + $0x658] sm:$0xff]
      %v384 = vld [vmem:[%s170 + $0x660] sm:$0xff]
      %v385 = vld [vmem:[%s170 + $0x668] sm:$0xff]
      %v386 = vld [vmem:[%s170 + $0x670] sm:$0xff]
      %v387 = vld [vmem:[%s170 + $0x678] sm:$0xff]
      %v388 = vld [vmem:[%s170 + $0x680] sm:$0xff]
      %v389 = vld [vmem:[%s170 + $0x688] sm:$0xff]
      %v390 = vld [vmem:[%s170 + $0x690] sm:$0xff]
      %v391 = vld [vmem:[%s170 + $0x698] sm:$0xff]
      %v392 = vld [vmem:[%s170 + $0x6a0] sm:$0xff]
      %v393 = vld [vmem:[%s170 + $0x6a8] sm:$0xff]
      %v394 = vld [vmem:[%s170 + $0x6b0] sm:$0xff]
      %v395 = vld [vmem:[%s170 + $0x6b8] sm:$0xff]
      %v396 = vld [vmem:[%s170 + $0x6c0] sm:$0xff]
      %v397 = vld [vmem:[%s170 + $0x6c8] sm:$0xff]
      %v398 = vld [vmem:[%s170 + $0x6d0] sm:$0xff]
      %v399 = vld [vmem:[%s170 + $0x6d8] sm:$0xff]
      %v400 = vld [vmem:[%s170 + $0x6e0] sm:$0xff]
      %v401 = vld [vmem:[%s170 + $0x6e8] sm:$0xff]
      %v402 = vld [vmem:[%s170 + $0x6f0] sm:$0xff]
      %v403 = vld [vmem:[%s170 + $0x6f8] sm:$0xff]
      %v404 = vld [vmem:[%s1] sm:$0xff]
      %v405 = vld [vmem:[%s1 + $0x8] sm:$0xff]
      %v406 = vld [vmem:[%s1 + $0x10] sm:$0xff]
      %v407 = vld [vmem:[%s1 + $0x18] sm:$0xff]
      %v408 = vld [vmem:[%s1 + $0x20] sm:$0xff]
      %v409 = vld [vmem:[%s1 + $0x28] sm:$0xff]
      %v410 = vld [vmem:[%s1 + $0x30] sm:$0xff]
      %v411 = vld [vmem:[%s1 + $0x38] sm:$0xff]
      %v412 = vld [vmem:[%s1 + $0x40] sm:$0xff]
      %v413 = vld [vmem:[%s1 + $0x48] sm:$0xff]
      %v414 = vld [vmem:[%s1 + $0x50] sm:$0xff]
      %v415 = vld [vmem:[%s1 + $0x58] sm:$0xff]
      %v416 = vld [vmem:[%s1 + $0x60] sm:$0xff]
      %v417 = vld [vmem:[%s1 + $0x68] sm:$0xff]
      %v418 = vld [vmem:[%s1 + $0x70] sm:$0xff]
      %v419 = vld [vmem:[%s1 + $0x78] sm:$0xff]
      %v420 = vld [vmem:[%s1 + $0x80] sm:$0xff]
      %v421 = vld [vmem:[%s1 + $0x88] sm:$0xff]
      %v422 = vld [vmem:[%s1 + $0x90] sm:$0xff]
      %v423 = vld [vmem:[%s1 + $0x98] sm:$0xff]
      %v424 = vld [vmem:[%s1 + $0xa0] sm:$0xff]
      %v425 = vld [vmem:[%s1 + $0xa8] sm:$0xff]
      %v426 = vld [vmem:[%s1 + $0xb0] sm:$0xff]
      %v427 = vld [vmem:[%s1 + $0xb8] sm:$0xff]
      %v428 = vld [vmem:[%s1 + $0xc0] sm:$0xff]
      %v429 = vld [vmem:[%s1 + $0xc8] sm:$0xff]
      %v430 = vld [vmem:[%s1 + $0xd0] sm:$0xff]
      %v431 = vld [vmem:[%s1 + $0xd8] sm:$0xff]
      %v432 = vld [vmem:[%s1 + $0xe0] sm:$0xff]
      %v433 = vld [vmem:[%s1 + $0xe8] sm:$0xff]
      %v434 = vld [vmem:[%s1 + $0xf0] sm:$0xff]
      %v435 = vld [vmem:[%s1 + $0xf8] sm:$0xff]
      %v436 = vld [vmem:[%s1 + $0x100] sm:$0xff]
      %v437 = vld [vmem:[%s1 + $0x108] sm:$0xff]
      %v438 = vld [vmem:[%s1 + $0x110] sm:$0xff]
      %v439 = vld [vmem:[%s1 + $0x118] sm:$0xff]
      %v440 = vld [vmem:[%s1 + $0x120] sm:$0xff]
      %v441 = vld [vmem:[%s1 + $0x128] sm:$0xff]
      %v442 = vld [vmem:[%s1 + $0x130] sm:$0xff]
      %v443 = vld [vmem:[%s1 + $0x138] sm:$0xff]
      %v444 = vld [vmem:[%s1 + $0x140] sm:$0xff]
      %v445 = vld [vmem:[%s1 + $0x148] sm:$0xff]
      %v446 = vld [vmem:[%s1 + $0x150] sm:$0xff]
      %v447 = vld [vmem:[%s1 + $0x158] sm:$0xff]
      %v448 = vld [vmem:[%s1 + $0x160] sm:$0xff]
      %v449 = vld [vmem:[%s1 + $0x168] sm:$0xff]
      %v450 = vld [vmem:[%s1 + $0x170] sm:$0xff]
      %v451 = vld [vmem:[%s1 + $0x178] sm:$0xff]
      %v452 = vld [vmem:[%s1 + $0x180] sm:$0xff]
      %v453 = vld [vmem:[%s1 + $0x188] sm:$0xff]
      %v454 = vld [vmem:[%s1 + $0x190] sm:$0xff]
      %v455 = vld [vmem:[%s1 + $0x198] sm:$0xff]
      %v456 = vld [vmem:[%s1 + $0x1a0] sm:$0xff]
      %v457 = vld [vmem:[%s1 + $0x1a8] sm:$0xff]
      %v458 = vld [vmem:[%s1 + $0x1b0] sm:$0xff]
      %v459 = vld [vmem:[%s1 + $0x1b8] sm:$0xff]
      %v460 = vld [vmem:[%s1 + $0x1c0] sm:$0xff]
      %v461 = vld [vmem:[%s1 + $0x1c8] sm:$0xff]
      %v462 = vld [vmem:[%s1 + $0x1d0] sm:$0xff]
      %v463 = vld [vmem:[%s1 + $0x1d8] sm:$0xff]
      %v464 = vld [vmem:[%s1 + $0x1e0] sm:$0xff]
      %v465 = vld [vmem:[%s1 + $0x1e8] sm:$0xff]
      %v466 = vld [vmem:[%s1 + $0x1f0] sm:$0xff]
      %v467 = vld [vmem:[%s1 + $0x1f8] sm:$0xff]
      %v468 = vld [vmem:[%s1 + $0x200] sm:$0xff]
      %v469 = vld [vmem:[%s1 + $0x208] sm:$0xff]
      %v470 = vld [vmem:[%s1 + $0x210] sm:$0xff]
      %v471 = vld [vmem:[%s1 + $0x218] sm:$0xff]
      %v472 = vld [vmem:[%s1 + $0x220] sm:$0xff]
      %v473 = vld [vmem:[%s1 + $0x228] sm:$0xff]
      %v474 = vld [vmem:[%s1 + $0x230] sm:$0xff]
      %v475 = vld [vmem:[%s1 + $0x238] sm:$0xff]
      %v476 = vld [vmem:[%s1 + $0x240] sm:$0xff]
      %v477 = vld [vmem:[%s1 + $0x248] sm:$0xff]
      %v478 = vld [vmem:[%s1 + $0x250] sm:$0xff]
      %v479 = vld [vmem:[%s1 + $0x258] sm:$0xff]
      %v480 = vld [vmem:[%s1 + $0x260] sm:$0xff]
      %v481 = vld [vmem:[%s1 + $0x268] sm:$0xff]
      %v482 = vld [vmem:[%s1 + $0x270] sm:$0xff]
      %v483 = vld [vmem:[%s1 + $0x278] sm:$0xff]
      %v484 = vld [vmem:[%s1 + $0x280] sm:$0xff]
      %v485 = vld [vmem:[%s1 + $0x288] sm:$0xff]
      %v486 = vld [vmem:[%s1 + $0x290] sm:$0xff]
      %v487 = vld [vmem:[%s1 + $0x298] sm:$0xff]
      %v488 = vld [vmem:[%s1 + $0x2a0] sm:$0xff]
      %v489 = vld [vmem:[%s1 + $0x2a8] sm:$0xff]
      %v490 = vld [vmem:[%s1 + $0x2b0] sm:$0xff]
      %v491 = vld [vmem:[%s1 + $0x2b8] sm:$0xff]
      %v492 = vld [vmem:[%s1 + $0x2c0] sm:$0xff]
      %v493 = vld [vmem:[%s1 + $0x2c8] sm:$0xff]
      %v494 = vld [vmem:[%s1 + $0x2d0] sm:$0xff]
      %v495 = vld [vmem:[%s1 + $0x2d8] sm:$0xff]
      %v496 = vld [vmem:[%s1 + $0x2e0] sm:$0xff]
      %v497 = vld [vmem:[%s1 + $0x2e8] sm:$0xff]
      %v498 = vld [vmem:[%s1 + $0x2f0] sm:$0xff]
      %v499 = vld [vmem:[%s1 + $0x2f8] sm:$0xff]
      %v500 = vld [vmem:[%s1 + $0x300] sm:$0xff]
      %v501 = vld [vmem:[%s1 + $0x308] sm:$0xff]
      %v502 = vld [vmem:[%s1 + $0x310] sm:$0xff]
      %v503 = vld [vmem:[%s1 + $0x318] sm:$0xff]
      %v504 = vld [vmem:[%s1 + $0x320] sm:$0xff]
      %v505 = vld [vmem:[%s1 + $0x328] sm:$0xff]
      %v506 = vld [vmem:[%s1 + $0x330] sm:$0xff]
      %v507 = vld [vmem:[%s1 + $0x338] sm:$0xff]
      %v508 = vld [vmem:[%s1 + $0x340] sm:$0xff]
      %v509 = vld [vmem:[%s1 + $0x348] sm:$0xff]
      %v510 = vld [vmem:[%s1 + $0x350] sm:$0xff]
      %v511 = vld [vmem:[%s1 + $0x358] sm:$0xff]
      %v512 = vld [vmem:[%s1 + $0x360] sm:$0xff]
      %v513 = vld [vmem:[%s1 + $0x368] sm:$0xff]
      %v514 = vld [vmem:[%s1 + $0x370] sm:$0xff]
      %v515 = vld [vmem:[%s1 + $0x378] sm:$0xff]
      %v516 = vld [vmem:[%s1 + $0x380] sm:$0xff]
      %v517 = vld [vmem:[%s1 + $0x388] sm:$0xff]
      %v518 = vld [vmem:[%s1 + $0x390] sm:$0xff]
      %v519 = vld [vmem:[%s1 + $0x398] sm:$0xff]
      %v520 = vld [vmem:[%s1 + $0x3a0] sm:$0xff]
      %v521 = vld [vmem:[%s1 + $0x3a8] sm:$0xff]
      %v522 = vld [vmem:[%s1 + $0x3b0] sm:$0xff]
      %v523 = vld [vmem:[%s1 + $0x3b8] sm:$0xff]
      %v524 = vld [vmem:[%s1 + $0x3c0] sm:$0xff]
      %v525 = vld [vmem:[%s1 + $0x3c8] sm:$0xff]
      %v526 = vld [vmem:[%s1 + $0x3d0] sm:$0xff]
      %v527 = vld [vmem:[%s1 + $0x3d8] sm:$0xff]
      %v528 = vld [vmem:[%s1 + $0x3e0] sm:$0xff]
      %v529 = vld [vmem:[%s1 + $0x3e8] sm:$0xff]
      %v530 = vld [vmem:[%s1 + $0x3f0] sm:$0xff]
      %v531 = vld [vmem:[%s1 + $0x3f8] sm:$0xff]
      %v532 = vld [vmem:[%s1 + $0x400] sm:$0xff]
      %v533 = vld [vmem:[%s1 + $0x408] sm:$0xff]
      %v534 = vld [vmem:[%s1 + $0x410] sm:$0xff]
      %v535 = vld [vmem:[%s1 + $0x418] sm:$0xff]
      %v536 = vld [vmem:[%s1 + $0x420] sm:$0xff]
      %v537 = vld [vmem:[%s1 + $0x428] sm:$0xff]
      %v538 = vld [vmem:[%s1 + $0x430] sm:$0xff]
      %v539 = vld [vmem:[%s1 + $0x438] sm:$0xff]
      %v540 = vld [vmem:[%s1 + $0x440] sm:$0xff]
      %v541 = vld [vmem:[%s1 + $0x448] sm:$0xff]
      %v542 = vld [vmem:[%s1 + $0x450] sm:$0xff]
      %v543 = vld [vmem:[%s1 + $0x458] sm:$0xff]
      %v544 = vld [vmem:[%s1 + $0x460] sm:$0xff]
      %v545 = vld [vmem:[%s1 + $0x468] sm:$0xff]
      %v546 = vld [vmem:[%s1 + $0x470] sm:$0xff]
      %v547 = vld [vmem:[%s1 + $0x478] sm:$0xff]
      %v548 = vld [vmem:[%s1 + $0x480] sm:$0xff]
      %v549 = vld [vmem:[%s1 + $0x488] sm:$0xff]
      %v550 = vld [vmem:[%s1 + $0x490] sm:$0xff]
      %v551 = vld [vmem:[%s1 + $0x498] sm:$0xff]
      %v552 = vld [vmem:[%s1 + $0x4a0] sm:$0xff]
      %v553 = vld [vmem:[%s1 + $0x4a8] sm:$0xff]
      %v554 = vld [vmem:[%s1 + $0x4b0] sm:$0xff]
      %v555 = vld [vmem:[%s1 + $0x4b8] sm:$0xff]
      %v556 = vld [vmem:[%s1 + $0x4c0] sm:$0xff]
      %v557 = vld [vmem:[%s1 + $0x4c8] sm:$0xff]
      %v558 = vld [vmem:[%s1 + $0x4d0] sm:$0xff]
      %v559 = vld [vmem:[%s1 + $0x4d8] sm:$0xff]
      %v560 = vld [vmem:[%s1 + $0x4e0] sm:$0xff]
      %v561 = vld [vmem:[%s1 + $0x4e8] sm:$0xff]
      %v562 = vld [vmem:[%s1 + $0x4f0] sm:$0xff]
      %v563 = vld [vmem:[%s1 + $0x4f8] sm:$0xff]
      %v564 = vld [vmem:[%s1 + $0x500] sm:$0xff]
      %v565 = vld [vmem:[%s1 + $0x508] sm:$0xff]
      %v566 = vld [vmem:[%s1 + $0x510] sm:$0xff]
      %v567 = vld [vmem:[%s1 + $0x518] sm:$0xff]
      %v568 = vld [vmem:[%s1 + $0x520] sm:$0xff]
      %v569 = vld [vmem:[%s1 + $0x528] sm:$0xff]
      %v570 = vld [vmem:[%s1 + $0x530] sm:$0xff]
      %v571 = vld [vmem:[%s1 + $0x538] sm:$0xff]
      %v572 = vld [vmem:[%s1 + $0x540] sm:$0xff]
      %v573 = vld [vmem:[%s1 + $0x548] sm:$0xff]
      %v574 = vld [vmem:[%s1 + $0x550] sm:$0xff]
      %v575 = vld [vmem:[%s1 + $0x558] sm:$0xff]
      %v576 = vld [vmem:[%s1 + $0x560] sm:$0xff]
      %v577 = vld [vmem:[%s1 + $0x568] sm:$0xff]
      %v578 = vld [vmem:[%s1 + $0x570] sm:$0xff]
      %v579 = vld [vmem:[%s1 + $0x578] sm:$0xff]
      %v580 = vld [vmem:[%s1 + $0x580] sm:$0xff]
      %v581 = vld [vmem:[%s1 + $0x588] sm:$0xff]
      %v582 = vld [vmem:[%s1 + $0x590] sm:$0xff]
      %v583 = vld [vmem:[%s1 + $0x598] sm:$0xff]
      %v584 = vld [vmem:[%s1 + $0x5a0] sm:$0xff]
      %v585 = vld [vmem:[%s1 + $0x5a8] sm:$0xff]
      %v586 = vld [vmem:[%s1 + $0x5b0] sm:$0xff]
      %v587 = vld [vmem:[%s1 + $0x5b8] sm:$0xff]
      %v588 = vld [vmem:[%s1 + $0x5c0] sm:$0xff]
      %v589 = vld [vmem:[%s1 + $0x5c8] sm:$0xff]
      %v590 = vld [vmem:[%s1 + $0x5d0] sm:$0xff]
      %v591 = vld [vmem:[%s1 + $0x5d8] sm:$0xff]
      %v592 = vld [vmem:[%s1 + $0x5e0] sm:$0xff]
      %v593 = vld [vmem:[%s1 + $0x5e8] sm:$0xff]
      %v594 = vld [vmem:[%s1 + $0x5f0] sm:$0xff]
      %v595 = vld [vmem:[%s1 + $0x5f8] sm:$0xff]
      %v596 = vld [vmem:[%s1 + $0x600] sm:$0xff]
      %v597 = vld [vmem:[%s1 + $0x608] sm:$0xff]
      %v598 = vld [vmem:[%s1 + $0x610] sm:$0xff]
      %v599 = vld [vmem:[%s1 + $0x618] sm:$0xff]
      %v600 = vld [vmem:[%s1 + $0x620] sm:$0xff]
      %v601 = vld [vmem:[%s1 + $0x628] sm:$0xff]
      %v602 = vld [vmem:[%s1 + $0x630] sm:$0xff]
      %v603 = vld [vmem:[%s1 + $0x638] sm:$0xff]
      %v604 = vld [vmem:[%s1 + $0x640] sm:$0xff]
      %v605 = vld [vmem:[%s1 + $0x648] sm:$0xff]
      %v606 = vld [vmem:[%s1 + $0x650] sm:$0xff]
      %v607 = vld [vmem:[%s1 + $0x658] sm:$0xff]
      %v608 = vld [vmem:[%s1 + $0x660] sm:$0xff]
      %v609 = vld [vmem:[%s1 + $0x668] sm:$0xff]
      %v610 = vld [vmem:[%s1 + $0x670] sm:$0xff]
      %v611 = vld [vmem:[%s1 + $0x678] sm:$0xff]
      %v612 = vld [vmem:[%s1 + $0x680] sm:$0xff]
      %v613 = vld [vmem:[%s1 + $0x688] sm:$0xff]
      %v614 = vld [vmem:[%s1 + $0x690] sm:$0xff]
      %v615 = vld [vmem:[%s1 + $0x698] sm:$0xff]
      %v616 = vld [vmem:[%s1 + $0x6a0] sm:$0xff]
      %v617 = vld [vmem:[%s1 + $0x6a8] sm:$0xff]
      %v618 = vld [vmem:[%s1 + $0x6b0] sm:$0xff]
      %v619 = vld [vmem:[%s1 + $0x6b8] sm:$0xff]
      %v620 = vld [vmem:[%s2] sm:$0x3]
      %v622 = vlaneseq
      %v623 = vshrl.u32 %v622, 7
      %v624 = vsub.s32 0, %v623
      %v625 = vrot.slane %v620, %v624
      %v626 = vlaneseq
      %v627 = vshrl.u32 %v626, 7
      %v628 = vsub.s32 1, %v627
      %v629 = vrot.slane %v620, %v628
      %v856 = vunpack.c.l.b16 %v180
      %v857 = vunpack.c.h.b16 %v180
      %v858 = vunpack.c.l.b16 %v181
      %v859 = vunpack.c.h.b16 %v181
      %v860 = vunpack.c.l.b16 %v182
      %v861 = vunpack.c.h.b16 %v182
      %v862 = vunpack.c.l.b16 %v183
      %v863 = vunpack.c.h.b16 %v183
      %v864 = vunpack.c.l.b16 %v184
      %v865 = vunpack.c.h.b16 %v184
      %v866 = vunpack.c.l.b16 %v185
      %v867 = vunpack.c.h.b16 %v185
      %v868 = vunpack.c.l.b16 %v186
      %v869 = vunpack.c.h.b16 %v186
      %v870 = vunpack.c.l.b16 %v187
      %v871 = vunpack.c.h.b16 %v187
      %v872 = vunpack.c.l.b16 %v188
      %v873 = vunpack.c.h.b16 %v188
      %v874 = vunpack.c.l.b16 %v189
      %v875 = vunpack.c.h.b16 %v189
      %v876 = vunpack.c.l.b16 %v190
      %v877 = vunpack.c.h.b16 %v190
      %v878 = vunpack.c.l.b16 %v191
      %v879 = vunpack.c.h.b16 %v191
      %v880 = vunpack.c.l.b16 %v192
      %v881 = vunpack.c.h.b16 %v192
      %v882 = vunpack.c.l.b16 %v193
      %v883 = vunpack.c.h.b16 %v193
      %v884 = vunpack.c.l.b16 %v194
      %v885 = vunpack.c.h.b16 %v194
      %v886 = vunpack.c.l.b16 %v195
      %v887 = vunpack.c.h.b16 %v195
      %v888 = vunpack.c.l.b16 %v196
      %v889 = vunpack.c.h.b16 %v196
      %v890 = vunpack.c.l.b16 %v197
      %v891 = vunpack.c.h.b16 %v197
      %v892 = vunpack.c.l.b16 %v198
      %v893 = vunpack.c.h.b16 %v198
      %v894 = vunpack.c.l.b16 %v199
      %v895 = vunpack.c.h.b16 %v199
      %v896 = vunpack.c.l.b16 %v200
      %v897 = vunpack.c.h.b16 %v200
      %v898 = vunpack.c.l.b16 %v201
      %v899 = vunpack.c.h.b16 %v201
      %v900 = vunpack.c.l.b16 %v202
      %v901 = vunpack.c.h.b16 %v202
      %v902 = vunpack.c.l.b16 %v203
      %v903 = vunpack.c.h.b16 %v203
      %v904 = vunpack.c.l.b16 %v204
      %v905 = vunpack.c.h.b16 %v204
      %v906 = vunpack.c.l.b16 %v205
      %v907 = vunpack.c.h.b16 %v205
      %v908 = vunpack.c.l.b16 %v206
      %v909 = vunpack.c.h.b16 %v206
      %v910 = vunpack.c.l.b16 %v207
      %v911 = vunpack.c.h.b16 %v207
      %v912 = vunpack.c.l.b16 %v208
      %v913 = vunpack.c.h.b16 %v208
      %v914 = vunpack.c.l.b16 %v209
      %v915 = vunpack.c.h.b16 %v209
      %v916 = vunpack.c.l.b16 %v210
      %v917 = vunpack.c.h.b16 %v210
      %v918 = vunpack.c.l.b16 %v211
      %v919 = vunpack.c.h.b16 %v211
      %v920 = vunpack.c.l.b16 %v212
      %v921 = vunpack.c.h.b16 %v212
      %v922 = vunpack.c.l.b16 %v213
      %v923 = vunpack.c.h.b16 %v213
      %v924 = vunpack.c.l.b16 %v214
      %v925 = vunpack.c.h.b16 %v214
      %v926 = vunpack.c.l.b16 %v215
      %v927 = vunpack.c.h.b16 %v215
      %v928 = vunpack.c.l.b16 %v216
      %v929 = vunpack.c.h.b16 %v216
      %v930 = vunpack.c.l.b16 %v217
      %v931 = vunpack.c.h.b16 %v217
      %v932 = vunpack.c.l.b16 %v218
      %v933 = vunpack.c.h.b16 %v218
      %v934 = vunpack.c.l.b16 %v219
      %v935 = vunpack.c.h.b16 %v219
      %v936 = vunpack.c.l.b16 %v220
      %v937 = vunpack.c.h.b16 %v220
      %v938 = vunpack.c.l.b16 %v221
      %v939 = vunpack.c.h.b16 %v221
      %v940 = vunpack.c.l.b16 %v222
      %v941 = vunpack.c.h.b16 %v222
      %v942 = vunpack.c.l.b16 %v223
      %v943 = vunpack.c.h.b16 %v223
      %v944 = vunpack.c.l.b16 %v224
      %v945 = vunpack.c.h.b16 %v224
      %v946 = vunpack.c.l.b16 %v225
      %v947 = vunpack.c.h.b16 %v225
      %v948 = vunpack.c.l.b16 %v226
      %v949 = vunpack.c.h.b16 %v226
      %v950 = vunpack.c.l.b16 %v227
      %v951 = vunpack.c.h.b16 %v227
      %v952 = vunpack.c.l.b16 %v228
      %v953 = vunpack.c.h.b16 %v228
      %v954 = vunpack.c.l.b16 %v229
      %v955 = vunpack.c.h.b16 %v229
      %v956 = vunpack.c.l.b16 %v230
      %v957 = vunpack.c.h.b16 %v230
      %v958 = vunpack.c.l.b16 %v231
      %v959 = vunpack.c.h.b16 %v231
      %v960 = vunpack.c.l.b16 %v232
      %v961 = vunpack.c.h.b16 %v232
      %v962 = vunpack.c.l.b16 %v233
      %v963 = vunpack.c.h.b16 %v233
      %v964 = vunpack.c.l.b16 %v234
      %v965 = vunpack.c.h.b16 %v234
      %v966 = vunpack.c.l.b16 %v235
      %v967 = vunpack.c.h.b16 %v235
      %v968 = vunpack.c.l.b16 %v236
      %v969 = vunpack.c.h.b16 %v236
      %v970 = vunpack.c.l.b16 %v237
      %v971 = vunpack.c.h.b16 %v237
      %v972 = vunpack.c.l.b16 %v238
      %v973 = vunpack.c.h.b16 %v238
      %v974 = vunpack.c.l.b16 %v239
      %v975 = vunpack.c.h.b16 %v239
      %v976 = vunpack.c.l.b16 %v240
      %v977 = vunpack.c.h.b16 %v240
      %v978 = vunpack.c.l.b16 %v241
      %v979 = vunpack.c.h.b16 %v241
      %v980 = vunpack.c.l.b16 %v242
      %v981 = vunpack.c.h.b16 %v242
      %v982 = vunpack.c.l.b16 %v243
      %v983 = vunpack.c.h.b16 %v243
      %v984 = vunpack.c.l.b16 %v244
      %v985 = vunpack.c.h.b16 %v244
      %v986 = vunpack.c.l.b16 %v245
      %v987 = vunpack.c.h.b16 %v245
      %v988 = vunpack.c.l.b16 %v246
      %v989 = vunpack.c.h.b16 %v246
      %v990 = vunpack.c.l.b16 %v247
      %v991 = vunpack.c.h.b16 %v247
      %v992 = vunpack.c.l.b16 %v248
      %v993 = vunpack.c.h.b16 %v248
      %v994 = vunpack.c.l.b16 %v249
      %v995 = vunpack.c.h.b16 %v249
      %v996 = vunpack.c.l.b16 %v250
      %v997 = vunpack.c.h.b16 %v250
      %v998 = vunpack.c.l.b16 %v251
      %v999 = vunpack.c.h.b16 %v251
      %v1000 = vunpack.c.l.b16 %v252
      %v1001 = vunpack.c.h.b16 %v252
      %v1002 = vunpack.c.l.b16 %v253
      %v1003 = vunpack.c.h.b16 %v253
      %v1004 = vunpack.c.l.b16 %v254
      %v1005 = vunpack.c.h.b16 %v254
      %v1006 = vunpack.c.l.b16 %v255
      %v1007 = vunpack.c.h.b16 %v255
      %v1008 = vunpack.c.l.b16 %v256
      %v1009 = vunpack.c.h.b16 %v256
      %v1010 = vunpack.c.l.b16 %v257
      %v1011 = vunpack.c.h.b16 %v257
      %v1012 = vunpack.c.l.b16 %v258
      %v1013 = vunpack.c.h.b16 %v258
      %v1014 = vunpack.c.l.b16 %v259
      %v1015 = vunpack.c.h.b16 %v259
      %v1016 = vunpack.c.l.b16 %v260
      %v1017 = vunpack.c.h.b16 %v260
      %v1018 = vunpack.c.l.b16 %v261
      %v1019 = vunpack.c.h.b16 %v261
      %v1020 = vunpack.c.l.b16 %v262
      %v1021 = vunpack.c.h.b16 %v262
      %v1022 = vunpack.c.l.b16 %v263
      %v1023 = vunpack.c.h.b16 %v263
      %v1024 = vunpack.c.l.b16 %v264
      %v1025 = vunpack.c.h.b16 %v264
      %v1026 = vunpack.c.l.b16 %v265
      %v1027 = vunpack.c.h.b16 %v265
      %v1028 = vunpack.c.l.b16 %v266
      %v1029 = vunpack.c.h.b16 %v266
      %v1030 = vunpack.c.l.b16 %v267
      %v1031 = vunpack.c.h.b16 %v267
      %v1032 = vunpack.c.l.b16 %v268
      %v1033 = vunpack.c.h.b16 %v268
      %v1034 = vunpack.c.l.b16 %v269
      %v1035 = vunpack.c.h.b16 %v269
      %v1036 = vunpack.c.l.b16 %v270
      %v1037 = vunpack.c.h.b16 %v270
      %v1038 = vunpack.c.l.b16 %v271
      %v1039 = vunpack.c.h.b16 %v271
      %v1040 = vunpack.c.l.b16 %v272
      %v1041 = vunpack.c.h.b16 %v272
      %v1042 = vunpack.c.l.b16 %v273
      %v1043 = vunpack.c.h.b16 %v273
      %v1044 = vunpack.c.l.b16 %v274
      %v1045 = vunpack.c.h.b16 %v274
      %v1046 = vunpack.c.l.b16 %v275
      %v1047 = vunpack.c.h.b16 %v275
      %v1048 = vunpack.c.l.b16 %v276
      %v1049 = vunpack.c.h.b16 %v276
      %v1050 = vunpack.c.l.b16 %v277
      %v1051 = vunpack.c.h.b16 %v277
      %v1052 = vunpack.c.l.b16 %v278
      %v1053 = vunpack.c.h.b16 %v278
      %v1054 = vunpack.c.l.b16 %v279
      %v1055 = vunpack.c.h.b16 %v279
      %v1056 = vunpack.c.l.b16 %v280
      %v1057 = vunpack.c.h.b16 %v280
      %v1058 = vunpack.c.l.b16 %v281
      %v1059 = vunpack.c.h.b16 %v281
      %v1060 = vunpack.c.l.b16 %v282
      %v1061 = vunpack.c.h.b16 %v282
      %v1062 = vunpack.c.l.b16 %v283
      %v1063 = vunpack.c.h.b16 %v283
      %v1064 = vunpack.c.l.b16 %v284
      %v1065 = vunpack.c.h.b16 %v284
      %v1066 = vunpack.c.l.b16 %v285
      %v1067 = vunpack.c.h.b16 %v285
      %v1068 = vunpack.c.l.b16 %v286
      %v1069 = vunpack.c.h.b16 %v286
      %v1070 = vunpack.c.l.b16 %v287
      %v1071 = vunpack.c.h.b16 %v287
      %v1072 = vunpack.c.l.b16 %v288
      %v1073 = vunpack.c.h.b16 %v288
      %v1074 = vunpack.c.l.b16 %v289
      %v1075 = vunpack.c.h.b16 %v289
      %v1076 = vunpack.c.l.b16 %v290
      %v1077 = vunpack.c.h.b16 %v290
      %v1078 = vunpack.c.l.b16 %v291
      %v1079 = vunpack.c.h.b16 %v291
      %v1080 = vunpack.c.l.b16 %v292
      %v1081 = vunpack.c.h.b16 %v292
      %v1082 = vunpack.c.l.b16 %v293
      %v1083 = vunpack.c.h.b16 %v293
      %v1084 = vunpack.c.l.b16 %v294
      %v1085 = vunpack.c.h.b16 %v294
      %v1086 = vunpack.c.l.b16 %v295
      %v1087 = vunpack.c.h.b16 %v295
      %v1088 = vunpack.c.l.b16 %v296
      %v1089 = vunpack.c.h.b16 %v296
      %v1090 = vunpack.c.l.b16 %v297
      %v1091 = vunpack.c.h.b16 %v297
      %v1092 = vunpack.c.l.b16 %v298
      %v1093 = vunpack.c.h.b16 %v298
      %v1094 = vunpack.c.l.b16 %v299
      %v1095 = vunpack.c.h.b16 %v299
      %v1096 = vunpack.c.l.b16 %v300
      %v1097 = vunpack.c.h.b16 %v300
      %v1098 = vunpack.c.l.b16 %v301
      %v1099 = vunpack.c.h.b16 %v301
      %v1100 = vunpack.c.l.b16 %v302
      %v1101 = vunpack.c.h.b16 %v302
      %v1102 = vunpack.c.l.b16 %v303
      %v1103 = vunpack.c.h.b16 %v303
      %v1104 = vunpack.c.l.b16 %v304
      %v1105 = vunpack.c.h.b16 %v304
      %v1106 = vunpack.c.l.b16 %v305
      %v1107 = vunpack.c.h.b16 %v305
      %v1108 = vunpack.c.l.b16 %v306
      %v1109 = vunpack.c.h.b16 %v306
      %v1110 = vunpack.c.l.b16 %v307
      %v1111 = vunpack.c.h.b16 %v307
      %v1112 = vunpack.c.l.b16 %v308
      %v1113 = vunpack.c.h.b16 %v308
      %v1114 = vunpack.c.l.b16 %v309
      %v1115 = vunpack.c.h.b16 %v309
      %v1116 = vunpack.c.l.b16 %v310
      %v1117 = vunpack.c.h.b16 %v310
      %v1118 = vunpack.c.l.b16 %v311
      %v1119 = vunpack.c.h.b16 %v311
      %v1120 = vunpack.c.l.b16 %v312
      %v1121 = vunpack.c.h.b16 %v312
      %v1122 = vunpack.c.l.b16 %v313
      %v1123 = vunpack.c.h.b16 %v313
      %v1124 = vunpack.c.l.b16 %v314
      %v1125 = vunpack.c.h.b16 %v314
      %v1126 = vunpack.c.l.b16 %v315
      %v1127 = vunpack.c.h.b16 %v315
      %v1128 = vunpack.c.l.b16 %v316
      %v1129 = vunpack.c.h.b16 %v316
      %v1130 = vunpack.c.l.b16 %v317
      %v1131 = vunpack.c.h.b16 %v317
      %v1132 = vunpack.c.l.b16 %v318
      %v1133 = vunpack.c.h.b16 %v318
      %v1134 = vunpack.c.l.b16 %v319
      %v1135 = vunpack.c.h.b16 %v319
      %v1136 = vunpack.c.l.b16 %v320
      %v1137 = vunpack.c.h.b16 %v320
      %v1138 = vunpack.c.l.b16 %v321
      %v1139 = vunpack.c.h.b16 %v321
      %v1140 = vunpack.c.l.b16 %v322
      %v1141 = vunpack.c.h.b16 %v322
      %v1142 = vunpack.c.l.b16 %v323
      %v1143 = vunpack.c.h.b16 %v323
      %v1144 = vunpack.c.l.b16 %v324
      %v1145 = vunpack.c.h.b16 %v324
      %v1146 = vunpack.c.l.b16 %v325
      %v1147 = vunpack.c.h.b16 %v325
      %v1148 = vunpack.c.l.b16 %v326
      %v1149 = vunpack.c.h.b16 %v326
      %v1150 = vunpack.c.l.b16 %v327
      %v1151 = vunpack.c.h.b16 %v327
      %v1152 = vunpack.c.l.b16 %v328
      %v1153 = vunpack.c.h.b16 %v328
      %v1154 = vunpack.c.l.b16 %v329
      %v1155 = vunpack.c.h.b16 %v329
      %v1156 = vunpack.c.l.b16 %v330
      %v1157 = vunpack.c.h.b16 %v330
      %v1158 = vunpack.c.l.b16 %v331
      %v1159 = vunpack.c.h.b16 %v331
      %v1160 = vunpack.c.l.b16 %v332
      %v1161 = vunpack.c.h.b16 %v332
      %v1162 = vunpack.c.l.b16 %v333
      %v1163 = vunpack.c.h.b16 %v333
      %v1164 = vunpack.c.l.b16 %v334
      %v1165 = vunpack.c.h.b16 %v334
      %v1166 = vunpack.c.l.b16 %v335
      %v1167 = vunpack.c.h.b16 %v335
      %v1168 = vunpack.c.l.b16 %v336
      %v1169 = vunpack.c.h.b16 %v336
      %v1170 = vunpack.c.l.b16 %v337
      %v1171 = vunpack.c.h.b16 %v337
      %v1172 = vunpack.c.l.b16 %v338
      %v1173 = vunpack.c.h.b16 %v338
      %v1174 = vunpack.c.l.b16 %v339
      %v1175 = vunpack.c.h.b16 %v339
      %v1176 = vunpack.c.l.b16 %v340
      %v1177 = vunpack.c.h.b16 %v340
      %v1178 = vunpack.c.l.b16 %v341
      %v1179 = vunpack.c.h.b16 %v341
      %v1180 = vunpack.c.l.b16 %v342
      %v1181 = vunpack.c.h.b16 %v342
      %v1182 = vunpack.c.l.b16 %v343
      %v1183 = vunpack.c.h.b16 %v343
      %v1184 = vunpack.c.l.b16 %v344
      %v1185 = vunpack.c.h.b16 %v344
      %v1186 = vunpack.c.l.b16 %v345
      %v1187 = vunpack.c.h.b16 %v345
      %v1188 = vunpack.c.l.b16 %v346
      %v1189 = vunpack.c.h.b16 %v346
      %v1190 = vunpack.c.l.b16 %v347
      %v1191 = vunpack.c.h.b16 %v347
      %v1192 = vunpack.c.l.b16 %v348
      %v1193 = vunpack.c.h.b16 %v348
      %v1194 = vunpack.c.l.b16 %v349
      %v1195 = vunpack.c.h.b16 %v349
      %v1196 = vunpack.c.l.b16 %v350
      %v1197 = vunpack.c.h.b16 %v350
      %v1198 = vunpack.c.l.b16 %v351
      %v1199 = vunpack.c.h.b16 %v351
      %v1200 = vunpack.c.l.b16 %v352
      %v1201 = vunpack.c.h.b16 %v352
      %v1202 = vunpack.c.l.b16 %v353
      %v1203 = vunpack.c.h.b16 %v353
      %v1204 = vunpack.c.l.b16 %v354
      %v1205 = vunpack.c.h.b16 %v354
      %v1206 = vunpack.c.l.b16 %v355
      %v1207 = vunpack.c.h.b16 %v355
      %v1208 = vunpack.c.l.b16 %v356
      %v1209 = vunpack.c.h.b16 %v356
      %v1210 = vunpack.c.l.b16 %v357
      %v1211 = vunpack.c.h.b16 %v357
      %v1212 = vunpack.c.l.b16 %v358
      %v1213 = vunpack.c.h.b16 %v358
      %v1214 = vunpack.c.l.b16 %v359
      %v1215 = vunpack.c.h.b16 %v359
      %v1216 = vunpack.c.l.b16 %v360
      %v1217 = vunpack.c.h.b16 %v360
      %v1218 = vunpack.c.l.b16 %v361
      %v1219 = vunpack.c.h.b16 %v361
      %v1220 = vunpack.c.l.b16 %v362
      %v1221 = vunpack.c.h.b16 %v362
      %v1222 = vunpack.c.l.b16 %v363
      %v1223 = vunpack.c.h.b16 %v363
      %v1224 = vunpack.c.l.b16 %v364
      %v1225 = vunpack.c.h.b16 %v364
      %v1226 = vunpack.c.l.b16 %v365
      %v1227 = vunpack.c.h.b16 %v365
      %v1228 = vunpack.c.l.b16 %v366
      %v1229 = vunpack.c.h.b16 %v366
      %v1230 = vunpack.c.l.b16 %v367
      %v1231 = vunpack.c.h.b16 %v367
      %v1232 = vunpack.c.l.b16 %v368
      %v1233 = vunpack.c.h.b16 %v368
      %v1234 = vunpack.c.l.b16 %v369
      %v1235 = vunpack.c.h.b16 %v369
      %v1236 = vunpack.c.l.b16 %v370
      %v1237 = vunpack.c.h.b16 %v370
      %v1238 = vunpack.c.l.b16 %v371
      %v1239 = vunpack.c.h.b16 %v371
      %v1240 = vunpack.c.l.b16 %v372
      %v1241 = vunpack.c.h.b16 %v372
      %v1242 = vunpack.c.l.b16 %v373
      %v1243 = vunpack.c.h.b16 %v373
      %v1244 = vunpack.c.l.b16 %v374
      %v1245 = vunpack.c.h.b16 %v374
      %v1246 = vunpack.c.l.b16 %v375
      %v1247 = vunpack.c.h.b16 %v375
      %v1248 = vunpack.c.l.b16 %v376
      %v1249 = vunpack.c.h.b16 %v376
      %v1250 = vunpack.c.l.b16 %v377
      %v1251 = vunpack.c.h.b16 %v377
      %v1252 = vunpack.c.l.b16 %v378
      %v1253 = vunpack.c.h.b16 %v378
      %v1254 = vunpack.c.l.b16 %v379
      %v1255 = vunpack.c.h.b16 %v379
      %v1256 = vunpack.c.l.b16 %v380
      %v1257 = vunpack.c.h.b16 %v380
      %v1258 = vunpack.c.l.b16 %v381
      %v1259 = vunpack.c.h.b16 %v381
      %v1260 = vunpack.c.l.b16 %v382
      %v1261 = vunpack.c.h.b16 %v382
      %v1262 = vunpack.c.l.b16 %v383
      %v1263 = vunpack.c.h.b16 %v383
      %v1264 = vunpack.c.l.b16 %v384
      %v1265 = vunpack.c.h.b16 %v384
      %v1266 = vunpack.c.l.b16 %v385
      %v1267 = vunpack.c.h.b16 %v385
      %v1268 = vunpack.c.l.b16 %v386
      %v1269 = vunpack.c.h.b16 %v386
      %v1270 = vunpack.c.l.b16 %v387
      %v1271 = vunpack.c.h.b16 %v387
      %v1272 = vunpack.c.l.b16 %v388
      %v1273 = vunpack.c.h.b16 %v388
      %v1274 = vunpack.c.l.b16 %v389
      %v1275 = vunpack.c.h.b16 %v389
      %v1276 = vunpack.c.l.b16 %v390
      %v1277 = vunpack.c.h.b16 %v390
      %v1278 = vunpack.c.l.b16 %v391
      %v1279 = vunpack.c.h.b16 %v391
      %v1280 = vunpack.c.l.b16 %v392
      %v1281 = vunpack.c.h.b16 %v392
      %v1282 = vunpack.c.l.b16 %v393
      %v1283 = vunpack.c.h.b16 %v393
      %v1284 = vunpack.c.l.b16 %v394
      %v1285 = vunpack.c.h.b16 %v394
      %v1286 = vunpack.c.l.b16 %v395
      %v1287 = vunpack.c.h.b16 %v395
      %v1288 = vunpack.c.l.b16 %v396
      %v1289 = vunpack.c.h.b16 %v396
      %v1290 = vunpack.c.l.b16 %v397
      %v1291 = vunpack.c.h.b16 %v397
      %v1292 = vunpack.c.l.b16 %v398
      %v1293 = vunpack.c.h.b16 %v398
      %v1294 = vunpack.c.l.b16 %v399
      %v1295 = vunpack.c.h.b16 %v399
      %v1296 = vunpack.c.l.b16 %v400
      %v1297 = vunpack.c.h.b16 %v400
      %v1298 = vunpack.c.l.b16 %v401
      %v1299 = vunpack.c.h.b16 %v401
      %v1300 = vunpack.c.l.b16 %v402
      %v1301 = vunpack.c.h.b16 %v402
      %v1302 = vunpack.c.l.b16 %v403
      %v1303 = vunpack.c.h.b16 %v403
      %v1304 = vpack.c.b16 %v870, %v856
      %v1305 = vpack.c.b16 %v871, %v857
      %v1306 = vpack.c.b16 %v872, %v858
      %v1307 = vpack.c.b16 %v873, %v859
      %v1308 = vpack.c.b16 %v874, %v860
      %v1309 = vpack.c.b16 %v875, %v861
      %v1310 = vpack.c.b16 %v876, %v862
      %v1311 = vpack.c.b16 %v877, %v863
      %v1312 = vpack.c.b16 %v878, %v864
      %v1313 = vpack.c.b16 %v879, %v865
      %v1314 = vpack.c.b16 %v880, %v866
      %v1315 = vpack.c.b16 %v881, %v867
      %v1316 = vpack.c.b16 %v882, %v868
      %v1317 = vpack.c.b16 %v883, %v869
      %v1318 = vpack.c.b16 %v898, %v884
      %v1319 = vpack.c.b16 %v899, %v885
      %v1320 = vpack.c.b16 %v900, %v886
      %v1321 = vpack.c.b16 %v901, %v887
      %v1322 = vpack.c.b16 %v902, %v888
      %v1323 = vpack.c.b16 %v903, %v889
      %v1324 = vpack.c.b16 %v904, %v890
      %v1325 = vpack.c.b16 %v905, %v891
      %v1326 = vpack.c.b16 %v906, %v892
      %v1327 = vpack.c.b16 %v907, %v893
      %v1328 = vpack.c.b16 %v908, %v894
      %v1329 = vpack.c.b16 %v909, %v895
      %v1330 = vpack.c.b16 %v910, %v896
      %v1331 = vpack.c.b16 %v911, %v897
      %v1332 = vpack.c.b16 %v926, %v912
      %v1333 = vpack.c.b16 %v927, %v913
      %v1334 = vpack.c.b16 %v928, %v914
      %v1335 = vpack.c.b16 %v929, %v915
      %v1336 = vpack.c.b16 %v930, %v916
      %v1337 = vpack.c.b16 %v931, %v917
      %v1338 = vpack.c.b16 %v932, %v918
      %v1339 = vpack.c.b16 %v933, %v919
      %v1340 = vpack.c.b16 %v934, %v920
      %v1341 = vpack.c.b16 %v935, %v921
      %v1342 = vpack.c.b16 %v936, %v922
      %v1343 = vpack.c.b16 %v937, %v923
      %v1344 = vpack.c.b16 %v938, %v924
      %v1345 = vpack.c.b16 %v939, %v925
      %v1346 = vpack.c.b16 %v954, %v940
      %v1347 = vpack.c.b16 %v955, %v941
      %v1348 = vpack.c.b16 %v956, %v942
      %v1349 = vpack.c.b16 %v957, %v943
      %v1350 = vpack.c.b16 %v958, %v944
      %v1351 = vpack.c.b16 %v959, %v945
      %v1352 = vpack.c.b16 %v960, %v946
      %v1353 = vpack.c.b16 %v961, %v947
      %v1354 = vpack.c.b16 %v962, %v948
      %v1355 = vpack.c.b16 %v963, %v949
      %v1356 = vpack.c.b16 %v964, %v950
      %v1357 = vpack.c.b16 %v965, %v951
      %v1358 = vpack.c.b16 %v966, %v952
      %v1359 = vpack.c.b16 %v967, %v953
      %v1360 = vpack.c.b16 %v982, %v968
      %v1361 = vpack.c.b16 %v983, %v969
      %v1362 = vpack.c.b16 %v984, %v970
      %v1363 = vpack.c.b16 %v985, %v971
      %v1364 = vpack.c.b16 %v986, %v972
      %v1365 = vpack.c.b16 %v987, %v973
      %v1366 = vpack.c.b16 %v988, %v974
      %v1367 = vpack.c.b16 %v989, %v975
      %v1368 = vpack.c.b16 %v990, %v976
      %v1369 = vpack.c.b16 %v991, %v977
      %v1370 = vpack.c.b16 %v992, %v978
      %v1371 = vpack.c.b16 %v993, %v979
      %v1372 = vpack.c.b16 %v994, %v980
      %v1373 = vpack.c.b16 %v995, %v981
      %v1374 = vpack.c.b16 %v1010, %v996
      %v1375 = vpack.c.b16 %v1011, %v997
      %v1376 = vpack.c.b16 %v1012, %v998
      %v1377 = vpack.c.b16 %v1013, %v999
      %v1378 = vpack.c.b16 %v1014, %v1000
      %v1379 = vpack.c.b16 %v1015, %v1001
      %v1380 = vpack.c.b16 %v1016, %v1002
      %v1381 = vpack.c.b16 %v1017, %v1003
      %v1382 = vpack.c.b16 %v1018, %v1004
      %v1383 = vpack.c.b16 %v1019, %v1005
      %v1384 = vpack.c.b16 %v1020, %v1006
      %v1385 = vpack.c.b16 %v1021, %v1007
      %v1386 = vpack.c.b16 %v1022, %v1008
      %v1387 = vpack.c.b16 %v1023, %v1009
      %v1388 = vpack.c.b16 %v1038, %v1024
      %v1389 = vpack.c.b16 %v1039, %v1025
      %v1390 = vpack.c.b16 %v1040, %v1026
      %v1391 = vpack.c.b16 %v1041, %v1027
      %v1392 = vpack.c.b16 %v1042, %v1028
      %v1393 = vpack.c.b16 %v1043, %v1029
      %v1394 = vpack.c.b16 %v1044, %v1030
      %v1395 = vpack.c.b16 %v1045, %v1031
      %v1396 = vpack.c.b16 %v1046, %v1032
      %v1397 = vpack.c.b16 %v1047, %v1033
      %v1398 = vpack.c.b16 %v1048, %v1034
      %v1399 = vpack.c.b16 %v1049, %v1035
      %v1400 = vpack.c.b16 %v1050, %v1036
      %v1401 = vpack.c.b16 %v1051, %v1037
      %v1402 = vpack.c.b16 %v1066, %v1052
      %v1403 = vpack.c.b16 %v1067, %v1053
      %v1404 = vpack.c.b16 %v1068, %v1054
      %v1405 = vpack.c.b16 %v1069, %v1055
      %v1406 = vpack.c.b16 %v1070, %v1056
      %v1407 = vpack.c.b16 %v1071, %v1057
      %v1408 = vpack.c.b16 %v1072, %v1058
      %v1409 = vpack.c.b16 %v1073, %v1059
      %v1410 = vpack.c.b16 %v1074, %v1060
      %v1411 = vpack.c.b16 %v1075, %v1061
      %v1412 = vpack.c.b16 %v1076, %v1062
      %v1413 = vpack.c.b16 %v1077, %v1063
      %v1414 = vpack.c.b16 %v1078, %v1064
      %v1415 = vpack.c.b16 %v1079, %v1065
      %v1416 = vpack.c.b16 %v1094, %v1080
      %v1417 = vpack.c.b16 %v1095, %v1081
      %v1418 = vpack.c.b16 %v1096, %v1082
      %v1419 = vpack.c.b16 %v1097, %v1083
      %v1420 = vpack.c.b16 %v1098, %v1084
      %v1421 = vpack.c.b16 %v1099, %v1085
      %v1422 = vpack.c.b16 %v1100, %v1086
      %v1423 = vpack.c.b16 %v1101, %v1087
      %v1424 = vpack.c.b16 %v1102, %v1088
      %v1425 = vpack.c.b16 %v1103, %v1089
      %v1426 = vpack.c.b16 %v1104, %v1090
      %v1427 = vpack.c.b16 %v1105, %v1091
      %v1428 = vpack.c.b16 %v1106, %v1092
      %v1429 = vpack.c.b16 %v1107, %v1093
      %v1430 = vpack.c.b16 %v1122, %v1108
      %v1431 = vpack.c.b16 %v1123, %v1109
      %v1432 = vpack.c.b16 %v1124, %v1110
      %v1433 = vpack.c.b16 %v1125, %v1111
      %v1434 = vpack.c.b16 %v1126, %v1112
      %v1435 = vpack.c.b16 %v1127, %v1113
      %v1436 = vpack.c.b16 %v1128, %v1114
      %v1437 = vpack.c.b16 %v1129, %v1115
      %v1438 = vpack.c.b16 %v1130, %v1116
      %v1439 = vpack.c.b16 %v1131, %v1117
      %v1440 = vpack.c.b16 %v1132, %v1118
      %v1441 = vpack.c.b16 %v1133, %v1119
      %v1442 = vpack.c.b16 %v1134, %v1120
      %v1443 = vpack.c.b16 %v1135, %v1121
      %v1444 = vpack.c.b16 %v1150, %v1136
      %v1445 = vpack.c.b16 %v1151, %v1137
      %v1446 = vpack.c.b16 %v1152, %v1138
      %v1447 = vpack.c.b16 %v1153, %v1139
      %v1448 = vpack.c.b16 %v1154, %v1140
      %v1449 = vpack.c.b16 %v1155, %v1141
      %v1450 = vpack.c.b16 %v1156, %v1142
      %v1451 = vpack.c.b16 %v1157, %v1143
      %v1452 = vpack.c.b16 %v1158, %v1144
      %v1453 = vpack.c.b16 %v1159, %v1145
      %v1454 = vpack.c.b16 %v1160, %v1146
      %v1455 = vpack.c.b16 %v1161, %v1147
      %v1456 = vpack.c.b16 %v1162, %v1148
      %v1457 = vpack.c.b16 %v1163, %v1149
      %v1458 = vpack.c.b16 %v1178, %v1164
      %v1459 = vpack.c.b16 %v1179, %v1165
      %v1460 = vpack.c.b16 %v1180, %v1166
      %v1461 = vpack.c.b16 %v1181, %v1167
      %v1462 = vpack.c.b16 %v1182, %v1168
      %v1463 = vpack.c.b16 %v1183, %v1169
      %v1464 = vpack.c.b16 %v1184, %v1170
      %v1465 = vpack.c.b16 %v1185, %v1171
      %v1466 = vpack.c.b16 %v1186, %v1172
      %v1467 = vpack.c.b16 %v1187, %v1173
      %v1468 = vpack.c.b16 %v1188, %v1174
      %v1469 = vpack.c.b16 %v1189, %v1175
      %v1470 = vpack.c.b16 %v1190, %v1176
      %v1471 = vpack.c.b16 %v1191, %v1177
      %v1472 = vpack.c.b16 %v1206, %v1192
      %v1473 = vpack.c.b16 %v1207, %v1193
      %v1474 = vpack.c.b16 %v1208, %v1194
      %v1475 = vpack.c.b16 %v1209, %v1195
      %v1476 = vpack.c.b16 %v1210, %v1196
      %v1477 = vpack.c.b16 %v1211, %v1197
      %v1478 = vpack.c.b16 %v1212, %v1198
      %v1479 = vpack.c.b16 %v1213, %v1199
      %v1480 = vpack.c.b16 %v1214, %v1200
      %v1481 = vpack.c.b16 %v1215, %v1201
      %v1482 = vpack.c.b16 %v1216, %v1202
      %v1483 = vpack.c.b16 %v1217, %v1203
      %v1484 = vpack.c.b16 %v1218, %v1204
      %v1485 = vpack.c.b16 %v1219, %v1205
      %v1486 = vpack.c.b16 %v1234, %v1220
      %v1487 = vpack.c.b16 %v1235, %v1221
      %v1488 = vpack.c.b16 %v1236, %v1222
      %v1489 = vpack.c.b16 %v1237, %v1223
      %v1490 = vpack.c.b16 %v1238, %v1224
      %v1491 = vpack.c.b16 %v1239, %v1225
      %v1492 = vpack.c.b16 %v1240, %v1226
      %v1493 = vpack.c.b16 %v1241, %v1227
      %v1494 = vpack.c.b16 %v1242, %v1228
      %v1495 = vpack.c.b16 %v1243, %v1229
      %v1496 = vpack.c.b16 %v1244, %v1230
      %v1497 = vpack.c.b16 %v1245, %v1231
      %v1498 = vpack.c.b16 %v1246, %v1232
      %v1499 = vpack.c.b16 %v1247, %v1233
      %v1500 = vpack.c.b16 %v1262, %v1248
      %v1501 = vpack.c.b16 %v1263, %v1249
      %v1502 = vpack.c.b16 %v1264, %v1250
      %v1503 = vpack.c.b16 %v1265, %v1251
      %v1504 = vpack.c.b16 %v1266, %v1252
      %v1505 = vpack.c.b16 %v1267, %v1253
      %v1506 = vpack.c.b16 %v1268, %v1254
      %v1507 = vpack.c.b16 %v1269, %v1255
      %v1508 = vpack.c.b16 %v1270, %v1256
      %v1509 = vpack.c.b16 %v1271, %v1257
      %v1510 = vpack.c.b16 %v1272, %v1258
      %v1511 = vpack.c.b16 %v1273, %v1259
      %v1512 = vpack.c.b16 %v1274, %v1260
      %v1513 = vpack.c.b16 %v1275, %v1261
      %v1514 = vpack.c.b16 %v1290, %v1276
      %v1515 = vpack.c.b16 %v1291, %v1277
      %v1516 = vpack.c.b16 %v1292, %v1278
      %v1517 = vpack.c.b16 %v1293, %v1279
      %v1518 = vpack.c.b16 %v1294, %v1280
      %v1519 = vpack.c.b16 %v1295, %v1281
      %v1520 = vpack.c.b16 %v1296, %v1282
      %v1521 = vpack.c.b16 %v1297, %v1283
      %v1522 = vpack.c.b16 %v1298, %v1284
      %v1523 = vpack.c.b16 %v1299, %v1285
      %v1524 = vpack.c.b16 %v1300, %v1286
      %v1525 = vpack.c.b16 %v1301, %v1287
      %v1526 = vpack.c.b16 %v1302, %v1288
      %v1527 = vpack.c.b16 %v1303, %v1289
      %v1952 = vunpack.c.l.b16 %v404
      %v1953 = vunpack.c.h.b16 %v404
      %v1954 = vunpack.c.l.b16 %v405
      %v1955 = vunpack.c.h.b16 %v405
      %v1956 = vunpack.c.l.b16 %v406
      %v1957 = vunpack.c.h.b16 %v406
      %v1958 = vunpack.c.l.b16 %v407
      %v1959 = vunpack.c.h.b16 %v407
      %v1960 = vunpack.c.l.b16 %v408
      %v1961 = vunpack.c.h.b16 %v408
      %v1962 = vunpack.c.l.b16 %v409
      %v1963 = vunpack.c.h.b16 %v409
      %v1964 = vunpack.c.l.b16 %v410
      %v1965 = vunpack.c.h.b16 %v410
      %v1966 = vunpack.c.l.b16 %v411
      %v1967 = vunpack.c.h.b16 %v411
      %v1968 = vunpack.c.l.b16 %v412
      %v1969 = vunpack.c.h.b16 %v412
      %v1970 = vunpack.c.l.b16 %v413
      %v1971 = vunpack.c.h.b16 %v413
      %v1972 = vunpack.c.l.b16 %v414
      %v1973 = vunpack.c.h.b16 %v414
      %v1974 = vunpack.c.l.b16 %v415
      %v1975 = vunpack.c.h.b16 %v415
      %v1976 = vunpack.c.l.b16 %v416
      %v1977 = vunpack.c.h.b16 %v416
      %v1978 = vunpack.c.l.b16 %v417
      %v1979 = vunpack.c.h.b16 %v417
      %v1980 = vunpack.c.l.b16 %v418
      %v1981 = vunpack.c.h.b16 %v418
      %v1982 = vunpack.c.l.b16 %v419
      %v1983 = vunpack.c.h.b16 %v419
      %v1984 = vunpack.c.l.b16 %v420
      %v1985 = vunpack.c.h.b16 %v420
      %v1986 = vunpack.c.l.b16 %v421
      %v1987 = vunpack.c.h.b16 %v421
      %v1988 = vunpack.c.l.b16 %v422
      %v1989 = vunpack.c.h.b16 %v422
      %v1990 = vunpack.c.l.b16 %v423
      %v1991 = vunpack.c.h.b16 %v423
      %v1992 = vunpack.c.l.b16 %v424
      %v1993 = vunpack.c.h.b16 %v424
      %v1994 = vunpack.c.l.b16 %v425
      %v1995 = vunpack.c.h.b16 %v425
      %v1996 = vunpack.c.l.b16 %v426
      %v1997 = vunpack.c.h.b16 %v426
      %v1998 = vunpack.c.l.b16 %v427
      %v1999 = vunpack.c.h.b16 %v427
      %v2000 = vunpack.c.l.b16 %v428
      %v2001 = vunpack.c.h.b16 %v428
      %v2002 = vunpack.c.l.b16 %v429
      %v2003 = vunpack.c.h.b16 %v429
      %v2004 = vunpack.c.l.b16 %v430
      %v2005 = vunpack.c.h.b16 %v430
      %v2006 = vunpack.c.l.b16 %v431
      %v2007 = vunpack.c.h.b16 %v431
      %v2008 = vunpack.c.l.b16 %v432
      %v2009 = vunpack.c.h.b16 %v432
      %v2010 = vunpack.c.l.b16 %v433
      %v2011 = vunpack.c.h.b16 %v433
      %v2012 = vunpack.c.l.b16 %v434
      %v2013 = vunpack.c.h.b16 %v434
      %v2014 = vunpack.c.l.b16 %v435
      %v2015 = vunpack.c.h.b16 %v435
      %v2016 = vunpack.c.l.b16 %v436
      %v2017 = vunpack.c.h.b16 %v436
      %v2018 = vunpack.c.l.b16 %v437
      %v2019 = vunpack.c.h.b16 %v437
      %v2020 = vunpack.c.l.b16 %v438
      %v2021 = vunpack.c.h.b16 %v438
      %v2022 = vunpack.c.l.b16 %v439
      %v2023 = vunpack.c.h.b16 %v439
      %v2024 = vunpack.c.l.b16 %v440
      %v2025 = vunpack.c.h.b16 %v440
      %v2026 = vunpack.c.l.b16 %v441
      %v2027 = vunpack.c.h.b16 %v441
      %v2028 = vunpack.c.l.b16 %v442
      %v2029 = vunpack.c.h.b16 %v442
      %v2030 = vunpack.c.l.b16 %v443
      %v2031 = vunpack.c.h.b16 %v443
      %v2032 = vunpack.c.l.b16 %v444
      %v2033 = vunpack.c.h.b16 %v444
      %v2034 = vunpack.c.l.b16 %v445
      %v2035 = vunpack.c.h.b16 %v445
      %v2036 = vunpack.c.l.b16 %v446
      %v2037 = vunpack.c.h.b16 %v446
      %v2038 = vunpack.c.l.b16 %v447
      %v2039 = vunpack.c.h.b16 %v447
      %v2040 = vunpack.c.l.b16 %v448
      %v2041 = vunpack.c.h.b16 %v448
      %v2042 = vunpack.c.l.b16 %v449
      %v2043 = vunpack.c.h.b16 %v449
      %v2044 = vunpack.c.l.b16 %v450
      %v2045 = vunpack.c.h.b16 %v450
      %v2046 = vunpack.c.l.b16 %v451
      %v2047 = vunpack.c.h.b16 %v451
      %v2048 = vunpack.c.l.b16 %v452
      %v2049 = vunpack.c.h.b16 %v452
      %v2050 = vunpack.c.l.b16 %v453
      %v2051 = vunpack.c.h.b16 %v453
      %v2052 = vunpack.c.l.b16 %v454
      %v2053 = vunpack.c.h.b16 %v454
      %v2054 = vunpack.c.l.b16 %v455
      %v2055 = vunpack.c.h.b16 %v455
      %v2056 = vunpack.c.l.b16 %v456
      %v2057 = vunpack.c.h.b16 %v456
      %v2058 = vunpack.c.l.b16 %v457
      %v2059 = vunpack.c.h.b16 %v457
      %v2060 = vunpack.c.l.b16 %v458
      %v2061 = vunpack.c.h.b16 %v458
      %v2062 = vunpack.c.l.b16 %v459
      %v2063 = vunpack.c.h.b16 %v459
      %v2064 = vunpack.c.l.b16 %v460
      %v2065 = vunpack.c.h.b16 %v460
      %v2066 = vunpack.c.l.b16 %v461
      %v2067 = vunpack.c.h.b16 %v461
      %v2068 = vunpack.c.l.b16 %v462
      %v2069 = vunpack.c.h.b16 %v462
      %v2070 = vunpack.c.l.b16 %v463
      %v2071 = vunpack.c.h.b16 %v463
      %v2072 = vunpack.c.l.b16 %v464
      %v2073 = vunpack.c.h.b16 %v464
      %v2074 = vunpack.c.l.b16 %v465
      %v2075 = vunpack.c.h.b16 %v465
      %v2076 = vunpack.c.l.b16 %v466
      %v2077 = vunpack.c.h.b16 %v466
      %v2078 = vunpack.c.l.b16 %v467
      %v2079 = vunpack.c.h.b16 %v467
      %v2080 = vunpack.c.l.b16 %v468
      %v2081 = vunpack.c.h.b16 %v468
      %v2082 = vunpack.c.l.b16 %v469
      %v2083 = vunpack.c.h.b16 %v469
      %v2084 = vunpack.c.l.b16 %v470
      %v2085 = vunpack.c.h.b16 %v470
      %v2086 = vunpack.c.l.b16 %v471
      %v2087 = vunpack.c.h.b16 %v471
      %v2088 = vunpack.c.l.b16 %v472
      %v2089 = vunpack.c.h.b16 %v472
      %v2090 = vunpack.c.l.b16 %v473
      %v2091 = vunpack.c.h.b16 %v473
      %v2092 = vunpack.c.l.b16 %v474
      %v2093 = vunpack.c.h.b16 %v474
      %v2094 = vunpack.c.l.b16 %v475
      %v2095 = vunpack.c.h.b16 %v475
      %v2096 = vunpack.c.l.b16 %v476
      %v2097 = vunpack.c.h.b16 %v476
      %v2098 = vunpack.c.l.b16 %v477
      %v2099 = vunpack.c.h.b16 %v477
      %v2100 = vunpack.c.l.b16 %v478
      %v2101 = vunpack.c.h.b16 %v478
      %v2102 = vunpack.c.l.b16 %v479
      %v2103 = vunpack.c.h.b16 %v479
      %v2104 = vunpack.c.l.b16 %v480
      %v2105 = vunpack.c.h.b16 %v480
      %v2106 = vunpack.c.l.b16 %v481
      %v2107 = vunpack.c.h.b16 %v481
      %v2108 = vunpack.c.l.b16 %v482
      %v2109 = vunpack.c.h.b16 %v482
      %v2110 = vunpack.c.l.b16 %v483
      %v2111 = vunpack.c.h.b16 %v483
      %v2112 = vunpack.c.l.b16 %v484
      %v2113 = vunpack.c.h.b16 %v484
      %v2114 = vunpack.c.l.b16 %v485
      %v2115 = vunpack.c.h.b16 %v485
      %v2116 = vunpack.c.l.b16 %v486
      %v2117 = vunpack.c.h.b16 %v486
      %v2118 = vunpack.c.l.b16 %v487
      %v2119 = vunpack.c.h.b16 %v487
      %v2120 = vunpack.c.l.b16 %v488
      %v2121 = vunpack.c.h.b16 %v488
      %v2122 = vunpack.c.l.b16 %v489
      %v2123 = vunpack.c.h.b16 %v489
      %v2124 = vunpack.c.l.b16 %v490
      %v2125 = vunpack.c.h.b16 %v490
      %v2126 = vunpack.c.l.b16 %v491
      %v2127 = vunpack.c.h.b16 %v491
      %v2128 = vunpack.c.l.b16 %v492
      %v2129 = vunpack.c.h.b16 %v492
      %v2130 = vunpack.c.l.b16 %v493
      %v2131 = vunpack.c.h.b16 %v493
      %v2132 = vunpack.c.l.b16 %v494
      %v2133 = vunpack.c.h.b16 %v494
      %v2134 = vunpack.c.l.b16 %v495
      %v2135 = vunpack.c.h.b16 %v495
      %v2136 = vunpack.c.l.b16 %v496
      %v2137 = vunpack.c.h.b16 %v496
      %v2138 = vunpack.c.l.b16 %v497
      %v2139 = vunpack.c.h.b16 %v497
      %v2140 = vunpack.c.l.b16 %v498
      %v2141 = vunpack.c.h.b16 %v498
      %v2142 = vunpack.c.l.b16 %v499
      %v2143 = vunpack.c.h.b16 %v499
      %v2144 = vunpack.c.l.b16 %v500
      %v2145 = vunpack.c.h.b16 %v500
      %v2146 = vunpack.c.l.b16 %v501
      %v2147 = vunpack.c.h.b16 %v501
      %v2148 = vunpack.c.l.b16 %v502
      %v2149 = vunpack.c.h.b16 %v502
      %v2150 = vunpack.c.l.b16 %v503
      %v2151 = vunpack.c.h.b16 %v503
      %v2152 = vunpack.c.l.b16 %v504
      %v2153 = vunpack.c.h.b16 %v504
      %v2154 = vunpack.c.l.b16 %v505
      %v2155 = vunpack.c.h.b16 %v505
      %v2156 = vunpack.c.l.b16 %v506
      %v2157 = vunpack.c.h.b16 %v506
      %v2158 = vunpack.c.l.b16 %v507
      %v2159 = vunpack.c.h.b16 %v507
      %v2160 = vunpack.c.l.b16 %v508
      %v2161 = vunpack.c.h.b16 %v508
      %v2162 = vunpack.c.l.b16 %v509
      %v2163 = vunpack.c.h.b16 %v509
      %v2164 = vunpack.c.l.b16 %v510
      %v2165 = vunpack.c.h.b16 %v510
      %v2166 = vunpack.c.l.b16 %v511
      %v2167 = vunpack.c.h.b16 %v511
      %v2168 = vunpack.c.l.b16 %v512
      %v2169 = vunpack.c.h.b16 %v512
      %v2170 = vunpack.c.l.b16 %v513
      %v2171 = vunpack.c.h.b16 %v513
      %v2172 = vunpack.c.l.b16 %v514
      %v2173 = vunpack.c.h.b16 %v514
      %v2174 = vunpack.c.l.b16 %v515
      %v2175 = vunpack.c.h.b16 %v515
      %v2176 = vunpack.c.l.b16 %v516
      %v2177 = vunpack.c.h.b16 %v516
      %v2178 = vunpack.c.l.b16 %v517
      %v2179 = vunpack.c.h.b16 %v517
      %v2180 = vunpack.c.l.b16 %v518
      %v2181 = vunpack.c.h.b16 %v518
      %v2182 = vunpack.c.l.b16 %v519
      %v2183 = vunpack.c.h.b16 %v519
      %v2184 = vunpack.c.l.b16 %v520
      %v2185 = vunpack.c.h.b16 %v520
      %v2186 = vunpack.c.l.b16 %v521
      %v2187 = vunpack.c.h.b16 %v521
      %v2188 = vunpack.c.l.b16 %v522
      %v2189 = vunpack.c.h.b16 %v522
      %v2190 = vunpack.c.l.b16 %v523
      %v2191 = vunpack.c.h.b16 %v523
      %v2192 = vunpack.c.l.b16 %v524
      %v2193 = vunpack.c.h.b16 %v524
      %v2194 = vunpack.c.l.b16 %v525
      %v2195 = vunpack.c.h.b16 %v525
      %v2196 = vunpack.c.l.b16 %v526
      %v2197 = vunpack.c.h.b16 %v526
      %v2198 = vunpack.c.l.b16 %v527
      %v2199 = vunpack.c.h.b16 %v527
      %v2200 = vunpack.c.l.b16 %v528
      %v2201 = vunpack.c.h.b16 %v528
      %v2202 = vunpack.c.l.b16 %v529
      %v2203 = vunpack.c.h.b16 %v529
      %v2204 = vunpack.c.l.b16 %v530
      %v2205 = vunpack.c.h.b16 %v530
      %v2206 = vunpack.c.l.b16 %v531
      %v2207 = vunpack.c.h.b16 %v531
      %v2208 = vunpack.c.l.b16 %v532
      %v2209 = vunpack.c.h.b16 %v532
      %v2210 = vunpack.c.l.b16 %v533
      %v2211 = vunpack.c.h.b16 %v533
      %v2212 = vunpack.c.l.b16 %v534
      %v2213 = vunpack.c.h.b16 %v534
      %v2214 = vunpack.c.l.b16 %v535
      %v2215 = vunpack.c.h.b16 %v535
      %v2216 = vunpack.c.l.b16 %v536
      %v2217 = vunpack.c.h.b16 %v536
      %v2218 = vunpack.c.l.b16 %v537
      %v2219 = vunpack.c.h.b16 %v537
      %v2220 = vunpack.c.l.b16 %v538
      %v2221 = vunpack.c.h.b16 %v538
      %v2222 = vunpack.c.l.b16 %v539
      %v2223 = vunpack.c.h.b16 %v539
      %v2224 = vunpack.c.l.b16 %v540
      %v2225 = vunpack.c.h.b16 %v540
      %v2226 = vunpack.c.l.b16 %v541
      %v2227 = vunpack.c.h.b16 %v541
      %v2228 = vunpack.c.l.b16 %v542
      %v2229 = vunpack.c.h.b16 %v542
      %v2230 = vunpack.c.l.b16 %v543
      %v2231 = vunpack.c.h.b16 %v543
      %v2232 = vunpack.c.l.b16 %v544
      %v2233 = vunpack.c.h.b16 %v544
      %v2234 = vunpack.c.l.b16 %v545
      %v2235 = vunpack.c.h.b16 %v545
      %v2236 = vunpack.c.l.b16 %v546
      %v2237 = vunpack.c.h.b16 %v546
      %v2238 = vunpack.c.l.b16 %v547
      %v2239 = vunpack.c.h.b16 %v547
      %v2240 = vunpack.c.l.b16 %v548
      %v2241 = vunpack.c.h.b16 %v548
      %v2242 = vunpack.c.l.b16 %v549
      %v2243 = vunpack.c.h.b16 %v549
      %v2244 = vunpack.c.l.b16 %v550
      %v2245 = vunpack.c.h.b16 %v550
      %v2246 = vunpack.c.l.b16 %v551
      %v2247 = vunpack.c.h.b16 %v551
      %v2248 = vunpack.c.l.b16 %v552
      %v2249 = vunpack.c.h.b16 %v552
      %v2250 = vunpack.c.l.b16 %v553
      %v2251 = vunpack.c.h.b16 %v553
      %v2252 = vunpack.c.l.b16 %v554
      %v2253 = vunpack.c.h.b16 %v554
      %v2254 = vunpack.c.l.b16 %v555
      %v2255 = vunpack.c.h.b16 %v555
      %v2256 = vunpack.c.l.b16 %v556
      %v2257 = vunpack.c.h.b16 %v556
      %v2258 = vunpack.c.l.b16 %v557
      %v2259 = vunpack.c.h.b16 %v557
      %v2260 = vunpack.c.l.b16 %v558
      %v2261 = vunpack.c.h.b16 %v558
      %v2262 = vunpack.c.l.b16 %v559
      %v2263 = vunpack.c.h.b16 %v559
      %v2264 = vunpack.c.l.b16 %v560
      %v2265 = vunpack.c.h.b16 %v560
      %v2266 = vunpack.c.l.b16 %v561
      %v2267 = vunpack.c.h.b16 %v561
      %v2268 = vunpack.c.l.b16 %v562
      %v2269 = vunpack.c.h.b16 %v562
      %v2270 = vunpack.c.l.b16 %v563
      %v2271 = vunpack.c.h.b16 %v563
      %v2272 = vunpack.c.l.b16 %v564
      %v2273 = vunpack.c.h.b16 %v564
      %v2274 = vunpack.c.l.b16 %v565
      %v2275 = vunpack.c.h.b16 %v565
      %v2276 = vunpack.c.l.b16 %v566
      %v2277 = vunpack.c.h.b16 %v566
      %v2278 = vunpack.c.l.b16 %v567
      %v2279 = vunpack.c.h.b16 %v567
      %v2280 = vunpack.c.l.b16 %v568
      %v2281 = vunpack.c.h.b16 %v568
      %v2282 = vunpack.c.l.b16 %v569
      %v2283 = vunpack.c.h.b16 %v569
      %v2284 = vunpack.c.l.b16 %v570
      %v2285 = vunpack.c.h.b16 %v570
      %v2286 = vunpack.c.l.b16 %v571
      %v2287 = vunpack.c.h.b16 %v571
      %v2288 = vunpack.c.l.b16 %v572
      %v2289 = vunpack.c.h.b16 %v572
      %v2290 = vunpack.c.l.b16 %v573
      %v2291 = vunpack.c.h.b16 %v573
      %v2292 = vunpack.c.l.b16 %v574
      %v2293 = vunpack.c.h.b16 %v574
      %v2294 = vunpack.c.l.b16 %v575
      %v2295 = vunpack.c.h.b16 %v575
      %v2296 = vunpack.c.l.b16 %v576
      %v2297 = vunpack.c.h.b16 %v576
      %v2298 = vunpack.c.l.b16 %v577
      %v2299 = vunpack.c.h.b16 %v577
      %v2300 = vunpack.c.l.b16 %v578
      %v2301 = vunpack.c.h.b16 %v578
      %v2302 = vunpack.c.l.b16 %v579
      %v2303 = vunpack.c.h.b16 %v579
      %v2304 = vunpack.c.l.b16 %v580
      %v2305 = vunpack.c.h.b16 %v580
      %v2306 = vunpack.c.l.b16 %v581
      %v2307 = vunpack.c.h.b16 %v581
      %v2308 = vunpack.c.l.b16 %v582
      %v2309 = vunpack.c.h.b16 %v582
      %v2310 = vunpack.c.l.b16 %v583
      %v2311 = vunpack.c.h.b16 %v583
      %v2312 = vunpack.c.l.b16 %v584
      %v2313 = vunpack.c.h.b16 %v584
      %v2314 = vunpack.c.l.b16 %v585
      %v2315 = vunpack.c.h.b16 %v585
      %v2316 = vunpack.c.l.b16 %v586
      %v2317 = vunpack.c.h.b16 %v586
      %v2318 = vunpack.c.l.b16 %v587
      %v2319 = vunpack.c.h.b16 %v587
      %v2320 = vunpack.c.l.b16 %v588
      %v2321 = vunpack.c.h.b16 %v588
      %v2322 = vunpack.c.l.b16 %v589
      %v2323 = vunpack.c.h.b16 %v589
      %v2324 = vunpack.c.l.b16 %v590
      %v2325 = vunpack.c.h.b16 %v590
      %v2326 = vunpack.c.l.b16 %v591
      %v2327 = vunpack.c.h.b16 %v591
      %v2328 = vunpack.c.l.b16 %v592
      %v2329 = vunpack.c.h.b16 %v592
      %v2330 = vunpack.c.l.b16 %v593
      %v2331 = vunpack.c.h.b16 %v593
      %v2332 = vunpack.c.l.b16 %v594
      %v2333 = vunpack.c.h.b16 %v594
      %v2334 = vunpack.c.l.b16 %v595
      %v2335 = vunpack.c.h.b16 %v595
      %v2336 = vunpack.c.l.b16 %v596
      %v2337 = vunpack.c.h.b16 %v596
      %v2338 = vunpack.c.l.b16 %v597
      %v2339 = vunpack.c.h.b16 %v597
      %v2340 = vunpack.c.l.b16 %v598
      %v2341 = vunpack.c.h.b16 %v598
      %v2342 = vunpack.c.l.b16 %v599
      %v2343 = vunpack.c.h.b16 %v599
      %v2344 = vunpack.c.l.b16 %v600
      %v2345 = vunpack.c.h.b16 %v600
      %v2346 = vunpack.c.l.b16 %v601
      %v2347 = vunpack.c.h.b16 %v601
      %v2348 = vunpack.c.l.b16 %v602
      %v2349 = vunpack.c.h.b16 %v602
      %v2350 = vunpack.c.l.b16 %v603
      %v2351 = vunpack.c.h.b16 %v603
      %v2352 = vunpack.c.l.b16 %v604
      %v2353 = vunpack.c.h.b16 %v604
      %v2354 = vunpack.c.l.b16 %v605
      %v2355 = vunpack.c.h.b16 %v605
      %v2356 = vunpack.c.l.b16 %v606
      %v2357 = vunpack.c.h.b16 %v606
      %v2358 = vunpack.c.l.b16 %v607
      %v2359 = vunpack.c.h.b16 %v607
      %v2360 = vunpack.c.l.b16 %v608
      %v2361 = vunpack.c.h.b16 %v608
      %v2362 = vunpack.c.l.b16 %v609
      %v2363 = vunpack.c.h.b16 %v609
      %v2364 = vunpack.c.l.b16 %v610
      %v2365 = vunpack.c.h.b16 %v610
      %v2366 = vunpack.c.l.b16 %v611
      %v2367 = vunpack.c.h.b16 %v611
      %v2368 = vunpack.c.l.b16 %v612
      %v2369 = vunpack.c.h.b16 %v612
      %v2370 = vunpack.c.l.b16 %v613
      %v2371 = vunpack.c.h.b16 %v613
      %v2372 = vunpack.c.l.b16 %v614
      %v2373 = vunpack.c.h.b16 %v614
      %v2374 = vunpack.c.l.b16 %v615
      %v2375 = vunpack.c.h.b16 %v615
      %v2376 = vunpack.c.l.b16 %v616
      %v2377 = vunpack.c.h.b16 %v616
      %v2378 = vunpack.c.l.b16 %v617
      %v2379 = vunpack.c.h.b16 %v617
      %v2380 = vunpack.c.l.b16 %v618
      %v2381 = vunpack.c.h.b16 %v618
      %v2382 = vunpack.c.l.b16 %v619
      %v2383 = vunpack.c.h.b16 %v619
      %v2384 = vpack.c.b16 %v1954, %v1952
      %v2385 = vpack.c.b16 %v1955, %v1953
      %v2386 = vpack.c.b16 %v1958, %v1956
      %v2387 = vpack.c.b16 %v1959, %v1957
      %v2388 = vpack.c.b16 %v1962, %v1960
      %v2389 = vpack.c.b16 %v1963, %v1961
      %v2390 = vpack.c.b16 %v1966, %v1964
      %v2391 = vpack.c.b16 %v1967, %v1965
      %v2392 = vpack.c.b16 %v1970, %v1968
      %v2393 = vpack.c.b16 %v1971, %v1969
      %v2394 = vpack.c.b16 %v1974, %v1972
      %v2395 = vpack.c.b16 %v1975, %v1973
      %v2396 = vpack.c.b16 %v1978, %v1976
      %v2397 = vpack.c.b16 %v1979, %v1977
      %v2398 = vpack.c.b16 %v1982, %v1980
      %v2399 = vpack.c.b16 %v1983, %v1981
      %v2400 = vpack.c.b16 %v1986, %v1984
      %v2401 = vpack.c.b16 %v1987, %v1985
      %v2402 = vpack.c.b16 %v1990, %v1988
      %v2403 = vpack.c.b16 %v1991, %v1989
      %v2404 = vpack.c.b16 %v1994, %v1992
      %v2405 = vpack.c.b16 %v1995, %v1993
      %v2406 = vpack.c.b16 %v1998, %v1996
      %v2407 = vpack.c.b16 %v1999, %v1997
      %v2408 = vpack.c.b16 %v2002, %v2000
      %v2409 = vpack.c.b16 %v2003, %v2001
      %v2410 = vpack.c.b16 %v2006, %v2004
      %v2411 = vpack.c.b16 %v2007, %v2005
      %v2412 = vpack.c.b16 %v2010, %v2008
      %v2413 = vpack.c.b16 %v2011, %v2009
      %v2414 = vpack.c.b16 %v2014, %v2012
      %v2415 = vpack.c.b16 %v2015, %v2013
      %v2416 = vpack.c.b16 %v2018, %v2016
      %v2417 = vpack.c.b16 %v2019, %v2017
      %v2418 = vpack.c.b16 %v2022, %v2020
      %v2419 = vpack.c.b16 %v2023, %v2021
      %v2420 = vpack.c.b16 %v2026, %v2024
      %v2421 = vpack.c.b16 %v2027, %v2025
      %v2422 = vpack.c.b16 %v2030, %v2028
      %v2423 = vpack.c.b16 %v2031, %v2029
      %v2424 = vpack.c.b16 %v2034, %v2032
      %v2425 = vpack.c.b16 %v2035, %v2033
      %v2426 = vpack.c.b16 %v2038, %v2036
      %v2427 = vpack.c.b16 %v2039, %v2037
      %v2428 = vpack.c.b16 %v2042, %v2040
      %v2429 = vpack.c.b16 %v2043, %v2041
      %v2430 = vpack.c.b16 %v2046, %v2044
      %v2431 = vpack.c.b16 %v2047, %v2045
      %v2432 = vpack.c.b16 %v2050, %v2048
      %v2433 = vpack.c.b16 %v2051, %v2049
      %v2434 = vpack.c.b16 %v2054, %v2052
      %v2435 = vpack.c.b16 %v2055, %v2053
      %v2436 = vpack.c.b16 %v2058, %v2056
      %v2437 = vpack.c.b16 %v2059, %v2057
      %v2438 = vpack.c.b16 %v2062, %v2060
      %v2439 = vpack.c.b16 %v2063, %v2061
      %v2440 = vpack.c.b16 %v2066, %v2064
      %v2441 = vpack.c.b16 %v2067, %v2065
      %v2442 = vpack.c.b16 %v2070, %v2068
      %v2443 = vpack.c.b16 %v2071, %v2069
      %v2444 = vpack.c.b16 %v2074, %v2072
      %v2445 = vpack.c.b16 %v2075, %v2073
      %v2446 = vpack.c.b16 %v2078, %v2076
      %v2447 = vpack.c.b16 %v2079, %v2077
      %v2448 = vpack.c.b16 %v2082, %v2080
      %v2449 = vpack.c.b16 %v2083, %v2081
      %v2450 = vpack.c.b16 %v2086, %v2084
      %v2451 = vpack.c.b16 %v2087, %v2085
      %v2452 = vpack.c.b16 %v2090, %v2088
      %v2453 = vpack.c.b16 %v2091, %v2089
      %v2454 = vpack.c.b16 %v2094, %v2092
      %v2455 = vpack.c.b16 %v2095, %v2093
      %v2456 = vpack.c.b16 %v2098, %v2096
      %v2457 = vpack.c.b16 %v2099, %v2097
      %v2458 = vpack.c.b16 %v2102, %v2100
      %v2459 = vpack.c.b16 %v2103, %v2101
      %v2460 = vpack.c.b16 %v2106, %v2104
      %v2461 = vpack.c.b16 %v2107, %v2105
      %v2462 = vpack.c.b16 %v2110, %v2108
      %v2463 = vpack.c.b16 %v2111, %v2109
      %v2464 = vpack.c.b16 %v2114, %v2112
      %v2465 = vpack.c.b16 %v2115, %v2113
      %v2466 = vpack.c.b16 %v2118, %v2116
      %v2467 = vpack.c.b16 %v2119, %v2117
      %v2468 = vpack.c.b16 %v2122, %v2120
      %v2469 = vpack.c.b16 %v2123, %v2121
      %v2470 = vpack.c.b16 %v2126, %v2124
      %v2471 = vpack.c.b16 %v2127, %v2125
      %v2472 = vpack.c.b16 %v2130, %v2128
      %v2473 = vpack.c.b16 %v2131, %v2129
      %v2474 = vpack.c.b16 %v2134, %v2132
      %v2475 = vpack.c.b16 %v2135, %v2133
      %v2476 = vpack.c.b16 %v2138, %v2136
      %v2477 = vpack.c.b16 %v2139, %v2137
      %v2478 = vpack.c.b16 %v2142, %v2140
      %v2479 = vpack.c.b16 %v2143, %v2141
      %v2480 = vpack.c.b16 %v2146, %v2144
      %v2481 = vpack.c.b16 %v2147, %v2145
      %v2482 = vpack.c.b16 %v2150, %v2148
      %v2483 = vpack.c.b16 %v2151, %v2149
      %v2484 = vpack.c.b16 %v2154, %v2152
      %v2485 = vpack.c.b16 %v2155, %v2153
      %v2486 = vpack.c.b16 %v2158, %v2156
      %v2487 = vpack.c.b16 %v2159, %v2157
      %v2488 = vpack.c.b16 %v2162, %v2160
      %v2489 = vpack.c.b16 %v2163, %v2161
      %v2490 = vpack.c.b16 %v2166, %v2164
      %v2491 = vpack.c.b16 %v2167, %v2165
      %v2492 = vpack.c.b16 %v2170, %v2168
      %v2493 = vpack.c.b16 %v2171, %v2169
      %v2494 = vpack.c.b16 %v2174, %v2172
      %v2495 = vpack.c.b16 %v2175, %v2173
      %v2496 = vpack.c.b16 %v2178, %v2176
      %v2497 = vpack.c.b16 %v2179, %v2177
      %v2498 = vpack.c.b16 %v2182, %v2180
      %v2499 = vpack.c.b16 %v2183, %v2181
      %v2500 = vpack.c.b16 %v2186, %v2184
      %v2501 = vpack.c.b16 %v2187, %v2185
      %v2502 = vpack.c.b16 %v2190, %v2188
      %v2503 = vpack.c.b16 %v2191, %v2189
      %v2504 = vpack.c.b16 %v2194, %v2192
      %v2505 = vpack.c.b16 %v2195, %v2193
      %v2506 = vpack.c.b16 %v2198, %v2196
      %v2507 = vpack.c.b16 %v2199, %v2197
      %v2508 = vpack.c.b16 %v2202, %v2200
      %v2509 = vpack.c.b16 %v2203, %v2201
      %v2510 = vpack.c.b16 %v2206, %v2204
      %v2511 = vpack.c.b16 %v2207, %v2205
      %v2512 = vpack.c.b16 %v2210, %v2208
      %v2513 = vpack.c.b16 %v2211, %v2209
      %v2514 = vpack.c.b16 %v2214, %v2212
      %v2515 = vpack.c.b16 %v2215, %v2213
      %v2516 = vpack.c.b16 %v2218, %v2216
      %v2517 = vpack.c.b16 %v2219, %v2217
      %v2518 = vpack.c.b16 %v2222, %v2220
      %v2519 = vpack.c.b16 %v2223, %v2221
      %v2520 = vpack.c.b16 %v2226, %v2224
      %v2521 = vpack.c.b16 %v2227, %v2225
      %v2522 = vpack.c.b16 %v2230, %v2228
      %v2523 = vpack.c.b16 %v2231, %v2229
      %v2524 = vpack.c.b16 %v2234, %v2232
      %v2525 = vpack.c.b16 %v2235, %v2233
      %v2526 = vpack.c.b16 %v2238, %v2236
      %v2527 = vpack.c.b16 %v2239, %v2237
      %v2528 = vpack.c.b16 %v2242, %v2240
      %v2529 = vpack.c.b16 %v2243, %v2241
      %v2530 = vpack.c.b16 %v2246, %v2244
      %v2531 = vpack.c.b16 %v2247, %v2245
      %v2532 = vpack.c.b16 %v2250, %v2248
      %v2533 = vpack.c.b16 %v2251, %v2249
      %v2534 = vpack.c.b16 %v2254, %v2252
      %v2535 = vpack.c.b16 %v2255, %v2253
      %v2536 = vpack.c.b16 %v2258, %v2256
      %v2537 = vpack.c.b16 %v2259, %v2257
      %v2538 = vpack.c.b16 %v2262, %v2260
      %v2539 = vpack.c.b16 %v2263, %v2261
      %v2540 = vpack.c.b16 %v2266, %v2264
      %v2541 = vpack.c.b16 %v2267, %v2265
      %v2542 = vpack.c.b16 %v2270, %v2268
      %v2543 = vpack.c.b16 %v2271, %v2269
      %v2544 = vpack.c.b16 %v2274, %v2272
      %v2545 = vpack.c.b16 %v2275, %v2273
      %v2546 = vpack.c.b16 %v2278, %v2276
      %v2547 = vpack.c.b16 %v2279, %v2277
      %v2548 = vpack.c.b16 %v2282, %v2280
      %v2549 = vpack.c.b16 %v2283, %v2281
      %v2550 = vpack.c.b16 %v2286, %v2284
      %v2551 = vpack.c.b16 %v2287, %v2285
      %v2552 = vpack.c.b16 %v2290, %v2288
      %v2553 = vpack.c.b16 %v2291, %v2289
      %v2554 = vpack.c.b16 %v2294, %v2292
      %v2555 = vpack.c.b16 %v2295, %v2293
      %v2556 = vpack.c.b16 %v2298, %v2296
      %v2557 = vpack.c.b16 %v2299, %v2297
      %v2558 = vpack.c.b16 %v2302, %v2300
      %v2559 = vpack.c.b16 %v2303, %v2301
      %v2560 = vpack.c.b16 %v2306, %v2304
      %v2561 = vpack.c.b16 %v2307, %v2305
      %v2562 = vpack.c.b16 %v2310, %v2308
      %v2563 = vpack.c.b16 %v2311, %v2309
      %v2564 = vpack.c.b16 %v2314, %v2312
      %v2565 = vpack.c.b16 %v2315, %v2313
      %v2566 = vpack.c.b16 %v2318, %v2316
      %v2567 = vpack.c.b16 %v2319, %v2317
      %v2568 = vpack.c.b16 %v2322, %v2320
      %v2569 = vpack.c.b16 %v2323, %v2321
      %v2570 = vpack.c.b16 %v2326, %v2324
      %v2571 = vpack.c.b16 %v2327, %v2325
      %v2572 = vpack.c.b16 %v2330, %v2328
      %v2573 = vpack.c.b16 %v2331, %v2329
      %v2574 = vpack.c.b16 %v2334, %v2332
      %v2575 = vpack.c.b16 %v2335, %v2333
      %v2576 = vpack.c.b16 %v2338, %v2336
      %v2577 = vpack.c.b16 %v2339, %v2337
      %v2578 = vpack.c.b16 %v2342, %v2340
      %v2579 = vpack.c.b16 %v2343, %v2341
      %v2580 = vpack.c.b16 %v2346, %v2344
      %v2581 = vpack.c.b16 %v2347, %v2345
      %v2582 = vpack.c.b16 %v2350, %v2348
      %v2583 = vpack.c.b16 %v2351, %v2349
      %v2584 = vpack.c.b16 %v2354, %v2352
      %v2585 = vpack.c.b16 %v2355, %v2353
      %v2586 = vpack.c.b16 %v2358, %v2356
      %v2587 = vpack.c.b16 %v2359, %v2357
      %v2588 = vpack.c.b16 %v2362, %v2360
      %v2589 = vpack.c.b16 %v2363, %v2361
      %v2590 = vpack.c.b16 %v2366, %v2364
      %v2591 = vpack.c.b16 %v2367, %v2365
      %v2592 = vpack.c.b16 %v2370, %v2368
      %v2593 = vpack.c.b16 %v2371, %v2369
      %v2594 = vpack.c.b16 %v2374, %v2372
      %v2595 = vpack.c.b16 %v2375, %v2373
      %v2596 = vpack.c.b16 %v2378, %v2376
      %v2597 = vpack.c.b16 %v2379, %v2377
      %v2598 = vpack.c.b16 %v2382, %v2380
      %v2599 = vpack.c.b16 %v2383, %v2381
      %vm2816 = vcmask 523264
      %v2818 = vsel %vm2816, %v1317, 0
      %v2821 = vsel %vm2816, %v1331, 0
      %v2824 = vsel %vm2816, %v1345, 0
      %v2827 = vsel %vm2816, %v1359, 0
      %v2830 = vsel %vm2816, %v1373, 0
      %v2833 = vsel %vm2816, %v1387, 0
      %v2836 = vsel %vm2816, %v1401, 0
      %v2839 = vsel %vm2816, %v1415, 0
      %v2842 = vsel %vm2816, %v1429, 0
      %v2845 = vsel %vm2816, %v1443, 0
      %v2848 = vsel %vm2816, %v1457, 0
      %v2851 = vsel %vm2816, %v1471, 0
      %v2854 = vsel %vm2816, %v1485, 0
      %v2857 = vsel %vm2816, %v1499, 0
      %v2860 = vsel %vm2816, %v1513, 0
      %v2863 = vsel %vm2816, %v1527, 0
      %2865 = vmatprep.subr.bf16.mxu0 %v2399
      %2866 = vmatpush1.bf16.msra.mxu0 %v2398
      %2867 = vmatprep.subr.bf16.mxu0 %v2397
      %2868 = vmatpush1.bf16.msra.mxu0 %v2396
      %2869 = vmatprep.subr.bf16.mxu0 %v2395
      %2870 = vmatpush1.bf16.msra.mxu0 %v2394
      %2871 = vmatprep.subr.bf16.mxu0 %v2393
      %2872 = vmatpush1.bf16.msra.mxu0 %v2392
      %2873 = vmatprep.subr.bf16.mxu0 %v2391
      %2874 = vmatpush1.bf16.msra.mxu0 %v2390
      %2875 = vmatprep.subr.bf16.mxu0 %v2389
      %2876 = vmatpush1.bf16.msra.mxu0 %v2388
      %2877 = vmatprep.subr.bf16.mxu0 %v2387
      %2878 = vmatpush1.bf16.msra.mxu0 %v2386
      %2879 = vmatprep.subr.bf16.mxu0 %v2385
      %2880 = vmatpush1.bf16.msra.mxu0 %v2384
      %2881 = vmatprep.subr.bf16.mxu0 %v2415
      %2882 = vmatpush2.bf16.msra.mxu0 %v2414
      %2883 = vmatprep.subr.bf16.mxu0 %v2413
      %2884 = vmatpush2.bf16.msra.mxu0 %v2412
      %2885 = vmatprep.subr.bf16.mxu0 %v2411
      %2886 = vmatpush2.bf16.msra.mxu0 %v2410
      %2887 = vmatprep.subr.bf16.mxu0 %v2409
      %2888 = vmatpush2.bf16.msra.mxu0 %v2408
      %2889 = vmatprep.subr.bf16.mxu0 %v2407
      %2890 = vmatpush2.bf16.msra.mxu0 %v2406
      %2891 = vmatprep.subr.bf16.mxu0 %v2405
      %2892 = vmatpush2.bf16.msra.mxu0 %v2404
      %2893 = vmatprep.subr.bf16.mxu0 %v2403
      %2894 = vmatpush2.bf16.msra.mxu0 %v2402
      %2895 = vmatprep.subr.bf16.mxu0 %v2401
      %2896 = vmatpush2.bf16.msra.mxu0 %v2400
      %2897 = vmatprep.mubr.bf16.mxu0 %v1305
      %2898 = vmatmul.mubr.bf16.gmra.mxu0 %v1304
      %v2899 = vpop.f32.mrf.mxu0
      %v2900 = vadd.f32 %v625, %v2899
      %v2901 = vpop.f32.mrf.mxu0
      %v2902 = vadd.f32 %v629, %v2901
      %v2903 = vpop.f32.mrf.mxu0
      %v2904 = vadd.f32 %v625, %v2903
      %v2905 = vpop.f32.mrf.mxu0
      %v2906 = vadd.f32 %v629, %v2905
      %2907 = vmatprep.mubr.bf16.mxu0 %v1319
      %2908 = vmatmul.mubr.bf16.gmra.mxu0 %v1318
      %v2909 = vpop.f32.mrf.mxu0
      %v2910 = vadd.f32 %v625, %v2909
      %v2911 = vpop.f32.mrf.mxu0
      %v2912 = vadd.f32 %v629, %v2911
      %v2913 = vpop.f32.mrf.mxu0
      %v2914 = vadd.f32 %v625, %v2913
      %v2915 = vpop.f32.mrf.mxu0
      %v2916 = vadd.f32 %v629, %v2915
      %2917 = vmatprep.mubr.bf16.mxu0 %v1333
      %2918 = vmatmul.mubr.bf16.gmra.mxu0 %v1332
      %v2919 = vpop.f32.mrf.mxu0
      %v2920 = vadd.f32 %v625, %v2919
      %v2921 = vpop.f32.mrf.mxu0
      %v2922 = vadd.f32 %v629, %v2921
      %v2923 = vpop.f32.mrf.mxu0
      %v2924 = vadd.f32 %v625, %v2923
      %v2925 = vpop.f32.mrf.mxu0
      %v2926 = vadd.f32 %v629, %v2925
      %2927 = vmatprep.mubr.bf16.mxu0 %v1347
      %2928 = vmatmul.mubr.bf16.gmra.mxu0 %v1346
      %v2929 = vpop.f32.mrf.mxu0
      %v2930 = vadd.f32 %v625, %v2929
      %v2931 = vpop.f32.mrf.mxu0
      %v2932 = vadd.f32 %v629, %v2931
      %v2933 = vpop.f32.mrf.mxu0
      %v2934 = vadd.f32 %v625, %v2933
      %v2935 = vpop.f32.mrf.mxu0
      %v2936 = vadd.f32 %v629, %v2935
      %2937 = vmatprep.mubr.bf16.mxu0 %v1361
      %2938 = vmatmul.mubr.bf16.gmra.mxu0 %v1360
      %v2939 = vpop.f32.mrf.mxu0
      %v2940 = vadd.f32 %v625, %v2939
      %v2941 = vpop.f32.mrf.mxu0
      %v2942 = vadd.f32 %v629, %v2941
      %v2943 = vpop.f32.mrf.mxu0
      %v2944 = vadd.f32 %v625, %v2943
      %v2945 = vpop.f32.mrf.mxu0
      %v2946 = vadd.f32 %v629, %v2945
      %2947 = vmatprep.mubr.bf16.mxu0 %v1375
      %2948 = vmatmul.mubr.bf16.gmra.mxu0 %v1374
      %v2949 = vpop.f32.mrf.mxu0
      %v2950 = vadd.f32 %v625, %v2949
      %v2951 = vpop.f32.mrf.mxu0
      %v2952 = vadd.f32 %v629, %v2951
      %v2953 = vpop.f32.mrf.mxu0
      %v2954 = vadd.f32 %v625, %v2953
      %v2955 = vpop.f32.mrf.mxu0
      %v2956 = vadd.f32 %v629, %v2955
      %2957 = vmatprep.mubr.bf16.mxu0 %v1389
      %2958 = vmatmul.mubr.bf16.gmra.mxu0 %v1388
      %v2959 = vpop.f32.mrf.mxu0
      %v2960 = vadd.f32 %v625, %v2959
      %v2961 = vpop.f32.mrf.mxu0
      %v2962 = vadd.f32 %v629, %v2961
      %v2963 = vpop.f32.mrf.mxu0
      %v2964 = vadd.f32 %v625, %v2963
      %v2965 = vpop.f32.mrf.mxu0
      %v2966 = vadd.f32 %v629, %v2965
      %2967 = vmatprep.mubr.bf16.mxu0 %v1403
      %2968 = vmatmul.mubr.bf16.gmra.mxu0 %v1402
      %v2969 = vpop.f32.mrf.mxu0
      %v2970 = vadd.f32 %v625, %v2969
      %v2971 = vpop.f32.mrf.mxu0
      %v2972 = vadd.f32 %v629, %v2971
      %v2973 = vpop.f32.mrf.mxu0
      %v2974 = vadd.f32 %v625, %v2973
      %v2975 = vpop.f32.mrf.mxu0
      %v2976 = vadd.f32 %v629, %v2975
      %2977 = vmatprep.mubr.bf16.mxu0 %v1417
      %2978 = vmatmul.mubr.bf16.gmra.mxu0 %v1416
      %v2979 = vpop.f32.mrf.mxu0
      %v2980 = vadd.f32 %v625, %v2979
      %v2981 = vpop.f32.mrf.mxu0
      %v2982 = vadd.f32 %v629, %v2981
      %v2983 = vpop.f32.mrf.mxu0
      %v2984 = vadd.f32 %v625, %v2983
      %v2985 = vpop.f32.mrf.mxu0
      %v2986 = vadd.f32 %v629, %v2985
      %2987 = vmatprep.mubr.bf16.mxu0 %v1431
      %2988 = vmatmul.mubr.bf16.gmra.mxu0 %v1430
      %v2989 = vpop.f32.mrf.mxu0
      %v2990 = vadd.f32 %v625, %v2989
      %v2991 = vpop.f32.mrf.mxu0
      %v2992 = vadd.f32 %v629, %v2991
      %v2993 = vpop.f32.mrf.mxu0
      %v2994 = vadd.f32 %v625, %v2993
      %v2995 = vpop.f32.mrf.mxu0
      %v2996 = vadd.f32 %v629, %v2995
      %2997 = vmatprep.mubr.bf16.mxu0 %v1445
      %2998 = vmatmul.mubr.bf16.gmra.mxu0 %v1444
      %v2999 = vpop.f32.mrf.mxu0
      %v3000 = vadd.f32 %v625, %v2999
      %v3001 = vpop.f32.mrf.mxu0
      %v3002 = vadd.f32 %v629, %v3001
      %v3003 = vpop.f32.mrf.mxu0
      %v3004 = vadd.f32 %v625, %v3003
      %v3005 = vpop.f32.mrf.mxu0
      %v3006 = vadd.f32 %v629, %v3005
      %3007 = vmatprep.mubr.bf16.mxu0 %v1459
      %3008 = vmatmul.mubr.bf16.gmra.mxu0 %v1458
      %v3009 = vpop.f32.mrf.mxu0
      %v3010 = vadd.f32 %v625, %v3009
      %v3011 = vpop.f32.mrf.mxu0
      %v3012 = vadd.f32 %v629, %v3011
      %v3013 = vpop.f32.mrf.mxu0
      %v3014 = vadd.f32 %v625, %v3013
      %v3015 = vpop.f32.mrf.mxu0
      %v3016 = vadd.f32 %v629, %v3015
      %3017 = vmatprep.mubr.bf16.mxu0 %v1473
      %3018 = vmatmul.mubr.bf16.gmra.mxu0 %v1472
      %v3019 = vpop.f32.mrf.mxu0
      %v3020 = vadd.f32 %v625, %v3019
      %v3021 = vpop.f32.mrf.mxu0
      %v3022 = vadd.f32 %v629, %v3021
      %v3023 = vpop.f32.mrf.mxu0
      %v3024 = vadd.f32 %v625, %v3023
      %v3025 = vpop.f32.mrf.mxu0
      %v3026 = vadd.f32 %v629, %v3025
      %3027 = vmatprep.mubr.bf16.mxu0 %v1487
      %3028 = vmatmul.mubr.bf16.gmra.mxu0 %v1486
      %v3029 = vpop.f32.mrf.mxu0
      %v3030 = vadd.f32 %v625, %v3029
      %v3031 = vpop.f32.mrf.mxu0
      %v3032 = vadd.f32 %v629, %v3031
      %v3033 = vpop.f32.mrf.mxu0
      %v3034 = vadd.f32 %v625, %v3033
      %v3035 = vpop.f32.mrf.mxu0
      %v3036 = vadd.f32 %v629, %v3035
      %3037 = vmatprep.mubr.bf16.mxu0 %v1501
      %3038 = vmatmul.mubr.bf16.gmra.mxu0 %v1500
      %v3039 = vpop.f32.mrf.mxu0
      %v3040 = vadd.f32 %v625, %v3039
      %v3041 = vpop.f32.mrf.mxu0
      %v3042 = vadd.f32 %v629, %v3041
      %v3043 = vpop.f32.mrf.mxu0
      %v3044 = vadd.f32 %v625, %v3043
      %v3045 = vpop.f32.mrf.mxu0
      %v3046 = vadd.f32 %v629, %v3045
      %3047 = vmatprep.mubr.bf16.mxu0 %v1515
      %3048 = vmatmul.mubr.bf16.gmra.mxu0 %v1514
      %v3049 = vpop.f32.mrf.mxu0
      %v3050 = vadd.f32 %v625, %v3049
      %v3051 = vpop.f32.mrf.mxu0
      %v3052 = vadd.f32 %v629, %v3051
      %v3053 = vpop.f32.mrf.mxu0
      %v3054 = vadd.f32 %v625, %v3053
      %v3055 = vpop.f32.mrf.mxu0
      %v3056 = vadd.f32 %v629, %v3055
      %3057 = vdwg.mxu0
      %3058 = vmatprep.subr.bf16.mxu0 %v2431
      %3059 = vmatpush1.bf16.msra.mxu0 %v2430
      %3060 = vmatprep.subr.bf16.mxu0 %v2429
      %3061 = vmatpush1.bf16.msra.mxu0 %v2428
      %3062 = vmatprep.subr.bf16.mxu0 %v2427
      %3063 = vmatpush1.bf16.msra.mxu0 %v2426
      %3064 = vmatprep.subr.bf16.mxu0 %v2425
      %3065 = vmatpush1.bf16.msra.mxu0 %v2424
      %3066 = vmatprep.subr.bf16.mxu0 %v2423
      %3067 = vmatpush1.bf16.msra.mxu0 %v2422
      %3068 = vmatprep.subr.bf16.mxu0 %v2421
      %3069 = vmatpush1.bf16.msra.mxu0 %v2420
      %3070 = vmatprep.subr.bf16.mxu0 %v2419
      %3071 = vmatpush1.bf16.msra.mxu0 %v2418
      %3072 = vmatprep.subr.bf16.mxu0 %v2417
      %3073 = vmatpush1.bf16.msra.mxu0 %v2416
      %3074 = vmatprep.subr.bf16.mxu0 %v2447
      %3075 = vmatpush2.bf16.msra.mxu0 %v2446
      %3076 = vmatprep.subr.bf16.mxu0 %v2445
      %3077 = vmatpush2.bf16.msra.mxu0 %v2444
      %3078 = vmatprep.subr.bf16.mxu0 %v2443
      %3079 = vmatpush2.bf16.msra.mxu0 %v2442
      %3080 = vmatprep.subr.bf16.mxu0 %v2441
      %3081 = vmatpush2.bf16.msra.mxu0 %v2440
      %3082 = vmatprep.subr.bf16.mxu0 %v2439
      %3083 = vmatpush2.bf16.msra.mxu0 %v2438
      %3084 = vmatprep.subr.bf16.mxu0 %v2437
      %3085 = vmatpush2.bf16.msra.mxu0 %v2436
      %3086 = vmatprep.subr.bf16.mxu0 %v2435
      %3087 = vmatpush2.bf16.msra.mxu0 %v2434
      %3088 = vmatprep.subr.bf16.mxu0 %v2433
      %3089 = vmatpush2.bf16.msra.mxu0 %v2432
      %3090 = vmatprep.mubr.bf16.mxu0 %v1307
      %3091 = vmatmul.mubr.bf16.gmra.mxu0 %v1306
      %v3092 = vpop.f32.mrf.mxu0
      %v3093 = vadd.f32 %v2900, %v3092
      %v3094 = vpop.f32.mrf.mxu0
      %v3095 = vadd.f32 %v2902, %v3094
      %v3096 = vpop.f32.mrf.mxu0
      %v3097 = vadd.f32 %v2904, %v3096
      %v3098 = vpop.f32.mrf.mxu0
      %v3099 = vadd.f32 %v2906, %v3098
      %3100 = vmatprep.mubr.bf16.mxu0 %v1321
      %3101 = vmatmul.mubr.bf16.gmra.mxu0 %v1320
      %v3102 = vpop.f32.mrf.mxu0
      %v3103 = vadd.f32 %v2910, %v3102
      %v3104 = vpop.f32.mrf.mxu0
      %v3105 = vadd.f32 %v2912, %v3104
      %v3106 = vpop.f32.mrf.mxu0
      %v3107 = vadd.f32 %v2914, %v3106
      %v3108 = vpop.f32.mrf.mxu0
      %v3109 = vadd.f32 %v2916, %v3108
      %3110 = vmatprep.mubr.bf16.mxu0 %v1335
      %3111 = vmatmul.mubr.bf16.gmra.mxu0 %v1334
      %v3112 = vpop.f32.mrf.mxu0
      %v3113 = vadd.f32 %v2920, %v3112
      %v3114 = vpop.f32.mrf.mxu0
      %v3115 = vadd.f32 %v2922, %v3114
      %v3116 = vpop.f32.mrf.mxu0
      %v3117 = vadd.f32 %v2924, %v3116
      %v3118 = vpop.f32.mrf.mxu0
      %v3119 = vadd.f32 %v2926, %v3118
      %3120 = vmatprep.mubr.bf16.mxu0 %v1349
      %3121 = vmatmul.mubr.bf16.gmra.mxu0 %v1348
      %v3122 = vpop.f32.mrf.mxu0
      %v3123 = vadd.f32 %v2930, %v3122
      %v3124 = vpop.f32.mrf.mxu0
      %v3125 = vadd.f32 %v2932, %v3124
      %v3126 = vpop.f32.mrf.mxu0
      %v3127 = vadd.f32 %v2934, %v3126
      %v3128 = vpop.f32.mrf.mxu0
      %v3129 = vadd.f32 %v2936, %v3128
      %3130 = vmatprep.mubr.bf16.mxu0 %v1363
      %3131 = vmatmul.mubr.bf16.gmra.mxu0 %v1362
      %v3132 = vpop.f32.mrf.mxu0
      %v3133 = vadd.f32 %v2940, %v3132
      %v3134 = vpop.f32.mrf.mxu0
      %v3135 = vadd.f32 %v2942, %v3134
      %v3136 = vpop.f32.mrf.mxu0
      %v3137 = vadd.f32 %v2944, %v3136
      %v3138 = vpop.f32.mrf.mxu0
      %v3139 = vadd.f32 %v2946, %v3138
      %3140 = vmatprep.mubr.bf16.mxu0 %v1377
      %3141 = vmatmul.mubr.bf16.gmra.mxu0 %v1376
      %v3142 = vpop.f32.mrf.mxu0
      %v3143 = vadd.f32 %v2950, %v3142
      %v3144 = vpop.f32.mrf.mxu0
      %v3145 = vadd.f32 %v2952, %v3144
      %v3146 = vpop.f32.mrf.mxu0
      %v3147 = vadd.f32 %v2954, %v3146
      %v3148 = vpop.f32.mrf.mxu0
      %v3149 = vadd.f32 %v2956, %v3148
      %3150 = vmatprep.mubr.bf16.mxu0 %v1391
      %3151 = vmatmul.mubr.bf16.gmra.mxu0 %v1390
      %v3152 = vpop.f32.mrf.mxu0
      %v3153 = vadd.f32 %v2960, %v3152
      %v3154 = vpop.f32.mrf.mxu0
      %v3155 = vadd.f32 %v2962, %v3154
      %v3156 = vpop.f32.mrf.mxu0
      %v3157 = vadd.f32 %v2964, %v3156
      %v3158 = vpop.f32.mrf.mxu0
      %v3159 = vadd.f32 %v2966, %v3158
      %3160 = vmatprep.mubr.bf16.mxu0 %v1405
      %3161 = vmatmul.mubr.bf16.gmra.mxu0 %v1404
      %v3162 = vpop.f32.mrf.mxu0
      %v3163 = vadd.f32 %v2970, %v3162
      %v3164 = vpop.f32.mrf.mxu0
      %v3165 = vadd.f32 %v2972, %v3164
      %v3166 = vpop.f32.mrf.mxu0
      %v3167 = vadd.f32 %v2974, %v3166
      %v3168 = vpop.f32.mrf.mxu0
      %v3169 = vadd.f32 %v2976, %v3168
      %3170 = vmatprep.mubr.bf16.mxu0 %v1419
      %3171 = vmatmul.mubr.bf16.gmra.mxu0 %v1418
      %v3172 = vpop.f32.mrf.mxu0
      %v3173 = vadd.f32 %v2980, %v3172
      %v3174 = vpop.f32.mrf.mxu0
      %v3175 = vadd.f32 %v2982, %v3174
      %v3176 = vpop.f32.mrf.mxu0
      %v3177 = vadd.f32 %v2984, %v3176
      %v3178 = vpop.f32.mrf.mxu0
      %v3179 = vadd.f32 %v2986, %v3178
      %3180 = vmatprep.mubr.bf16.mxu0 %v1433
      %3181 = vmatmul.mubr.bf16.gmra.mxu0 %v1432
      %v3182 = vpop.f32.mrf.mxu0
      %v3183 = vadd.f32 %v2990, %v3182
      %v3184 = vpop.f32.mrf.mxu0
      %v3185 = vadd.f32 %v2992, %v3184
      %v3186 = vpop.f32.mrf.mxu0
      %v3187 = vadd.f32 %v2994, %v3186
      %v3188 = vpop.f32.mrf.mxu0
      %v3189 = vadd.f32 %v2996, %v3188
      %3190 = vmatprep.mubr.bf16.mxu0 %v1447
      %3191 = vmatmul.mubr.bf16.gmra.mxu0 %v1446
      %v3192 = vpop.f32.mrf.mxu0
      %v3193 = vadd.f32 %v3000, %v3192
      %v3194 = vpop.f32.mrf.mxu0
      %v3195 = vadd.f32 %v3002, %v3194
      %v3196 = vpop.f32.mrf.mxu0
      %v3197 = vadd.f32 %v3004, %v3196
      %v3198 = vpop.f32.mrf.mxu0
      %v3199 = vadd.f32 %v3006, %v3198
      %3200 = vmatprep.mubr.bf16.mxu0 %v1461
      %3201 = vmatmul.mubr.bf16.gmra.mxu0 %v1460
      %v3202 = vpop.f32.mrf.mxu0
      %v3203 = vadd.f32 %v3010, %v3202
      %v3204 = vpop.f32.mrf.mxu0
      %v3205 = vadd.f32 %v3012, %v3204
      %v3206 = vpop.f32.mrf.mxu0
      %v3207 = vadd.f32 %v3014, %v3206
      %v3208 = vpop.f32.mrf.mxu0
      %v3209 = vadd.f32 %v3016, %v3208
      %3210 = vmatprep.mubr.bf16.mxu0 %v1475
      %3211 = vmatmul.mubr.bf16.gmra.mxu0 %v1474
      %v3212 = vpop.f32.mrf.mxu0
      %v3213 = vadd.f32 %v3020, %v3212
      %v3214 = vpop.f32.mrf.mxu0
      %v3215 = vadd.f32 %v3022, %v3214
      %v3216 = vpop.f32.mrf.mxu0
      %v3217 = vadd.f32 %v3024, %v3216
      %v3218 = vpop.f32.mrf.mxu0
      %v3219 = vadd.f32 %v3026, %v3218
      %3220 = vmatprep.mubr.bf16.mxu0 %v1489
      %3221 = vmatmul.mubr.bf16.gmra.mxu0 %v1488
      %v3222 = vpop.f32.mrf.mxu0
      %v3223 = vadd.f32 %v3030, %v3222
      %v3224 = vpop.f32.mrf.mxu0
      %v3225 = vadd.f32 %v3032, %v3224
      %v3226 = vpop.f32.mrf.mxu0
      %v3227 = vadd.f32 %v3034, %v3226
      %v3228 = vpop.f32.mrf.mxu0
      %v3229 = vadd.f32 %v3036, %v3228
      %3230 = vmatprep.mubr.bf16.mxu0 %v1503
      %3231 = vmatmul.mubr.bf16.gmra.mxu0 %v1502
      %v3232 = vpop.f32.mrf.mxu0
      %v3233 = vadd.f32 %v3040, %v3232
      %v3234 = vpop.f32.mrf.mxu0
      %v3235 = vadd.f32 %v3042, %v3234
      %v3236 = vpop.f32.mrf.mxu0
      %v3237 = vadd.f32 %v3044, %v3236
      %v3238 = vpop.f32.mrf.mxu0
      %v3239 = vadd.f32 %v3046, %v3238
      %3240 = vmatprep.mubr.bf16.mxu0 %v1517
      %3241 = vmatmul.mubr.bf16.gmra.mxu0 %v1516
      %v3242 = vpop.f32.mrf.mxu0
      %v3243 = vadd.f32 %v3050, %v3242
      %v3244 = vpop.f32.mrf.mxu0
      %v3245 = vadd.f32 %v3052, %v3244
      %v3246 = vpop.f32.mrf.mxu0
      %v3247 = vadd.f32 %v3054, %v3246
      %v3248 = vpop.f32.mrf.mxu0
      %v3249 = vadd.f32 %v3056, %v3248
      %3250 = vdwg.mxu0
      %3251 = vmatprep.subr.bf16.mxu0 %v2463
      %3252 = vmatpush1.bf16.msra.mxu0 %v2462
      %3253 = vmatprep.subr.bf16.mxu0 %v2461
      %3254 = vmatpush1.bf16.msra.mxu0 %v2460
      %3255 = vmatprep.subr.bf16.mxu0 %v2459
      %3256 = vmatpush1.bf16.msra.mxu0 %v2458
      %3257 = vmatprep.subr.bf16.mxu0 %v2457
      %3258 = vmatpush1.bf16.msra.mxu0 %v2456
      %3259 = vmatprep.subr.bf16.mxu0 %v2455
      %3260 = vmatpush1.bf16.msra.mxu0 %v2454
      %3261 = vmatprep.subr.bf16.mxu0 %v2453
      %3262 = vmatpush1.bf16.msra.mxu0 %v2452
      %3263 = vmatprep.subr.bf16.mxu0 %v2451
      %3264 = vmatpush1.bf16.msra.mxu0 %v2450
      %3265 = vmatprep.subr.bf16.mxu0 %v2449
      %3266 = vmatpush1.bf16.msra.mxu0 %v2448
      %3267 = vmatprep.subr.bf16.mxu0 %v2479
      %3268 = vmatpush2.bf16.msra.mxu0 %v2478
      %3269 = vmatprep.subr.bf16.mxu0 %v2477
      %3270 = vmatpush2.bf16.msra.mxu0 %v2476
      %3271 = vmatprep.subr.bf16.mxu0 %v2475
      %3272 = vmatpush2.bf16.msra.mxu0 %v2474
      %3273 = vmatprep.subr.bf16.mxu0 %v2473
      %3274 = vmatpush2.bf16.msra.mxu0 %v2472
      %3275 = vmatprep.subr.bf16.mxu0 %v2471
      %3276 = vmatpush2.bf16.msra.mxu0 %v2470
      %3277 = vmatprep.subr.bf16.mxu0 %v2469
      %3278 = vmatpush2.bf16.msra.mxu0 %v2468
      %3279 = vmatprep.subr.bf16.mxu0 %v2467
      %3280 = vmatpush2.bf16.msra.mxu0 %v2466
      %3281 = vmatprep.subr.bf16.mxu0 %v2465
      %3282 = vmatpush2.bf16.msra.mxu0 %v2464
      %3283 = vmatprep.mubr.bf16.mxu0 %v1309
      %3284 = vmatmul.mubr.bf16.gmra.mxu0 %v1308
      %v3285 = vpop.f32.mrf.mxu0
      %v3286 = vadd.f32 %v3093, %v3285
      %v3287 = vpop.f32.mrf.mxu0
      %v3288 = vadd.f32 %v3095, %v3287
      %v3289 = vpop.f32.mrf.mxu0
      %v3290 = vadd.f32 %v3097, %v3289
      %v3291 = vpop.f32.mrf.mxu0
      %v3292 = vadd.f32 %v3099, %v3291
      %3293 = vmatprep.mubr.bf16.mxu0 %v1323
      %3294 = vmatmul.mubr.bf16.gmra.mxu0 %v1322
      %v3295 = vpop.f32.mrf.mxu0
      %v3296 = vadd.f32 %v3103, %v3295
      %v3297 = vpop.f32.mrf.mxu0
      %v3298 = vadd.f32 %v3105, %v3297
      %v3299 = vpop.f32.mrf.mxu0
      %v3300 = vadd.f32 %v3107, %v3299
      %v3301 = vpop.f32.mrf.mxu0
      %v3302 = vadd.f32 %v3109, %v3301
      %3303 = vmatprep.mubr.bf16.mxu0 %v1337
      %3304 = vmatmul.mubr.bf16.gmra.mxu0 %v1336
      %v3305 = vpop.f32.mrf.mxu0
      %v3306 = vadd.f32 %v3113, %v3305
      %v3307 = vpop.f32.mrf.mxu0
      %v3308 = vadd.f32 %v3115, %v3307
      %v3309 = vpop.f32.mrf.mxu0
      %v3310 = vadd.f32 %v3117, %v3309
      %v3311 = vpop.f32.mrf.mxu0
      %v3312 = vadd.f32 %v3119, %v3311
      %3313 = vmatprep.mubr.bf16.mxu0 %v1351
      %3314 = vmatmul.mubr.bf16.gmra.mxu0 %v1350
      %v3315 = vpop.f32.mrf.mxu0
      %v3316 = vadd.f32 %v3123, %v3315
      %v3317 = vpop.f32.mrf.mxu0
      %v3318 = vadd.f32 %v3125, %v3317
      %v3319 = vpop.f32.mrf.mxu0
      %v3320 = vadd.f32 %v3127, %v3319
      %v3321 = vpop.f32.mrf.mxu0
      %v3322 = vadd.f32 %v3129, %v3321
      %3323 = vmatprep.mubr.bf16.mxu0 %v1365
      %3324 = vmatmul.mubr.bf16.gmra.mxu0 %v1364
      %v3325 = vpop.f32.mrf.mxu0
      %v3326 = vadd.f32 %v3133, %v3325
      %v3327 = vpop.f32.mrf.mxu0
      %v3328 = vadd.f32 %v3135, %v3327
      %v3329 = vpop.f32.mrf.mxu0
      %v3330 = vadd.f32 %v3137, %v3329
      %v3331 = vpop.f32.mrf.mxu0
      %v3332 = vadd.f32 %v3139, %v3331
      %3333 = vmatprep.mubr.bf16.mxu0 %v1379
      %3334 = vmatmul.mubr.bf16.gmra.mxu0 %v1378
      %v3335 = vpop.f32.mrf.mxu0
      %v3336 = vadd.f32 %v3143, %v3335
      %v3337 = vpop.f32.mrf.mxu0
      %v3338 = vadd.f32 %v3145, %v3337
      %v3339 = vpop.f32.mrf.mxu0
      %v3340 = vadd.f32 %v3147, %v3339
      %v3341 = vpop.f32.mrf.mxu0
      %v3342 = vadd.f32 %v3149, %v3341
      %3343 = vmatprep.mubr.bf16.mxu0 %v1393
      %3344 = vmatmul.mubr.bf16.gmra.mxu0 %v1392
      %v3345 = vpop.f32.mrf.mxu0
      %v3346 = vadd.f32 %v3153, %v3345
      %v3347 = vpop.f32.mrf.mxu0
      %v3348 = vadd.f32 %v3155, %v3347
      %v3349 = vpop.f32.mrf.mxu0
      %v3350 = vadd.f32 %v3157, %v3349
      %v3351 = vpop.f32.mrf.mxu0
      %v3352 = vadd.f32 %v3159, %v3351
      %3353 = vmatprep.mubr.bf16.mxu0 %v1407
      %3354 = vmatmul.mubr.bf16.gmra.mxu0 %v1406
      %v3355 = vpop.f32.mrf.mxu0
      %v3356 = vadd.f32 %v3163, %v3355
      %v3357 = vpop.f32.mrf.mxu0
      %v3358 = vadd.f32 %v3165, %v3357
      %v3359 = vpop.f32.mrf.mxu0
      %v3360 = vadd.f32 %v3167, %v3359
      %v3361 = vpop.f32.mrf.mxu0
      %v3362 = vadd.f32 %v3169, %v3361
      %3363 = vmatprep.mubr.bf16.mxu0 %v1421
      %3364 = vmatmul.mubr.bf16.gmra.mxu0 %v1420
      %v3365 = vpop.f32.mrf.mxu0
      %v3366 = vadd.f32 %v3173, %v3365
      %v3367 = vpop.f32.mrf.mxu0
      %v3368 = vadd.f32 %v3175, %v3367
      %v3369 = vpop.f32.mrf.mxu0
      %v3370 = vadd.f32 %v3177, %v3369
      %v3371 = vpop.f32.mrf.mxu0
      %v3372 = vadd.f32 %v3179, %v3371
      %3373 = vmatprep.mubr.bf16.mxu0 %v1435
      %3374 = vmatmul.mubr.bf16.gmra.mxu0 %v1434
      %v3375 = vpop.f32.mrf.mxu0
      %v3376 = vadd.f32 %v3183, %v3375
      %v3377 = vpop.f32.mrf.mxu0
      %v3378 = vadd.f32 %v3185, %v3377
      %v3379 = vpop.f32.mrf.mxu0
      %v3380 = vadd.f32 %v3187, %v3379
      %v3381 = vpop.f32.mrf.mxu0
      %v3382 = vadd.f32 %v3189, %v3381
      %3383 = vmatprep.mubr.bf16.mxu0 %v1449
      %3384 = vmatmul.mubr.bf16.gmra.mxu0 %v1448
      %v3385 = vpop.f32.mrf.mxu0
      %v3386 = vadd.f32 %v3193, %v3385
      %v3387 = vpop.f32.mrf.mxu0
      %v3388 = vadd.f32 %v3195, %v3387
      %v3389 = vpop.f32.mrf.mxu0
      %v3390 = vadd.f32 %v3197, %v3389
      %v3391 = vpop.f32.mrf.mxu0
      %v3392 = vadd.f32 %v3199, %v3391
      %3393 = vmatprep.mubr.bf16.mxu0 %v1463
      %3394 = vmatmul.mubr.bf16.gmra.mxu0 %v1462
      %v3395 = vpop.f32.mrf.mxu0
      %v3396 = vadd.f32 %v3203, %v3395
      %v3397 = vpop.f32.mrf.mxu0
      %v3398 = vadd.f32 %v3205, %v3397
      %v3399 = vpop.f32.mrf.mxu0
      %v3400 = vadd.f32 %v3207, %v3399
      %v3401 = vpop.f32.mrf.mxu0
      %v3402 = vadd.f32 %v3209, %v3401
      %3403 = vmatprep.mubr.bf16.mxu0 %v1477
      %3404 = vmatmul.mubr.bf16.gmra.mxu0 %v1476
      %v3405 = vpop.f32.mrf.mxu0
      %v3406 = vadd.f32 %v3213, %v3405
      %v3407 = vpop.f32.mrf.mxu0
      %v3408 = vadd.f32 %v3215, %v3407
      %v3409 = vpop.f32.mrf.mxu0
      %v3410 = vadd.f32 %v3217, %v3409
      %v3411 = vpop.f32.mrf.mxu0
      %v3412 = vadd.f32 %v3219, %v3411
      %3413 = vmatprep.mubr.bf16.mxu0 %v1491
      %3414 = vmatmul.mubr.bf16.gmra.mxu0 %v1490
      %v3415 = vpop.f32.mrf.mxu0
      %v3416 = vadd.f32 %v3223, %v3415
      %v3417 = vpop.f32.mrf.mxu0
      %v3418 = vadd.f32 %v3225, %v3417
      %v3419 = vpop.f32.mrf.mxu0
      %v3420 = vadd.f32 %v3227, %v3419
      %v3421 = vpop.f32.mrf.mxu0
      %v3422 = vadd.f32 %v3229, %v3421
      %3423 = vmatprep.mubr.bf16.mxu0 %v1505
      %3424 = vmatmul.mubr.bf16.gmra.mxu0 %v1504
      %v3425 = vpop.f32.mrf.mxu0
      %v3426 = vadd.f32 %v3233, %v3425
      %v3427 = vpop.f32.mrf.mxu0
      %v3428 = vadd.f32 %v3235, %v3427
      %v3429 = vpop.f32.mrf.mxu0
      %v3430 = vadd.f32 %v3237, %v3429
      %v3431 = vpop.f32.mrf.mxu0
      %v3432 = vadd.f32 %v3239, %v3431
      %3433 = vmatprep.mubr.bf16.mxu0 %v1519
      %3434 = vmatmul.mubr.bf16.gmra.mxu0 %v1518
      %v3435 = vpop.f32.mrf.mxu0
      %v3436 = vadd.f32 %v3243, %v3435
      %v3437 = vpop.f32.mrf.mxu0
      %v3438 = vadd.f32 %v3245, %v3437
      %v3439 = vpop.f32.mrf.mxu0
      %v3440 = vadd.f32 %v3247, %v3439
      %v3441 = vpop.f32.mrf.mxu0
      %v3442 = vadd.f32 %v3249, %v3441
      %3443 = vdwg.mxu0
      %3444 = vmatprep.subr.bf16.mxu0 %v2495
      %3445 = vmatpush1.bf16.msra.mxu0 %v2494
      %3446 = vmatprep.subr.bf16.mxu0 %v2493
      %3447 = vmatpush1.bf16.msra.mxu0 %v2492
      %3448 = vmatprep.subr.bf16.mxu0 %v2491
      %3449 = vmatpush1.bf16.msra.mxu0 %v2490
      %3450 = vmatprep.subr.bf16.mxu0 %v2489
      %3451 = vmatpush1.bf16.msra.mxu0 %v2488
      %3452 = vmatprep.subr.bf16.mxu0 %v2487
      %3453 = vmatpush1.bf16.msra.mxu0 %v2486
      %3454 = vmatprep.subr.bf16.mxu0 %v2485
      %3455 = vmatpush1.bf16.msra.mxu0 %v2484
      %3456 = vmatprep.subr.bf16.mxu0 %v2483
      %3457 = vmatpush1.bf16.msra.mxu0 %v2482
      %3458 = vmatprep.subr.bf16.mxu0 %v2481
      %3459 = vmatpush1.bf16.msra.mxu0 %v2480
      %3460 = vmatprep.subr.bf16.mxu0 %v2511
      %3461 = vmatpush2.bf16.msra.mxu0 %v2510
      %3462 = vmatprep.subr.bf16.mxu0 %v2509
      %3463 = vmatpush2.bf16.msra.mxu0 %v2508
      %3464 = vmatprep.subr.bf16.mxu0 %v2507
      %3465 = vmatpush2.bf16.msra.mxu0 %v2506
      %3466 = vmatprep.subr.bf16.mxu0 %v2505
      %3467 = vmatpush2.bf16.msra.mxu0 %v2504
      %3468 = vmatprep.subr.bf16.mxu0 %v2503
      %3469 = vmatpush2.bf16.msra.mxu0 %v2502
      %3470 = vmatprep.subr.bf16.mxu0 %v2501
      %3471 = vmatpush2.bf16.msra.mxu0 %v2500
      %3472 = vmatprep.subr.bf16.mxu0 %v2499
      %3473 = vmatpush2.bf16.msra.mxu0 %v2498
      %3474 = vmatprep.subr.bf16.mxu0 %v2497
      %3475 = vmatpush2.bf16.msra.mxu0 %v2496
      %3476 = vmatprep.mubr.bf16.mxu0 %v1311
      %3477 = vmatmul.mubr.bf16.gmra.mxu0 %v1310
      %v3478 = vpop.f32.mrf.mxu0
      %v3479 = vadd.f32 %v3286, %v3478
      %v3480 = vpop.f32.mrf.mxu0
      %v3481 = vadd.f32 %v3288, %v3480
      %v3482 = vpop.f32.mrf.mxu0
      %v3483 = vadd.f32 %v3290, %v3482
      %v3484 = vpop.f32.mrf.mxu0
      %v3485 = vadd.f32 %v3292, %v3484
      %3486 = vmatprep.mubr.bf16.mxu0 %v1325
      %3487 = vmatmul.mubr.bf16.gmra.mxu0 %v1324
      %v3488 = vpop.f32.mrf.mxu0
      %v3489 = vadd.f32 %v3296, %v3488
      %v3490 = vpop.f32.mrf.mxu0
      %v3491 = vadd.f32 %v3298, %v3490
      %v3492 = vpop.f32.mrf.mxu0
      %v3493 = vadd.f32 %v3300, %v3492
      %v3494 = vpop.f32.mrf.mxu0
      %v3495 = vadd.f32 %v3302, %v3494
      %3496 = vmatprep.mubr.bf16.mxu0 %v1339
      %3497 = vmatmul.mubr.bf16.gmra.mxu0 %v1338
      %v3498 = vpop.f32.mrf.mxu0
      %v3499 = vadd.f32 %v3306, %v3498
      %v3500 = vpop.f32.mrf.mxu0
      %v3501 = vadd.f32 %v3308, %v3500
      %v3502 = vpop.f32.mrf.mxu0
      %v3503 = vadd.f32 %v3310, %v3502
      %v3504 = vpop.f32.mrf.mxu0
      %v3505 = vadd.f32 %v3312, %v3504
      %3506 = vmatprep.mubr.bf16.mxu0 %v1353
      %3507 = vmatmul.mubr.bf16.gmra.mxu0 %v1352
      %v3508 = vpop.f32.mrf.mxu0
      %v3509 = vadd.f32 %v3316, %v3508
      %v3510 = vpop.f32.mrf.mxu0
      %v3511 = vadd.f32 %v3318, %v3510
      %v3512 = vpop.f32.mrf.mxu0
      %v3513 = vadd.f32 %v3320, %v3512
      %v3514 = vpop.f32.mrf.mxu0
      %v3515 = vadd.f32 %v3322, %v3514
      %3516 = vmatprep.mubr.bf16.mxu0 %v1367
      %3517 = vmatmul.mubr.bf16.gmra.mxu0 %v1366
      %v3518 = vpop.f32.mrf.mxu0
      %v3519 = vadd.f32 %v3326, %v3518
      %v3520 = vpop.f32.mrf.mxu0
      %v3521 = vadd.f32 %v3328, %v3520
      %v3522 = vpop.f32.mrf.mxu0
      %v3523 = vadd.f32 %v3330, %v3522
      %v3524 = vpop.f32.mrf.mxu0
      %v3525 = vadd.f32 %v3332, %v3524
      %3526 = vmatprep.mubr.bf16.mxu0 %v1381
      %3527 = vmatmul.mubr.bf16.gmra.mxu0 %v1380
      %v3528 = vpop.f32.mrf.mxu0
      %v3529 = vadd.f32 %v3336, %v3528
      %v3530 = vpop.f32.mrf.mxu0
      %v3531 = vadd.f32 %v3338, %v3530
      %v3532 = vpop.f32.mrf.mxu0
      %v3533 = vadd.f32 %v3340, %v3532
      %v3534 = vpop.f32.mrf.mxu0
      %v3535 = vadd.f32 %v3342, %v3534
      %3536 = vmatprep.mubr.bf16.mxu0 %v1395
      %3537 = vmatmul.mubr.bf16.gmra.mxu0 %v1394
      %v3538 = vpop.f32.mrf.mxu0
      %v3539 = vadd.f32 %v3346, %v3538
      %v3540 = vpop.f32.mrf.mxu0
      %v3541 = vadd.f32 %v3348, %v3540
      %v3542 = vpop.f32.mrf.mxu0
      %v3543 = vadd.f32 %v3350, %v3542
      %v3544 = vpop.f32.mrf.mxu0
      %v3545 = vadd.f32 %v3352, %v3544
      %3546 = vmatprep.mubr.bf16.mxu0 %v1409
      %3547 = vmatmul.mubr.bf16.gmra.mxu0 %v1408
      %v3548 = vpop.f32.mrf.mxu0
      %v3549 = vadd.f32 %v3356, %v3548
      %v3550 = vpop.f32.mrf.mxu0
      %v3551 = vadd.f32 %v3358, %v3550
      %v3552 = vpop.f32.mrf.mxu0
      %v3553 = vadd.f32 %v3360, %v3552
      %v3554 = vpop.f32.mrf.mxu0
      %v3555 = vadd.f32 %v3362, %v3554
      %3556 = vmatprep.mubr.bf16.mxu0 %v1423
      %3557 = vmatmul.mubr.bf16.gmra.mxu0 %v1422
      %v3558 = vpop.f32.mrf.mxu0
      %v3559 = vadd.f32 %v3366, %v3558
      %v3560 = vpop.f32.mrf.mxu0
      %v3561 = vadd.f32 %v3368, %v3560
      %v3562 = vpop.f32.mrf.mxu0
      %v3563 = vadd.f32 %v3370, %v3562
      %v3564 = vpop.f32.mrf.mxu0
      %v3565 = vadd.f32 %v3372, %v3564
      %3566 = vmatprep.mubr.bf16.mxu0 %v1437
      %3567 = vmatmul.mubr.bf16.gmra.mxu0 %v1436
      %v3568 = vpop.f32.mrf.mxu0
      %v3569 = vadd.f32 %v3376, %v3568
      %v3570 = vpop.f32.mrf.mxu0
      %v3571 = vadd.f32 %v3378, %v3570
      %v3572 = vpop.f32.mrf.mxu0
      %v3573 = vadd.f32 %v3380, %v3572
      %v3574 = vpop.f32.mrf.mxu0
      %v3575 = vadd.f32 %v3382, %v3574
      %3576 = vmatprep.mubr.bf16.mxu0 %v1451
      %3577 = vmatmul.mubr.bf16.gmra.mxu0 %v1450
      %v3578 = vpop.f32.mrf.mxu0
      %v3579 = vadd.f32 %v3386, %v3578
      %v3580 = vpop.f32.mrf.mxu0
      %v3581 = vadd.f32 %v3388, %v3580
      %v3582 = vpop.f32.mrf.mxu0
      %v3583 = vadd.f32 %v3390, %v3582
      %v3584 = vpop.f32.mrf.mxu0
      %v3585 = vadd.f32 %v3392, %v3584
      %3586 = vmatprep.mubr.bf16.mxu0 %v1465
      %3587 = vmatmul.mubr.bf16.gmra.mxu0 %v1464
      %v3588 = vpop.f32.mrf.mxu0
      %v3589 = vadd.f32 %v3396, %v3588
      %v3590 = vpop.f32.mrf.mxu0
      %v3591 = vadd.f32 %v3398, %v3590
      %v3592 = vpop.f32.mrf.mxu0
      %v3593 = vadd.f32 %v3400, %v3592
      %v3594 = vpop.f32.mrf.mxu0
      %v3595 = vadd.f32 %v3402, %v3594
      %3596 = vmatprep.mubr.bf16.mxu0 %v1479
      %3597 = vmatmul.mubr.bf16.gmra.mxu0 %v1478
      %v3598 = vpop.f32.mrf.mxu0
      %v3599 = vadd.f32 %v3406, %v3598
      %v3600 = vpop.f32.mrf.mxu0
      %v3601 = vadd.f32 %v3408, %v3600
      %v3602 = vpop.f32.mrf.mxu0
      %v3603 = vadd.f32 %v3410, %v3602
      %v3604 = vpop.f32.mrf.mxu0
      %v3605 = vadd.f32 %v3412, %v3604
      %3606 = vmatprep.mubr.bf16.mxu0 %v1493
      %3607 = vmatmul.mubr.bf16.gmra.mxu0 %v1492
      %v3608 = vpop.f32.mrf.mxu0
      %v3609 = vadd.f32 %v3416, %v3608
      %v3610 = vpop.f32.mrf.mxu0
      %v3611 = vadd.f32 %v3418, %v3610
      %v3612 = vpop.f32.mrf.mxu0
      %v3613 = vadd.f32 %v3420, %v3612
      %v3614 = vpop.f32.mrf.mxu0
      %v3615 = vadd.f32 %v3422, %v3614
      %3616 = vmatprep.mubr.bf16.mxu0 %v1507
      %3617 = vmatmul.mubr.bf16.gmra.mxu0 %v1506
      %v3618 = vpop.f32.mrf.mxu0
      %v3619 = vadd.f32 %v3426, %v3618
      %v3620 = vpop.f32.mrf.mxu0
      %v3621 = vadd.f32 %v3428, %v3620
      %v3622 = vpop.f32.mrf.mxu0
      %v3623 = vadd.f32 %v3430, %v3622
      %v3624 = vpop.f32.mrf.mxu0
      %v3625 = vadd.f32 %v3432, %v3624
      %3626 = vmatprep.mubr.bf16.mxu0 %v1521
      %3627 = vmatmul.mubr.bf16.gmra.mxu0 %v1520
      %v3628 = vpop.f32.mrf.mxu0
      %v3629 = vadd.f32 %v3436, %v3628
      %v3630 = vpop.f32.mrf.mxu0
      %v3631 = vadd.f32 %v3438, %v3630
      %v3632 = vpop.f32.mrf.mxu0
      %v3633 = vadd.f32 %v3440, %v3632
      %v3634 = vpop.f32.mrf.mxu0
      %v3635 = vadd.f32 %v3442, %v3634
      %3636 = vdwg.mxu0
      %3637 = vmatprep.subr.bf16.mxu0 %v2527
      %3638 = vmatpush1.bf16.msra.mxu0 %v2526
      %3639 = vmatprep.subr.bf16.mxu0 %v2525
      %3640 = vmatpush1.bf16.msra.mxu0 %v2524
      %3641 = vmatprep.subr.bf16.mxu0 %v2523
      %3642 = vmatpush1.bf16.msra.mxu0 %v2522
      %3643 = vmatprep.subr.bf16.mxu0 %v2521
      %3644 = vmatpush1.bf16.msra.mxu0 %v2520
      %3645 = vmatprep.subr.bf16.mxu0 %v2519
      %3646 = vmatpush1.bf16.msra.mxu0 %v2518
      %3647 = vmatprep.subr.bf16.mxu0 %v2517
      %3648 = vmatpush1.bf16.msra.mxu0 %v2516
      %3649 = vmatprep.subr.bf16.mxu0 %v2515
      %3650 = vmatpush1.bf16.msra.mxu0 %v2514
      %3651 = vmatprep.subr.bf16.mxu0 %v2513
      %3652 = vmatpush1.bf16.msra.mxu0 %v2512
      %3653 = vmatprep.subr.bf16.mxu0 %v2543
      %3654 = vmatpush2.bf16.msra.mxu0 %v2542
      %3655 = vmatprep.subr.bf16.mxu0 %v2541
      %3656 = vmatpush2.bf16.msra.mxu0 %v2540
      %3657 = vmatprep.subr.bf16.mxu0 %v2539
      %3658 = vmatpush2.bf16.msra.mxu0 %v2538
      %3659 = vmatprep.subr.bf16.mxu0 %v2537
      %3660 = vmatpush2.bf16.msra.mxu0 %v2536
      %3661 = vmatprep.subr.bf16.mxu0 %v2535
      %3662 = vmatpush2.bf16.msra.mxu0 %v2534
      %3663 = vmatprep.subr.bf16.mxu0 %v2533
      %3664 = vmatpush2.bf16.msra.mxu0 %v2532
      %3665 = vmatprep.subr.bf16.mxu0 %v2531
      %3666 = vmatpush2.bf16.msra.mxu0 %v2530
      %3667 = vmatprep.subr.bf16.mxu0 %v2529
      %3668 = vmatpush2.bf16.msra.mxu0 %v2528
      %3669 = vmatprep.mubr.bf16.mxu0 %v1313
      %3670 = vmatmul.mubr.bf16.gmra.mxu0 %v1312
      %v3671 = vpop.f32.mrf.mxu0
      %v3672 = vadd.f32 %v3479, %v3671
      %v3673 = vpop.f32.mrf.mxu0
      %v3674 = vadd.f32 %v3481, %v3673
      %v3675 = vpop.f32.mrf.mxu0
      %v3676 = vadd.f32 %v3483, %v3675
      %v3677 = vpop.f32.mrf.mxu0
      %v3678 = vadd.f32 %v3485, %v3677
      %3679 = vmatprep.mubr.bf16.mxu0 %v1327
      %3680 = vmatmul.mubr.bf16.gmra.mxu0 %v1326
      %v3681 = vpop.f32.mrf.mxu0
      %v3682 = vadd.f32 %v3489, %v3681
      %v3683 = vpop.f32.mrf.mxu0
      %v3684 = vadd.f32 %v3491, %v3683
      %v3685 = vpop.f32.mrf.mxu0
      %v3686 = vadd.f32 %v3493, %v3685
      %v3687 = vpop.f32.mrf.mxu0
      %v3688 = vadd.f32 %v3495, %v3687
      %3689 = vmatprep.mubr.bf16.mxu0 %v1341
      %3690 = vmatmul.mubr.bf16.gmra.mxu0 %v1340
      %v3691 = vpop.f32.mrf.mxu0
      %v3692 = vadd.f32 %v3499, %v3691
      %v3693 = vpop.f32.mrf.mxu0
      %v3694 = vadd.f32 %v3501, %v3693
      %v3695 = vpop.f32.mrf.mxu0
      %v3696 = vadd.f32 %v3503, %v3695
      %v3697 = vpop.f32.mrf.mxu0
      %v3698 = vadd.f32 %v3505, %v3697
      %3699 = vmatprep.mubr.bf16.mxu0 %v1355
      %3700 = vmatmul.mubr.bf16.gmra.mxu0 %v1354
      %v3701 = vpop.f32.mrf.mxu0
      %v3702 = vadd.f32 %v3509, %v3701
      %v3703 = vpop.f32.mrf.mxu0
      %v3704 = vadd.f32 %v3511, %v3703
      %v3705 = vpop.f32.mrf.mxu0
      %v3706 = vadd.f32 %v3513, %v3705
      %v3707 = vpop.f32.mrf.mxu0
      %v3708 = vadd.f32 %v3515, %v3707
      %3709 = vmatprep.mubr.bf16.mxu0 %v1369
      %3710 = vmatmul.mubr.bf16.gmra.mxu0 %v1368
      %v3711 = vpop.f32.mrf.mxu0
      %v3712 = vadd.f32 %v3519, %v3711
      %v3713 = vpop.f32.mrf.mxu0
      %v3714 = vadd.f32 %v3521, %v3713
      %v3715 = vpop.f32.mrf.mxu0
      %v3716 = vadd.f32 %v3523, %v3715
      %v3717 = vpop.f32.mrf.mxu0
      %v3718 = vadd.f32 %v3525, %v3717
      %3719 = vmatprep.mubr.bf16.mxu0 %v1383
      %3720 = vmatmul.mubr.bf16.gmra.mxu0 %v1382
      %v3721 = vpop.f32.mrf.mxu0
      %v3722 = vadd.f32 %v3529, %v3721
      %v3723 = vpop.f32.mrf.mxu0
      %v3724 = vadd.f32 %v3531, %v3723
      %v3725 = vpop.f32.mrf.mxu0
      %v3726 = vadd.f32 %v3533, %v3725
      %v3727 = vpop.f32.mrf.mxu0
      %v3728 = vadd.f32 %v3535, %v3727
      %3729 = vmatprep.mubr.bf16.mxu0 %v1397
      %3730 = vmatmul.mubr.bf16.gmra.mxu0 %v1396
      %v3731 = vpop.f32.mrf.mxu0
      %v3732 = vadd.f32 %v3539, %v3731
      %v3733 = vpop.f32.mrf.mxu0
      %v3734 = vadd.f32 %v3541, %v3733
      %v3735 = vpop.f32.mrf.mxu0
      %v3736 = vadd.f32 %v3543, %v3735
      %v3737 = vpop.f32.mrf.mxu0
      %v3738 = vadd.f32 %v3545, %v3737
      %3739 = vmatprep.mubr.bf16.mxu0 %v1411
      %3740 = vmatmul.mubr.bf16.gmra.mxu0 %v1410
      %v3741 = vpop.f32.mrf.mxu0
      %v3742 = vadd.f32 %v3549, %v3741
      %v3743 = vpop.f32.mrf.mxu0
      %v3744 = vadd.f32 %v3551, %v3743
      %v3745 = vpop.f32.mrf.mxu0
      %v3746 = vadd.f32 %v3553, %v3745
      %v3747 = vpop.f32.mrf.mxu0
      %v3748 = vadd.f32 %v3555, %v3747
      %3749 = vmatprep.mubr.bf16.mxu0 %v1425
      %3750 = vmatmul.mubr.bf16.gmra.mxu0 %v1424
      %v3751 = vpop.f32.mrf.mxu0
      %v3752 = vadd.f32 %v3559, %v3751
      %v3753 = vpop.f32.mrf.mxu0
      %v3754 = vadd.f32 %v3561, %v3753
      %v3755 = vpop.f32.mrf.mxu0
      %v3756 = vadd.f32 %v3563, %v3755
      %v3757 = vpop.f32.mrf.mxu0
      %v3758 = vadd.f32 %v3565, %v3757
      %3759 = vmatprep.mubr.bf16.mxu0 %v1439
      %3760 = vmatmul.mubr.bf16.gmra.mxu0 %v1438
      %v3761 = vpop.f32.mrf.mxu0
      %v3762 = vadd.f32 %v3569, %v3761
      %v3763 = vpop.f32.mrf.mxu0
      %v3764 = vadd.f32 %v3571, %v3763
      %v3765 = vpop.f32.mrf.mxu0
      %v3766 = vadd.f32 %v3573, %v3765
      %v3767 = vpop.f32.mrf.mxu0
      %v3768 = vadd.f32 %v3575, %v3767
      %3769 = vmatprep.mubr.bf16.mxu0 %v1453
      %3770 = vmatmul.mubr.bf16.gmra.mxu0 %v1452
      %v3771 = vpop.f32.mrf.mxu0
      %v3772 = vadd.f32 %v3579, %v3771
      %v3773 = vpop.f32.mrf.mxu0
      %v3774 = vadd.f32 %v3581, %v3773
      %v3775 = vpop.f32.mrf.mxu0
      %v3776 = vadd.f32 %v3583, %v3775
      %v3777 = vpop.f32.mrf.mxu0
      %v3778 = vadd.f32 %v3585, %v3777
      %3779 = vmatprep.mubr.bf16.mxu0 %v1467
      %3780 = vmatmul.mubr.bf16.gmra.mxu0 %v1466
      %v3781 = vpop.f32.mrf.mxu0
      %v3782 = vadd.f32 %v3589, %v3781
      %v3783 = vpop.f32.mrf.mxu0
      %v3784 = vadd.f32 %v3591, %v3783
      %v3785 = vpop.f32.mrf.mxu0
      %v3786 = vadd.f32 %v3593, %v3785
      %v3787 = vpop.f32.mrf.mxu0
      %v3788 = vadd.f32 %v3595, %v3787
      %3789 = vmatprep.mubr.bf16.mxu0 %v1481
      %3790 = vmatmul.mubr.bf16.gmra.mxu0 %v1480
      %v3791 = vpop.f32.mrf.mxu0
      %v3792 = vadd.f32 %v3599, %v3791
      %v3793 = vpop.f32.mrf.mxu0
      %v3794 = vadd.f32 %v3601, %v3793
      %v3795 = vpop.f32.mrf.mxu0
      %v3796 = vadd.f32 %v3603, %v3795
      %v3797 = vpop.f32.mrf.mxu0
      %v3798 = vadd.f32 %v3605, %v3797
      %3799 = vmatprep.mubr.bf16.mxu0 %v1495
      %3800 = vmatmul.mubr.bf16.gmra.mxu0 %v1494
      %v3801 = vpop.f32.mrf.mxu0
      %v3802 = vadd.f32 %v3609, %v3801
      %v3803 = vpop.f32.mrf.mxu0
      %v3804 = vadd.f32 %v3611, %v3803
      %v3805 = vpop.f32.mrf.mxu0
      %v3806 = vadd.f32 %v3613, %v3805
      %v3807 = vpop.f32.mrf.mxu0
      %v3808 = vadd.f32 %v3615, %v3807
      %3809 = vmatprep.mubr.bf16.mxu0 %v1509
      %3810 = vmatmul.mubr.bf16.gmra.mxu0 %v1508
      %v3811 = vpop.f32.mrf.mxu0
      %v3812 = vadd.f32 %v3619, %v3811
      %v3813 = vpop.f32.mrf.mxu0
      %v3814 = vadd.f32 %v3621, %v3813
      %v3815 = vpop.f32.mrf.mxu0
      %v3816 = vadd.f32 %v3623, %v3815
      %v3817 = vpop.f32.mrf.mxu0
      %v3818 = vadd.f32 %v3625, %v3817
      %3819 = vmatprep.mubr.bf16.mxu0 %v1523
      %3820 = vmatmul.mubr.bf16.gmra.mxu0 %v1522
      %v3821 = vpop.f32.mrf.mxu0
      %v3822 = vadd.f32 %v3629, %v3821
      %v3823 = vpop.f32.mrf.mxu0
      %v3824 = vadd.f32 %v3631, %v3823
      %v3825 = vpop.f32.mrf.mxu0
      %v3826 = vadd.f32 %v3633, %v3825
      %v3827 = vpop.f32.mrf.mxu0
      %v3828 = vadd.f32 %v3635, %v3827
      %3829 = vdwg.mxu0
      %3830 = vmatprep.subr.bf16.mxu0 %v2559
      %3831 = vmatpush1.bf16.msra.mxu0 %v2558
      %3832 = vmatprep.subr.bf16.mxu0 %v2557
      %3833 = vmatpush1.bf16.msra.mxu0 %v2556
      %3834 = vmatprep.subr.bf16.mxu0 %v2555
      %3835 = vmatpush1.bf16.msra.mxu0 %v2554
      %3836 = vmatprep.subr.bf16.mxu0 %v2553
      %3837 = vmatpush1.bf16.msra.mxu0 %v2552
      %3838 = vmatprep.subr.bf16.mxu0 %v2551
      %3839 = vmatpush1.bf16.msra.mxu0 %v2550
      %3840 = vmatprep.subr.bf16.mxu0 %v2549
      %3841 = vmatpush1.bf16.msra.mxu0 %v2548
      %3842 = vmatprep.subr.bf16.mxu0 %v2547
      %3843 = vmatpush1.bf16.msra.mxu0 %v2546
      %3844 = vmatprep.subr.bf16.mxu0 %v2545
      %3845 = vmatpush1.bf16.msra.mxu0 %v2544
      %3846 = vmatprep.subr.bf16.mxu0 %v2575
      %3847 = vmatpush2.bf16.msra.mxu0 %v2574
      %3848 = vmatprep.subr.bf16.mxu0 %v2573
      %3849 = vmatpush2.bf16.msra.mxu0 %v2572
      %3850 = vmatprep.subr.bf16.mxu0 %v2571
      %3851 = vmatpush2.bf16.msra.mxu0 %v2570
      %3852 = vmatprep.subr.bf16.mxu0 %v2569
      %3853 = vmatpush2.bf16.msra.mxu0 %v2568
      %3854 = vmatprep.subr.bf16.mxu0 %v2567
      %3855 = vmatpush2.bf16.msra.mxu0 %v2566
      %3856 = vmatprep.subr.bf16.mxu0 %v2565
      %3857 = vmatpush2.bf16.msra.mxu0 %v2564
      %3858 = vmatprep.subr.bf16.mxu0 %v2563
      %3859 = vmatpush2.bf16.msra.mxu0 %v2562
      %3860 = vmatprep.subr.bf16.mxu0 %v2561
      %3861 = vmatpush2.bf16.msra.mxu0 %v2560
      %3862 = vmatprep.mubr.bf16.mxu0 %v1315
      %3863 = vmatmul.mubr.bf16.gmra.mxu0 %v1314
      %v3864 = vpop.f32.mrf.mxu0
      %v3865 = vadd.f32 %v3672, %v3864
      %v3866 = vpop.f32.mrf.mxu0
      %v3867 = vadd.f32 %v3674, %v3866
      %v3868 = vpop.f32.mrf.mxu0
      %v3869 = vadd.f32 %v3676, %v3868
      %v3870 = vpop.f32.mrf.mxu0
      %v3871 = vadd.f32 %v3678, %v3870
      %3872 = vmatprep.mubr.bf16.mxu0 %v1329
      %3873 = vmatmul.mubr.bf16.gmra.mxu0 %v1328
      %v3874 = vpop.f32.mrf.mxu0
      %v3875 = vadd.f32 %v3682, %v3874
      %v3876 = vpop.f32.mrf.mxu0
      %v3877 = vadd.f32 %v3684, %v3876
      %v3878 = vpop.f32.mrf.mxu0
      %v3879 = vadd.f32 %v3686, %v3878
      %v3880 = vpop.f32.mrf.mxu0
      %v3881 = vadd.f32 %v3688, %v3880
      %3882 = vmatprep.mubr.bf16.mxu0 %v1343
      %3883 = vmatmul.mubr.bf16.gmra.mxu0 %v1342
      %v3884 = vpop.f32.mrf.mxu0
      %v3885 = vadd.f32 %v3692, %v3884
      %v3886 = vpop.f32.mrf.mxu0
      %v3887 = vadd.f32 %v3694, %v3886
      %v3888 = vpop.f32.mrf.mxu0
      %v3889 = vadd.f32 %v3696, %v3888
      %v3890 = vpop.f32.mrf.mxu0
      %v3891 = vadd.f32 %v3698, %v3890
      %3892 = vmatprep.mubr.bf16.mxu0 %v1357
      %3893 = vmatmul.mubr.bf16.gmra.mxu0 %v1356
      %v3894 = vpop.f32.mrf.mxu0
      %v3895 = vadd.f32 %v3702, %v3894
      %v3896 = vpop.f32.mrf.mxu0
      %v3897 = vadd.f32 %v3704, %v3896
      %v3898 = vpop.f32.mrf.mxu0
      %v3899 = vadd.f32 %v3706, %v3898
      %v3900 = vpop.f32.mrf.mxu0
      %v3901 = vadd.f32 %v3708, %v3900
      %3902 = vmatprep.mubr.bf16.mxu0 %v1371
      %3903 = vmatmul.mubr.bf16.gmra.mxu0 %v1370
      %v3904 = vpop.f32.mrf.mxu0
      %v3905 = vadd.f32 %v3712, %v3904
      %v3906 = vpop.f32.mrf.mxu0
      %v3907 = vadd.f32 %v3714, %v3906
      %v3908 = vpop.f32.mrf.mxu0
      %v3909 = vadd.f32 %v3716, %v3908
      %v3910 = vpop.f32.mrf.mxu0
      %v3911 = vadd.f32 %v3718, %v3910
      %3912 = vmatprep.mubr.bf16.mxu0 %v1385
      %3913 = vmatmul.mubr.bf16.gmra.mxu0 %v1384
      %v3914 = vpop.f32.mrf.mxu0
      %v3915 = vadd.f32 %v3722, %v3914
      %v3916 = vpop.f32.mrf.mxu0
      %v3917 = vadd.f32 %v3724, %v3916
      %v3918 = vpop.f32.mrf.mxu0
      %v3919 = vadd.f32 %v3726, %v3918
      %v3920 = vpop.f32.mrf.mxu0
      %v3921 = vadd.f32 %v3728, %v3920
      %3922 = vmatprep.mubr.bf16.mxu0 %v1399
      %3923 = vmatmul.mubr.bf16.gmra.mxu0 %v1398
      %v3924 = vpop.f32.mrf.mxu0
      %v3925 = vadd.f32 %v3732, %v3924
      %v3926 = vpop.f32.mrf.mxu0
      %v3927 = vadd.f32 %v3734, %v3926
      %v3928 = vpop.f32.mrf.mxu0
      %v3929 = vadd.f32 %v3736, %v3928
      %v3930 = vpop.f32.mrf.mxu0
      %v3931 = vadd.f32 %v3738, %v3930
      %3932 = vmatprep.mubr.bf16.mxu0 %v1413
      %3933 = vmatmul.mubr.bf16.gmra.mxu0 %v1412
      %v3934 = vpop.f32.mrf.mxu0
      %v3935 = vadd.f32 %v3742, %v3934
      %v3936 = vpop.f32.mrf.mxu0
      %v3937 = vadd.f32 %v3744, %v3936
      %v3938 = vpop.f32.mrf.mxu0
      %v3939 = vadd.f32 %v3746, %v3938
      %v3940 = vpop.f32.mrf.mxu0
      %v3941 = vadd.f32 %v3748, %v3940
      %3942 = vmatprep.mubr.bf16.mxu0 %v1427
      %3943 = vmatmul.mubr.bf16.gmra.mxu0 %v1426
      %v3944 = vpop.f32.mrf.mxu0
      %v3945 = vadd.f32 %v3752, %v3944
      %v3946 = vpop.f32.mrf.mxu0
      %v3947 = vadd.f32 %v3754, %v3946
      %v3948 = vpop.f32.mrf.mxu0
      %v3949 = vadd.f32 %v3756, %v3948
      %v3950 = vpop.f32.mrf.mxu0
      %v3951 = vadd.f32 %v3758, %v3950
      %3952 = vmatprep.mubr.bf16.mxu0 %v1441
      %3953 = vmatmul.mubr.bf16.gmra.mxu0 %v1440
      %v3954 = vpop.f32.mrf.mxu0
      %v3955 = vadd.f32 %v3762, %v3954
      %v3956 = vpop.f32.mrf.mxu0
      %v3957 = vadd.f32 %v3764, %v3956
      %v3958 = vpop.f32.mrf.mxu0
      %v3959 = vadd.f32 %v3766, %v3958
      %v3960 = vpop.f32.mrf.mxu0
      %v3961 = vadd.f32 %v3768, %v3960
      %3962 = vmatprep.mubr.bf16.mxu0 %v1455
      %3963 = vmatmul.mubr.bf16.gmra.mxu0 %v1454
      %v3964 = vpop.f32.mrf.mxu0
      %v3965 = vadd.f32 %v3772, %v3964
      %v3966 = vpop.f32.mrf.mxu0
      %v3967 = vadd.f32 %v3774, %v3966
      %v3968 = vpop.f32.mrf.mxu0
      %v3969 = vadd.f32 %v3776, %v3968
      %v3970 = vpop.f32.mrf.mxu0
      %v3971 = vadd.f32 %v3778, %v3970
      %3972 = vmatprep.mubr.bf16.mxu0 %v1469
      %3973 = vmatmul.mubr.bf16.gmra.mxu0 %v1468
      %v3974 = vpop.f32.mrf.mxu0
      %v3975 = vadd.f32 %v3782, %v3974
      %v3976 = vpop.f32.mrf.mxu0
      %v3977 = vadd.f32 %v3784, %v3976
      %v3978 = vpop.f32.mrf.mxu0
      %v3979 = vadd.f32 %v3786, %v3978
      %v3980 = vpop.f32.mrf.mxu0
      %v3981 = vadd.f32 %v3788, %v3980
      %3982 = vmatprep.mubr.bf16.mxu0 %v1483
      %3983 = vmatmul.mubr.bf16.gmra.mxu0 %v1482
      %v3984 = vpop.f32.mrf.mxu0
      %v3985 = vadd.f32 %v3792, %v3984
      %v3986 = vpop.f32.mrf.mxu0
      %v3987 = vadd.f32 %v3794, %v3986
      %v3988 = vpop.f32.mrf.mxu0
      %v3989 = vadd.f32 %v3796, %v3988
      %v3990 = vpop.f32.mrf.mxu0
      %v3991 = vadd.f32 %v3798, %v3990
      %3992 = vmatprep.mubr.bf16.mxu0 %v1497
      %3993 = vmatmul.mubr.bf16.gmra.mxu0 %v1496
      %v3994 = vpop.f32.mrf.mxu0
      %v3995 = vadd.f32 %v3802, %v3994
      %v3996 = vpop.f32.mrf.mxu0
      %v3997 = vadd.f32 %v3804, %v3996
      %v3998 = vpop.f32.mrf.mxu0
      %v3999 = vadd.f32 %v3806, %v3998
      %v4000 = vpop.f32.mrf.mxu0
      %v4001 = vadd.f32 %v3808, %v4000
      %4002 = vmatprep.mubr.bf16.mxu0 %v1511
      %4003 = vmatmul.mubr.bf16.gmra.mxu0 %v1510
      %v4004 = vpop.f32.mrf.mxu0
      %v4005 = vadd.f32 %v3812, %v4004
      %v4006 = vpop.f32.mrf.mxu0
      %v4007 = vadd.f32 %v3814, %v4006
      %v4008 = vpop.f32.mrf.mxu0
      %v4009 = vadd.f32 %v3816, %v4008
      %v4010 = vpop.f32.mrf.mxu0
      %v4011 = vadd.f32 %v3818, %v4010
      %4012 = vmatprep.mubr.bf16.mxu0 %v1525
      %4013 = vmatmul.mubr.bf16.gmra.mxu0 %v1524
      %v4014 = vpop.f32.mrf.mxu0
      %v4015 = vadd.f32 %v3822, %v4014
      %v4016 = vpop.f32.mrf.mxu0
      %v4017 = vadd.f32 %v3824, %v4016
      %v4018 = vpop.f32.mrf.mxu0
      %v4019 = vadd.f32 %v3826, %v4018
      %v4020 = vpop.f32.mrf.mxu0
      %v4021 = vadd.f32 %v3828, %v4020
      %4022 = vdwg.mxu0
      %4023 = vmatprep.subr.bf16.mxu0 %v2591
      %4024 = vmatpush1.bf16.msra.mxu0 %v2590
      %4025 = vmatprep.subr.bf16.mxu0 %v2589
      %4026 = vmatpush1.bf16.msra.mxu0 %v2588
      %4027 = vmatprep.subr.bf16.mxu0 %v2587
      %4028 = vmatpush1.bf16.msra.mxu0 %v2586
      %4029 = vmatprep.subr.bf16.mxu0 %v2585
      %4030 = vmatpush1.bf16.msra.mxu0 %v2584
      %4031 = vmatprep.subr.bf16.mxu0 %v2583
      %4032 = vmatpush1.bf16.msra.mxu0 %v2582
      %4033 = vmatprep.subr.bf16.mxu0 %v2581
      %4034 = vmatpush1.bf16.msra.mxu0 %v2580
      %4035 = vmatprep.subr.bf16.mxu0 %v2579
      %4036 = vmatpush1.bf16.msra.mxu0 %v2578
      %4037 = vmatprep.subr.bf16.mxu0 %v2577
      %4038 = vmatpush1.bf16.msra.mxu0 %v2576
      %4039 = vmatprep.subr.bf16.mxu0 0
      %4040 = vmatpush2.bf16.msra.mxu0 0
      %4041 = vmatprep.subr.bf16.mxu0 0
      %4042 = vmatpush2.bf16.msra.mxu0 0
      %4043 = vmatprep.subr.bf16.mxu0 0
      %4044 = vmatpush2.bf16.msra.mxu0 0
      %4045 = vmatprep.subr.bf16.mxu0 0
      %4046 = vmatpush2.bf16.msra.mxu0 0
      %4047 = vmatprep.subr.bf16.mxu0 %v2599
      %4048 = vmatpush2.bf16.msra.mxu0 %v2598
      %4049 = vmatprep.subr.bf16.mxu0 %v2597
      %4050 = vmatpush2.bf16.msra.mxu0 %v2596
      %4051 = vmatprep.subr.bf16.mxu0 %v2595
      %4052 = vmatpush2.bf16.msra.mxu0 %v2594
      %4053 = vmatprep.subr.bf16.mxu0 %v2593
      %4054 = vmatpush2.bf16.msra.mxu0 %v2592
      %4055 = vmatprep.mubr.bf16.mxu0 %v2818
      %4056 = vmatmul.mubr.bf16.gmra.mxu0 %v1316
      %v4057 = vpop.f32.mrf.mxu0
      %v4058 = vadd.f32 %v3865, %v4057
      %v4059 = vpop.f32.mrf.mxu0
      %v4060 = vadd.f32 %v3867, %v4059
      %v4061 = vpop.f32.mrf.mxu0
      %v4062 = vadd.f32 %v3869, %v4061
      %v4063 = vpop.f32.mrf.mxu0
      %v4064 = vadd.f32 %v3871, %v4063
      %4065 = vmatprep.mubr.bf16.mxu0 %v2821
      %4066 = vmatmul.mubr.bf16.gmra.mxu0 %v1330
      %v4067 = vpop.f32.mrf.mxu0
      %v4068 = vadd.f32 %v3875, %v4067
      %v4069 = vpop.f32.mrf.mxu0
      %v4070 = vadd.f32 %v3877, %v4069
      %v4071 = vpop.f32.mrf.mxu0
      %v4072 = vadd.f32 %v3879, %v4071
      %v4073 = vpop.f32.mrf.mxu0
      %v4074 = vadd.f32 %v3881, %v4073
      %4075 = vmatprep.mubr.bf16.mxu0 %v2824
      %4076 = vmatmul.mubr.bf16.gmra.mxu0 %v1344
      %v4077 = vpop.f32.mrf.mxu0
      %v4078 = vadd.f32 %v3885, %v4077
      %v4079 = vpop.f32.mrf.mxu0
      %v4080 = vadd.f32 %v3887, %v4079
      %v4081 = vpop.f32.mrf.mxu0
      %v4082 = vadd.f32 %v3889, %v4081
      %v4083 = vpop.f32.mrf.mxu0
      %v4084 = vadd.f32 %v3891, %v4083
      %4085 = vmatprep.mubr.bf16.mxu0 %v2827
      %4086 = vmatmul.mubr.bf16.gmra.mxu0 %v1358
      %v4087 = vpop.f32.mrf.mxu0
      %v4088 = vadd.f32 %v3895, %v4087
      %v4089 = vpop.f32.mrf.mxu0
      %v4090 = vadd.f32 %v3897, %v4089
      %v4091 = vpop.f32.mrf.mxu0
      %v4092 = vadd.f32 %v3899, %v4091
      %v4093 = vpop.f32.mrf.mxu0
      %v4094 = vadd.f32 %v3901, %v4093
      %4095 = vmatprep.mubr.bf16.mxu0 %v2830
      %4096 = vmatmul.mubr.bf16.gmra.mxu0 %v1372
      %v4097 = vpop.f32.mrf.mxu0
      %v4098 = vadd.f32 %v3905, %v4097
      %v4099 = vpop.f32.mrf.mxu0
      %v4100 = vadd.f32 %v3907, %v4099
      %v4101 = vpop.f32.mrf.mxu0
      %v4102 = vadd.f32 %v3909, %v4101
      %v4103 = vpop.f32.mrf.mxu0
      %v4104 = vadd.f32 %v3911, %v4103
      %4105 = vmatprep.mubr.bf16.mxu0 %v2833
      %4106 = vmatmul.mubr.bf16.gmra.mxu0 %v1386
      %v4107 = vpop.f32.mrf.mxu0
      %v4108 = vadd.f32 %v3915, %v4107
      %v4109 = vpop.f32.mrf.mxu0
      %v4110 = vadd.f32 %v3917, %v4109
      %v4111 = vpop.f32.mrf.mxu0
      %v4112 = vadd.f32 %v3919, %v4111
      %v4113 = vpop.f32.mrf.mxu0
      %v4114 = vadd.f32 %v3921, %v4113
      %4115 = vmatprep.mubr.bf16.mxu0 %v2836
      %4116 = vmatmul.mubr.bf16.gmra.mxu0 %v1400
      %v4117 = vpop.f32.mrf.mxu0
      %v4118 = vadd.f32 %v3925, %v4117
      %v4119 = vpop.f32.mrf.mxu0
      %v4120 = vadd.f32 %v3927, %v4119
      %v4121 = vpop.f32.mrf.mxu0
      %v4122 = vadd.f32 %v3929, %v4121
      %v4123 = vpop.f32.mrf.mxu0
      %v4124 = vadd.f32 %v3931, %v4123
      %4125 = vmatprep.mubr.bf16.mxu0 %v2839
      %4126 = vmatmul.mubr.bf16.gmra.mxu0 %v1414
      %v4127 = vpop.f32.mrf.mxu0
      %v4128 = vadd.f32 %v3935, %v4127
      %v4129 = vpop.f32.mrf.mxu0
      %v4130 = vadd.f32 %v3937, %v4129
      %v4131 = vpop.f32.mrf.mxu0
      %v4132 = vadd.f32 %v3939, %v4131
      %v4133 = vpop.f32.mrf.mxu0
      %v4134 = vadd.f32 %v3941, %v4133
      %4135 = vmatprep.mubr.bf16.mxu0 %v2842
      %4136 = vmatmul.mubr.bf16.gmra.mxu0 %v1428
      %v4137 = vpop.f32.mrf.mxu0
      %v4138 = vadd.f32 %v3945, %v4137
      %v4139 = vpop.f32.mrf.mxu0
      %v4140 = vadd.f32 %v3947, %v4139
      %v4141 = vpop.f32.mrf.mxu0
      %v4142 = vadd.f32 %v3949, %v4141
      %v4143 = vpop.f32.mrf.mxu0
      %v4144 = vadd.f32 %v3951, %v4143
      %4145 = vmatprep.mubr.bf16.mxu0 %v2845
      %4146 = vmatmul.mubr.bf16.gmra.mxu0 %v1442
      %v4147 = vpop.f32.mrf.mxu0
      %v4148 = vadd.f32 %v3955, %v4147
      %v4149 = vpop.f32.mrf.mxu0
      %v4150 = vadd.f32 %v3957, %v4149
      %v4151 = vpop.f32.mrf.mxu0
      %v4152 = vadd.f32 %v3959, %v4151
      %v4153 = vpop.f32.mrf.mxu0
      %v4154 = vadd.f32 %v3961, %v4153
      %4155 = vmatprep.mubr.bf16.mxu0 %v2848
      %4156 = vmatmul.mubr.bf16.gmra.mxu0 %v1456
      %v4157 = vpop.f32.mrf.mxu0
      %v4158 = vadd.f32 %v3965, %v4157
      %v4159 = vpop.f32.mrf.mxu0
      %v4160 = vadd.f32 %v3967, %v4159
      %v4161 = vpop.f32.mrf.mxu0
      %v4162 = vadd.f32 %v3969, %v4161
      %v4163 = vpop.f32.mrf.mxu0
      %v4164 = vadd.f32 %v3971, %v4163
      %4165 = vmatprep.mubr.bf16.mxu0 %v2851
      %4166 = vmatmul.mubr.bf16.gmra.mxu0 %v1470
      %v4167 = vpop.f32.mrf.mxu0
      %v4168 = vadd.f32 %v3975, %v4167
      %v4169 = vpop.f32.mrf.mxu0
      %v4170 = vadd.f32 %v3977, %v4169
      %v4171 = vpop.f32.mrf.mxu0
      %v4172 = vadd.f32 %v3979, %v4171
      %v4173 = vpop.f32.mrf.mxu0
      %v4174 = vadd.f32 %v3981, %v4173
      %4175 = vmatprep.mubr.bf16.mxu0 %v2854
      %4176 = vmatmul.mubr.bf16.gmra.mxu0 %v1484
      %v4177 = vpop.f32.mrf.mxu0
      %v4178 = vadd.f32 %v3985, %v4177
      %v4179 = vpop.f32.mrf.mxu0
      %v4180 = vadd.f32 %v3987, %v4179
      %v4181 = vpop.f32.mrf.mxu0
      %v4182 = vadd.f32 %v3989, %v4181
      %v4183 = vpop.f32.mrf.mxu0
      %v4184 = vadd.f32 %v3991, %v4183
      %4185 = vmatprep.mubr.bf16.mxu0 %v2857
      %4186 = vmatmul.mubr.bf16.gmra.mxu0 %v1498
      %v4187 = vpop.f32.mrf.mxu0
      %v4188 = vadd.f32 %v3995, %v4187
      %v4189 = vpop.f32.mrf.mxu0
      %v4190 = vadd.f32 %v3997, %v4189
      %v4191 = vpop.f32.mrf.mxu0
      %v4192 = vadd.f32 %v3999, %v4191
      %v4193 = vpop.f32.mrf.mxu0
      %v4194 = vadd.f32 %v4001, %v4193
      %4195 = vmatprep.mubr.bf16.mxu0 %v2860
      %4196 = vmatmul.mubr.bf16.gmra.mxu0 %v1512
      %v4197 = vpop.f32.mrf.mxu0
      %v4198 = vadd.f32 %v4005, %v4197
      %v4199 = vpop.f32.mrf.mxu0
      %v4200 = vadd.f32 %v4007, %v4199
      %v4201 = vpop.f32.mrf.mxu0
      %v4202 = vadd.f32 %v4009, %v4201
      %v4203 = vpop.f32.mrf.mxu0
      %v4204 = vadd.f32 %v4011, %v4203
      %4205 = vmatprep.mubr.bf16.mxu0 %v2863
      %4206 = vmatmul.mubr.bf16.gmra.mxu0 %v1526
      %v4207 = vpop.f32.mrf.mxu0
      %v4208 = vadd.f32 %v4015, %v4207
      %v4209 = vpop.f32.mrf.mxu0
      %v4210 = vadd.f32 %v4017, %v4209
      %v4211 = vpop.f32.mrf.mxu0
      %v4212 = vadd.f32 %v4019, %v4211
      %v4213 = vpop.f32.mrf.mxu0
      %v4214 = vadd.f32 %v4021, %v4213
      %4215 = vdwg.mxu0
      %v4216 = vmax.f32 %v4058, 0.0
      %v4217 = vmax.f32 %v4060, 0.0
      %v4218 = vmax.f32 %v4062, 0.0
      %v4219 = vmax.f32 %v4064, 0.0
      %v4220 = vmax.f32 %v4068, 0.0
      %v4221 = vmax.f32 %v4070, 0.0
      %v4222 = vmax.f32 %v4072, 0.0
      %v4223 = vmax.f32 %v4074, 0.0
      %v4224 = vmax.f32 %v4078, 0.0
      %v4225 = vmax.f32 %v4080, 0.0
      %v4226 = vmax.f32 %v4082, 0.0
      %v4227 = vmax.f32 %v4084, 0.0
      %v4228 = vmax.f32 %v4088, 0.0
      %v4229 = vmax.f32 %v4090, 0.0
      %v4230 = vmax.f32 %v4092, 0.0
      %v4231 = vmax.f32 %v4094, 0.0
      %v4232 = vmax.f32 %v4098, 0.0
      %v4233 = vmax.f32 %v4100, 0.0
      %v4234 = vmax.f32 %v4102, 0.0
      %v4235 = vmax.f32 %v4104, 0.0
      %v4236 = vmax.f32 %v4108, 0.0
      %v4237 = vmax.f32 %v4110, 0.0
      %v4238 = vmax.f32 %v4112, 0.0
      %v4239 = vmax.f32 %v4114, 0.0
      %v4240 = vmax.f32 %v4118, 0.0
      %v4241 = vmax.f32 %v4120, 0.0
      %v4242 = vmax.f32 %v4122, 0.0
      %v4243 = vmax.f32 %v4124, 0.0
      %v4244 = vmax.f32 %v4128, 0.0
      %v4245 = vmax.f32 %v4130, 0.0
      %v4246 = vmax.f32 %v4132, 0.0
      %v4247 = vmax.f32 %v4134, 0.0
      %v4248 = vmax.f32 %v4138, 0.0
      %v4249 = vmax.f32 %v4140, 0.0
      %v4250 = vmax.f32 %v4142, 0.0
      %v4251 = vmax.f32 %v4144, 0.0
      %v4252 = vmax.f32 %v4148, 0.0
      %v4253 = vmax.f32 %v4150, 0.0
      %v4254 = vmax.f32 %v4152, 0.0
      %v4255 = vmax.f32 %v4154, 0.0
      %v4256 = vmax.f32 %v4158, 0.0
      %v4257 = vmax.f32 %v4160, 0.0
      %v4258 = vmax.f32 %v4162, 0.0
      %v4259 = vmax.f32 %v4164, 0.0
      %v4260 = vmax.f32 %v4168, 0.0
      %v4261 = vmax.f32 %v4170, 0.0
      %v4262 = vmax.f32 %v4172, 0.0
      %v4263 = vmax.f32 %v4174, 0.0
      %v4264 = vmax.f32 %v4178, 0.0
      %v4265 = vmax.f32 %v4180, 0.0
      %v4266 = vmax.f32 %v4182, 0.0
      %v4267 = vmax.f32 %v4184, 0.0
      %v4268 = vmax.f32 %v4188, 0.0
      %v4269 = vmax.f32 %v4190, 0.0
      %v4270 = vmax.f32 %v4192, 0.0
      %v4271 = vmax.f32 %v4194, 0.0
      %v4272 = vmax.f32 %v4198, 0.0
      %v4273 = vmax.f32 %v4200, 0.0
      %v4274 = vmax.f32 %v4202, 0.0
      %v4275 = vmax.f32 %v4204, 0.0
      %v4276 = vmax.f32 %v4208, 0.0
      %v4277 = vmax.f32 %v4210, 0.0
      %v4278 = vmax.f32 %v4212, 0.0
      %v4279 = vmax.f32 %v4214, 0.0
      %4280 = vst [vmem:[%s177] sm:$0xff] %v4216
      %4281 = vst [vmem:[%s177 + $0x8] sm:$0xff] %v4217
      %4282 = vst [vmem:[%s177 + $0x10] sm:$0xff] %v4218
      %4283 = vst [vmem:[%s177 + $0x18] sm:$0xff] %v4219
      %4284 = vst [vmem:[%s177 + $0x20] sm:$0xff] %v4220
      %4285 = vst [vmem:[%s177 + $0x28] sm:$0xff] %v4221
      %4286 = vst [vmem:[%s177 + $0x30] sm:$0xff] %v4222
      %4287 = vst [vmem:[%s177 + $0x38] sm:$0xff] %v4223
      %4288 = vst [vmem:[%s177 + $0x40] sm:$0xff] %v4224
      %4289 = vst [vmem:[%s177 + $0x48] sm:$0xff] %v4225
      %4290 = vst [vmem:[%s177 + $0x50] sm:$0xff] %v4226
      %4291 = vst [vmem:[%s177 + $0x58] sm:$0xff] %v4227
      %4292 = vst [vmem:[%s177 + $0x60] sm:$0xff] %v4228
      %4293 = vst [vmem:[%s177 + $0x68] sm:$0xff] %v4229
      %4294 = vst [vmem:[%s177 + $0x70] sm:$0xff] %v4230
      %4295 = vst [vmem:[%s177 + $0x78] sm:$0xff] %v4231
      %4296 = vst [vmem:[%s177 + $0x80] sm:$0xff] %v4232
      %4297 = vst [vmem:[%s177 + $0x88] sm:$0xff] %v4233
      %4298 = vst [vmem:[%s177 + $0x90] sm:$0xff] %v4234
      %4299 = vst [vmem:[%s177 + $0x98] sm:$0xff] %v4235
      %4300 = vst [vmem:[%s177 + $0xa0] sm:$0xff] %v4236
      %4301 = vst [vmem:[%s177 + $0xa8] sm:$0xff] %v4237
      %4302 = vst [vmem:[%s177 + $0xb0] sm:$0xff] %v4238
      %4303 = vst [vmem:[%s177 + $0xb8] sm:$0xff] %v4239
      %4304 = vst [vmem:[%s177 + $0xc0] sm:$0xff] %v4240
      %4305 = vst [vmem:[%s177 + $0xc8] sm:$0xff] %v4241
      %4306 = vst [vmem:[%s177 + $0xd0] sm:$0xff] %v4242
      %4307 = vst [vmem:[%s177 + $0xd8] sm:$0xff] %v4243
      %4308 = vst [vmem:[%s177 + $0xe0] sm:$0xff] %v4244
      %4309 = vst [vmem:[%s177 + $0xe8] sm:$0xff] %v4245
      %4310 = vst [vmem:[%s177 + $0xf0] sm:$0xff] %v4246
      %4311 = vst [vmem:[%s177 + $0xf8] sm:$0xff] %v4247
      %4312 = vst [vmem:[%s177 + $0x100] sm:$0xff] %v4248
      %4313 = vst [vmem:[%s177 + $0x108] sm:$0xff] %v4249
      %4314 = vst [vmem:[%s177 + $0x110] sm:$0xff] %v4250
      %4315 = vst [vmem:[%s177 + $0x118] sm:$0xff] %v4251
      %4316 = vst [vmem:[%s177 + $0x120] sm:$0xff] %v4252
      %4317 = vst [vmem:[%s177 + $0x128] sm:$0xff] %v4253
      %4318 = vst [vmem:[%s177 + $0x130] sm:$0xff] %v4254
      %4319 = vst [vmem:[%s177 + $0x138] sm:$0xff] %v4255
      %4320 = vst [vmem:[%s177 + $0x140] sm:$0xff] %v4256
      %4321 = vst [vmem:[%s177 + $0x148] sm:$0xff] %v4257
      %4322 = vst [vmem:[%s177 + $0x150] sm:$0xff] %v4258
      %4323 = vst [vmem:[%s177 + $0x158] sm:$0xff] %v4259
      %4324 = vst [vmem:[%s177 + $0x160] sm:$0xff] %v4260
      %4325 = vst [vmem:[%s177 + $0x168] sm:$0xff] %v4261
      %4326 = vst [vmem:[%s177 + $0x170] sm:$0xff] %v4262
      %4327 = vst [vmem:[%s177 + $0x178] sm:$0xff] %v4263
      %4328 = vst [vmem:[%s177 + $0x180] sm:$0xff] %v4264
      %4329 = vst [vmem:[%s177 + $0x188] sm:$0xff] %v4265
      %4330 = vst [vmem:[%s177 + $0x190] sm:$0xff] %v4266
      %4331 = vst [vmem:[%s177 + $0x198] sm:$0xff] %v4267
      %4332 = vst [vmem:[%s177 + $0x1a0] sm:$0xff] %v4268
      %4333 = vst [vmem:[%s177 + $0x1a8] sm:$0xff] %v4269
      %4334 = vst [vmem:[%s177 + $0x1b0] sm:$0xff] %v4270
      %4335 = vst [vmem:[%s177 + $0x1b8] sm:$0xff] %v4271
      %4336 = vst [vmem:[%s177 + $0x1c0] sm:$0xff] %v4272
      %4337 = vst [vmem:[%s177 + $0x1c8] sm:$0xff] %v4273
      %4338 = vst [vmem:[%s177 + $0x1d0] sm:$0xff] %v4274
      %4339 = vst [vmem:[%s177 + $0x1d8] sm:$0xff] %v4275
      %4340 = vst [vmem:[%s177 + $0x1e0] sm:$0xff] %v4276
      %4341 = vst [vmem:[%s177 + $0x1e8] sm:$0xff] %v4277
      %4342 = vst [vmem:[%s177 + $0x1f0] sm:$0xff] %v4278
      %4343 = vst [vmem:[%s177 + $0x1f8] sm:$0xff] %v4279
      %s4344 = smul.u32 32, %s14
      %p4345 = scmp.lt.s32.totalorder %s4344, 63
      %s4346 = scalar_select %p4345, %s4344, 63
      %s4347 = smul.addr %s4346, 2
      %s4348 = smul.addr %s4347, 8
      %s4349 = scalar_lea.vmem %s3, %s4348
      // Predicated region
      $region33: #{emotion_net.9} parent=31 // pred_check
        %p4350 = pneg %p100
      $region34: #{emotion_net.9} parent=31 // pred_check_branch
        %4352 = sbr.rel (%p4350) target = $region36
      $region35: #{emotion_net.9} parent=31 // pred_region
        %s4353 = smul.u32 32, %s14
      $region36: #{emotion_net.9} parent=31 // pred_fallthru
        _
    $region32: #{emotion_net.9} parent=5 // pred_fallthru
      _
    %p4354 = scmp.le.s32.totalorder 2, %s9
    // Predicated region
    $region37: #{emotion_net.9} parent=5 // pred_check
      %p4355 = pneg %p4354
    $region38: #{emotion_net.9} parent=5 // pred_check_branch
      %4357 = sbr.rel (%p4355) target = $region40
    $region39: #{emotion_net.9} parent=5 // pred_region
      %s4358 = ssub.s32 %s9, 2
      // Predicated region
      $region41: #{emotion_net.9} parent=39 // pred_check
        %p4359 = pneg %p106
      $region42: #{emotion_net.9} parent=39 // pred_check_branch
        %4361 = sbr.rel (%p4359) target = $region44
      $region43: #{emotion_net.9} parent=39 // pred_region
        %s4362 = smul.u32 32, %s15
        %p4363 = scmp.lt.s32.totalorder %s4362, 63
        %s4364 = scalar_select %p4363, %s4362, 63
        %s4365 = smul.addr %s4364, 2
        %s4366 = smul.addr %s4365, 8
        %s4367 = scalar_lea.vmem %s3, %s4366
      $region44: #{emotion_net.9} parent=39 // pred_fallthru
        _
    $region40: #{emotion_net.9} parent=5 // pred_fallthru
      _
  $region6: #{emotion_net.9} parent=0 // loop_footer
    %s13 = sadd.s32 1, %s9
  $region7: #{emotion_net.9} parent=0 // loop_footer_branch
    %8 = sbr.rel target = $region3
  $region8: #{emotion_net.9} parent=0 // loop_exit
    _

// kernel: emotion_net.11
$region0: #{emotion_net.11}
  #allocation0 [shape = 'u32[]', space=smem, size = 0x4, offset = 0x4, fixed_abs, tag = 'smem constant byte address 0x4 - core index']
  #allocation1 [shape = 'u32[144,128]{1,0:T(1,128)}', space=vmem, size = 0x12000, scoped, tag = 'internal scratch']
  %s0 = inlined_call_operand.vmem [shape: f32[2,4,64,128], index: 0, kind: input, shape index: {}]
  %s1 = inlined_call_operand.vmem [shape: f32[128,512], index: 1, kind: input, shape index: {}]
  %s2 = inlined_call_operand.vmem [shape: f32[1,512], index: 2, kind: input, shape index: {}]
  %s3 = inlined_call_operand.vmem [shape: f32[2,4,512], index: 3, kind: output, shape index: {}]
  %s4 = sld [smem:[#allocation0]]
  $region45: #{emotion_net.11} parent=0
    _
  %s6 = ssub.s32 1, %s4
  %s7 = scalar_select 0, %s6, %s4
  loop: start=0, step=1, limit=4
  $region2: #{emotion_net.11} parent=0 // loop_pre_header
    _
  $region3: #{emotion_net.11} parent=0 // loop_header
    %s9 = sphi 0, %s13
    %p10 = scmp.ge.s32.totalorder %s9, 4
    %s19 = sphi 0, %s21
    %s22 = sphi 0, %s19
    %s23 = sphi 0, %s22
    %s39 = sphi 0, %s23
    %s43 = sphi 0, %s43
    %s45 = sphi 0, %s43
    %s46 = sphi 0, %s45
    %s60 = sphi 0, %s46
    %s64 = sphi 0, %s64
    %s66 = sphi 0, %s64
    %s67 = sphi 0, %s66
    %s81 = sphi 0, %s67
    %s87 = sphi 0, %s89
    %s90 = sphi 0, %s87
    %s91 = sphi 0, %s90
    %s107 = sphi 0, %s91
  $region4: #{emotion_net.11} parent=0 // loop_header_branch
    %12 = sbr.rel (%p10) target = $region8
  $region5: #{emotion_net.11} parent=0 // loop_body
    %s14 = ssub.s32 %s9, 1
    %s15 = ssub.s32 %s9, 2
    %s16 = sadd.s32 %s9, 1
    %s17 = ssub.s32 %s9, %s16
    %p18 = scmp.eq.s32.totalorder %s17, 0
    %s20 = sadd.s32 %s19, 1
    %s21 = scalar_select %p18, %s19, %s20
    %p24 = pneg %p18
    %p25 = scmp.eq.s32.totalorder %s9, 1
    %p26 = por %p24, %p25
    %p27 = scmp.ne.s32.totalorder %s19, %s22
    %p28 = scmp.eq.s32.totalorder %s9, 0
    %p29 = por %p27, %p28
    %p30 = scmp.ne.s32.totalorder %s19, %s22
    %p31 = scmp.eq.s32.totalorder %s14, 1
    %p32 = por %p30, %p31
    %p33 = scmp.ne.s32.totalorder %s22, %s23
    %p34 = scmp.eq.s32.totalorder %s14, 0
    %p35 = por %p33, %p34
    %p36 = scmp.ne.s32.totalorder %s22, %s23
    %p37 = scmp.eq.s32.totalorder %s15, 1
    %p38 = por %p36, %p37
    %p40 = scmp.ne.s32.totalorder %s23, %s39
    %p41 = scmp.eq.s32.totalorder %s15, 0
    %p42 = por %p40, %p41
    %s44 = sadd.s32 %s43, 1
    %p47 = scmp.eq.s32.totalorder %s9, 1
    %p48 = scmp.ne.s32.totalorder %s43, %s45
    %p49 = scmp.eq.s32.totalorder %s9, 0
    %p50 = por %p48, %p49
    %p51 = scmp.ne.s32.totalorder %s43, %s45
    %p52 = scmp.eq.s32.totalorder %s14, 1
    %p53 = por %p51, %p52
    %p54 = scmp.ne.s32.totalorder %s45, %s46
    %p55 = scmp.eq.s32.totalorder %s14, 0
    %p56 = por %p54, %p55
    %p57 = scmp.ne.s32.totalorder %s45, %s46
    %p58 = scmp.eq.s32.totalorder %s15, 1
    %p59 = por %p57, %p58
    %p61 = scmp.ne.s32.totalorder %s46, %s60
    %p62 = scmp.eq.s32.totalorder %s15, 0
    %p63 = por %p61, %p62
    %s65 = sadd.s32 %s64, 1
    %p68 = scmp.eq.s32.totalorder %s9, 1
    %p69 = scmp.ne.s32.totalorder %s64, %s66
    %p70 = scmp.eq.s32.totalorder %s9, 0
    %p71 = por %p69, %p70
    %p72 = scmp.ne.s32.totalorder %s64, %s66
    %p73 = scmp.eq.s32.totalorder %s14, 1
    %p74 = por %p72, %p73
    %p75 = scmp.ne.s32.totalorder %s66, %s67
    %p76 = scmp.eq.s32.totalorder %s14, 0
    %p77 = por %p75, %p76
    %p78 = scmp.ne.s32.totalorder %s66, %s67
    %p79 = scmp.eq.s32.totalorder %s15, 1
    %p80 = por %p78, %p79
    %p82 = scmp.ne.s32.totalorder %s67, %s81
    %p83 = scmp.eq.s32.totalorder %s15, 0
    %p84 = por %p82, %p83
    %s85 = ssub.s32 %s9, %s16
    %p86 = scmp.eq.s32.totalorder %s85, 0
    %s88 = sadd.s32 %s87, 1
    %s89 = scalar_select %p86, %s87, %s88
    %p92 = pneg %p86
    %p93 = scmp.eq.s32.totalorder %s9, 1
    %p94 = por %p92, %p93
    %p95 = scmp.ne.s32.totalorder %s87, %s90
    %p96 = scmp.eq.s32.totalorder %s9, 0
    %p97 = por %p95, %p96
    %p98 = scmp.ne.s32.totalorder %s87, %s90
    %p99 = scmp.eq.s32.totalorder %s14, 1
    %p100 = por %p98, %p99
    %p101 = scmp.ne.s32.totalorder %s90, %s91
    %p102 = scmp.eq.s32.totalorder %s14, 0
    %p103 = por %p101, %p102
    %p104 = scmp.ne.s32.totalorder %s90, %s91
    %p105 = scmp.eq.s32.totalorder %s15, 1
    %p106 = por %p104, %p105
    %p108 = scmp.ne.s32.totalorder %s91, %s107
    %p109 = scmp.eq.s32.totalorder %s15, 0
    %p110 = por %p108, %p109
    %p111 = scmp.le.s32.totalorder 1, %s9
    %p112 = scmp.lt.s32.totalorder %s9, 3
    %p113 = pnand %p111, %p112
    %p114 = pneg %p113
    // Predicated region
    $region9: #{emotion_net.11} parent=5 // pred_check
      _
    $region10: #{emotion_net.11} parent=5 // pred_check_branch
      %116 = sbr.rel (%p113) target = $region12
    $region11: #{emotion_net.11} parent=5 // pred_region
      %s117 = ssub.s32 %s9, 1
      // Predicated region
      $region13: #{emotion_net.11} parent=11 // pred_check
        %p118 = pneg %p56
      $region14: #{emotion_net.11} parent=11 // pred_check_branch
        %120 = sbr.rel (%p118) target = $region16
      $region15: #{emotion_net.11} parent=11 // pred_region
        _
      $region16: #{emotion_net.11} parent=11 // pred_fallthru
        _
      // Predicated region
      $region17: #{emotion_net.11} parent=11 // pred_check
        %p121 = pneg %p77
      $region18: #{emotion_net.11} parent=11 // pred_check_branch
        %123 = sbr.rel (%p121) target = $region20
      $region19: #{emotion_net.11} parent=11 // pred_region
        _
      $region20: #{emotion_net.11} parent=11 // pred_fallthru
        _
    $region12: #{emotion_net.11} parent=5 // pred_fallthru
      _
    %p124 = scmp.lt.s32.totalorder %s9, 2
    // Predicated region
    $region21: #{emotion_net.11} parent=5 // pred_check
      %p125 = pneg %p124
    $region22: #{emotion_net.11} parent=5 // pred_check_branch
      %127 = sbr.rel (%p125) target = $region24
    $region23: #{emotion_net.11} parent=5 // pred_region
      // Predicated region
      $region25: #{emotion_net.11} parent=23 // pred_check
        %p128 = pneg %p29
      $region26: #{emotion_net.11} parent=23 // pred_check_branch
        %130 = sbr.rel (%p128) target = $region28
      $region27: #{emotion_net.11} parent=23 // pred_region
        %p131 = scmp.lt.s32.totalorder %s9, 1
        %s132 = scalar_select %p131, %s9, 1
        %s133 = smul.addr %s132, 32
        %s134 = smul.addr %s133, 8
        %s135 = scalar_lea.vmem %s0, %s134
      $region28: #{emotion_net.11} parent=23 // pred_fallthru
        _
    $region24: #{emotion_net.11} parent=5 // pred_fallthru
      _
    %p136 = scmp.le.s32.totalorder 1, %s9
    %p137 = scmp.lt.s32.totalorder %s9, 3
    %p138 = pnand %p136, %p137
    %p139 = pneg %p138
    // Predicated region
    $region29: #{emotion_net.11} parent=5 // pred_check
      _
    $region30: #{emotion_net.11} parent=5 // pred_check_branch
      %141 = sbr.rel (%p138) target = $region32
    $region31: #{emotion_net.11} parent=5 // pred_region
      %s142 = ssub.s32 %s9, 1
      %p143 = scmp.lt.s32.totalorder %s14, 1
      %s144 = scalar_select %p143, %s14, 1
      %s145 = smul.addr %s144, 32
      %s146 = smul.addr %s145, 8
      %s147 = scalar_lea.vmem %s0, %s146
      %p148 = pneg %p35
      %p149 = pneg %p32
      %p150 = pneg %p56
      %p151 = pneg %p53
      %p152 = pneg %p77
      %p153 = pneg %p74
      %p154 = pneg %p103
      %p155 = pneg %p100
      %p156 = scmp.lt.s32.totalorder %s14, 1
      %s157 = scalar_select %p156, %s14, 1
      %s158 = smul.addr %s157, 4
      %s159 = smul.addr %s158, 4
      %s160 = scalar_lea.vmem %s3, %s159
      %p161 = scmp.lt.s32.totalorder %s14, 1
      %s162 = scalar_select %p161, %s14, 1
      %s163 = smul.addr %s162, 32
      %s164 = smul.addr %s163, 8
      %s165 = scalar_lea.vmem %s0, %s164
      %p166 = scmp.lt.s32.totalorder %s14, 1
      %s167 = scalar_select %p166, %s14, 1
      %s168 = smul.addr %s167, 4
      %s169 = smul.addr %s168, 4
      %s170 = scalar_lea.vmem %s3, %s169
      %v171 = vld [vmem:[%s165] sm:$0xff]
      %v172 = vld [vmem:[%s165 + $0x8] sm:$0xff]
      %v173 = vld [vmem:[%s165 + $0x10] sm:$0xff]
      %v174 = vld [vmem:[%s165 + $0x18] sm:$0xff]
      %v175 = vld [vmem:[%s165 + $0x20] sm:$0xff]
      %v176 = vld [vmem:[%s165 + $0x28] sm:$0xff]
      %v177 = vld [vmem:[%s165 + $0x30] sm:$0xff]
      %v178 = vld [vmem:[%s165 + $0x38] sm:$0xff]
      %v179 = vld [vmem:[%s165 + $0x40] sm:$0xff]
      %v180 = vld [vmem:[%s165 + $0x48] sm:$0xff]
      %v181 = vld [vmem:[%s165 + $0x50] sm:$0xff]
      %v182 = vld [vmem:[%s165 + $0x58] sm:$0xff]
      %v183 = vld [vmem:[%s165 + $0x60] sm:$0xff]
      %v184 = vld [vmem:[%s165 + $0x68] sm:$0xff]
      %v185 = vld [vmem:[%s165 + $0x70] sm:$0xff]
      %v186 = vld [vmem:[%s165 + $0x78] sm:$0xff]
      %v187 = vld [vmem:[%s165 + $0x80] sm:$0xff]
      %v188 = vld [vmem:[%s165 + $0x88] sm:$0xff]
      %v189 = vld [vmem:[%s165 + $0x90] sm:$0xff]
      %v190 = vld [vmem:[%s165 + $0x98] sm:$0xff]
      %v191 = vld [vmem:[%s165 + $0xa0] sm:$0xff]
      %v192 = vld [vmem:[%s165 + $0xa8] sm:$0xff]
      %v193 = vld [vmem:[%s165 + $0xb0] sm:$0xff]
      %v194 = vld [vmem:[%s165 + $0xb8] sm:$0xff]
      %v195 = vld [vmem:[%s165 + $0xc0] sm:$0xff]
      %v196 = vld [vmem:[%s165 + $0xc8] sm:$0xff]
      %v197 = vld [vmem:[%s165 + $0xd0] sm:$0xff]
      %v198 = vld [vmem:[%s165 + $0xd8] sm:$0xff]
      %v199 = vld [vmem:[%s165 + $0xe0] sm:$0xff]
      %v200 = vld [vmem:[%s165 + $0xe8] sm:$0xff]
      %v201 = vld [vmem:[%s165 + $0xf0] sm:$0xff]
      %v202 = vld [vmem:[%s165 + $0xf8] sm:$0xff]
      %v203 = vadd.f32 %v171, %v172
      %v204 = vadd.f32 %v203, %v173
      %v205 = vadd.f32 %v204, %v174
      %v206 = vadd.f32 %v205, %v175
      %v207 = vadd.f32 %v206, %v176
      %v208 = vadd.f32 %v207, %v177
      %v209 = vadd.f32 %v208, %v178
      %v210 = vrot.slane %v209, 4
      %v211 = vadd.f32 %v209, %v210
      %v212 = vrot.slane %v211, 2
      %v213 = vadd.f32 %v211, %v212
      %v214 = vrot.slane %v213, 1
      %v215 = vadd.f32 %v213, %v214
      %v216 = vadd.f32 %v179, %v180
      %v217 = vadd.f32 %v216, %v181
      %v218 = vadd.f32 %v217, %v182
      %v219 = vadd.f32 %v218, %v183
      %v220 = vadd.f32 %v219, %v184
      %v221 = vadd.f32 %v220, %v185
      %v222 = vadd.f32 %v221, %v186
      %v223 = vrot.slane %v222, 4
      %v224 = vadd.f32 %v222, %v223
      %v225 = vrot.slane %v224, 2
      %v226 = vadd.f32 %v224, %v225
      %v227 = vrot.slane %v226, 1
      %v228 = vadd.f32 %v226, %v227
      %v229 = vadd.f32 %v187, %v188
      %v230 = vadd.f32 %v229, %v189
      %v231 = vadd.f32 %v230, %v190
      %v232 = vadd.f32 %v231, %v191
      %v233 = vadd.f32 %v232, %v192
      %v234 = vadd.f32 %v233, %v193
      %v235 = vadd.f32 %v234, %v194
      %v236 = vrot.slane %v235, 4
      %v237 = vadd.f32 %v235, %v236
      %v238 = vrot.slane %v237, 2
      %v239 = vadd.f32 %v237, %v238
      %v240 = vrot.slane %v239, 1
      %v241 = vadd.f32 %v239, %v240
      %v242 = vadd.f32 %v195, %v196
      %v243 = vadd.f32 %v242, %v197
      %v244 = vadd.f32 %v243, %v198
      %v245 = vadd.f32 %v244, %v199
      %v246 = vadd.f32 %v245, %v200
      %v247 = vadd.f32 %v246, %v201
      %v248 = vadd.f32 %v247, %v202
      %v249 = vrot.slane %v248, 4
      %v250 = vadd.f32 %v248, %v249
      %v251 = vrot.slane %v250, 2
      %v252 = vadd.f32 %v250, %v251
      %v253 = vrot.slane %v252, 1
      %v254 = vadd.f32 %v252, %v253
      %v255 = vrcp.pop 64.0
      %v256 = vmul.f32 %v215, %v255
      %v257 = vmul.f32 %v228, %v255
      %v258 = vmul.f32 %v241, %v255
      %v259 = vmul.f32 %v254, %v255
      %v260 = vld [vmem:[%s1] sm:$0xff]
      %v261 = vld [vmem:[%s1 + $0x8] sm:$0xff]
      %v262 = vld [vmem:[%s1 + $0x10] sm:$0xff]
      %v263 = vld [vmem:[%s1 + $0x18] sm:$0xff]
      %v264 = vld [vmem:[%s1 + $0x20] sm:$0xff]
      %v265 = vld [vmem:[%s1 + $0x28] sm:$0xff]
      %v266 = vld [vmem:[%s1 + $0x30] sm:$0xff]
      %v267 = vld [vmem:[%s1 + $0x38] sm:$0xff]
      %v268 = vld [vmem:[%s1 + $0x40] sm:$0xff]
      %v269 = vld [vmem:[%s1 + $0x48] sm:$0xff]
      %v270 = vld [vmem:[%s1 + $0x50] sm:$0xff]
      %v271 = vld [vmem:[%s1 + $0x58] sm:$0xff]
      %v272 = vld [vmem:[%s1 + $0x60] sm:$0xff]
      %v273 = vld [vmem:[%s1 + $0x68] sm:$0xff]
      %v274 = vld [vmem:[%s1 + $0x70] sm:$0xff]
      %v275 = vld [vmem:[%s1 + $0x78] sm:$0xff]
      %v276 = vld [vmem:[%s1 + $0x80] sm:$0xff]
      %v277 = vld [vmem:[%s1 + $0x88] sm:$0xff]
      %v278 = vld [vmem:[%s1 + $0x90] sm:$0xff]
      %v279 = vld [vmem:[%s1 + $0x98] sm:$0xff]
      %v280 = vld [vmem:[%s1 + $0xa0] sm:$0xff]
      %v281 = vld [vmem:[%s1 + $0xa8] sm:$0xff]
      %v282 = vld [vmem:[%s1 + $0xb0] sm:$0xff]
      %v283 = vld [vmem:[%s1 + $0xb8] sm:$0xff]
      %v284 = vld [vmem:[%s1 + $0xc0] sm:$0xff]
      %v285 = vld [vmem:[%s1 + $0xc8] sm:$0xff]
      %v286 = vld [vmem:[%s1 + $0xd0] sm:$0xff]
      %v287 = vld [vmem:[%s1 + $0xd8] sm:$0xff]
      %v288 = vld [vmem:[%s1 + $0xe0] sm:$0xff]
      %v289 = vld [vmem:[%s1 + $0xe8] sm:$0xff]
      %v290 = vld [vmem:[%s1 + $0xf0] sm:$0xff]
      %v291 = vld [vmem:[%s1 + $0xf8] sm:$0xff]
      %v292 = vld [vmem:[%s1 + $0x100] sm:$0xff]
      %v293 = vld [vmem:[%s1 + $0x108] sm:$0xff]
      %v294 = vld [vmem:[%s1 + $0x110] sm:$0xff]
      %v295 = vld [vmem:[%s1 + $0x118] sm:$0xff]
      %v296 = vld [vmem:[%s1 + $0x120] sm:$0xff]
      %v297 = vld [vmem:[%s1 + $0x128] sm:$0xff]
      %v298 = vld [vmem:[%s1 + $0x130] sm:$0xff]
      %v299 = vld [vmem:[%s1 + $0x138] sm:$0xff]
      %v300 = vld [vmem:[%s1 + $0x140] sm:$0xff]
      %v301 = vld [vmem:[%s1 + $0x148] sm:$0xff]
      %v302 = vld [vmem:[%s1 + $0x150] sm:$0xff]
      %v303 = vld [vmem:[%s1 + $0x158] sm:$0xff]
      %v304 = vld [vmem:[%s1 + $0x160] sm:$0xff]
      %v305 = vld [vmem:[%s1 + $0x168] sm:$0xff]
      %v306 = vld [vmem:[%s1 + $0x170] sm:$0xff]
      %v307 = vld [vmem:[%s1 + $0x178] sm:$0xff]
      %v308 = vld [vmem:[%s1 + $0x180] sm:$0xff]
      %v309 = vld [vmem:[%s1 + $0x188] sm:$0xff]
      %v310 = vld [vmem:[%s1 + $0x190] sm:$0xff]
      %v311 = vld [vmem:[%s1 + $0x198] sm:$0xff]
      %v312 = vld [vmem:[%s1 + $0x1a0] sm:$0xff]
      %v313 = vld [vmem:[%s1 + $0x1a8] sm:$0xff]
      %v314 = vld [vmem:[%s1 + $0x1b0] sm:$0xff]
      %v315 = vld [vmem:[%s1 + $0x1b8] sm:$0xff]
      %v316 = vld [vmem:[%s1 + $0x1c0] sm:$0xff]
      %v317 = vld [vmem:[%s1 + $0x1c8] sm:$0xff]
      %v318 = vld [vmem:[%s1 + $0x1d0] sm:$0xff]
      %v319 = vld [vmem:[%s1 + $0x1d8] sm:$0xff]
      %v320 = vld [vmem:[%s1 + $0x1e0] sm:$0xff]
      %v321 = vld [vmem:[%s1 + $0x1e8] sm:$0xff]
      %v322 = vld [vmem:[%s1 + $0x1f0] sm:$0xff]
      %v323 = vld [vmem:[%s1 + $0x1f8] sm:$0xff]
      %v324 = vld [vmem:[%s2] sm:$0xf]
      %vm329 = vcmask 1041409
      %v330 = vsel %vm329, %v257, %v256
      %vm331 = vcmask 1042434
      %v332 = vsel %vm331, %v258, %v330
      %vm333 = vcmask 1043459
      %v334 = vsel %vm333, %v259, %v332
      %vm336 = vcmask 1043456
      %v337 = vsel %vm336, %v334, 0.0
      %v339 = vlaneseq
      %v340 = vshrl.u32 %v339, 7
      %v341 = vsub.s32 0, %v340
      %v342 = vrot.slane %v324, %v341
      %v343 = vlaneseq
      %v344 = vshrl.u32 %v343, 7
      %v345 = vsub.s32 1, %v344
      %v346 = vrot.slane %v324, %v345
      %v347 = vlaneseq
      %v348 = vshrl.u32 %v347, 7
      %v349 = vsub.s32 2, %v348
      %v350 = vrot.slane %v324, %v349
      %v351 = vlaneseq
      %v352 = vshrl.u32 %v351, 7
      %v353 = vsub.s32 3, %v352
      %v354 = vrot.slane %v324, %v353
      %359 = vmatprep.subr.mxu0 %v321
      %360 = vmatpush1.msra.mxu0 %v320
      %361 = vmatprep.subr.mxu0 %v317
      %362 = vmatpush1.msra.mxu0 %v316
      %363 = vmatprep.subr.mxu0 %v313
      %364 = vmatpush1.msra.mxu0 %v312
      %365 = vmatprep.subr.mxu0 %v309
      %366 = vmatpush1.msra.mxu0 %v308
      %367 = vmatprep.subr.mxu0 %v305
      %368 = vmatpush1.msra.mxu0 %v304
      %369 = vmatprep.subr.mxu0 %v301
      %370 = vmatpush1.msra.mxu0 %v300
      %371 = vmatprep.subr.mxu0 %v297
      %372 = vmatpush1.msra.mxu0 %v296
      %373 = vmatprep.subr.mxu0 %v293
      %374 = vmatpush1.msra.mxu0 %v292
      %375 = vmatprep.subr.mxu0 %v289
      %376 = vmatpush1.msra.mxu0 %v288
      %377 = vmatprep.subr.mxu0 %v285
      %378 = vmatpush1.msra.mxu0 %v284
      %379 = vmatprep.subr.mxu0 %v281
      %380 = vmatpush1.msra.mxu0 %v280
      %381 = vmatprep.subr.mxu0 %v277
      %382 = vmatpush1.msra.mxu0 %v276
      %383 = vmatprep.subr.mxu0 %v273
      %384 = vmatpush1.msra.mxu0 %v272
      %385 = vmatprep.subr.mxu0 %v269
      %386 = vmatpush1.msra.mxu0 %v268
      %387 = vmatprep.subr.mxu0 %v265
      %388 = vmatpush1.msra.mxu0 %v264
      %389 = vmatprep.subr.mxu0 %v261
      %390 = vmatpush1.msra.mxu0 %v260
      %391 = vmatprep.subr.mxu0 0.0
      %392 = vmatpush2.msra.mxu0 0.0
      %393 = vmatprep.subr.mxu0 0.0
      %394 = vmatpush2.msra.mxu0 0.0
      %395 = vmatprep.subr.mxu0 0.0
      %396 = vmatpush2.msra.mxu0 0.0
      %397 = vmatprep.subr.mxu0 0.0
      %398 = vmatpush2.msra.mxu0 0.0
      %399 = vmatprep.subr.mxu0 0.0
      %400 = vmatpush2.msra.mxu0 0.0
      %401 = vmatprep.subr.mxu0 0.0
      %402 = vmatpush2.msra.mxu0 0.0
      %403 = vmatprep.subr.mxu0 0.0
      %404 = vmatpush2.msra.mxu0 0.0
      %405 = vmatprep.subr.mxu0 0.0
      %406 = vmatpush2.msra.mxu0 0.0
      %407 = vmatprep.subr.mxu0 0.0
      %408 = vmatpush2.msra.mxu0 0.0
      %409 = vmatprep.subr.mxu0 0.0
      %410 = vmatpush2.msra.mxu0 0.0
      %411 = vmatprep.subr.mxu0 0.0
      %412 = vmatpush2.msra.mxu0 0.0
      %413 = vmatprep.subr.mxu0 0.0
      %414 = vmatpush2.msra.mxu0 0.0
      %415 = vmatprep.subr.mxu0 0.0
      %416 = vmatpush2.msra.mxu0 0.0
      %417 = vmatprep.subr.mxu0 0.0
      %418 = vmatpush2.msra.mxu0 0.0
      %419 = vmatprep.subr.mxu0 0.0
      %420 = vmatpush2.msra.mxu0 0.0
      %421 = vmatprep.subr.mxu0 0.0
      %422 = vmatpush2.msra.mxu0 0.0
      %423 = vmatprep.mubr.f32.mxu0 0.0
      %424 = vmatmul.mubr.f32.gmra.mxu0 %v337
      %v425 = vpop.f32.mrf.mxu0
      %v426 = vadd.f32 %v342, %v425
      %v427 = vpop.f32.mrf.mxu0
      %v428 = vadd.f32 %v346, %v427
      %429 = vdwg.mxu0
      %430 = vmatprep.subr.mxu0 %v323
      %431 = vmatpush1.msra.mxu0 %v322
      %432 = vmatprep.subr.mxu0 %v319
      %433 = vmatpush1.msra.mxu0 %v318
      %434 = vmatprep.subr.mxu0 %v315
      %435 = vmatpush1.msra.mxu0 %v314
      %436 = vmatprep.subr.mxu0 %v311
      %437 = vmatpush1.msra.mxu0 %v310
      %438 = vmatprep.subr.mxu0 %v307
      %439 = vmatpush1.msra.mxu0 %v306
      %440 = vmatprep.subr.mxu0 %v303
      %441 = vmatpush1.msra.mxu0 %v302
      %442 = vmatprep.subr.mxu0 %v299
      %443 = vmatpush1.msra.mxu0 %v298
      %444 = vmatprep.subr.mxu0 %v295
      %445 = vmatpush1.msra.mxu0 %v294
      %446 = vmatprep.subr.mxu0 %v291
      %447 = vmatpush1.msra.mxu0 %v290
      %448 = vmatprep.subr.mxu0 %v287
      %449 = vmatpush1.msra.mxu0 %v286
      %450 = vmatprep.subr.mxu0 %v283
      %451 = vmatpush1.msra.mxu0 %v282
      %452 = vmatprep.subr.mxu0 %v279
      %453 = vmatpush1.msra.mxu0 %v278
      %454 = vmatprep.subr.mxu0 %v275
      %455 = vmatpush1.msra.mxu0 %v274
      %456 = vmatprep.subr.mxu0 %v271
      %457 = vmatpush1.msra.mxu0 %v270
      %458 = vmatprep.subr.mxu0 %v267
      %459 = vmatpush1.msra.mxu0 %v266
      %460 = vmatprep.subr.mxu0 %v263
      %461 = vmatpush1.msra.mxu0 %v262
      %462 = vmatprep.subr.mxu0 0.0
      %463 = vmatpush2.msra.mxu0 0.0
      %464 = vmatprep.subr.mxu0 0.0
      %465 = vmatpush2.msra.mxu0 0.0
      %466 = vmatprep.subr.mxu0 0.0
      %467 = vmatpush2.msra.mxu0 0.0
      %468 = vmatprep.subr.mxu0 0.0
      %469 = vmatpush2.msra.mxu0 0.0
      %470 = vmatprep.subr.mxu0 0.0
      %471 = vmatpush2.msra.mxu0 0.0
      %472 = vmatprep.subr.mxu0 0.0
      %473 = vmatpush2.msra.mxu0 0.0
      %474 = vmatprep.subr.mxu0 0.0
      %475 = vmatpush2.msra.mxu0 0.0
      %476 = vmatprep.subr.mxu0 0.0
      %477 = vmatpush2.msra.mxu0 0.0
      %478 = vmatprep.subr.mxu0 0.0
      %479 = vmatpush2.msra.mxu0 0.0
      %480 = vmatprep.subr.mxu0 0.0
      %481 = vmatpush2.msra.mxu0 0.0
      %482 = vmatprep.subr.mxu0 0.0
      %483 = vmatpush2.msra.mxu0 0.0
      %484 = vmatprep.subr.mxu0 0.0
      %485 = vmatpush2.msra.mxu0 0.0
      %486 = vmatprep.subr.mxu0 0.0
      %487 = vmatpush2.msra.mxu0 0.0
      %488 = vmatprep.subr.mxu0 0.0
      %489 = vmatpush2.msra.mxu0 0.0
      %490 = vmatprep.subr.mxu0 0.0
      %491 = vmatpush2.msra.mxu0 0.0
      %492 = vmatprep.subr.mxu0 0.0
      %493 = vmatpush2.msra.mxu0 0.0
      %494 = vmatprep.mubr.f32.mxu0 0.0
      %495 = vmatmul.mubr.f32.gmra.mxu0 %v337
      %v496 = vpop.f32.mrf.mxu0
      %v497 = vadd.f32 %v350, %v496
      %v498 = vpop.f32.mrf.mxu0
      %v499 = vadd.f32 %v354, %v498
      %500 = vdwg.mxu0
      %v505 = vcombine.low %v426, %v428
      %v506 = vcombine.low %v497, %v499
      %509 = vst [vmem:[%s170] sm:$0xff] %v505
      %510 = vst [vmem:[%s170 + $0x8] sm:$0xff] %v506
      %p511 = scmp.lt.s32.totalorder %s14, 1
      %s512 = scalar_select %p511, %s14, 1
      %s513 = smul.addr %s512, 4
      %s514 = smul.addr %s513, 4
      %s515 = scalar_lea.vmem %s3, %s514
      // Predicated region
      $region33: #{emotion_net.11} parent=31 // pred_check
        %p516 = pneg %p100
      $region34: #{emotion_net.11} parent=31 // pred_check_branch
        %518 = sbr.rel (%p516) target = $region36
      $region35: #{emotion_net.11} parent=31 // pred_region
        _
      $region36: #{emotion_net.11} parent=31 // pred_fallthru
        _
    $region32: #{emotion_net.11} parent=5 // pred_fallthru
      _
    %p519 = scmp.le.s32.totalorder 2, %s9
    // Predicated region
    $region37: #{emotion_net.11} parent=5 // pred_check
      %p520 = pneg %p519
    $region38: #{emotion_net.11} parent=5 // pred_check_branch
      %522 = sbr.rel (%p520) target = $region40
    $region39: #{emotion_net.11} parent=5 // pred_region
      %s523 = ssub.s32 %s9, 2
      // Predicated region
      $region41: #{emotion_net.11} parent=39 // pred_check
        %p524 = pneg %p106
      $region42: #{emotion_net.11} parent=39 // pred_check_branch
        %526 = sbr.rel (%p524) target = $region44
      $region43: #{emotion_net.11} parent=39 // pred_region
        %p527 = scmp.lt.s32.totalorder %s15, 1
        %s528 = scalar_select %p527, %s15, 1
        %s529 = smul.addr %s528, 4
        %s530 = smul.addr %s529, 4
        %s531 = scalar_lea.vmem %s3, %s530
      $region44: #{emotion_net.11} parent=39 // pred_fallthru
        _
    $region40: #{emotion_net.11} parent=5 // pred_fallthru
      _
  $region6: #{emotion_net.11} parent=0 // loop_footer
    %s13 = sadd.s32 1, %s9
  $region7: #{emotion_net.11} parent=0 // loop_footer_branch
    %8 = sbr.rel target = $region3
  $region8: #{emotion_net.11} parent=0 // loop_exit
    _

</llo_original>
